<compile_context>
chip_gen: v6e
topology: v6e:2x2x1
jax: 0.10.0
libtpu: 0.0.40
codegen_flags: <defaults>
</compile_context>

<pallas_src>
import math
import jax
import jax.numpy as jnp
from jax.experimental import pallas as pl
from jax.experimental.pallas import tpu as pltpu  # noqa: F401  (TPU backend)

# ----- small "MiniLM-like" config (synthetic, deterministic) -----
VOCAB = 64
TYPE_VOCAB = 2
MAX_POS = 16
HIDDEN = 32
NUM_HEADS = 4
HEAD_DIM = HIDDEN // NUM_HEADS
INTERMEDIATE = 64
NUM_LAYERS = 2
LN_EPS = 1e-12
_PARAMS_PER_LAYER = 12


def _layernorm(x, gamma, beta):
    mu = jnp.mean(x, axis=-1, keepdims=True)
    var = jnp.mean(jnp.square(x - mu), axis=-1, keepdims=True)
    return (x - mu) * jax.lax.rsqrt(var + LN_EPS) * gamma + beta


def _erf(x):
    # Abramowitz & Stegun 7.1.26 rational approximation (|err| < 1.5e-7).
    # Used for exact-erf GELU without relying on an erf lowering in Mosaic.
    a1, a2, a3, a4, a5 = 0.254829592, -0.284496736, 1.421413741, -1.453152027, 1.061405429
    p = 0.3275911
    sgn = jnp.where(x >= 0.0, 1.0, -1.0)
    ax = jnp.abs(x)
    t = 1.0 / (1.0 + p * ax)
    poly = ((((a5 * t + a4) * t + a3) * t + a2) * t + a1) * t
    return sgn * (1.0 - poly * jnp.exp(-ax * ax))


def _gelu_exact(x):
    return 0.5 * x * (1.0 + _erf(x * (1.0 / math.sqrt(2.0))))


# ---------------------------- fused Pallas kernel ----------------------------

def _make_observer_kernel(B, S, with_loss):
    BS = B * S
    scale = 1.0 / math.sqrt(HEAD_DIM)

    def kernel(*refs):
        i = 0
        emb_ref, bias_ref = refs[i], refs[i + 1]
        i += 2
        if with_loss:
            evenm_ref, pairw_ref = refs[i], refs[i + 1]
            i += 2
        eg_ref, eb_ref = refs[i], refs[i + 1]
        i += 2
        layer_refs = refs[i:i + _PARAMS_PER_LAYER * NUM_LAYERS]
        i += _PARAMS_PER_LAYER * NUM_LAYERS
        pw_ref, pb_ref, cw_ref, cb_ref = refs[i:i + 4]
        i += 4
        logits_ref = refs[i]
        i += 1
        if with_loss:
            lo_ref, lw_ref = refs[i], refs[i + 1]

        # Embedding LayerNorm.  Activations live as (B*S, H) for every matmul/LN.
        x = _layernorm(emb_ref[...], eg_ref[...], eb_ref[...])      # (B*S, H)
        bias3 = bias_ref[...]                                        # (B, 1, S)

        for l in range(NUM_LAYERS):
            (wqkv, bqkv, wo, bo, l1g, l1b,
             w1, b1, w2, b2, l2g, l2b) = layer_refs[_PARAMS_PER_LAYER * l:
                                                    _PARAMS_PER_LAYER * (l + 1)]
            # Fused QKV projection: one (B*S, 3H) MXU push + one bias add.
            qkv = jnp.dot(x, wqkv[...], preferred_element_type=jnp.float32) + bqkv[...]
            qkv3 = qkv.reshape(B, S, 3 * HIDDEN)     # layout-preserving (S == 8)
            # 1/sqrt(d) folded into Q once for all heads (single VPU mul).
            q_all = qkv3[:, :, :HIDDEN] * scale
            wo_full = wo[...]
            attn_out = jnp.zeros((BS, HIDDEN), jnp.float32)
            for h in range(NUM_HEADS):               # static unrolled, batched over B
                q0 = h * HEAD_DIM
                qh = q_all[:, :, q0:q0 + HEAD_DIM]
                kh = qkv3[:, :, HIDDEN + q0:HIDDEN + q0 + HEAD_DIM]
                vh = qkv3[:, :, 2 * HIDDEN + q0:2 * HIDDEN + q0 + HEAD_DIM]
                s = jnp.einsum('bqd,bkd->bqk', qh, kh,
                               preferred_element_type=jnp.float32) + bias3
                s = s - jnp.max(s, axis=-1, keepdims=True)           # stable softmax
                p = jnp.exp(s)
                p = p * pl.reciprocal(jnp.sum(p, axis=-1, keepdims=True), approx=True)
                ctx = jnp.einsum('bqk,bkd->bqd', p, vh,
                                 preferred_element_type=jnp.float32)  # (B, S, dH)
                # Fold output projection per head (== concat(ctx_h) @ wo, no concat).
                attn_out = attn_out + jnp.dot(
                    ctx.reshape(BS, HEAD_DIM), wo_full[q0:q0 + HEAD_DIM, :],
                    preferred_element_type=jnp.float32)
            attn_out = attn_out + bo[...]
            h1 = _layernorm(x + attn_out, l1g[...], l1b[...])
            ff = jnp.dot(h1, w1[...], preferred_element_type=jnp.float32) + b1[...]
            ff = _gelu_exact(ff)
            ff = jnp.dot(ff, w2[...], preferred_element_type=jnp.float32) + b2[...]
            x = _layernorm(h1 + ff, l2g[...], l2b[...])

        # [CLS] rows (0, S, 2S, ...) gathered via a tiny selection matmul (MXU
        # slot, avoids a sublane gather on the XLU path).
        rr = jax.lax.broadcasted_iota(jnp.int32, (B, BS), 0)
        cc = jax.lax.broadcasted_iota(jnp.int32, (B, BS), 1)
        sel = (cc == rr * S).astype(jnp.float32)                     # (B, B*S)
        cls = jnp.dot(sel, x, preferred_element_type=jnp.float32)    # (B, H)
        pooled = jnp.tanh(jnp.dot(cls, pw_ref[...],
                                  preferred_element_type=jnp.float32) + pb_ref[...])
        # TODO(synk): nn.Dropout(p=0.2) before the classifier is skipped
        # (deterministic forward; matches eval-mode PyTorch).
        logits = jnp.dot(pooled, cw_ref[...],
                         preferred_element_type=jnp.float32) + cb_ref[...]  # (B, 1)
        logits_ref[...] = logits

        if with_loss:
            # Pairwise CE against label 0: loss_i = LSE(s_2i, s_2i+1) - s_2i.
            # Pair partner fetched with a next-row selection matmul (no reshape).
            r2 = jax.lax.broadcasted_iota(jnp.int32, (B, B), 0)
            c2 = jax.lax.broadcasted_iota(jnp.int32, (B, B), 1)
            nxt = (c2 == r2 + 1).astype(jnp.float32)
            s_pair = jnp.dot(nxt, logits, preferred_element_type=jnp.float32)
            m = jnp.maximum(logits, s_pair)
            lse = m + jnp.log(jnp.exp(logits - m) + jnp.exp(s_pair - m))
            row_loss = lse - logits                 # valid at even rows only
            inv_n = 1.0 / float(B // 2)             # both losses divide by B/2 (reference)
            lo_ref[...] = jnp.sum(evenm_ref[...] * row_loss, keepdims=True) * inv_n
            lw_ref[...] = jnp.sum(pairw_ref[...] * row_loss, keepdims=True) * inv_n

    return kernel


# ---------------------------- wrapper / glue ----------------------------

def observer_forward(params, input_ids, token_type_ids, attention_mask,
                     weight=None, is_training=True):
    B, S = input_ids.shape
    f32 = jnp.float32

    # BERT embeddings (table lookups stay in plain JAX).
    pos_ids = jnp.arange(S)
    emb = (params['word_emb'][input_ids]
           + params['pos_emb'][pos_ids][None, :, :]
           + params['type_emb'][token_type_ids]).astype(f32)
    emb2d = emb.reshape(B * S, HIDDEN)

    # Additive attention bias, pre-shaped (B, 1, S): 0 attended, -1e9 masked.
    bias3 = ((1.0 - attention_mask.astype(f32)) * -1e9).reshape(B, 1, S)

    layer_args = []
    for lp in params['layers']:
        layer_args += [lp['wqkv'], lp['bqkv'], lp['wo'], lp['bo'],
                       lp['ln1_g'], lp['ln1_b'], lp['w1'], lp['b1'],
                       lp['w2'], lp['b2'], lp['ln2_g'], lp['ln2_b']]
    tail_args = [params['pool_w'], params['pool_b'], params['cls_w'], params['cls_b']]

    if not is_training:
        kernel = _make_observer_kernel(B, S, with_loss=False)
        logits = pl.pallas_call(
            kernel, out_shape=jax.ShapeDtypeStruct((B, 1), f32),
        )(emb2d, bias3, params['emb_ln_g'], params['emb_ln_b'],
          *layer_args, *tail_args)
        return logits

    assert B % 2 == 0, "pairwise loss needs an even batch"
    B2 = B // 2
    if weight is None:
        weight = jnp.ones((B2,), f32)
    # Even-row masks expanded to (B, 1): row 2i carries 1.0 / weight_i, odd rows 0.
    even_mask = (jnp.arange(B) % 2 == 0).astype(f32).reshape(B, 1)
    pair_w = jnp.zeros((B, 1), f32).at[0::2, 0].set(weight.astype(f32))

    kernel = _make_observer_kernel(B, S, with_loss=True)
    logits, lo, lw = pl.pallas_call(
        kernel,
        out_shape=(jax.ShapeDtypeStruct((B, 1), f32),
                   jax.ShapeDtypeStruct((1, 1), f32),
                   jax.ShapeDtypeStruct((1, 1), f32)),
    )(emb2d, bias3, even_mask, pair_w,
      params['emb_ln_g'], params['emb_ln_b'], *layer_args, *tail_args)
    return lo[0, 0], lw[0, 0], logits


# ---------------------------- parameter init ----------------------------

def init_params(key):
    keys = jax.random.split(key, 5 + NUM_LAYERS)

    def n(k, shape):
        return jax.random.normal(k, shape, jnp.float32) * 0.02

    params = {
        'word_emb': n(keys[0], (VOCAB, HIDDEN)),
        'pos_emb': n(keys[1], (MAX_POS, HIDDEN)),
        'type_emb': n(keys[2], (TYPE_VOCAB, HIDDEN)),
        'emb_ln_g': jnp.ones((1, HIDDEN), jnp.float32),
        'emb_ln_b': jnp.zeros((1, HIDDEN), jnp.float32),
        'pool_w': n(keys[3], (HIDDEN, HIDDEN)),
        'pool_b': jnp.zeros((1, HIDDEN), jnp.float32),
        'cls_w': n(keys[4], (HIDDEN, 1)),
        'cls_b': jnp.zeros((1, 1), jnp.float32),
        'layers': [],
    }
    for i in range(NUM_LAYERS):
        lk = jax.random.split(keys[5 + i], 6)
        wq, wk, wv = (n(lk[0], (HIDDEN, HIDDEN)),
                      n(lk[1], (HIDDEN, HIDDEN)),
                      n(lk[2], (HIDDEN, HIDDEN)))
        params['layers'].append({
            'wqkv': jnp.concatenate([wq, wk, wv], axis=1),        # (H, 3H) fused
            'bqkv': jnp.zeros((1, 3 * HIDDEN), jnp.float32),
            'wo': n(lk[3], (HIDDEN, HIDDEN)),
            'bo': jnp.zeros((1, HIDDEN), jnp.float32),
            'ln1_g': jnp.ones((1, HIDDEN), jnp.float32),
            'ln1_b': jnp.zeros((1, HIDDEN), jnp.float32),
            'w1': n(lk[4], (HIDDEN, INTERMEDIATE)),
            'b1': jnp.zeros((1, INTERMEDIATE), jnp.float32),
            'w2': n(lk[5], (INTERMEDIATE, HIDDEN)),
            'b2': jnp.zeros((1, HIDDEN), jnp.float32),
            'ln2_g': jnp.ones((1, HIDDEN), jnp.float32),
            'ln2_b': jnp.zeros((1, HIDDEN), jnp.float32),
        })
    return params


if __name__ == "__main__":
    key = jax.random.PRNGKey(0)
    pkey, dkey = jax.random.split(key)
    params = init_params(pkey)

    B, S = 4, 8  # batch must be even (pairwise loss)
    k1, k2 = jax.random.split(dkey)
    input_ids = jax.random.randint(k1, (B, S), 0, VOCAB, dtype=jnp.int32)
    token_type_ids = jax.random.randint(k2, (B, S), 0, TYPE_VOCAB, dtype=jnp.int32)
    attention_mask = jnp.ones((B, S), dtype=jnp.int32).at[:, -2:].set(0)  # pad last 2 tokens

    # Training path: (loss_origin, loss_weight, logits).
    loss_origin, loss_weight, logits = observer_forward(
        params, input_ids, token_type_ids, attention_mask, weight=None, is_training=True)
    jax.block_until_ready((loss_origin, loss_weight, logits))
    assert logits.shape == (B, 1)
    assert bool(jnp.all(jnp.isfinite(logits)))
    assert bool(jnp.isfinite(loss_origin)) and bool(jnp.isfinite(loss_weight))

    # Eval path: raw logits only (exercises the no-loss kernel variant too).
    logits_eval = observer_forward(
        params, input_ids, token_type_ids, attention_mask, is_training=False)
    jax.block_until_ready(logits_eval)
    assert logits_eval.shape == (B, 1)
    assert bool(jnp.all(jnp.isfinite(logits_eval)))

    print("KERNEL_OK")
</pallas_src>

<mosaic_0001>
module attributes {stable_mosaic.version = 11 : i64} {
  func.func @kernel(%arg0: memref<32x32xf32, #tpu.memory_space<vmem>>, %arg1: memref<4x1x8xf32, #tpu.memory_space<vmem>>, %arg2: memref<4x1xf32, #tpu.memory_space<vmem>>, %arg3: memref<4x1xf32, #tpu.memory_space<vmem>>, %arg4: memref<1x32xf32, #tpu.memory_space<vmem>>, %arg5: memref<1x32xf32, #tpu.memory_space<vmem>>, %arg6: memref<32x96xf32, #tpu.memory_space<vmem>>, %arg7: memref<1x96xf32, #tpu.memory_space<vmem>>, %arg8: memref<32x32xf32, #tpu.memory_space<vmem>>, %arg9: memref<1x32xf32, #tpu.memory_space<vmem>>, %arg10: memref<1x32xf32, #tpu.memory_space<vmem>>, %arg11: memref<1x32xf32, #tpu.memory_space<vmem>>, %arg12: memref<32x64xf32, #tpu.memory_space<vmem>>, %arg13: memref<1x64xf32, #tpu.memory_space<vmem>>, %arg14: memref<64x32xf32, #tpu.memory_space<vmem>>, %arg15: memref<1x32xf32, #tpu.memory_space<vmem>>, %arg16: memref<1x32xf32, #tpu.memory_space<vmem>>, %arg17: memref<1x32xf32, #tpu.memory_space<vmem>>, %arg18: memref<32x96xf32, #tpu.memory_space<vmem>>, %arg19: memref<1x96xf32, #tpu.memory_space<vmem>>, %arg20: memref<32x32xf32, #tpu.memory_space<vmem>>, %arg21: memref<1x32xf32, #tpu.memory_space<vmem>>, %arg22: memref<1x32xf32, #tpu.memory_space<vmem>>, %arg23: memref<1x32xf32, #tpu.memory_space<vmem>>, %arg24: memref<32x64xf32, #tpu.memory_space<vmem>>, %arg25: memref<1x64xf32, #tpu.memory_space<vmem>>, %arg26: memref<64x32xf32, #tpu.memory_space<vmem>>, %arg27: memref<1x32xf32, #tpu.memory_space<vmem>>, %arg28: memref<1x32xf32, #tpu.memory_space<vmem>>, %arg29: memref<1x32xf32, #tpu.memory_space<vmem>>, %arg30: memref<32x32xf32, #tpu.memory_space<vmem>>, %arg31: memref<1x32xf32, #tpu.memory_space<vmem>>, %arg32: memref<32x1xf32, #tpu.memory_space<vmem>>, %arg33: memref<1x1xf32, #tpu.memory_space<vmem>>, %arg34: memref<4x1xf32, #tpu.memory_space<vmem>>, %arg35: memref<1x1xf32, #tpu.memory_space<vmem>>, %arg36: memref<1x1xf32, #tpu.memory_space<vmem>>) attributes {dimension_semantics = [], scalar_prefetch = 0 : i64, scratch_operands = 0 : i64, tpu.core_type = #tpu.core_type<tc>} {
    %c0 = arith.constant 0 : index
    %c0_0 = arith.constant 0 : index
    %0 = vector.load %arg0[%c0, %c0_0] : memref<32x32xf32, #tpu.memory_space<vmem>>, vector<32x32xf32>
    %c0_1 = arith.constant 0 : index
    %c0_2 = arith.constant 0 : index
    %1 = vector.load %arg4[%c0_1, %c0_2] : memref<1x32xf32, #tpu.memory_space<vmem>>, vector<1x32xf32>
    %c0_3 = arith.constant 0 : index
    %c0_4 = arith.constant 0 : index
    %2 = vector.load %arg5[%c0_3, %c0_4] : memref<1x32xf32, #tpu.memory_space<vmem>>, vector<1x32xf32>
    %cst = arith.constant dense<0.000000e+00> : vector<32xf32>
    %3 = vector.multi_reduction <add>, %0, %cst [1] : vector<32x32xf32> to vector<32xf32>
    %4 = vector.shape_cast %3 : vector<32xf32> to vector<32x1xf32>
    %cst_5 = arith.constant 3.200000e+01 : f32
    %5 = vector.broadcast %cst_5 : f32 to vector<32x1xf32>
    %6 = arith.divf %4, %5 : vector<32x1xf32>
    %7 = vector.broadcast %6 : vector<32x1xf32> to vector<32x32xf32>
    %8 = arith.subf %0, %7 : vector<32x32xf32>
    %9 = arith.mulf %8, %8 : vector<32x32xf32>
    %cst_6 = arith.constant dense<0.000000e+00> : vector<32xf32>
    %10 = vector.multi_reduction <add>, %9, %cst_6 [1] : vector<32x32xf32> to vector<32xf32>
    %11 = vector.shape_cast %10 : vector<32xf32> to vector<32x1xf32>
    %cst_7 = arith.constant 3.200000e+01 : f32
    %12 = vector.broadcast %cst_7 : f32 to vector<32x1xf32>
    %13 = arith.divf %11, %12 : vector<32x1xf32>
    %14 = vector.broadcast %6 : vector<32x1xf32> to vector<32x32xf32>
    %15 = arith.subf %0, %14 : vector<32x32xf32>
    %cst_8 = arith.constant 9.99999996E-13 : f32
    %16 = vector.broadcast %cst_8 : f32 to vector<32x1xf32>
    %17 = arith.addf %13, %16 : vector<32x1xf32>
    %18 = math.rsqrt %17 : vector<32x1xf32>
    %19 = vector.broadcast %18 : vector<32x1xf32> to vector<32x32xf32>
    %20 = arith.mulf %15, %19 : vector<32x32xf32>
    %21 = vector.broadcast %1 : vector<1x32xf32> to vector<32x32xf32>
    %22 = arith.mulf %20, %21 : vector<32x32xf32>
    %23 = vector.broadcast %2 : vector<1x32xf32> to vector<32x32xf32>
    %24 = arith.addf %22, %23 : vector<32x32xf32>
    %c0_9 = arith.constant 0 : index
    %c0_10 = arith.constant 0 : index
    %c0_11 = arith.constant 0 : index
    %25 = vector.load %arg1[%c0_9, %c0_10, %c0_11] : memref<4x1x8xf32, #tpu.memory_space<vmem>>, vector<4x1x8xf32>
    %c0_12 = arith.constant 0 : index
    %c0_13 = arith.constant 0 : index
    %26 = vector.load %arg6[%c0_12, %c0_13] : memref<32x96xf32, #tpu.memory_space<vmem>>, vector<32x96xf32>
    %cst_14 = arith.constant dense<0.000000e+00> : vector<32x96xf32>
    %27 = tpu.matmul %24, %26, %cst_14 {dimension_numbers = #tpu.dot_dimension_numbers<[1], [0], [0], [1], [0, 0, 1, 1], [], []>} : vector<32x32xf32>, vector<32x96xf32>, vector<32x96xf32> -> vector<32x96xf32>
    %c0_15 = arith.constant 0 : index
    %c0_16 = arith.constant 0 : index
    %28 = vector.load %arg7[%c0_15, %c0_16] : memref<1x96xf32, #tpu.memory_space<vmem>>, vector<1x96xf32>
    %29 = vector.broadcast %28 : vector<1x96xf32> to vector<32x96xf32>
    %30 = arith.addf %27, %29 : vector<32x96xf32>
    %31 = vector.shape_cast %30 : vector<32x96xf32> to vector<4x8x96xf32>
    %32 = vector.extract_strided_slice %31 {offsets = [0, 0, 0], sizes = [4, 8, 32], strides = [1, 1, 1]} : vector<4x8x96xf32> to vector<4x8x32xf32>
    %cst_17 = arith.constant 0.353553385 : f32
    %33 = vector.broadcast %cst_17 : f32 to vector<4x8x32xf32>
    %34 = arith.mulf %32, %33 : vector<4x8x32xf32>
    %c0_18 = arith.constant 0 : index
    %c0_19 = arith.constant 0 : index
    %35 = vector.load %arg8[%c0_18, %c0_19] : memref<32x32xf32, #tpu.memory_space<vmem>>, vector<32x32xf32>
    %cst_20 = arith.constant 0.000000e+00 : f32
    %36 = vector.broadcast %cst_20 : f32 to vector<32x32xf32>
    %37 = vector.extract_strided_slice %34 {offsets = [0, 0, 0], sizes = [4, 8, 8], strides = [1, 1, 1]} : vector<4x8x32xf32> to vector<4x8x8xf32>
    %38 = vector.extract_strided_slice %31 {offsets = [0, 0, 32], sizes = [4, 8, 8], strides = [1, 1, 1]} : vector<4x8x96xf32> to vector<4x8x8xf32>
    %39 = vector.extract_strided_slice %31 {offsets = [0, 0, 64], sizes = [4, 8, 8], strides = [1, 1, 1]} : vector<4x8x96xf32> to vector<4x8x8xf32>
    "tpu.trace_start"() <{level = 10 : i32, message = "bqd,bkd->bqk"}> : () -> ()
    %cst_21 = arith.constant dense<0.000000e+00> : vector<4x8x8xf32>
    %40 = tpu.matmul %37, %38, %cst_21 {dimension_numbers = #tpu.dot_dimension_numbers<[2], [2], [1], [1], [0, 0, 0, 1, 1, 1], [0], [0]>} : vector<4x8x8xf32>, vector<4x8x8xf32>, vector<4x8x8xf32> -> vector<4x8x8xf32>
    "tpu.trace_stop"() : () -> ()
    %41 = vector.broadcast %25 : vector<4x1x8xf32> to vector<4x8x8xf32>
    %42 = arith.addf %40, %41 : vector<4x8x8xf32>
    %cst_22 = arith.constant dense<0xFF800000> : vector<4x8xf32>
    %43 = vector.multi_reduction <maximumf>, %42, %cst_22 [2] : vector<4x8x8xf32> to vector<4x8xf32>
    %44 = vector.shape_cast %43 : vector<4x8xf32> to vector<4x8x1xf32>
    %45 = vector.broadcast %44 : vector<4x8x1xf32> to vector<4x8x8xf32>
    %46 = arith.subf %42, %45 : vector<4x8x8xf32>
    %47 = math.exp %46 : vector<4x8x8xf32>
    %cst_23 = arith.constant dense<0.000000e+00> : vector<4x8xf32>
    %48 = vector.multi_reduction <add>, %47, %cst_23 [2] : vector<4x8x8xf32> to vector<4x8xf32>
    %49 = vector.shape_cast %48 : vector<4x8xf32> to vector<4x8x1xf32>
    %50 = tpu.reciprocal %49 {approx = true} : vector<4x8x1xf32> -> vector<4x8x1xf32>
    %51 = vector.broadcast %50 : vector<4x8x1xf32> to vector<4x8x8xf32>
    %52 = arith.mulf %47, %51 : vector<4x8x8xf32>
    "tpu.trace_start"() <{level = 10 : i32, message = "bqk,bkd->bqd"}> : () -> ()
    %cst_24 = arith.constant dense<0.000000e+00> : vector<4x8x8xf32>
    %53 = tpu.matmul %52, %39, %cst_24 {dimension_numbers = #tpu.dot_dimension_numbers<[2], [1], [1], [2], [0, 0, 0, 1, 1, 2], [0], [0]>} : vector<4x8x8xf32>, vector<4x8x8xf32>, vector<4x8x8xf32> -> vector<4x8x8xf32>
    "tpu.trace_stop"() : () -> ()
    %54 = vector.shape_cast %53 : vector<4x8x8xf32> to vector<32x8xf32>
    %55 = vector.extract_strided_slice %35 {offsets = [0, 0], sizes = [8, 32], strides = [1, 1]} : vector<32x32xf32> to vector<8x32xf32>
    %cst_25 = arith.constant dense<0.000000e+00> : vector<32x32xf32>
    %56 = tpu.matmul %54, %55, %cst_25 {dimension_numbers = #tpu.dot_dimension_numbers<[1], [0], [0], [1], [0, 0, 1, 1], [], []>} : vector<32x8xf32>, vector<8x32xf32>, vector<32x32xf32> -> vector<32x32xf32>
    %57 = arith.addf %36, %56 : vector<32x32xf32>
    %58 = vector.extract_strided_slice %34 {offsets = [0, 0, 8], sizes = [4, 8, 8], strides = [1, 1, 1]} : vector<4x8x32xf32> to vector<4x8x8xf32>
    %59 = vector.extract_strided_slice %31 {offsets = [0, 0, 40], sizes = [4, 8, 8], strides = [1, 1, 1]} : vector<4x8x96xf32> to vector<4x8x8xf32>
    %60 = vector.extract_strided_slice %31 {offsets = [0, 0, 72], sizes = [4, 8, 8], strides = [1, 1, 1]} : vector<4x8x96xf32> to vector<4x8x8xf32>
    "tpu.trace_start"() <{level = 10 : i32, message = "bqd,bkd->bqk"}> : () -> ()
    %cst_26 = arith.constant dense<0.000000e+00> : vector<4x8x8xf32>
    %61 = tpu.matmul %58, %59, %cst_26 {dimension_numbers = #tpu.dot_dimension_numbers<[2], [2], [1], [1], [0, 0, 0, 1, 1, 1], [0], [0]>} : vector<4x8x8xf32>, vector<4x8x8xf32>, vector<4x8x8xf32> -> vector<4x8x8xf32>
    "tpu.trace_stop"() : () -> ()
    %62 = vector.broadcast %25 : vector<4x1x8xf32> to vector<4x8x8xf32>
    %63 = arith.addf %61, %62 : vector<4x8x8xf32>
    %cst_27 = arith.constant dense<0xFF800000> : vector<4x8xf32>
    %64 = vector.multi_reduction <maximumf>, %63, %cst_27 [2] : vector<4x8x8xf32> to vector<4x8xf32>
    %65 = vector.shape_cast %64 : vector<4x8xf32> to vector<4x8x1xf32>
    %66 = vector.broadcast %65 : vector<4x8x1xf32> to vector<4x8x8xf32>
    %67 = arith.subf %63, %66 : vector<4x8x8xf32>
    %68 = math.exp %67 : vector<4x8x8xf32>
    %cst_28 = arith.constant dense<0.000000e+00> : vector<4x8xf32>
    %69 = vector.multi_reduction <add>, %68, %cst_28 [2] : vector<4x8x8xf32> to vector<4x8xf32>
    %70 = vector.shape_cast %69 : vector<4x8xf32> to vector<4x8x1xf32>
    %71 = tpu.reciprocal %70 {approx = true} : vector<4x8x1xf32> -> vector<4x8x1xf32>
    %72 = vector.broadcast %71 : vector<4x8x1xf32> to vector<4x8x8xf32>
    %73 = arith.mulf %68, %72 : vector<4x8x8xf32>
    "tpu.trace_start"() <{level = 10 : i32, message = "bqk,bkd->bqd"}> : () -> ()
    %cst_29 = arith.constant dense<0.000000e+00> : vector<4x8x8xf32>
    %74 = tpu.matmul %73, %60, %cst_29 {dimension_numbers = #tpu.dot_dimension_numbers<[2], [1], [1], [2], [0, 0, 0, 1, 1, 2], [0], [0]>} : vector<4x8x8xf32>, vector<4x8x8xf32>, vector<4x8x8xf32> -> vector<4x8x8xf32>
    "tpu.trace_stop"() : () -> ()
    %75 = vector.shape_cast %74 : vector<4x8x8xf32> to vector<32x8xf32>
    %76 = vector.extract_strided_slice %35 {offsets = [8, 0], sizes = [8, 32], strides = [1, 1]} : vector<32x32xf32> to vector<8x32xf32>
    %cst_30 = arith.constant dense<0.000000e+00> : vector<32x32xf32>
    %77 = tpu.matmul %75, %76, %cst_30 {dimension_numbers = #tpu.dot_dimension_numbers<[1], [0], [0], [1], [0, 0, 1, 1], [], []>} : vector<32x8xf32>, vector<8x32xf32>, vector<32x32xf32> -> vector<32x32xf32>
    %78 = arith.addf %57, %77 : vector<32x32xf32>
    %79 = vector.extract_strided_slice %34 {offsets = [0, 0, 16], sizes = [4, 8, 8], strides = [1, 1, 1]} : vector<4x8x32xf32> to vector<4x8x8xf32>
    %80 = vector.extract_strided_slice %31 {offsets = [0, 0, 48], sizes = [4, 8, 8], strides = [1, 1, 1]} : vector<4x8x96xf32> to vector<4x8x8xf32>
    %81 = vector.extract_strided_slice %31 {offsets = [0, 0, 80], sizes = [4, 8, 8], strides = [1, 1, 1]} : vector<4x8x96xf32> to vector<4x8x8xf32>
    "tpu.trace_start"() <{level = 10 : i32, message = "bqd,bkd->bqk"}> : () -> ()
    %cst_31 = arith.constant dense<0.000000e+00> : vector<4x8x8xf32>
    %82 = tpu.matmul %79, %80, %cst_31 {dimension_numbers = #tpu.dot_dimension_numbers<[2], [2], [1], [1], [0, 0, 0, 1, 1, 1], [0], [0]>} : vector<4x8x8xf32>, vector<4x8x8xf32>, vector<4x8x8xf32> -> vector<4x8x8xf32>
    "tpu.trace_stop"() : () -> ()
    %83 = vector.broadcast %25 : vector<4x1x8xf32> to vector<4x8x8xf32>
    %84 = arith.addf %82, %83 : vector<4x8x8xf32>
    %cst_32 = arith.constant dense<0xFF800000> : vector<4x8xf32>
    %85 = vector.multi_reduction <maximumf>, %84, %cst_32 [2] : vector<4x8x8xf32> to vector<4x8xf32>
    %86 = vector.shape_cast %85 : vector<4x8xf32> to vector<4x8x1xf32>
    %87 = vector.broadcast %86 : vector<4x8x1xf32> to vector<4x8x8xf32>
    %88 = arith.subf %84, %87 : vector<4x8x8xf32>
    %89 = math.exp %88 : vector<4x8x8xf32>
    %cst_33 = arith.constant dense<0.000000e+00> : vector<4x8xf32>
    %90 = vector.multi_reduction <add>, %89, %cst_33 [2] : vector<4x8x8xf32> to vector<4x8xf32>
    %91 = vector.shape_cast %90 : vector<4x8xf32> to vector<4x8x1xf32>
    %92 = tpu.reciprocal %91 {approx = true} : vector<4x8x1xf32> -> vector<4x8x1xf32>
    %93 = vector.broadcast %92 : vector<4x8x1xf32> to vector<4x8x8xf32>
    %94 = arith.mulf %89, %93 : vector<4x8x8xf32>
    "tpu.trace_start"() <{level = 10 : i32, message = "bqk,bkd->bqd"}> : () -> ()
    %cst_34 = arith.constant dense<0.000000e+00> : vector<4x8x8xf32>
    %95 = tpu.matmul %94, %81, %cst_34 {dimension_numbers = #tpu.dot_dimension_numbers<[2], [1], [1], [2], [0, 0, 0, 1, 1, 2], [0], [0]>} : vector<4x8x8xf32>, vector<4x8x8xf32>, vector<4x8x8xf32> -> vector<4x8x8xf32>
    "tpu.trace_stop"() : () -> ()
    %96 = vector.shape_cast %95 : vector<4x8x8xf32> to vector<32x8xf32>
    %97 = vector.extract_strided_slice %35 {offsets = [16, 0], sizes = [8, 32], strides = [1, 1]} : vector<32x32xf32> to vector<8x32xf32>
    %cst_35 = arith.constant dense<0.000000e+00> : vector<32x32xf32>
    %98 = tpu.matmul %96, %97, %cst_35 {dimension_numbers = #tpu.dot_dimension_numbers<[1], [0], [0], [1], [0, 0, 1, 1], [], []>} : vector<32x8xf32>, vector<8x32xf32>, vector<32x32xf32> -> vector<32x32xf32>
    %99 = arith.addf %78, %98 : vector<32x32xf32>
    %100 = vector.extract_strided_slice %34 {offsets = [0, 0, 24], sizes = [4, 8, 8], strides = [1, 1, 1]} : vector<4x8x32xf32> to vector<4x8x8xf32>
    %101 = vector.extract_strided_slice %31 {offsets = [0, 0, 56], sizes = [4, 8, 8], strides = [1, 1, 1]} : vector<4x8x96xf32> to vector<4x8x8xf32>
    %102 = vector.extract_strided_slice %31 {offsets = [0, 0, 88], sizes = [4, 8, 8], strides = [1, 1, 1]} : vector<4x8x96xf32> to vector<4x8x8xf32>
    "tpu.trace_start"() <{level = 10 : i32, message = "bqd,bkd->bqk"}> : () -> ()
    %cst_36 = arith.constant dense<0.000000e+00> : vector<4x8x8xf32>
    %103 = tpu.matmul %100, %101, %cst_36 {dimension_numbers = #tpu.dot_dimension_numbers<[2], [2], [1], [1], [0, 0, 0, 1, 1, 1], [0], [0]>} : vector<4x8x8xf32>, vector<4x8x8xf32>, vector<4x8x8xf32> -> vector<4x8x8xf32>
    "tpu.trace_stop"() : () -> ()
    %104 = vector.broadcast %25 : vector<4x1x8xf32> to vector<4x8x8xf32>
    %105 = arith.addf %103, %104 : vector<4x8x8xf32>
    %cst_37 = arith.constant dense<0xFF800000> : vector<4x8xf32>
    %106 = vector.multi_reduction <maximumf>, %105, %cst_37 [2] : vector<4x8x8xf32> to vector<4x8xf32>
    %107 = vector.shape_cast %106 : vector<4x8xf32> to vector<4x8x1xf32>
    %108 = vector.broadcast %107 : vector<4x8x1xf32> to vector<4x8x8xf32>
    %109 = arith.subf %105, %108 : vector<4x8x8xf32>
    %110 = math.exp %109 : vector<4x8x8xf32>
    %cst_38 = arith.constant dense<0.000000e+00> : vector<4x8xf32>
    %111 = vector.multi_reduction <add>, %110, %cst_38 [2] : vector<4x8x8xf32> to vector<4x8xf32>
    %112 = vector.shape_cast %111 : vector<4x8xf32> to vector<4x8x1xf32>
    %113 = tpu.reciprocal %112 {approx = true} : vector<4x8x1xf32> -> vector<4x8x1xf32>
    %114 = vector.broadcast %113 : vector<4x8x1xf32> to vector<4x8x8xf32>
    %115 = arith.mulf %110, %114 : vector<4x8x8xf32>
    "tpu.trace_start"() <{level = 10 : i32, message = "bqk,bkd->bqd"}> : () -> ()
    %cst_39 = arith.constant dense<0.000000e+00> : vector<4x8x8xf32>
    %116 = tpu.matmul %115, %102, %cst_39 {dimension_numbers = #tpu.dot_dimension_numbers<[2], [1], [1], [2], [0, 0, 0, 1, 1, 2], [0], [0]>} : vector<4x8x8xf32>, vector<4x8x8xf32>, vector<4x8x8xf32> -> vector<4x8x8xf32>
    "tpu.trace_stop"() : () -> ()
    %117 = vector.shape_cast %116 : vector<4x8x8xf32> to vector<32x8xf32>
    %118 = vector.extract_strided_slice %35 {offsets = [24, 0], sizes = [8, 32], strides = [1, 1]} : vector<32x32xf32> to vector<8x32xf32>
    %cst_40 = arith.constant dense<0.000000e+00> : vector<32x32xf32>
    %119 = tpu.matmul %117, %118, %cst_40 {dimension_numbers = #tpu.dot_dimension_numbers<[1], [0], [0], [1], [0, 0, 1, 1], [], []>} : vector<32x8xf32>, vector<8x32xf32>, vector<32x32xf32> -> vector<32x32xf32>
    %120 = arith.addf %99, %119 : vector<32x32xf32>
    %c0_41 = arith.constant 0 : index
    %c0_42 = arith.constant 0 : index
    %121 = vector.load %arg9[%c0_41, %c0_42] : memref<1x32xf32, #tpu.memory_space<vmem>>, vector<1x32xf32>
    %122 = vector.broadcast %121 : vector<1x32xf32> to vector<32x32xf32>
    %123 = arith.addf %120, %122 : vector<32x32xf32>
    %124 = arith.addf %24, %123 : vector<32x32xf32>
    %c0_43 = arith.constant 0 : index
    %c0_44 = arith.constant 0 : index
    %125 = vector.load %arg10[%c0_43, %c0_44] : memref<1x32xf32, #tpu.memory_space<vmem>>, vector<1x32xf32>
    %c0_45 = arith.constant 0 : index
    %c0_46 = arith.constant 0 : index
    %126 = vector.load %arg11[%c0_45, %c0_46] : memref<1x32xf32, #tpu.memory_space<vmem>>, vector<1x32xf32>
    %cst_47 = arith.constant dense<0.000000e+00> : vector<32xf32>
    %127 = vector.multi_reduction <add>, %124, %cst_47 [1] : vector<32x32xf32> to vector<32xf32>
    %128 = vector.shape_cast %127 : vector<32xf32> to vector<32x1xf32>
    %cst_48 = arith.constant 3.200000e+01 : f32
    %129 = vector.broadcast %cst_48 : f32 to vector<32x1xf32>
    %130 = arith.divf %128, %129 : vector<32x1xf32>
    %131 = vector.broadcast %130 : vector<32x1xf32> to vector<32x32xf32>
    %132 = arith.subf %124, %131 : vector<32x32xf32>
    %133 = arith.mulf %132, %132 : vector<32x32xf32>
    %cst_49 = arith.constant dense<0.000000e+00> : vector<32xf32>
    %134 = vector.multi_reduction <add>, %133, %cst_49 [1] : vector<32x32xf32> to vector<32xf32>
    %135 = vector.shape_cast %134 : vector<32xf32> to vector<32x1xf32>
    %cst_50 = arith.constant 3.200000e+01 : f32
    %136 = vector.broadcast %cst_50 : f32 to vector<32x1xf32>
    %137 = arith.divf %135, %136 : vector<32x1xf32>
    %138 = vector.broadcast %130 : vector<32x1xf32> to vector<32x32xf32>
    %139 = arith.subf %124, %138 : vector<32x32xf32>
    %cst_51 = arith.constant 9.99999996E-13 : f32
    %140 = vector.broadcast %cst_51 : f32 to vector<32x1xf32>
    %141 = arith.addf %137, %140 : vector<32x1xf32>
    %142 = math.rsqrt %141 : vector<32x1xf32>
    %143 = vector.broadcast %142 : vector<32x1xf32> to vector<32x32xf32>
    %144 = arith.mulf %139, %143 : vector<32x32xf32>
    %145 = vector.broadcast %125 : vector<1x32xf32> to vector<32x32xf32>
    %146 = arith.mulf %144, %145 : vector<32x32xf32>
    %147 = vector.broadcast %126 : vector<1x32xf32> to vector<32x32xf32>
    %148 = arith.addf %146, %147 : vector<32x32xf32>
    %c0_52 = arith.constant 0 : index
    %c0_53 = arith.constant 0 : index
    %149 = vector.load %arg12[%c0_52, %c0_53] : memref<32x64xf32, #tpu.memory_space<vmem>>, vector<32x64xf32>
    %cst_54 = arith.constant dense<0.000000e+00> : vector<32x64xf32>
    %150 = tpu.matmul %148, %149, %cst_54 {dimension_numbers = #tpu.dot_dimension_numbers<[1], [0], [0], [1], [0, 0, 1, 1], [], []>} : vector<32x32xf32>, vector<32x64xf32>, vector<32x64xf32> -> vector<32x64xf32>
    %c0_55 = arith.constant 0 : index
    %c0_56 = arith.constant 0 : index
    %151 = vector.load %arg13[%c0_55, %c0_56] : memref<1x64xf32, #tpu.memory_space<vmem>>, vector<1x64xf32>
    %152 = vector.broadcast %151 : vector<1x64xf32> to vector<32x64xf32>
    %153 = arith.addf %150, %152 : vector<32x64xf32>
    %cst_57 = arith.constant 5.000000e-01 : f32
    %154 = vector.broadcast %cst_57 : f32 to vector<32x64xf32>
    %155 = arith.mulf %154, %153 : vector<32x64xf32>
    %cst_58 = arith.constant 0.707106769 : f32
    %156 = vector.broadcast %cst_58 : f32 to vector<32x64xf32>
    %157 = arith.mulf %153, %156 : vector<32x64xf32>
    %cst_59 = arith.constant 0.000000e+00 : f32
    %158 = vector.broadcast %cst_59 : f32 to vector<32x64xf32>
    %159 = arith.cmpf oge, %157, %158 : vector<32x64xf32>
    %cst_60 = arith.constant 1.000000e+00 : f32
    %cst_61 = arith.constant -1.000000e+00 : f32
    %160 = vector.broadcast %cst_60 : f32 to vector<32x64xf32>
    %161 = vector.broadcast %cst_61 : f32 to vector<32x64xf32>
    %162 = arith.select %159, %160, %161 : vector<32x64xi1>, vector<32x64xf32>
    %163 = math.absf %157 : vector<32x64xf32>
    %cst_62 = arith.constant 0.327591091 : f32
    %164 = vector.broadcast %cst_62 : f32 to vector<32x64xf32>
    %165 = arith.mulf %164, %163 : vector<32x64xf32>
    %cst_63 = arith.constant 1.000000e+00 : f32
    %166 = vector.broadcast %cst_63 : f32 to vector<32x64xf32>
    %167 = arith.addf %166, %165 : vector<32x64xf32>
    %cst_64 = arith.constant 1.000000e+00 : f32
    %168 = vector.broadcast %cst_64 : f32 to vector<32x64xf32>
    %169 = arith.divf %168, %167 : vector<32x64xf32>
    %cst_65 = arith.constant 1.06140542 : f32
    %170 = vector.broadcast %cst_65 : f32 to vector<32x64xf32>
    %171 = arith.mulf %170, %169 : vector<32x64xf32>
    %cst_66 = arith.constant -1.45315206 : f32
    %172 = vector.broadcast %cst_66 : f32 to vector<32x64xf32>
    %173 = arith.addf %171, %172 : vector<32x64xf32>
    %174 = arith.mulf %173, %169 : vector<32x64xf32>
    %cst_67 = arith.constant 1.42141378 : f32
    %175 = vector.broadcast %cst_67 : f32 to vector<32x64xf32>
    %176 = arith.addf %174, %175 : vector<32x64xf32>
    %177 = arith.mulf %176, %169 : vector<32x64xf32>
    %cst_68 = arith.constant -0.284496725 : f32
    %178 = vector.broadcast %cst_68 : f32 to vector<32x64xf32>
    %179 = arith.addf %177, %178 : vector<32x64xf32>
    %180 = arith.mulf %179, %169 : vector<32x64xf32>
    %cst_69 = arith.constant 0.254829586 : f32
    %181 = vector.broadcast %cst_69 : f32 to vector<32x64xf32>
    %182 = arith.addf %180, %181 : vector<32x64xf32>
    %183 = arith.mulf %182, %169 : vector<32x64xf32>
    %cst_70 = arith.constant 0.000000e+00 : f32
    %184 = vector.broadcast %cst_70 : f32 to vector<32x64xf32>
    %185 = arith.subf %184, %163 : vector<32x64xf32>
    %186 = arith.mulf %185, %163 : vector<32x64xf32>
    %187 = math.exp %186 : vector<32x64xf32>
    %188 = arith.mulf %183, %187 : vector<32x64xf32>
    %cst_71 = arith.constant 1.000000e+00 : f32
    %189 = vector.broadcast %cst_71 : f32 to vector<32x64xf32>
    %190 = arith.subf %189, %188 : vector<32x64xf32>
    %191 = arith.mulf %162, %190 : vector<32x64xf32>
    %cst_72 = arith.constant 1.000000e+00 : f32
    %192 = vector.broadcast %cst_72 : f32 to vector<32x64xf32>
    %193 = arith.addf %192, %191 : vector<32x64xf32>
    %194 = arith.mulf %155, %193 : vector<32x64xf32>
    %c0_73 = arith.constant 0 : index
    %c0_74 = arith.constant 0 : index
    %195 = vector.load %arg14[%c0_73, %c0_74] : memref<64x32xf32, #tpu.memory_space<vmem>>, vector<64x32xf32>
    %cst_75 = arith.constant dense<0.000000e+00> : vector<32x32xf32>
    %196 = tpu.matmul %194, %195, %cst_75 {dimension_numbers = #tpu.dot_dimension_numbers<[1], [0], [0], [1], [0, 0, 1, 1], [], []>} : vector<32x64xf32>, vector<64x32xf32>, vector<32x32xf32> -> vector<32x32xf32>
    %c0_76 = arith.constant 0 : index
    %c0_77 = arith.constant 0 : index
    %197 = vector.load %arg15[%c0_76, %c0_77] : memref<1x32xf32, #tpu.memory_space<vmem>>, vector<1x32xf32>
    %198 = vector.broadcast %197 : vector<1x32xf32> to vector<32x32xf32>
    %199 = arith.addf %196, %198 : vector<32x32xf32>
    %200 = arith.addf %148, %199 : vector<32x32xf32>
    %c0_78 = arith.constant 0 : index
    %c0_79 = arith.constant 0 : index
    %201 = vector.load %arg16[%c0_78, %c0_79] : memref<1x32xf32, #tpu.memory_space<vmem>>, vector<1x32xf32>
    %c0_80 = arith.constant 0 : index
    %c0_81 = arith.constant 0 : index
    %202 = vector.load %arg17[%c0_80, %c0_81] : memref<1x32xf32, #tpu.memory_space<vmem>>, vector<1x32xf32>
    %cst_82 = arith.constant dense<0.000000e+00> : vector<32xf32>
    %203 = vector.multi_reduction <add>, %200, %cst_82 [1] : vector<32x32xf32> to vector<32xf32>
    %204 = vector.shape_cast %203 : vector<32xf32> to vector<32x1xf32>
    %cst_83 = arith.constant 3.200000e+01 : f32
    %205 = vector.broadcast %cst_83 : f32 to vector<32x1xf32>
    %206 = arith.divf %204, %205 : vector<32x1xf32>
    %207 = vector.broadcast %206 : vector<32x1xf32> to vector<32x32xf32>
    %208 = arith.subf %200, %207 : vector<32x32xf32>
    %209 = arith.mulf %208, %208 : vector<32x32xf32>
    %cst_84 = arith.constant dense<0.000000e+00> : vector<32xf32>
    %210 = vector.multi_reduction <add>, %209, %cst_84 [1] : vector<32x32xf32> to vector<32xf32>
    %211 = vector.shape_cast %210 : vector<32xf32> to vector<32x1xf32>
    %cst_85 = arith.constant 3.200000e+01 : f32
    %212 = vector.broadcast %cst_85 : f32 to vector<32x1xf32>
    %213 = arith.divf %211, %212 : vector<32x1xf32>
    %214 = vector.broadcast %206 : vector<32x1xf32> to vector<32x32xf32>
    %215 = arith.subf %200, %214 : vector<32x32xf32>
    %cst_86 = arith.constant 9.99999996E-13 : f32
    %216 = vector.broadcast %cst_86 : f32 to vector<32x1xf32>
    %217 = arith.addf %213, %216 : vector<32x1xf32>
    %218 = math.rsqrt %217 : vector<32x1xf32>
    %219 = vector.broadcast %218 : vector<32x1xf32> to vector<32x32xf32>
    %220 = arith.mulf %215, %219 : vector<32x32xf32>
    %221 = vector.broadcast %201 : vector<1x32xf32> to vector<32x32xf32>
    %222 = arith.mulf %220, %221 : vector<32x32xf32>
    %223 = vector.broadcast %202 : vector<1x32xf32> to vector<32x32xf32>
    %224 = arith.addf %222, %223 : vector<32x32xf32>
    %c0_87 = arith.constant 0 : index
    %c0_88 = arith.constant 0 : index
    %225 = vector.load %arg18[%c0_87, %c0_88] : memref<32x96xf32, #tpu.memory_space<vmem>>, vector<32x96xf32>
    %cst_89 = arith.constant dense<0.000000e+00> : vector<32x96xf32>
    %226 = tpu.matmul %224, %225, %cst_89 {dimension_numbers = #tpu.dot_dimension_numbers<[1], [0], [0], [1], [0, 0, 1, 1], [], []>} : vector<32x32xf32>, vector<32x96xf32>, vector<32x96xf32> -> vector<32x96xf32>
    %c0_90 = arith.constant 0 : index
    %c0_91 = arith.constant 0 : index
    %227 = vector.load %arg19[%c0_90, %c0_91] : memref<1x96xf32, #tpu.memory_space<vmem>>, vector<1x96xf32>
    %228 = vector.broadcast %227 : vector<1x96xf32> to vector<32x96xf32>
    %229 = arith.addf %226, %228 : vector<32x96xf32>
    %230 = vector.shape_cast %229 : vector<32x96xf32> to vector<4x8x96xf32>
    %231 = vector.extract_strided_slice %230 {offsets = [0, 0, 0], sizes = [4, 8, 32], strides = [1, 1, 1]} : vector<4x8x96xf32> to vector<4x8x32xf32>
    %cst_92 = arith.constant 0.353553385 : f32
    %232 = vector.broadcast %cst_92 : f32 to vector<4x8x32xf32>
    %233 = arith.mulf %231, %232 : vector<4x8x32xf32>
    %c0_93 = arith.constant 0 : index
    %c0_94 = arith.constant 0 : index
    %234 = vector.load %arg20[%c0_93, %c0_94] : memref<32x32xf32, #tpu.memory_space<vmem>>, vector<32x32xf32>
    %cst_95 = arith.constant 0.000000e+00 : f32
    %235 = vector.broadcast %cst_95 : f32 to vector<32x32xf32>
    %236 = vector.extract_strided_slice %233 {offsets = [0, 0, 0], sizes = [4, 8, 8], strides = [1, 1, 1]} : vector<4x8x32xf32> to vector<4x8x8xf32>
    %237 = vector.extract_strided_slice %230 {offsets = [0, 0, 32], sizes = [4, 8, 8], strides = [1, 1, 1]} : vector<4x8x96xf32> to vector<4x8x8xf32>
    %238 = vector.extract_strided_slice %230 {offsets = [0, 0, 64], sizes = [4, 8, 8], strides = [1, 1, 1]} : vector<4x8x96xf32> to vector<4x8x8xf32>
    "tpu.trace_start"() <{level = 10 : i32, message = "bqd,bkd->bqk"}> : () -> ()
    %cst_96 = arith.constant dense<0.000000e+00> : vector<4x8x8xf32>
    %239 = tpu.matmul %236, %237, %cst_96 {dimension_numbers = #tpu.dot_dimension_numbers<[2], [2], [1], [1], [0, 0, 0, 1, 1, 1], [0], [0]>} : vector<4x8x8xf32>, vector<4x8x8xf32>, vector<4x8x8xf32> -> vector<4x8x8xf32>
    "tpu.trace_stop"() : () -> ()
    %240 = vector.broadcast %25 : vector<4x1x8xf32> to vector<4x8x8xf32>
    %241 = arith.addf %239, %240 : vector<4x8x8xf32>
    %cst_97 = arith.constant dense<0xFF800000> : vector<4x8xf32>
    %242 = vector.multi_reduction <maximumf>, %241, %cst_97 [2] : vector<4x8x8xf32> to vector<4x8xf32>
    %243 = vector.shape_cast %242 : vector<4x8xf32> to vector<4x8x1xf32>
    %244 = vector.broadcast %243 : vector<4x8x1xf32> to vector<4x8x8xf32>
    %245 = arith.subf %241, %244 : vector<4x8x8xf32>
    %246 = math.exp %245 : vector<4x8x8xf32>
    %cst_98 = arith.constant dense<0.000000e+00> : vector<4x8xf32>
    %247 = vector.multi_reduction <add>, %246, %cst_98 [2] : vector<4x8x8xf32> to vector<4x8xf32>
    %248 = vector.shape_cast %247 : vector<4x8xf32> to vector<4x8x1xf32>
    %249 = tpu.reciprocal %248 {approx = true} : vector<4x8x1xf32> -> vector<4x8x1xf32>
    %250 = vector.broadcast %249 : vector<4x8x1xf32> to vector<4x8x8xf32>
    %251 = arith.mulf %246, %250 : vector<4x8x8xf32>
    "tpu.trace_start"() <{level = 10 : i32, message = "bqk,bkd->bqd"}> : () -> ()
    %cst_99 = arith.constant dense<0.000000e+00> : vector<4x8x8xf32>
    %252 = tpu.matmul %251, %238, %cst_99 {dimension_numbers = #tpu.dot_dimension_numbers<[2], [1], [1], [2], [0, 0, 0, 1, 1, 2], [0], [0]>} : vector<4x8x8xf32>, vector<4x8x8xf32>, vector<4x8x8xf32> -> vector<4x8x8xf32>
    "tpu.trace_stop"() : () -> ()
    %253 = vector.shape_cast %252 : vector<4x8x8xf32> to vector<32x8xf32>
    %254 = vector.extract_strided_slice %234 {offsets = [0, 0], sizes = [8, 32], strides = [1, 1]} : vector<32x32xf32> to vector<8x32xf32>
    %cst_100 = arith.constant dense<0.000000e+00> : vector<32x32xf32>
    %255 = tpu.matmul %253, %254, %cst_100 {dimension_numbers = #tpu.dot_dimension_numbers<[1], [0], [0], [1], [0, 0, 1, 1], [], []>} : vector<32x8xf32>, vector<8x32xf32>, vector<32x32xf32> -> vector<32x32xf32>
    %256 = arith.addf %235, %255 : vector<32x32xf32>
    %257 = vector.extract_strided_slice %233 {offsets = [0, 0, 8], sizes = [4, 8, 8], strides = [1, 1, 1]} : vector<4x8x32xf32> to vector<4x8x8xf32>
    %258 = vector.extract_strided_slice %230 {offsets = [0, 0, 40], sizes = [4, 8, 8], strides = [1, 1, 1]} : vector<4x8x96xf32> to vector<4x8x8xf32>
    %259 = vector.extract_strided_slice %230 {offsets = [0, 0, 72], sizes = [4, 8, 8], strides = [1, 1, 1]} : vector<4x8x96xf32> to vector<4x8x8xf32>
    "tpu.trace_start"() <{level = 10 : i32, message = "bqd,bkd->bqk"}> : () -> ()
    %cst_101 = arith.constant dense<0.000000e+00> : vector<4x8x8xf32>
    %260 = tpu.matmul %257, %258, %cst_101 {dimension_numbers = #tpu.dot_dimension_numbers<[2], [2], [1], [1], [0, 0, 0, 1, 1, 1], [0], [0]>} : vector<4x8x8xf32>, vector<4x8x8xf32>, vector<4x8x8xf32> -> vector<4x8x8xf32>
    "tpu.trace_stop"() : () -> ()
    %261 = vector.broadcast %25 : vector<4x1x8xf32> to vector<4x8x8xf32>
    %262 = arith.addf %260, %261 : vector<4x8x8xf32>
    %cst_102 = arith.constant dense<0xFF800000> : vector<4x8xf32>
    %263 = vector.multi_reduction <maximumf>, %262, %cst_102 [2] : vector<4x8x8xf32> to vector<4x8xf32>
    %264 = vector.shape_cast %263 : vector<4x8xf32> to vector<4x8x1xf32>
    %265 = vector.broadcast %264 : vector<4x8x1xf32> to vector<4x8x8xf32>
    %266 = arith.subf %262, %265 : vector<4x8x8xf32>
    %267 = math.exp %266 : vector<4x8x8xf32>
    %cst_103 = arith.constant dense<0.000000e+00> : vector<4x8xf32>
    %268 = vector.multi_reduction <add>, %267, %cst_103 [2] : vector<4x8x8xf32> to vector<4x8xf32>
    %269 = vector.shape_cast %268 : vector<4x8xf32> to vector<4x8x1xf32>
    %270 = tpu.reciprocal %269 {approx = true} : vector<4x8x1xf32> -> vector<4x8x1xf32>
    %271 = vector.broadcast %270 : vector<4x8x1xf32> to vector<4x8x8xf32>
    %272 = arith.mulf %267, %271 : vector<4x8x8xf32>
    "tpu.trace_start"() <{level = 10 : i32, message = "bqk,bkd->bqd"}> : () -> ()
    %cst_104 = arith.constant dense<0.000000e+00> : vector<4x8x8xf32>
    %273 = tpu.matmul %272, %259, %cst_104 {dimension_numbers = #tpu.dot_dimension_numbers<[2], [1], [1], [2], [0, 0, 0, 1, 1, 2], [0], [0]>} : vector<4x8x8xf32>, vector<4x8x8xf32>, vector<4x8x8xf32> -> vector<4x8x8xf32>
    "tpu.trace_stop"() : () -> ()
    %274 = vector.shape_cast %273 : vector<4x8x8xf32> to vector<32x8xf32>
    %275 = vector.extract_strided_slice %234 {offsets = [8, 0], sizes = [8, 32], strides = [1, 1]} : vector<32x32xf32> to vector<8x32xf32>
    %cst_105 = arith.constant dense<0.000000e+00> : vector<32x32xf32>
    %276 = tpu.matmul %274, %275, %cst_105 {dimension_numbers = #tpu.dot_dimension_numbers<[1], [0], [0], [1], [0, 0, 1, 1], [], []>} : vector<32x8xf32>, vector<8x32xf32>, vector<32x32xf32> -> vector<32x32xf32>
    %277 = arith.addf %256, %276 : vector<32x32xf32>
    %278 = vector.extract_strided_slice %233 {offsets = [0, 0, 16], sizes = [4, 8, 8], strides = [1, 1, 1]} : vector<4x8x32xf32> to vector<4x8x8xf32>
    %279 = vector.extract_strided_slice %230 {offsets = [0, 0, 48], sizes = [4, 8, 8], strides = [1, 1, 1]} : vector<4x8x96xf32> to vector<4x8x8xf32>
    %280 = vector.extract_strided_slice %230 {offsets = [0, 0, 80], sizes = [4, 8, 8], strides = [1, 1, 1]} : vector<4x8x96xf32> to vector<4x8x8xf32>
    "tpu.trace_start"() <{level = 10 : i32, message = "bqd,bkd->bqk"}> : () -> ()
    %cst_106 = arith.constant dense<0.000000e+00> : vector<4x8x8xf32>
    %281 = tpu.matmul %278, %279, %cst_106 {dimension_numbers = #tpu.dot_dimension_numbers<[2], [2], [1], [1], [0, 0, 0, 1, 1, 1], [0], [0]>} : vector<4x8x8xf32>, vector<4x8x8xf32>, vector<4x8x8xf32> -> vector<4x8x8xf32>
    "tpu.trace_stop"() : () -> ()
    %282 = vector.broadcast %25 : vector<4x1x8xf32> to vector<4x8x8xf32>
    %283 = arith.addf %281, %282 : vector<4x8x8xf32>
    %cst_107 = arith.constant dense<0xFF800000> : vector<4x8xf32>
    %284 = vector.multi_reduction <maximumf>, %283, %cst_107 [2] : vector<4x8x8xf32> to vector<4x8xf32>
    %285 = vector.shape_cast %284 : vector<4x8xf32> to vector<4x8x1xf32>
    %286 = vector.broadcast %285 : vector<4x8x1xf32> to vector<4x8x8xf32>
    %287 = arith.subf %283, %286 : vector<4x8x8xf32>
    %288 = math.exp %287 : vector<4x8x8xf32>
    %cst_108 = arith.constant dense<0.000000e+00> : vector<4x8xf32>
    %289 = vector.multi_reduction <add>, %288, %cst_108 [2] : vector<4x8x8xf32> to vector<4x8xf32>
    %290 = vector.shape_cast %289 : vector<4x8xf32> to vector<4x8x1xf32>
    %291 = tpu.reciprocal %290 {approx = true} : vector<4x8x1xf32> -> vector<4x8x1xf32>
    %292 = vector.broadcast %291 : vector<4x8x1xf32> to vector<4x8x8xf32>
    %293 = arith.mulf %288, %292 : vector<4x8x8xf32>
    "tpu.trace_start"() <{level = 10 : i32, message = "bqk,bkd->bqd"}> : () -> ()
    %cst_109 = arith.constant dense<0.000000e+00> : vector<4x8x8xf32>
    %294 = tpu.matmul %293, %280, %cst_109 {dimension_numbers = #tpu.dot_dimension_numbers<[2], [1], [1], [2], [0, 0, 0, 1, 1, 2], [0], [0]>} : vector<4x8x8xf32>, vector<4x8x8xf32>, vector<4x8x8xf32> -> vector<4x8x8xf32>
    "tpu.trace_stop"() : () -> ()
    %295 = vector.shape_cast %294 : vector<4x8x8xf32> to vector<32x8xf32>
    %296 = vector.extract_strided_slice %234 {offsets = [16, 0], sizes = [8, 32], strides = [1, 1]} : vector<32x32xf32> to vector<8x32xf32>
    %cst_110 = arith.constant dense<0.000000e+00> : vector<32x32xf32>
    %297 = tpu.matmul %295, %296, %cst_110 {dimension_numbers = #tpu.dot_dimension_numbers<[1], [0], [0], [1], [0, 0, 1, 1], [], []>} : vector<32x8xf32>, vector<8x32xf32>, vector<32x32xf32> -> vector<32x32xf32>
    %298 = arith.addf %277, %297 : vector<32x32xf32>
    %299 = vector.extract_strided_slice %233 {offsets = [0, 0, 24], sizes = [4, 8, 8], strides = [1, 1, 1]} : vector<4x8x32xf32> to vector<4x8x8xf32>
    %300 = vector.extract_strided_slice %230 {offsets = [0, 0, 56], sizes = [4, 8, 8], strides = [1, 1, 1]} : vector<4x8x96xf32> to vector<4x8x8xf32>
    %301 = vector.extract_strided_slice %230 {offsets = [0, 0, 88], sizes = [4, 8, 8], strides = [1, 1, 1]} : vector<4x8x96xf32> to vector<4x8x8xf32>
    "tpu.trace_start"() <{level = 10 : i32, message = "bqd,bkd->bqk"}> : () -> ()
    %cst_111 = arith.constant dense<0.000000e+00> : vector<4x8x8xf32>
    %302 = tpu.matmul %299, %300, %cst_111 {dimension_numbers = #tpu.dot_dimension_numbers<[2], [2], [1], [1], [0, 0, 0, 1, 1, 1], [0], [0]>} : vector<4x8x8xf32>, vector<4x8x8xf32>, vector<4x8x8xf32> -> vector<4x8x8xf32>
    "tpu.trace_stop"() : () -> ()
    %303 = vector.broadcast %25 : vector<4x1x8xf32> to vector<4x8x8xf32>
    %304 = arith.addf %302, %303 : vector<4x8x8xf32>
    %cst_112 = arith.constant dense<0xFF800000> : vector<4x8xf32>
    %305 = vector.multi_reduction <maximumf>, %304, %cst_112 [2] : vector<4x8x8xf32> to vector<4x8xf32>
    %306 = vector.shape_cast %305 : vector<4x8xf32> to vector<4x8x1xf32>
    %307 = vector.broadcast %306 : vector<4x8x1xf32> to vector<4x8x8xf32>
    %308 = arith.subf %304, %307 : vector<4x8x8xf32>
    %309 = math.exp %308 : vector<4x8x8xf32>
    %cst_113 = arith.constant dense<0.000000e+00> : vector<4x8xf32>
    %310 = vector.multi_reduction <add>, %309, %cst_113 [2] : vector<4x8x8xf32> to vector<4x8xf32>
    %311 = vector.shape_cast %310 : vector<4x8xf32> to vector<4x8x1xf32>
    %312 = tpu.reciprocal %311 {approx = true} : vector<4x8x1xf32> -> vector<4x8x1xf32>
    %313 = vector.broadcast %312 : vector<4x8x1xf32> to vector<4x8x8xf32>
    %314 = arith.mulf %309, %313 : vector<4x8x8xf32>
    "tpu.trace_start"() <{level = 10 : i32, message = "bqk,bkd->bqd"}> : () -> ()
    %cst_114 = arith.constant dense<0.000000e+00> : vector<4x8x8xf32>
    %315 = tpu.matmul %314, %301, %cst_114 {dimension_numbers = #tpu.dot_dimension_numbers<[2], [1], [1], [2], [0, 0, 0, 1, 1, 2], [0], [0]>} : vector<4x8x8xf32>, vector<4x8x8xf32>, vector<4x8x8xf32> -> vector<4x8x8xf32>
    "tpu.trace_stop"() : () -> ()
    %316 = vector.shape_cast %315 : vector<4x8x8xf32> to vector<32x8xf32>
    %317 = vector.extract_strided_slice %234 {offsets = [24, 0], sizes = [8, 32], strides = [1, 1]} : vector<32x32xf32> to vector<8x32xf32>
    %cst_115 = arith.constant dense<0.000000e+00> : vector<32x32xf32>
    %318 = tpu.matmul %316, %317, %cst_115 {dimension_numbers = #tpu.dot_dimension_numbers<[1], [0], [0], [1], [0, 0, 1, 1], [], []>} : vector<32x8xf32>, vector<8x32xf32>, vector<32x32xf32> -> vector<32x32xf32>
    %319 = arith.addf %298, %318 : vector<32x32xf32>
    %c0_116 = arith.constant 0 : index
    %c0_117 = arith.constant 0 : index
    %320 = vector.load %arg21[%c0_116, %c0_117] : memref<1x32xf32, #tpu.memory_space<vmem>>, vector<1x32xf32>
    %321 = vector.broadcast %320 : vector<1x32xf32> to vector<32x32xf32>
    %322 = arith.addf %319, %321 : vector<32x32xf32>
    %323 = arith.addf %224, %322 : vector<32x32xf32>
    %c0_118 = arith.constant 0 : index
    %c0_119 = arith.constant 0 : index
    %324 = vector.load %arg22[%c0_118, %c0_119] : memref<1x32xf32, #tpu.memory_space<vmem>>, vector<1x32xf32>
    %c0_120 = arith.constant 0 : index
    %c0_121 = arith.constant 0 : index
    %325 = vector.load %arg23[%c0_120, %c0_121] : memref<1x32xf32, #tpu.memory_space<vmem>>, vector<1x32xf32>
    %cst_122 = arith.constant dense<0.000000e+00> : vector<32xf32>
    %326 = vector.multi_reduction <add>, %323, %cst_122 [1] : vector<32x32xf32> to vector<32xf32>
    %327 = vector.shape_cast %326 : vector<32xf32> to vector<32x1xf32>
    %cst_123 = arith.constant 3.200000e+01 : f32
    %328 = vector.broadcast %cst_123 : f32 to vector<32x1xf32>
    %329 = arith.divf %327, %328 : vector<32x1xf32>
    %330 = vector.broadcast %329 : vector<32x1xf32> to vector<32x32xf32>
    %331 = arith.subf %323, %330 : vector<32x32xf32>
    %332 = arith.mulf %331, %331 : vector<32x32xf32>
    %cst_124 = arith.constant dense<0.000000e+00> : vector<32xf32>
    %333 = vector.multi_reduction <add>, %332, %cst_124 [1] : vector<32x32xf32> to vector<32xf32>
    %334 = vector.shape_cast %333 : vector<32xf32> to vector<32x1xf32>
    %cst_125 = arith.constant 3.200000e+01 : f32
    %335 = vector.broadcast %cst_125 : f32 to vector<32x1xf32>
    %336 = arith.divf %334, %335 : vector<32x1xf32>
    %337 = vector.broadcast %329 : vector<32x1xf32> to vector<32x32xf32>
    %338 = arith.subf %323, %337 : vector<32x32xf32>
    %cst_126 = arith.constant 9.99999996E-13 : f32
    %339 = vector.broadcast %cst_126 : f32 to vector<32x1xf32>
    %340 = arith.addf %336, %339 : vector<32x1xf32>
    %341 = math.rsqrt %340 : vector<32x1xf32>
    %342 = vector.broadcast %341 : vector<32x1xf32> to vector<32x32xf32>
    %343 = arith.mulf %338, %342 : vector<32x32xf32>
    %344 = vector.broadcast %324 : vector<1x32xf32> to vector<32x32xf32>
    %345 = arith.mulf %343, %344 : vector<32x32xf32>
    %346 = vector.broadcast %325 : vector<1x32xf32> to vector<32x32xf32>
    %347 = arith.addf %345, %346 : vector<32x32xf32>
    %c0_127 = arith.constant 0 : index
    %c0_128 = arith.constant 0 : index
    %348 = vector.load %arg24[%c0_127, %c0_128] : memref<32x64xf32, #tpu.memory_space<vmem>>, vector<32x64xf32>
    %cst_129 = arith.constant dense<0.000000e+00> : vector<32x64xf32>
    %349 = tpu.matmul %347, %348, %cst_129 {dimension_numbers = #tpu.dot_dimension_numbers<[1], [0], [0], [1], [0, 0, 1, 1], [], []>} : vector<32x32xf32>, vector<32x64xf32>, vector<32x64xf32> -> vector<32x64xf32>
    %c0_130 = arith.constant 0 : index
    %c0_131 = arith.constant 0 : index
    %350 = vector.load %arg25[%c0_130, %c0_131] : memref<1x64xf32, #tpu.memory_space<vmem>>, vector<1x64xf32>
    %351 = vector.broadcast %350 : vector<1x64xf32> to vector<32x64xf32>
    %352 = arith.addf %349, %351 : vector<32x64xf32>
    %cst_132 = arith.constant 5.000000e-01 : f32
    %353 = vector.broadcast %cst_132 : f32 to vector<32x64xf32>
    %354 = arith.mulf %353, %352 : vector<32x64xf32>
    %cst_133 = arith.constant 0.707106769 : f32
    %355 = vector.broadcast %cst_133 : f32 to vector<32x64xf32>
    %356 = arith.mulf %352, %355 : vector<32x64xf32>
    %cst_134 = arith.constant 0.000000e+00 : f32
    %357 = vector.broadcast %cst_134 : f32 to vector<32x64xf32>
    %358 = arith.cmpf oge, %356, %357 : vector<32x64xf32>
    %cst_135 = arith.constant 1.000000e+00 : f32
    %cst_136 = arith.constant -1.000000e+00 : f32
    %359 = vector.broadcast %cst_135 : f32 to vector<32x64xf32>
    %360 = vector.broadcast %cst_136 : f32 to vector<32x64xf32>
    %361 = arith.select %358, %359, %360 : vector<32x64xi1>, vector<32x64xf32>
    %362 = math.absf %356 : vector<32x64xf32>
    %cst_137 = arith.constant 0.327591091 : f32
    %363 = vector.broadcast %cst_137 : f32 to vector<32x64xf32>
    %364 = arith.mulf %363, %362 : vector<32x64xf32>
    %cst_138 = arith.constant 1.000000e+00 : f32
    %365 = vector.broadcast %cst_138 : f32 to vector<32x64xf32>
    %366 = arith.addf %365, %364 : vector<32x64xf32>
    %cst_139 = arith.constant 1.000000e+00 : f32
    %367 = vector.broadcast %cst_139 : f32 to vector<32x64xf32>
    %368 = arith.divf %367, %366 : vector<32x64xf32>
    %cst_140 = arith.constant 1.06140542 : f32
    %369 = vector.broadcast %cst_140 : f32 to vector<32x64xf32>
    %370 = arith.mulf %369, %368 : vector<32x64xf32>
    %cst_141 = arith.constant -1.45315206 : f32
    %371 = vector.broadcast %cst_141 : f32 to vector<32x64xf32>
    %372 = arith.addf %370, %371 : vector<32x64xf32>
    %373 = arith.mulf %372, %368 : vector<32x64xf32>
    %cst_142 = arith.constant 1.42141378 : f32
    %374 = vector.broadcast %cst_142 : f32 to vector<32x64xf32>
    %375 = arith.addf %373, %374 : vector<32x64xf32>
    %376 = arith.mulf %375, %368 : vector<32x64xf32>
    %cst_143 = arith.constant -0.284496725 : f32
    %377 = vector.broadcast %cst_143 : f32 to vector<32x64xf32>
    %378 = arith.addf %376, %377 : vector<32x64xf32>
    %379 = arith.mulf %378, %368 : vector<32x64xf32>
    %cst_144 = arith.constant 0.254829586 : f32
    %380 = vector.broadcast %cst_144 : f32 to vector<32x64xf32>
    %381 = arith.addf %379, %380 : vector<32x64xf32>
    %382 = arith.mulf %381, %368 : vector<32x64xf32>
    %cst_145 = arith.constant 0.000000e+00 : f32
    %383 = vector.broadcast %cst_145 : f32 to vector<32x64xf32>
    %384 = arith.subf %383, %362 : vector<32x64xf32>
    %385 = arith.mulf %384, %362 : vector<32x64xf32>
    %386 = math.exp %385 : vector<32x64xf32>
    %387 = arith.mulf %382, %386 : vector<32x64xf32>
    %cst_146 = arith.constant 1.000000e+00 : f32
    %388 = vector.broadcast %cst_146 : f32 to vector<32x64xf32>
    %389 = arith.subf %388, %387 : vector<32x64xf32>
    %390 = arith.mulf %361, %389 : vector<32x64xf32>
    %cst_147 = arith.constant 1.000000e+00 : f32
    %391 = vector.broadcast %cst_147 : f32 to vector<32x64xf32>
    %392 = arith.addf %391, %390 : vector<32x64xf32>
    %393 = arith.mulf %354, %392 : vector<32x64xf32>
    %c0_148 = arith.constant 0 : index
    %c0_149 = arith.constant 0 : index
    %394 = vector.load %arg26[%c0_148, %c0_149] : memref<64x32xf32, #tpu.memory_space<vmem>>, vector<64x32xf32>
    %cst_150 = arith.constant dense<0.000000e+00> : vector<32x32xf32>
    %395 = tpu.matmul %393, %394, %cst_150 {dimension_numbers = #tpu.dot_dimension_numbers<[1], [0], [0], [1], [0, 0, 1, 1], [], []>} : vector<32x64xf32>, vector<64x32xf32>, vector<32x32xf32> -> vector<32x32xf32>
    %c0_151 = arith.constant 0 : index
    %c0_152 = arith.constant 0 : index
    %396 = vector.load %arg27[%c0_151, %c0_152] : memref<1x32xf32, #tpu.memory_space<vmem>>, vector<1x32xf32>
    %397 = vector.broadcast %396 : vector<1x32xf32> to vector<32x32xf32>
    %398 = arith.addf %395, %397 : vector<32x32xf32>
    %399 = arith.addf %347, %398 : vector<32x32xf32>
    %c0_153 = arith.constant 0 : index
    %c0_154 = arith.constant 0 : index
    %400 = vector.load %arg28[%c0_153, %c0_154] : memref<1x32xf32, #tpu.memory_space<vmem>>, vector<1x32xf32>
    %c0_155 = arith.constant 0 : index
    %c0_156 = arith.constant 0 : index
    %401 = vector.load %arg29[%c0_155, %c0_156] : memref<1x32xf32, #tpu.memory_space<vmem>>, vector<1x32xf32>
    %cst_157 = arith.constant dense<0.000000e+00> : vector<32xf32>
    %402 = vector.multi_reduction <add>, %399, %cst_157 [1] : vector<32x32xf32> to vector<32xf32>
    %403 = vector.shape_cast %402 : vector<32xf32> to vector<32x1xf32>
    %cst_158 = arith.constant 3.200000e+01 : f32
    %404 = vector.broadcast %cst_158 : f32 to vector<32x1xf32>
    %405 = arith.divf %403, %404 : vector<32x1xf32>
    %406 = vector.broadcast %405 : vector<32x1xf32> to vector<32x32xf32>
    %407 = arith.subf %399, %406 : vector<32x32xf32>
    %408 = arith.mulf %407, %407 : vector<32x32xf32>
    %cst_159 = arith.constant dense<0.000000e+00> : vector<32xf32>
    %409 = vector.multi_reduction <add>, %408, %cst_159 [1] : vector<32x32xf32> to vector<32xf32>
    %410 = vector.shape_cast %409 : vector<32xf32> to vector<32x1xf32>
    %cst_160 = arith.constant 3.200000e+01 : f32
    %411 = vector.broadcast %cst_160 : f32 to vector<32x1xf32>
    %412 = arith.divf %410, %411 : vector<32x1xf32>
    %413 = vector.broadcast %405 : vector<32x1xf32> to vector<32x32xf32>
    %414 = arith.subf %399, %413 : vector<32x32xf32>
    %cst_161 = arith.constant 9.99999996E-13 : f32
    %415 = vector.broadcast %cst_161 : f32 to vector<32x1xf32>
    %416 = arith.addf %412, %415 : vector<32x1xf32>
    %417 = math.rsqrt %416 : vector<32x1xf32>
    %418 = vector.broadcast %417 : vector<32x1xf32> to vector<32x32xf32>
    %419 = arith.mulf %414, %418 : vector<32x32xf32>
    %420 = vector.broadcast %400 : vector<1x32xf32> to vector<32x32xf32>
    %421 = arith.mulf %419, %420 : vector<32x32xf32>
    %422 = vector.broadcast %401 : vector<1x32xf32> to vector<32x32xf32>
    %423 = arith.addf %421, %422 : vector<32x32xf32>
    %424 = tpu.iota {dimensions = array<i32: 0>} : vector<4x32xi32>
    %425 = tpu.iota {dimensions = array<i32: 1>} : vector<4x32xi32>
    %c8_i32 = arith.constant 8 : i32
    %426 = vector.broadcast %c8_i32 : i32 to vector<4x32xi32>
    %427 = arith.muli %424, %426 : vector<4x32xi32>
    %428 = arith.cmpi eq, %425, %427 : vector<4x32xi32>
    %429 = arith.extui %428 : vector<4x32xi1> to vector<4x32xi32>
    %430 = arith.sitofp %429 : vector<4x32xi32> to vector<4x32xf32>
    %cst_162 = arith.constant dense<0.000000e+00> : vector<4x32xf32>
    %431 = tpu.matmul %430, %423, %cst_162 {dimension_numbers = #tpu.dot_dimension_numbers<[1], [0], [0], [1], [0, 0, 1, 1], [], []>} : vector<4x32xf32>, vector<32x32xf32>, vector<4x32xf32> -> vector<4x32xf32>
    %c0_163 = arith.constant 0 : index
    %c0_164 = arith.constant 0 : index
    %432 = vector.load %arg30[%c0_163, %c0_164] : memref<32x32xf32, #tpu.memory_space<vmem>>, vector<32x32xf32>
    %cst_165 = arith.constant dense<0.000000e+00> : vector<4x32xf32>
    %433 = tpu.matmul %431, %432, %cst_165 {dimension_numbers = #tpu.dot_dimension_numbers<[1], [0], [0], [1], [0, 0, 1, 1], [], []>} : vector<4x32xf32>, vector<32x32xf32>, vector<4x32xf32> -> vector<4x32xf32>
    %c0_166 = arith.constant 0 : index
    %c0_167 = arith.constant 0 : index
    %434 = vector.load %arg31[%c0_166, %c0_167] : memref<1x32xf32, #tpu.memory_space<vmem>>, vector<1x32xf32>
    %435 = vector.broadcast %434 : vector<1x32xf32> to vector<4x32xf32>
    %436 = arith.addf %433, %435 : vector<4x32xf32>
    %437 = math.tanh %436 : vector<4x32xf32>
    %c0_168 = arith.constant 0 : index
    %c0_169 = arith.constant 0 : index
    %438 = vector.load %arg32[%c0_168, %c0_169] : memref<32x1xf32, #tpu.memory_space<vmem>>, vector<32x1xf32>
    %cst_170 = arith.constant dense<0.000000e+00> : vector<4x1xf32>
    %439 = tpu.matmul %437, %438, %cst_170 {dimension_numbers = #tpu.dot_dimension_numbers<[1], [0], [0], [1], [0, 0, 1, 1], [], []>} : vector<4x32xf32>, vector<32x1xf32>, vector<4x1xf32> -> vector<4x1xf32>
    %c0_171 = arith.constant 0 : index
    %c0_172 = arith.constant 0 : index
    %440 = vector.load %arg33[%c0_171, %c0_172] : memref<1x1xf32, #tpu.memory_space<vmem>>, vector<1x1xf32>
    %441 = vector.broadcast %440 : vector<1x1xf32> to vector<4x1xf32>
    %442 = arith.addf %439, %441 : vector<4x1xf32>
    %c0_173 = arith.constant 0 : index
    %c0_174 = arith.constant 0 : index
    %443 = vector.load %arg34[%c0_173, %c0_174] : memref<4x1xf32, #tpu.memory_space<vmem>>, vector<4x1xf32>
    tpu.vector_store %arg34[%c0_173, %c0_174], %442 {strides = array<i32>} : memref<4x1xf32, #tpu.memory_space<vmem>>, vector<4x1xf32>,
    %444 = tpu.iota {dimensions = array<i32: 0>} : vector<4x4xi32>
    %445 = tpu.iota {dimensions = array<i32: 1>} : vector<4x4xi32>
    %c1_i32 = arith.constant 1 : i32
    %446 = vector.broadcast %c1_i32 : i32 to vector<4x4xi32>
    %447 = arith.addi %444, %446 : vector<4x4xi32>
    %448 = arith.cmpi eq, %445, %447 : vector<4x4xi32>
    %449 = arith.extui %448 : vector<4x4xi1> to vector<4x4xi32>
    %450 = arith.sitofp %449 : vector<4x4xi32> to vector<4x4xf32>
    %cst_175 = arith.constant dense<0.000000e+00> : vector<4x1xf32>
    %451 = tpu.matmul %450, %442, %cst_175 {dimension_numbers = #tpu.dot_dimension_numbers<[1], [0], [0], [1], [0, 0, 1, 1], [], []>} : vector<4x4xf32>, vector<4x1xf32>, vector<4x1xf32> -> vector<4x1xf32>
    %452 = arith.maximumf %442, %451 : vector<4x1xf32>
    %453 = arith.subf %442, %452 : vector<4x1xf32>
    %454 = math.exp %453 : vector<4x1xf32>
    %455 = arith.subf %451, %452 : vector<4x1xf32>
    %456 = math.exp %455 : vector<4x1xf32>
    %457 = arith.addf %454, %456 : vector<4x1xf32>
    %458 = math.log %457 : vector<4x1xf32>
    %459 = arith.addf %452, %458 : vector<4x1xf32>
    %460 = arith.subf %459, %442 : vector<4x1xf32>
    %c0_176 = arith.constant 0 : index
    %c0_177 = arith.constant 0 : index
    %461 = vector.load %arg2[%c0_176, %c0_177] : memref<4x1xf32, #tpu.memory_space<vmem>>, vector<4x1xf32>
    %462 = arith.mulf %461, %460 : vector<4x1xf32>
    %463 = vector.shape_cast %462 : vector<4x1xf32> to vector<1x4x1xf32>
    %cst_178 = arith.constant dense<0.000000e+00> : vector<1xf32>
    %464 = vector.multi_reduction <add>, %463, %cst_178 [1, 2] : vector<1x4x1xf32> to vector<1xf32>
    %465 = vector.shape_cast %464 : vector<1xf32> to vector<1x1x1xf32>
    %466 = vector.extract %465[0, 0, 0] : f32 from vector<1x1x1xf32>
    %467 = vector.broadcast %466 : f32 to vector<1x1xf32>
    %cst_179 = arith.constant 5.000000e-01 : f32
    %468 = vector.broadcast %cst_179 : f32 to vector<1x1xf32>
    %469 = arith.mulf %467, %468 : vector<1x1xf32>
    %c0_180 = arith.constant 0 : index
    %c0_181 = arith.constant 0 : index
    %470 = vector.load %arg35[%c0_180, %c0_181] : memref<1x1xf32, #tpu.memory_space<vmem>>, vector<1x1xf32>
    tpu.vector_store %arg35[%c0_180, %c0_181], %469 {strides = array<i32>} : memref<1x1xf32, #tpu.memory_space<vmem>>, vector<1x1xf32>,
    %c0_182 = arith.constant 0 : index
    %c0_183 = arith.constant 0 : index
    %471 = vector.load %arg3[%c0_182, %c0_183] : memref<4x1xf32, #tpu.memory_space<vmem>>, vector<4x1xf32>
    %472 = arith.mulf %471, %460 : vector<4x1xf32>
    %473 = vector.shape_cast %472 : vector<4x1xf32> to vector<1x4x1xf32>
    %cst_184 = arith.constant dense<0.000000e+00> : vector<1xf32>
    %474 = vector.multi_reduction <add>, %473, %cst_184 [1, 2] : vector<1x4x1xf32> to vector<1xf32>
    %475 = vector.shape_cast %474 : vector<1xf32> to vector<1x1x1xf32>
    %476 = vector.extract %475[0, 0, 0] : f32 from vector<1x1x1xf32>
    %477 = vector.broadcast %476 : f32 to vector<1x1xf32>
    %cst_185 = arith.constant 5.000000e-01 : f32
    %478 = vector.broadcast %cst_185 : f32 to vector<1x1xf32>
    %479 = arith.mulf %477, %478 : vector<1x1xf32>
    %c0_186 = arith.constant 0 : index
    %c0_187 = arith.constant 0 : index
    %480 = vector.load %arg36[%c0_186, %c0_187] : memref<1x1xf32, #tpu.memory_space<vmem>>, vector<1x1xf32>
    tpu.vector_store %arg36[%c0_186, %c0_187], %479 {strides = array<i32>} : memref<1x1xf32, #tpu.memory_space<vmem>>, vector<1x1xf32>,
    return
  }
}

</mosaic_0001>

<llo_original>
// kernel: tpu_custom_call.1
$region0: #{tpu_custom_call.1}
  #allocation0 [shape = 'u32[]', space=smem, size = 0x4, offset = 0x4, fixed_abs, tag = 'smem constant byte address 0x4 - core index']
  #allocation1 [shape = 'u32[144,128]{1,0:T(1,128)}', space=vmem, size = 0x12000, scoped, tag = 'internal scratch']
  #allocation2 [shape = 'f32[1,1]{1,0:T(1,128)S(1)}', space=vmem, size = 0x200, scoped, tag = 'scoped memory for tpu_custom_call.1']
  %s0 = inlined_call_operand.smem [shape: u32[37], index: -1, kind: input, shape index: {}]
  %s1 = sld [smem:[%s0]]
  %s2 = scalar_lea.smem %s0, 1
  %s3 = sld [smem:[%s2]]
  %s4 = scalar_lea.smem %s0, 2
  %s5 = sld [smem:[%s4]]
  %s6 = scalar_lea.smem %s0, 3
  %s7 = sld [smem:[%s6]]
  %s8 = scalar_lea.smem %s0, 4
  %s9 = sld [smem:[%s8]]
  %s10 = scalar_lea.smem %s0, 5
  %s11 = sld [smem:[%s10]]
  %s12 = scalar_lea.smem %s0, 6
  %s13 = sld [smem:[%s12]]
  %s14 = scalar_lea.smem %s0, 7
  %s15 = sld [smem:[%s14]]
  %s16 = scalar_lea.smem %s0, 8
  %s17 = sld [smem:[%s16]]
  %s18 = scalar_lea.smem %s0, 9
  %s19 = sld [smem:[%s18]]
  %s20 = scalar_lea.smem %s0, 10
  %s21 = sld [smem:[%s20]]
  %s22 = scalar_lea.smem %s0, 11
  %s23 = sld [smem:[%s22]]
  %s24 = scalar_lea.smem %s0, 12
  %s25 = sld [smem:[%s24]]
  %s26 = scalar_lea.smem %s0, 13
  %s27 = sld [smem:[%s26]]
  %s28 = scalar_lea.smem %s0, 14
  %s29 = sld [smem:[%s28]]
  %s30 = scalar_lea.smem %s0, 15
  %s31 = sld [smem:[%s30]]
  %s32 = scalar_lea.smem %s0, 16
  %s33 = sld [smem:[%s32]]
  %s34 = scalar_lea.smem %s0, 17
  %s35 = sld [smem:[%s34]]
  %s36 = scalar_lea.smem %s0, 18
  %s37 = sld [smem:[%s36]]
  %s38 = scalar_lea.smem %s0, 19
  %s39 = sld [smem:[%s38]]
  %s40 = scalar_lea.smem %s0, 20
  %s41 = sld [smem:[%s40]]
  %s42 = scalar_lea.smem %s0, 21
  %s43 = sld [smem:[%s42]]
  %s44 = scalar_lea.smem %s0, 22
  %s45 = sld [smem:[%s44]]
  %s46 = scalar_lea.smem %s0, 23
  %s47 = sld [smem:[%s46]]
  %s48 = scalar_lea.smem %s0, 24
  %s49 = sld [smem:[%s48]]
  %s50 = scalar_lea.smem %s0, 25
  %s51 = sld [smem:[%s50]]
  %s52 = scalar_lea.smem %s0, 26
  %s53 = sld [smem:[%s52]]
  %s54 = scalar_lea.smem %s0, 27
  %s55 = sld [smem:[%s54]]
  %s56 = scalar_lea.smem %s0, 28
  %s57 = sld [smem:[%s56]]
  %s58 = scalar_lea.smem %s0, 29
  %s59 = sld [smem:[%s58]]
  %s60 = scalar_lea.smem %s0, 30
  %s61 = sld [smem:[%s60]]
  %s62 = scalar_lea.smem %s0, 31
  %s63 = sld [smem:[%s62]]
  %s64 = scalar_lea.smem %s0, 32
  %s65 = sld [smem:[%s64]]
  %s66 = scalar_lea.smem %s0, 33
  %s67 = sld [smem:[%s66]]
  %s68 = scalar_lea.smem %s0, 34
  %s69 = sld [smem:[%s68]]
  %s70 = scalar_lea.smem %s0, 35
  %s71 = sld [smem:[%s70]]
  %s72 = scalar_lea.smem %s0, 36
  %s73 = sld [smem:[%s72]]
  %74 = xla_tuple %s69, %s71, %s73
  %s75 = sld [smem:[#allocation0]]
  $region234: #{tpu_custom_call.1} parent=0
    _
  %s77 = ssub.s32 1, %s75
  %s78 = scalar_select 0, %s77, %s75
  %v79 = vstv %s67
  %80 = vst [vmem:[#allocation2] sm:$0x1] %v79
  $region1: #{tpu_custom_call.1} parent=0
    #allocation3 [shape = 'u8[2048]{0}', space=vmem, size = 0x800, scoped, tag = 'input window, operand 1, single buffered']
    #allocation4 [shape = 's32[1]{0}', space=sflag, size = 0x4, scoped, tag = 'scoped memory for tpu_custom_call.1']
    #allocation5 [shape = 's32[1]{0}', space=sflag, size = 0x4, scoped, tag = 'scoped memory for tpu_custom_call.1']
    #allocation6 [shape = 'u8[512]{0}', space=vmem, size = 0x400, scoped, tag = 'input window, operand 5, single buffered']
    #allocation7 [shape = 's32[1]{0}', space=sflag, size = 0x4, scoped, tag = 'scoped memory for tpu_custom_call.1']
    #allocation8 [shape = 'u8[512]{0}', space=vmem, size = 0x400, scoped, tag = 'input window, operand 7, single buffered']
    #allocation9 [shape = 'u8[512]{0}', space=vmem, size = 0x400, scoped, tag = 'input window, operand 9, single buffered']
    #allocation10 [shape = 's32[1]{0}', space=sflag, size = 0x4, scoped, tag = 'scoped memory for tpu_custom_call.1']
    #allocation11 [shape = 'u8[512]{0}', space=vmem, size = 0x400, scoped, tag = 'input window, operand 10, single buffered']
    #allocation12 [shape = 'u8[512]{0}', space=vmem, size = 0x400, scoped, tag = 'input window, operand 11, single buffered']
    #allocation13 [shape = 's32[1]{0}', space=sflag, size = 0x4, scoped, tag = 'scoped memory for tpu_custom_call.1']
    #allocation14 [shape = 'u8[512]{0}', space=vmem, size = 0x400, scoped, tag = 'input window, operand 15, single buffered']
    #allocation15 [shape = 'u8[512]{0}', space=vmem, size = 0x400, scoped, tag = 'input window, operand 16, single buffered']
    #allocation16 [shape = 's32[1]{0}', space=sflag, size = 0x4, scoped, tag = 'scoped memory for tpu_custom_call.1']
    #allocation17 [shape = 'u8[512]{0}', space=vmem, size = 0x400, scoped, tag = 'input window, operand 17, single buffered']
    #allocation18 [shape = 'u8[512]{0}', space=vmem, size = 0x400, scoped, tag = 'input window, operand 19, single buffered']
    #allocation19 [shape = 's32[1]{0}', space=sflag, size = 0x4, scoped, tag = 'scoped memory for tpu_custom_call.1']
    #allocation20 [shape = 'u8[512]{0}', space=vmem, size = 0x400, scoped, tag = 'input window, operand 21, single buffered']
    #allocation21 [shape = 'u8[512]{0}', space=vmem, size = 0x400, scoped, tag = 'input window, operand 22, single buffered']
    #allocation22 [shape = 's32[1]{0}', space=sflag, size = 0x4, scoped, tag = 'scoped memory for tpu_custom_call.1']
    #allocation23 [shape = 'u8[512]{0}', space=vmem, size = 0x400, scoped, tag = 'input window, operand 23, single buffered']
    #allocation24 [shape = 'u8[16384]{0}', space=vmem, size = 0x4000, scoped, tag = 'input window, operand 24, single buffered']
    #allocation25 [shape = 's32[1]{0}', space=sflag, size = 0x4, scoped, tag = 'scoped memory for tpu_custom_call.1']
    #allocation26 [shape = 'u8[512]{0}', space=vmem, size = 0x400, scoped, tag = 'input window, operand 25, single buffered']
    #allocation27 [shape = 'u8[512]{0}', space=vmem, size = 0x400, scoped, tag = 'input window, operand 27, single buffered']
    #allocation28 [shape = 's32[1]{0}', space=sflag, size = 0x4, scoped, tag = 'scoped memory for tpu_custom_call.1']
    #allocation29 [shape = 'u8[512]{0}', space=vmem, size = 0x400, scoped, tag = 'input window, operand 28, single buffered']
    #allocation30 [shape = 'u8[512]{0}', space=vmem, size = 0x400, scoped, tag = 'input window, operand 29, single buffered']
    #allocation31 [shape = 's32[1]{0}', space=sflag, size = 0x4, scoped, tag = 'scoped memory for tpu_custom_call.1']
    #allocation32 [shape = 'u8[512]{0}', space=vmem, size = 0x400, scoped, tag = 'output window, operand 1, single buffered']
    #allocation33 [shape = 'u8[512]{0}', space=vmem, size = 0x400, scoped, tag = 'output window, operand 2, single buffered']
    #allocation34 [shape = 's32[1]{0}', space=sflag, size = 0x4, scoped, tag = 'scoped memory for tpu_custom_call.1']
    %81 = vsyncpa [#allocation4], 0
    %82 = vsyncpa [#allocation7], 0
    %83 = vsyncpa [#allocation10], 0
    %84 = vsyncpa [#allocation13], 0
    %85 = vsyncpa [#allocation16], 0
    %86 = vsyncpa [#allocation19], 0
    %87 = vsyncpa [#allocation22], 0
    %88 = vsyncpa [#allocation25], 0
    %89 = vsyncpa [#allocation28], 0
    %90 = vsyncpa [#allocation31], 0
    %91 = vsyncpa [#allocation5], 0
    %92 = vsyncpa [#allocation34], 0
    // Predicated region
    $region2: #{tpu_custom_call.1} parent=1 // pred_check
      _
    $region3: #{tpu_custom_call.1} parent=1 // pred_check_branch
      %94 = sbr.rel (0) target = $region5
    $region4: #{tpu_custom_call.1} parent=1 // pred_region
      _
    $region5: #{tpu_custom_call.1} parent=1 // pred_fallthru
      _
    // Predicated region
    $region6: #{tpu_custom_call.1} parent=1 // pred_check
      _
    $region7: #{tpu_custom_call.1} parent=1 // pred_check_branch
      %96 = sbr.rel (0) target = $region9
    $region8: #{tpu_custom_call.1} parent=1 // pred_region
      %s98 = ssub.s32 64, 64
      %99 = vsyncadd [#allocation4], %s98
      %s100 = sshll.u32 [#allocation3], 4
      %s101 = int_to_ptr.vmem [resolvable:$true] %s100
      %106 = dma.hbm_to_vmem [thread:$0]  %s3, 64, %s101, [#allocation4], 16, 16, 1
    $region9: #{tpu_custom_call.1} parent=1 // pred_fallthru
      _
    // Predicated region
    $region10: #{tpu_custom_call.1} parent=1 // pred_check
      _
    $region11: #{tpu_custom_call.1} parent=1 // pred_check_branch
      %108 = sbr.rel (0) target = $region13
    $region12: #{tpu_custom_call.1} parent=1 // pred_region
      _
    $region13: #{tpu_custom_call.1} parent=1 // pred_fallthru
      _
    // Predicated region
    $region14: #{tpu_custom_call.1} parent=1 // pred_check
      _
    $region15: #{tpu_custom_call.1} parent=1 // pred_check_branch
      %110 = sbr.rel (0) target = $region17
    $region16: #{tpu_custom_call.1} parent=1 // pred_region
      _
    $region17: #{tpu_custom_call.1} parent=1 // pred_fallthru
      _
    // Predicated region
    $region18: #{tpu_custom_call.1} parent=1 // pred_check
      _
    $region19: #{tpu_custom_call.1} parent=1 // pred_check_branch
      %112 = sbr.rel (0) target = $region21
    $region20: #{tpu_custom_call.1} parent=1 // pred_region
      _
    $region21: #{tpu_custom_call.1} parent=1 // pred_fallthru
      _
    // Predicated region
    $region22: #{tpu_custom_call.1} parent=1 // pred_check
      _
    $region23: #{tpu_custom_call.1} parent=1 // pred_check_branch
      %114 = sbr.rel (0) target = $region25
    $region24: #{tpu_custom_call.1} parent=1 // pred_region
      %s116 = ssub.s32 16, 16
      %117 = vsyncadd [#allocation7], %s116
      %s119 = sshll.u32 [#allocation6], 4
      %s120 = int_to_ptr.vmem [resolvable:$true] %s119
      %122 = dma.hbm_to_vmem [thread:$0]  %s11, 16, %s120, [#allocation7]
    $region25: #{tpu_custom_call.1} parent=1 // pred_fallthru
      _
    // Predicated region
    $region26: #{tpu_custom_call.1} parent=1 // pred_check
      _
    $region27: #{tpu_custom_call.1} parent=1 // pred_check_branch
      %124 = sbr.rel (0) target = $region29
    $region28: #{tpu_custom_call.1} parent=1 // pred_region
      _
    $region29: #{tpu_custom_call.1} parent=1 // pred_fallthru
      _
    // Predicated region
    $region30: #{tpu_custom_call.1} parent=1 // pred_check
      _
    $region31: #{tpu_custom_call.1} parent=1 // pred_check_branch
      %126 = sbr.rel (0) target = $region33
    $region32: #{tpu_custom_call.1} parent=1 // pred_region
      %s128 = ssub.s32 16, 16
      %129 = vsyncadd [#allocation7], %s128
      %s131 = sshll.u32 [#allocation8], 4
      %s132 = int_to_ptr.vmem [resolvable:$true] %s131
      %134 = dma.hbm_to_vmem [thread:$0]  %s15, 16, %s132, [#allocation7]
    $region33: #{tpu_custom_call.1} parent=1 // pred_fallthru
      _
    // Predicated region
    $region34: #{tpu_custom_call.1} parent=1 // pred_check
      _
    $region35: #{tpu_custom_call.1} parent=1 // pred_check_branch
      %136 = sbr.rel (0) target = $region37
    $region36: #{tpu_custom_call.1} parent=1 // pred_region
      _
    $region37: #{tpu_custom_call.1} parent=1 // pred_fallthru
      _
    // Predicated region
    $region38: #{tpu_custom_call.1} parent=1 // pred_check
      _
    $region39: #{tpu_custom_call.1} parent=1 // pred_check_branch
      %138 = sbr.rel (0) target = $region41
    $region40: #{tpu_custom_call.1} parent=1 // pred_region
      %s140 = ssub.s32 16, 16
      %141 = vsyncadd [#allocation10], %s140
      %s143 = sshll.u32 [#allocation9], 4
      %s144 = int_to_ptr.vmem [resolvable:$true] %s143
      %146 = dma.hbm_to_vmem [thread:$0]  %s19, 16, %s144, [#allocation10]
    $region41: #{tpu_custom_call.1} parent=1 // pred_fallthru
      _
    // Predicated region
    $region42: #{tpu_custom_call.1} parent=1 // pred_check
      _
    $region43: #{tpu_custom_call.1} parent=1 // pred_check_branch
      %148 = sbr.rel (0) target = $region45
    $region44: #{tpu_custom_call.1} parent=1 // pred_region
      %s150 = ssub.s32 16, 16
      %151 = vsyncadd [#allocation10], %s150
      %s153 = sshll.u32 [#allocation11], 4
      %s154 = int_to_ptr.vmem [resolvable:$true] %s153
      %156 = dma.hbm_to_vmem [thread:$0]  %s21, 16, %s154, [#allocation10]
    $region45: #{tpu_custom_call.1} parent=1 // pred_fallthru
      _
    // Predicated region
    $region46: #{tpu_custom_call.1} parent=1 // pred_check
      _
    $region47: #{tpu_custom_call.1} parent=1 // pred_check_branch
      %158 = sbr.rel (0) target = $region49
    $region48: #{tpu_custom_call.1} parent=1 // pred_region
      %s160 = ssub.s32 16, 16
      %161 = vsyncadd [#allocation13], %s160
      %s163 = sshll.u32 [#allocation12], 4
      %s164 = int_to_ptr.vmem [resolvable:$true] %s163
      %166 = dma.hbm_to_vmem [thread:$0]  %s23, 16, %s164, [#allocation13]
    $region49: #{tpu_custom_call.1} parent=1 // pred_fallthru
      _
    // Predicated region
    $region50: #{tpu_custom_call.1} parent=1 // pred_check
      _
    $region51: #{tpu_custom_call.1} parent=1 // pred_check_branch
      %168 = sbr.rel (0) target = $region53
    $region52: #{tpu_custom_call.1} parent=1 // pred_region
      _
    $region53: #{tpu_custom_call.1} parent=1 // pred_fallthru
      _
    // Predicated region
    $region54: #{tpu_custom_call.1} parent=1 // pred_check
      _
    $region55: #{tpu_custom_call.1} parent=1 // pred_check_branch
      %170 = sbr.rel (0) target = $region57
    $region56: #{tpu_custom_call.1} parent=1 // pred_region
      _
    $region57: #{tpu_custom_call.1} parent=1 // pred_fallthru
      _
    // Predicated region
    $region58: #{tpu_custom_call.1} parent=1 // pred_check
      _
    $region59: #{tpu_custom_call.1} parent=1 // pred_check_branch
      %172 = sbr.rel (0) target = $region61
    $region60: #{tpu_custom_call.1} parent=1 // pred_region
      _
    $region61: #{tpu_custom_call.1} parent=1 // pred_fallthru
      _
    // Predicated region
    $region62: #{tpu_custom_call.1} parent=1 // pred_check
      _
    $region63: #{tpu_custom_call.1} parent=1 // pred_check_branch
      %174 = sbr.rel (0) target = $region65
    $region64: #{tpu_custom_call.1} parent=1 // pred_region
      %s176 = ssub.s32 16, 16
      %177 = vsyncadd [#allocation13], %s176
      %s179 = sshll.u32 [#allocation14], 4
      %s180 = int_to_ptr.vmem [resolvable:$true] %s179
      %182 = dma.hbm_to_vmem [thread:$0]  %s31, 16, %s180, [#allocation13]
    $region65: #{tpu_custom_call.1} parent=1 // pred_fallthru
      _
    // Predicated region
    $region66: #{tpu_custom_call.1} parent=1 // pred_check
      _
    $region67: #{tpu_custom_call.1} parent=1 // pred_check_branch
      %184 = sbr.rel (0) target = $region69
    $region68: #{tpu_custom_call.1} parent=1 // pred_region
      %s186 = ssub.s32 16, 16
      %187 = vsyncadd [#allocation16], %s186
      %s189 = sshll.u32 [#allocation15], 4
      %s190 = int_to_ptr.vmem [resolvable:$true] %s189
      %192 = dma.hbm_to_vmem [thread:$0]  %s33, 16, %s190, [#allocation16]
    $region69: #{tpu_custom_call.1} parent=1 // pred_fallthru
      _
    // Predicated region
    $region70: #{tpu_custom_call.1} parent=1 // pred_check
      _
    $region71: #{tpu_custom_call.1} parent=1 // pred_check_branch
      %194 = sbr.rel (0) target = $region73
    $region72: #{tpu_custom_call.1} parent=1 // pred_region
      %s196 = ssub.s32 16, 16
      %197 = vsyncadd [#allocation16], %s196
      %s199 = sshll.u32 [#allocation17], 4
      %s200 = int_to_ptr.vmem [resolvable:$true] %s199
      %202 = dma.hbm_to_vmem [thread:$0]  %s35, 16, %s200, [#allocation16]
    $region73: #{tpu_custom_call.1} parent=1 // pred_fallthru
      _
    // Predicated region
    $region74: #{tpu_custom_call.1} parent=1 // pred_check
      _
    $region75: #{tpu_custom_call.1} parent=1 // pred_check_branch
      %204 = sbr.rel (0) target = $region77
    $region76: #{tpu_custom_call.1} parent=1 // pred_region
      _
    $region77: #{tpu_custom_call.1} parent=1 // pred_fallthru
      _
    // Predicated region
    $region78: #{tpu_custom_call.1} parent=1 // pred_check
      _
    $region79: #{tpu_custom_call.1} parent=1 // pred_check_branch
      %206 = sbr.rel (0) target = $region81
    $region80: #{tpu_custom_call.1} parent=1 // pred_region
      %s208 = ssub.s32 16, 16
      %209 = vsyncadd [#allocation19], %s208
      %s211 = sshll.u32 [#allocation18], 4
      %s212 = int_to_ptr.vmem [resolvable:$true] %s211
      %214 = dma.hbm_to_vmem [thread:$0]  %s39, 16, %s212, [#allocation19]
    $region81: #{tpu_custom_call.1} parent=1 // pred_fallthru
      _
    // Predicated region
    $region82: #{tpu_custom_call.1} parent=1 // pred_check
      _
    $region83: #{tpu_custom_call.1} parent=1 // pred_check_branch
      %216 = sbr.rel (0) target = $region85
    $region84: #{tpu_custom_call.1} parent=1 // pred_region
      _
    $region85: #{tpu_custom_call.1} parent=1 // pred_fallthru
      _
    // Predicated region
    $region86: #{tpu_custom_call.1} parent=1 // pred_check
      _
    $region87: #{tpu_custom_call.1} parent=1 // pred_check_branch
      %218 = sbr.rel (0) target = $region89
    $region88: #{tpu_custom_call.1} parent=1 // pred_region
      %s220 = ssub.s32 16, 16
      %221 = vsyncadd [#allocation19], %s220
      %s223 = sshll.u32 [#allocation20], 4
      %s224 = int_to_ptr.vmem [resolvable:$true] %s223
      %226 = dma.hbm_to_vmem [thread:$0]  %s43, 16, %s224, [#allocation19]
    $region89: #{tpu_custom_call.1} parent=1 // pred_fallthru
      _
    // Predicated region
    $region90: #{tpu_custom_call.1} parent=1 // pred_check
      _
    $region91: #{tpu_custom_call.1} parent=1 // pred_check_branch
      %228 = sbr.rel (0) target = $region93
    $region92: #{tpu_custom_call.1} parent=1 // pred_region
      %s230 = ssub.s32 16, 16
      %231 = vsyncadd [#allocation22], %s230
      %s233 = sshll.u32 [#allocation21], 4
      %s234 = int_to_ptr.vmem [resolvable:$true] %s233
      %236 = dma.hbm_to_vmem [thread:$0]  %s45, 16, %s234, [#allocation22]
    $region93: #{tpu_custom_call.1} parent=1 // pred_fallthru
      _
    // Predicated region
    $region94: #{tpu_custom_call.1} parent=1 // pred_check
      _
    $region95: #{tpu_custom_call.1} parent=1 // pred_check_branch
      %238 = sbr.rel (0) target = $region97
    $region96: #{tpu_custom_call.1} parent=1 // pred_region
      %s240 = ssub.s32 16, 16
      %241 = vsyncadd [#allocation22], %s240
      %s243 = sshll.u32 [#allocation23], 4
      %s244 = int_to_ptr.vmem [resolvable:$true] %s243
      %246 = dma.hbm_to_vmem [thread:$0]  %s47, 16, %s244, [#allocation22]
    $region97: #{tpu_custom_call.1} parent=1 // pred_fallthru
      _
    // Predicated region
    $region98: #{tpu_custom_call.1} parent=1 // pred_check
      _
    $region99: #{tpu_custom_call.1} parent=1 // pred_check_branch
      %248 = sbr.rel (0) target = $region101
    $region100: #{tpu_custom_call.1} parent=1 // pred_region
      %s250 = ssub.s32 512, 512
      %251 = vsyncadd [#allocation25], %s250
      %s252 = sshll.u32 [#allocation24], 4
      %s253 = int_to_ptr.vmem [resolvable:$true] %s252
      %258 = dma.hbm_to_vmem [thread:$0]  %s49, 512, %s253, [#allocation25], 128, 128, 8
    $region101: #{tpu_custom_call.1} parent=1 // pred_fallthru
      _
    // Predicated region
    $region102: #{tpu_custom_call.1} parent=1 // pred_check
      _
    $region103: #{tpu_custom_call.1} parent=1 // pred_check_branch
      %260 = sbr.rel (0) target = $region105
    $region104: #{tpu_custom_call.1} parent=1 // pred_region
      %s262 = ssub.s32 16, 16
      %263 = vsyncadd [#allocation25], %s262
      %s265 = sshll.u32 [#allocation26], 4
      %s266 = int_to_ptr.vmem [resolvable:$true] %s265
      %268 = dma.hbm_to_vmem [thread:$0]  %s51, 16, %s266, [#allocation25]
    $region105: #{tpu_custom_call.1} parent=1 // pred_fallthru
      _
    // Predicated region
    $region106: #{tpu_custom_call.1} parent=1 // pred_check
      _
    $region107: #{tpu_custom_call.1} parent=1 // pred_check_branch
      %270 = sbr.rel (0) target = $region109
    $region108: #{tpu_custom_call.1} parent=1 // pred_region
      _
    $region109: #{tpu_custom_call.1} parent=1 // pred_fallthru
      _
    // Predicated region
    $region110: #{tpu_custom_call.1} parent=1 // pred_check
      _
    $region111: #{tpu_custom_call.1} parent=1 // pred_check_branch
      %272 = sbr.rel (0) target = $region113
    $region112: #{tpu_custom_call.1} parent=1 // pred_region
      %s274 = ssub.s32 16, 16
      %275 = vsyncadd [#allocation28], %s274
      %s277 = sshll.u32 [#allocation27], 4
      %s278 = int_to_ptr.vmem [resolvable:$true] %s277
      %280 = dma.hbm_to_vmem [thread:$0]  %s55, 16, %s278, [#allocation28]
    $region113: #{tpu_custom_call.1} parent=1 // pred_fallthru
      _
    // Predicated region
    $region114: #{tpu_custom_call.1} parent=1 // pred_check
      _
    $region115: #{tpu_custom_call.1} parent=1 // pred_check_branch
      %282 = sbr.rel (0) target = $region117
    $region116: #{tpu_custom_call.1} parent=1 // pred_region
      %s284 = ssub.s32 16, 16
      %285 = vsyncadd [#allocation28], %s284
      %s287 = sshll.u32 [#allocation29], 4
      %s288 = int_to_ptr.vmem [resolvable:$true] %s287
      %290 = dma.hbm_to_vmem [thread:$0]  %s57, 16, %s288, [#allocation28]
    $region117: #{tpu_custom_call.1} parent=1 // pred_fallthru
      _
    // Predicated region
    $region118: #{tpu_custom_call.1} parent=1 // pred_check
      _
    $region119: #{tpu_custom_call.1} parent=1 // pred_check_branch
      %292 = sbr.rel (0) target = $region121
    $region120: #{tpu_custom_call.1} parent=1 // pred_region
      %s294 = ssub.s32 16, 16
      %295 = vsyncadd [#allocation31], %s294
      %s297 = sshll.u32 [#allocation30], 4
      %s298 = int_to_ptr.vmem [resolvable:$true] %s297
      %300 = dma.hbm_to_vmem [thread:$0]  %s59, 16, %s298, [#allocation31]
    $region121: #{tpu_custom_call.1} parent=1 // pred_fallthru
      _
    // Predicated region
    $region122: #{tpu_custom_call.1} parent=1 // pred_check
      _
    $region123: #{tpu_custom_call.1} parent=1 // pred_check_branch
      %302 = sbr.rel (0) target = $region125
    $region124: #{tpu_custom_call.1} parent=1 // pred_region
      _
    $region125: #{tpu_custom_call.1} parent=1 // pred_fallthru
      _
    // Predicated region
    $region126: #{tpu_custom_call.1} parent=1 // pred_check
      _
    $region127: #{tpu_custom_call.1} parent=1 // pred_check_branch
      %304 = sbr.rel (0) target = $region129
    $region128: #{tpu_custom_call.1} parent=1 // pred_region
      _
    $region129: #{tpu_custom_call.1} parent=1 // pred_fallthru
      _
    // Predicated region
    $region130: #{tpu_custom_call.1} parent=1 // pred_check
      _
    $region131: #{tpu_custom_call.1} parent=1 // pred_check_branch
      %306 = sbr.rel (0) target = $region133
    $region132: #{tpu_custom_call.1} parent=1 // pred_region
      _
    $region133: #{tpu_custom_call.1} parent=1 // pred_fallthru
      _
    // Predicated region
    $region134: #{tpu_custom_call.1} parent=1 // pred_check
      _
    $region135: #{tpu_custom_call.1} parent=1 // pred_check_branch
      %308 = sbr.rel (0) target = $region137
    $region136: #{tpu_custom_call.1} parent=1 // pred_region
      _
    $region137: #{tpu_custom_call.1} parent=1 // pred_fallthru
      _
    // Predicated region
    $region138: #{tpu_custom_call.1} parent=1 // pred_check
      _
    $region139: #{tpu_custom_call.1} parent=1 // pred_check_branch
      %310 = sbr.rel (0) target = $region141
    $region140: #{tpu_custom_call.1} parent=1 // pred_region
      %311 = dma.done [#allocation4], 64
    $region141: #{tpu_custom_call.1} parent=1 // pred_fallthru
      _
    // Predicated region
    $region142: #{tpu_custom_call.1} parent=1 // pred_check
      _
    $region143: #{tpu_custom_call.1} parent=1 // pred_check_branch
      %313 = sbr.rel (0) target = $region145
    $region144: #{tpu_custom_call.1} parent=1 // pred_region
      %314 = dma.done [#allocation7], 16
    $region145: #{tpu_custom_call.1} parent=1 // pred_fallthru
      _
    // Predicated region
    $region146: #{tpu_custom_call.1} parent=1 // pred_check
      _
    $region147: #{tpu_custom_call.1} parent=1 // pred_check_branch
      %316 = sbr.rel (0) target = $region149
    $region148: #{tpu_custom_call.1} parent=1 // pred_region
      %317 = dma.done [#allocation7], 16
    $region149: #{tpu_custom_call.1} parent=1 // pred_fallthru
      _
    // Predicated region
    $region150: #{tpu_custom_call.1} parent=1 // pred_check
      _
    $region151: #{tpu_custom_call.1} parent=1 // pred_check_branch
      %319 = sbr.rel (0) target = $region153
    $region152: #{tpu_custom_call.1} parent=1 // pred_region
      %320 = dma.done [#allocation10], 16
    $region153: #{tpu_custom_call.1} parent=1 // pred_fallthru
      _
    // Predicated region
    $region154: #{tpu_custom_call.1} parent=1 // pred_check
      _
    $region155: #{tpu_custom_call.1} parent=1 // pred_check_branch
      %322 = sbr.rel (0) target = $region157
    $region156: #{tpu_custom_call.1} parent=1 // pred_region
      %323 = dma.done [#allocation10], 16
    $region157: #{tpu_custom_call.1} parent=1 // pred_fallthru
      _
    // Predicated region
    $region158: #{tpu_custom_call.1} parent=1 // pred_check
      _
    $region159: #{tpu_custom_call.1} parent=1 // pred_check_branch
      %325 = sbr.rel (0) target = $region161
    $region160: #{tpu_custom_call.1} parent=1 // pred_region
      %326 = dma.done [#allocation13], 16
    $region161: #{tpu_custom_call.1} parent=1 // pred_fallthru
      _
    // Predicated region
    $region162: #{tpu_custom_call.1} parent=1 // pred_check
      _
    $region163: #{tpu_custom_call.1} parent=1 // pred_check_branch
      %328 = sbr.rel (0) target = $region165
    $region164: #{tpu_custom_call.1} parent=1 // pred_region
      %329 = dma.done [#allocation13], 16
    $region165: #{tpu_custom_call.1} parent=1 // pred_fallthru
      _
    // Predicated region
    $region166: #{tpu_custom_call.1} parent=1 // pred_check
      _
    $region167: #{tpu_custom_call.1} parent=1 // pred_check_branch
      %331 = sbr.rel (0) target = $region169
    $region168: #{tpu_custom_call.1} parent=1 // pred_region
      %332 = dma.done [#allocation16], 16
    $region169: #{tpu_custom_call.1} parent=1 // pred_fallthru
      _
    // Predicated region
    $region170: #{tpu_custom_call.1} parent=1 // pred_check
      _
    $region171: #{tpu_custom_call.1} parent=1 // pred_check_branch
      %334 = sbr.rel (0) target = $region173
    $region172: #{tpu_custom_call.1} parent=1 // pred_region
      %335 = dma.done [#allocation16], 16
    $region173: #{tpu_custom_call.1} parent=1 // pred_fallthru
      _
    // Predicated region
    $region174: #{tpu_custom_call.1} parent=1 // pred_check
      _
    $region175: #{tpu_custom_call.1} parent=1 // pred_check_branch
      %337 = sbr.rel (0) target = $region177
    $region176: #{tpu_custom_call.1} parent=1 // pred_region
      %338 = dma.done [#allocation19], 16
    $region177: #{tpu_custom_call.1} parent=1 // pred_fallthru
      _
    // Predicated region
    $region178: #{tpu_custom_call.1} parent=1 // pred_check
      _
    $region179: #{tpu_custom_call.1} parent=1 // pred_check_branch
      %340 = sbr.rel (0) target = $region181
    $region180: #{tpu_custom_call.1} parent=1 // pred_region
      %341 = dma.done [#allocation19], 16
    $region181: #{tpu_custom_call.1} parent=1 // pred_fallthru
      _
    // Predicated region
    $region182: #{tpu_custom_call.1} parent=1 // pred_check
      _
    $region183: #{tpu_custom_call.1} parent=1 // pred_check_branch
      %343 = sbr.rel (0) target = $region185
    $region184: #{tpu_custom_call.1} parent=1 // pred_region
      %344 = dma.done [#allocation22], 16
    $region185: #{tpu_custom_call.1} parent=1 // pred_fallthru
      _
    // Predicated region
    $region186: #{tpu_custom_call.1} parent=1 // pred_check
      _
    $region187: #{tpu_custom_call.1} parent=1 // pred_check_branch
      %346 = sbr.rel (0) target = $region189
    $region188: #{tpu_custom_call.1} parent=1 // pred_region
      %347 = dma.done [#allocation22], 16
    $region189: #{tpu_custom_call.1} parent=1 // pred_fallthru
      _
    // Predicated region
    $region190: #{tpu_custom_call.1} parent=1 // pred_check
      _
    $region191: #{tpu_custom_call.1} parent=1 // pred_check_branch
      %349 = sbr.rel (0) target = $region193
    $region192: #{tpu_custom_call.1} parent=1 // pred_region
      %350 = dma.done [#allocation25], 512
    $region193: #{tpu_custom_call.1} parent=1 // pred_fallthru
      _
    // Predicated region
    $region194: #{tpu_custom_call.1} parent=1 // pred_check
      _
    $region195: #{tpu_custom_call.1} parent=1 // pred_check_branch
      %352 = sbr.rel (0) target = $region197
    $region196: #{tpu_custom_call.1} parent=1 // pred_region
      %353 = dma.done [#allocation25], 16
    $region197: #{tpu_custom_call.1} parent=1 // pred_fallthru
      _
    // Predicated region
    $region198: #{tpu_custom_call.1} parent=1 // pred_check
      _
    $region199: #{tpu_custom_call.1} parent=1 // pred_check_branch
      %355 = sbr.rel (0) target = $region201
    $region200: #{tpu_custom_call.1} parent=1 // pred_region
      %356 = dma.done [#allocation28], 16
    $region201: #{tpu_custom_call.1} parent=1 // pred_fallthru
      _
    // Predicated region
    $region202: #{tpu_custom_call.1} parent=1 // pred_check
      _
    $region203: #{tpu_custom_call.1} parent=1 // pred_check_branch
      %358 = sbr.rel (0) target = $region205
    $region204: #{tpu_custom_call.1} parent=1 // pred_region
      %359 = dma.done [#allocation28], 16
    $region205: #{tpu_custom_call.1} parent=1 // pred_fallthru
      _
    // Predicated region
    $region206: #{tpu_custom_call.1} parent=1 // pred_check
      _
    $region207: #{tpu_custom_call.1} parent=1 // pred_check_branch
      %361 = sbr.rel (0) target = $region209
    $region208: #{tpu_custom_call.1} parent=1 // pred_region
      %362 = dma.done [#allocation31], 16
    $region209: #{tpu_custom_call.1} parent=1 // pred_fallthru
      _
    %v363 = vld [vmem:[%s1] sm:$0xff]
    %v364 = vld [vmem:[%s1 + $0x8] sm:$0xff]
    %v365 = vld [vmem:[%s1 + $0x10] sm:$0xff]
    %v366 = vld [vmem:[%s1 + $0x18] sm:$0xff]
    %v367 = vld [vmem:[%s9] sm:$0x1]
    %v368 = vld [vmem:[#allocation6] sm:$0x1]
    %vm369 = vcmask 261120
    %v370 = vsel %vm369, %v363, 0.0
    %371 = vadd.xlane.f32.xlu0 %v370
    %v372 = vpop.xlane.xlu0 %371
    %v373 = vsel %vm369, %v364, 0.0
    %374 = vadd.xlane.f32.xlu0 %v373
    %v375 = vpop.xlane.xlu0 %374
    %v376 = vsel %vm369, %v365, 0.0
    %377 = vadd.xlane.f32.xlu0 %v376
    %v378 = vpop.xlane.xlu0 %377
    %v379 = vsel %vm369, %v366, 0.0
    %380 = vadd.xlane.f32.xlu0 %v379
    %v381 = vpop.xlane.xlu0 %380
    %v382 = vrcp.pop 32.0
    %v383 = vmul.f32 %v372, %v382
    %v384 = vmul.f32 %v375, %v382
    %v385 = vmul.f32 %v378, %v382
    %v386 = vmul.f32 %v381, %v382
    %v387 = vsub.f32 %v363, %v383
    %v388 = vsub.f32 %v364, %v384
    %v389 = vsub.f32 %v365, %v385
    %v390 = vsub.f32 %v366, %v386
    %v391 = vmul.f32 %v387, %v387
    %v392 = vmul.f32 %v388, %v388
    %v393 = vmul.f32 %v389, %v389
    %v394 = vmul.f32 %v390, %v390
    %v395 = vsel %vm369, %v391, 0.0
    %396 = vadd.xlane.f32.xlu0 %v395
    %v397 = vpop.xlane.xlu0 %396
    %v398 = vsel %vm369, %v392, 0.0
    %399 = vadd.xlane.f32.xlu0 %v398
    %v400 = vpop.xlane.xlu0 %399
    %v401 = vsel %vm369, %v393, 0.0
    %402 = vadd.xlane.f32.xlu0 %v401
    %v403 = vpop.xlane.xlu0 %402
    %v404 = vsel %vm369, %v394, 0.0
    %405 = vadd.xlane.f32.xlu0 %v404
    %v406 = vpop.xlane.xlu0 %405
    %v407 = vmul.f32 %v397, %v382
    %v408 = vmul.f32 %v400, %v382
    %v409 = vmul.f32 %v403, %v382
    %v410 = vmul.f32 %v406, %v382
    %v411 = vadd.f32 %v407, 1e-12
    %v412 = vadd.f32 %v408, 1e-12
    %v413 = vadd.f32 %v409, 1e-12
    %v414 = vadd.f32 %v410, 1e-12
    %v415 = vrsqrt.pop %v411
    %v416 = vrsqrt.pop %v412
    %v417 = vrsqrt.pop %v413
    %v418 = vrsqrt.pop %v414
    %v419 = vmul.f32 %v387, %v415
    %v420 = vmul.f32 %v388, %v416
    %v421 = vmul.f32 %v389, %v417
    %v422 = vmul.f32 %v390, %v418
    %v424 = vlaneseq
    %v425 = vshrl.u32 %v424, 7
    %v426 = vsub.s32 0, %v425
    %v427 = vrot.slane %v367, %v426
    %v429 = vmul.f32 %v419, %v427
    %v430 = vmul.f32 %v420, %v427
    %v431 = vmul.f32 %v421, %v427
    %v432 = vmul.f32 %v422, %v427
    %v434 = vlaneseq
    %v435 = vshrl.u32 %v434, 7
    %v436 = vsub.s32 0, %v435
    %v437 = vrot.slane %v368, %v436
    %v439 = vadd.f32 %v429, %v437
    %v440 = vadd.f32 %v430, %v437
    %v441 = vadd.f32 %v431, %v437
    %v442 = vadd.f32 %v432, %v437
    %v443 = vld [vmem:[#allocation3] sm:$0x1]
    %v444 = vld [vmem:[#allocation3 + $0x1] sm:$0x1]
    %v445 = vld [vmem:[#allocation3 + $0x2] sm:$0x1]
    %v446 = vld [vmem:[#allocation3 + $0x3] sm:$0x1]
    %v447 = vld [vmem:[%s13] sm:$0xff]
    %v448 = vld [vmem:[%s13 + $0x8] sm:$0xff]
    %v449 = vld [vmem:[%s13 + $0x10] sm:$0xff]
    %v450 = vld [vmem:[%s13 + $0x18] sm:$0xff]
    %v451 = vld [vmem:[#allocation8] sm:$0x1]
    %v453 = vlaneseq
    %v454 = vshrl.u32 %v453, 7
    %v455 = vsub.s32 0, %v454
    %v456 = vrot.slane %v451, %v455
    %v459 = vsel %vm369, %v439, 0
    %v462 = vsel %vm369, %v440, 0
    %v465 = vsel %vm369, %v441, 0
    %v468 = vsel %vm369, %v442, 0
    %470 = vmatprep.subr.mxu0 0.0
    %471 = vmatpush1.msra.mxu0 0.0
    %472 = vmatprep.subr.mxu0 0.0
    %473 = vmatpush1.msra.mxu0 0.0
    %474 = vmatprep.subr.mxu0 0.0
    %475 = vmatpush1.msra.mxu0 0.0
    %476 = vmatprep.subr.mxu0 0.0
    %477 = vmatpush1.msra.mxu0 0.0
    %478 = vmatprep.subr.mxu0 0.0
    %479 = vmatpush1.msra.mxu0 0.0
    %480 = vmatprep.subr.mxu0 0.0
    %481 = vmatpush1.msra.mxu0 0.0
    %482 = vmatprep.subr.mxu0 0.0
    %483 = vmatpush1.msra.mxu0 0.0
    %484 = vmatprep.subr.mxu0 0.0
    %485 = vmatpush1.msra.mxu0 0.0
    %486 = vmatprep.subr.mxu0 0.0
    %487 = vmatpush1.msra.mxu0 0.0
    %488 = vmatprep.subr.mxu0 0.0
    %489 = vmatpush1.msra.mxu0 0.0
    %490 = vmatprep.subr.mxu0 0.0
    %491 = vmatpush1.msra.mxu0 0.0
    %492 = vmatprep.subr.mxu0 0.0
    %493 = vmatpush1.msra.mxu0 0.0
    %494 = vmatprep.subr.mxu0 0.0
    %495 = vmatpush1.msra.mxu0 %v450
    %496 = vmatprep.subr.mxu0 0.0
    %497 = vmatpush1.msra.mxu0 %v449
    %498 = vmatprep.subr.mxu0 0.0
    %499 = vmatpush1.msra.mxu0 %v448
    %500 = vmatprep.subr.mxu0 0.0
    %501 = vmatpush1.msra.mxu0 %v447
    %502 = vmatprep.subr.mxu0 0.0
    %503 = vmatpush2.msra.mxu0 0.0
    %504 = vmatprep.subr.mxu0 0.0
    %505 = vmatpush2.msra.mxu0 0.0
    %506 = vmatprep.subr.mxu0 0.0
    %507 = vmatpush2.msra.mxu0 0.0
    %508 = vmatprep.subr.mxu0 0.0
    %509 = vmatpush2.msra.mxu0 0.0
    %510 = vmatprep.subr.mxu0 0.0
    %511 = vmatpush2.msra.mxu0 0.0
    %512 = vmatprep.subr.mxu0 0.0
    %513 = vmatpush2.msra.mxu0 0.0
    %514 = vmatprep.subr.mxu0 0.0
    %515 = vmatpush2.msra.mxu0 0.0
    %516 = vmatprep.subr.mxu0 0.0
    %517 = vmatpush2.msra.mxu0 0.0
    %518 = vmatprep.subr.mxu0 0.0
    %519 = vmatpush2.msra.mxu0 0.0
    %520 = vmatprep.subr.mxu0 0.0
    %521 = vmatpush2.msra.mxu0 0.0
    %522 = vmatprep.subr.mxu0 0.0
    %523 = vmatpush2.msra.mxu0 0.0
    %524 = vmatprep.subr.mxu0 0.0
    %525 = vmatpush2.msra.mxu0 0.0
    %526 = vmatprep.subr.mxu0 0.0
    %527 = vmatpush2.msra.mxu0 0.0
    %528 = vmatprep.subr.mxu0 0.0
    %529 = vmatpush2.msra.mxu0 0.0
    %530 = vmatprep.subr.mxu0 0.0
    %531 = vmatpush2.msra.mxu0 0.0
    %532 = vmatprep.subr.mxu0 0.0
    %533 = vmatpush2.msra.mxu0 0.0
    %534 = vmatprep.mubr.f32.mxu0 0.0
    %535 = vmatmul.mubr.f32.gmra.mxu0 %v459
    %v536 = vpop.f32.mrf.mxu0
    %v537 = vadd.f32 %v456, %v536
    %v538 = vpop.f32.mrf.mxu0
    %539 = vmatprep.mubr.f32.mxu0 0.0
    %540 = vmatmul.mubr.f32.gmra.mxu0 %v462
    %v541 = vpop.f32.mrf.mxu0
    %v542 = vadd.f32 %v456, %v541
    %v543 = vpop.f32.mrf.mxu0
    %544 = vmatprep.mubr.f32.mxu0 0.0
    %545 = vmatmul.mubr.f32.gmra.mxu0 %v465
    %v546 = vpop.f32.mrf.mxu0
    %v547 = vadd.f32 %v456, %v546
    %v548 = vpop.f32.mrf.mxu0
    %549 = vmatprep.mubr.f32.mxu0 0.0
    %550 = vmatmul.mubr.f32.gmra.mxu0 %v468
    %v551 = vpop.f32.mrf.mxu0
    %v552 = vadd.f32 %v456, %v551
    %v553 = vpop.f32.mrf.mxu0
    %554 = vdwg.mxu0
    %v555 = vmul.f32 %v537, 0.35355338
    %v556 = vmul.f32 %v542, 0.35355338
    %v557 = vmul.f32 %v547, 0.35355338
    %v558 = vmul.f32 %v552, 0.35355338
    %v559 = vld [vmem:[%s17] sm:$0xff]
    %v560 = vld [vmem:[%s17 + $0x8] sm:$0xff]
    %v561 = vld [vmem:[%s17 + $0x10] sm:$0xff]
    %v562 = vld [vmem:[%s17 + $0x18] sm:$0xff]
    %v567 = vlaneseq
    %v568 = vshrl.u32 %v567, 7
    %v569 = vsub.s32 0, %v568
    %v570 = vrot.slane %v443, %v569
    %v571 = vlaneseq
    %v572 = vshrl.u32 %v571, 7
    %v573 = vsub.s32 0, %v572
    %v574 = vrot.slane %v444, %v573
    %v575 = vlaneseq
    %v576 = vshrl.u32 %v575, 7
    %v577 = vsub.s32 0, %v576
    %v578 = vrot.slane %v445, %v577
    %v579 = vlaneseq
    %v580 = vshrl.u32 %v579, 7
    %v581 = vsub.s32 0, %v580
    %v582 = vrot.slane %v446, %v581
    %588 = vrot.lane.b32.xlu0 %v537, 96
    %v589 = vpop.permute.xlu0 %588
    %vm590 = vcmask 64512
    %v592 = vsel %vm590, %v555, 0
    %v594 = vsel %vm590, %v589, 0
    %596 = vmatprep.subr.mxu0 0.0
    %597 = vmatpush1.xpose.msra.mxu0 0.0
    %598 = vmatprep.subr.mxu0 0.0
    %599 = vmatpush1.xpose.msra.mxu0 0.0
    %600 = vmatprep.subr.mxu0 0.0
    %601 = vmatpush1.xpose.msra.mxu0 0.0
    %602 = vmatprep.subr.mxu0 0.0
    %603 = vmatpush1.xpose.msra.mxu0 0.0
    %604 = vmatprep.subr.mxu0 0.0
    %605 = vmatpush1.xpose.msra.mxu0 0.0
    %606 = vmatprep.subr.mxu0 0.0
    %607 = vmatpush1.xpose.msra.mxu0 0.0
    %608 = vmatprep.subr.mxu0 0.0
    %609 = vmatpush1.xpose.msra.mxu0 0.0
    %610 = vmatprep.subr.mxu0 0.0
    %611 = vmatpush1.xpose.msra.mxu0 0.0
    %612 = vmatprep.subr.mxu0 0.0
    %613 = vmatpush1.xpose.msra.mxu0 0.0
    %614 = vmatprep.subr.mxu0 0.0
    %615 = vmatpush1.xpose.msra.mxu0 0.0
    %616 = vmatprep.subr.mxu0 0.0
    %617 = vmatpush1.xpose.msra.mxu0 0.0
    %618 = vmatprep.subr.mxu0 0.0
    %619 = vmatpush1.xpose.msra.mxu0 0.0
    %620 = vmatprep.subr.mxu0 0.0
    %621 = vmatpush1.xpose.msra.mxu0 0.0
    %622 = vmatprep.subr.mxu0 0.0
    %623 = vmatpush1.xpose.msra.mxu0 0.0
    %624 = vmatprep.subr.mxu0 0.0
    %625 = vmatpush1.xpose.msra.mxu0 0.0
    %626 = vmatprep.subr.mxu0 0.0
    %627 = vmatpush1.xpose.msra.mxu0 %v594
    %628 = vmatprep.subr.mxu0 0.0
    %629 = vmatpush2.xpose.msra.mxu0 0.0
    %630 = vmatprep.subr.mxu0 0.0
    %631 = vmatpush2.xpose.msra.mxu0 0.0
    %632 = vmatprep.subr.mxu0 0.0
    %633 = vmatpush2.xpose.msra.mxu0 0.0
    %634 = vmatprep.subr.mxu0 0.0
    %635 = vmatpush2.xpose.msra.mxu0 0.0
    %636 = vmatprep.subr.mxu0 0.0
    %637 = vmatpush2.xpose.msra.mxu0 0.0
    %638 = vmatprep.subr.mxu0 0.0
    %639 = vmatpush2.xpose.msra.mxu0 0.0
    %640 = vmatprep.subr.mxu0 0.0
    %641 = vmatpush2.xpose.msra.mxu0 0.0
    %642 = vmatprep.subr.mxu0 0.0
    %643 = vmatpush2.xpose.msra.mxu0 0.0
    %644 = vmatprep.subr.mxu0 0.0
    %645 = vmatpush2.xpose.msra.mxu0 0.0
    %646 = vmatprep.subr.mxu0 0.0
    %647 = vmatpush2.xpose.msra.mxu0 0.0
    %648 = vmatprep.subr.mxu0 0.0
    %649 = vmatpush2.xpose.msra.mxu0 0.0
    %650 = vmatprep.subr.mxu0 0.0
    %651 = vmatpush2.xpose.msra.mxu0 0.0
    %652 = vmatprep.subr.mxu0 0.0
    %653 = vmatpush2.xpose.msra.mxu0 0.0
    %654 = vmatprep.subr.mxu0 0.0
    %655 = vmatpush2.xpose.msra.mxu0 0.0
    %656 = vmatprep.subr.mxu0 0.0
    %657 = vmatpush2.xpose.msra.mxu0 0.0
    %658 = vmatprep.subr.mxu0 0.0
    %659 = vmatpush2.xpose.msra.mxu0 0.0
    %660 = vmatprep.mubr.f32.mxu0 0.0
    %661 = vmatmul.mubr.f32.gmra.mxu0 %v592
    %v662 = vpop.f32.mrf.mxu0
    %v663 = vadd.f32 %v570, %v662
    %v664 = vpop.f32.mrf.mxu0
    %665 = vdwg.mxu0
    %667 = vrot.lane.b32.xlu0 %v542, 96
    %v668 = vpop.permute.xlu0 %667
    %v670 = vsel %vm590, %v556, 0
    %v672 = vsel %vm590, %v668, 0
    %674 = vmatprep.subr.mxu0 0.0
    %675 = vmatpush1.xpose.msra.mxu0 0.0
    %676 = vmatprep.subr.mxu0 0.0
    %677 = vmatpush1.xpose.msra.mxu0 0.0
    %678 = vmatprep.subr.mxu0 0.0
    %679 = vmatpush1.xpose.msra.mxu0 0.0
    %680 = vmatprep.subr.mxu0 0.0
    %681 = vmatpush1.xpose.msra.mxu0 0.0
    %682 = vmatprep.subr.mxu0 0.0
    %683 = vmatpush1.xpose.msra.mxu0 0.0
    %684 = vmatprep.subr.mxu0 0.0
    %685 = vmatpush1.xpose.msra.mxu0 0.0
    %686 = vmatprep.subr.mxu0 0.0
    %687 = vmatpush1.xpose.msra.mxu0 0.0
    %688 = vmatprep.subr.mxu0 0.0
    %689 = vmatpush1.xpose.msra.mxu0 0.0
    %690 = vmatprep.subr.mxu0 0.0
    %691 = vmatpush1.xpose.msra.mxu0 0.0
    %692 = vmatprep.subr.mxu0 0.0
    %693 = vmatpush1.xpose.msra.mxu0 0.0
    %694 = vmatprep.subr.mxu0 0.0
    %695 = vmatpush1.xpose.msra.mxu0 0.0
    %696 = vmatprep.subr.mxu0 0.0
    %697 = vmatpush1.xpose.msra.mxu0 0.0
    %698 = vmatprep.subr.mxu0 0.0
    %699 = vmatpush1.xpose.msra.mxu0 0.0
    %700 = vmatprep.subr.mxu0 0.0
    %701 = vmatpush1.xpose.msra.mxu0 0.0
    %702 = vmatprep.subr.mxu0 0.0
    %703 = vmatpush1.xpose.msra.mxu0 0.0
    %704 = vmatprep.subr.mxu0 0.0
    %705 = vmatpush1.xpose.msra.mxu0 %v672
    %706 = vmatprep.subr.mxu0 0.0
    %707 = vmatpush2.xpose.msra.mxu0 0.0
    %708 = vmatprep.subr.mxu0 0.0
    %709 = vmatpush2.xpose.msra.mxu0 0.0
    %710 = vmatprep.subr.mxu0 0.0
    %711 = vmatpush2.xpose.msra.mxu0 0.0
    %712 = vmatprep.subr.mxu0 0.0
    %713 = vmatpush2.xpose.msra.mxu0 0.0
    %714 = vmatprep.subr.mxu0 0.0
    %715 = vmatpush2.xpose.msra.mxu0 0.0
    %716 = vmatprep.subr.mxu0 0.0
    %717 = vmatpush2.xpose.msra.mxu0 0.0
    %718 = vmatprep.subr.mxu0 0.0
    %719 = vmatpush2.xpose.msra.mxu0 0.0
    %720 = vmatprep.subr.mxu0 0.0
    %721 = vmatpush2.xpose.msra.mxu0 0.0
    %722 = vmatprep.subr.mxu0 0.0
    %723 = vmatpush2.xpose.msra.mxu0 0.0
    %724 = vmatprep.subr.mxu0 0.0
    %725 = vmatpush2.xpose.msra.mxu0 0.0
    %726 = vmatprep.subr.mxu0 0.0
    %727 = vmatpush2.xpose.msra.mxu0 0.0
    %728 = vmatprep.subr.mxu0 0.0
    %729 = vmatpush2.xpose.msra.mxu0 0.0
    %730 = vmatprep.subr.mxu0 0.0
    %731 = vmatpush2.xpose.msra.mxu0 0.0
    %732 = vmatprep.subr.mxu0 0.0
    %733 = vmatpush2.xpose.msra.mxu0 0.0
    %734 = vmatprep.subr.mxu0 0.0
    %735 = vmatpush2.xpose.msra.mxu0 0.0
    %736 = vmatprep.subr.mxu0 0.0
    %737 = vmatpush2.xpose.msra.mxu0 0.0
    %738 = vmatprep.mubr.f32.mxu0 0.0
    %739 = vmatmul.mubr.f32.gmra.mxu0 %v670
    %v740 = vpop.f32.mrf.mxu0
    %v741 = vadd.f32 %v574, %v740
    %v742 = vpop.f32.mrf.mxu0
    %743 = vdwg.mxu0
    %745 = vrot.lane.b32.xlu0 %v547, 96
    %v746 = vpop.permute.xlu0 %745
    %v748 = vsel %vm590, %v557, 0
    %v750 = vsel %vm590, %v746, 0
    %752 = vmatprep.subr.mxu0 0.0
    %753 = vmatpush1.xpose.msra.mxu0 0.0
    %754 = vmatprep.subr.mxu0 0.0
    %755 = vmatpush1.xpose.msra.mxu0 0.0
    %756 = vmatprep.subr.mxu0 0.0
    %757 = vmatpush1.xpose.msra.mxu0 0.0
    %758 = vmatprep.subr.mxu0 0.0
    %759 = vmatpush1.xpose.msra.mxu0 0.0
    %760 = vmatprep.subr.mxu0 0.0
    %761 = vmatpush1.xpose.msra.mxu0 0.0
    %762 = vmatprep.subr.mxu0 0.0
    %763 = vmatpush1.xpose.msra.mxu0 0.0
    %764 = vmatprep.subr.mxu0 0.0
    %765 = vmatpush1.xpose.msra.mxu0 0.0
    %766 = vmatprep.subr.mxu0 0.0
    %767 = vmatpush1.xpose.msra.mxu0 0.0
    %768 = vmatprep.subr.mxu0 0.0
    %769 = vmatpush1.xpose.msra.mxu0 0.0
    %770 = vmatprep.subr.mxu0 0.0
    %771 = vmatpush1.xpose.msra.mxu0 0.0
    %772 = vmatprep.subr.mxu0 0.0
    %773 = vmatpush1.xpose.msra.mxu0 0.0
    %774 = vmatprep.subr.mxu0 0.0
    %775 = vmatpush1.xpose.msra.mxu0 0.0
    %776 = vmatprep.subr.mxu0 0.0
    %777 = vmatpush1.xpose.msra.mxu0 0.0
    %778 = vmatprep.subr.mxu0 0.0
    %779 = vmatpush1.xpose.msra.mxu0 0.0
    %780 = vmatprep.subr.mxu0 0.0
    %781 = vmatpush1.xpose.msra.mxu0 0.0
    %782 = vmatprep.subr.mxu0 0.0
    %783 = vmatpush1.xpose.msra.mxu0 %v750
    %784 = vmatprep.subr.mxu0 0.0
    %785 = vmatpush2.xpose.msra.mxu0 0.0
    %786 = vmatprep.subr.mxu0 0.0
    %787 = vmatpush2.xpose.msra.mxu0 0.0
    %788 = vmatprep.subr.mxu0 0.0
    %789 = vmatpush2.xpose.msra.mxu0 0.0
    %790 = vmatprep.subr.mxu0 0.0
    %791 = vmatpush2.xpose.msra.mxu0 0.0
    %792 = vmatprep.subr.mxu0 0.0
    %793 = vmatpush2.xpose.msra.mxu0 0.0
    %794 = vmatprep.subr.mxu0 0.0
    %795 = vmatpush2.xpose.msra.mxu0 0.0
    %796 = vmatprep.subr.mxu0 0.0
    %797 = vmatpush2.xpose.msra.mxu0 0.0
    %798 = vmatprep.subr.mxu0 0.0
    %799 = vmatpush2.xpose.msra.mxu0 0.0
    %800 = vmatprep.subr.mxu0 0.0
    %801 = vmatpush2.xpose.msra.mxu0 0.0
    %802 = vmatprep.subr.mxu0 0.0
    %803 = vmatpush2.xpose.msra.mxu0 0.0
    %804 = vmatprep.subr.mxu0 0.0
    %805 = vmatpush2.xpose.msra.mxu0 0.0
    %806 = vmatprep.subr.mxu0 0.0
    %807 = vmatpush2.xpose.msra.mxu0 0.0
    %808 = vmatprep.subr.mxu0 0.0
    %809 = vmatpush2.xpose.msra.mxu0 0.0
    %810 = vmatprep.subr.mxu0 0.0
    %811 = vmatpush2.xpose.msra.mxu0 0.0
    %812 = vmatprep.subr.mxu0 0.0
    %813 = vmatpush2.xpose.msra.mxu0 0.0
    %814 = vmatprep.subr.mxu0 0.0
    %815 = vmatpush2.xpose.msra.mxu0 0.0
    %816 = vmatprep.mubr.f32.mxu0 0.0
    %817 = vmatmul.mubr.f32.gmra.mxu0 %v748
    %v818 = vpop.f32.mrf.mxu0
    %v819 = vadd.f32 %v578, %v818
    %v820 = vpop.f32.mrf.mxu0
    %821 = vdwg.mxu0
    %823 = vrot.lane.b32.xlu0 %v552, 96
    %v824 = vpop.permute.xlu0 %823
    %v826 = vsel %vm590, %v558, 0
    %v828 = vsel %vm590, %v824, 0
    %830 = vmatprep.subr.mxu0 0.0
    %831 = vmatpush1.xpose.msra.mxu0 0.0
    %832 = vmatprep.subr.mxu0 0.0
    %833 = vmatpush1.xpose.msra.mxu0 0.0
    %834 = vmatprep.subr.mxu0 0.0
    %835 = vmatpush1.xpose.msra.mxu0 0.0
    %836 = vmatprep.subr.mxu0 0.0
    %837 = vmatpush1.xpose.msra.mxu0 0.0
    %838 = vmatprep.subr.mxu0 0.0
    %839 = vmatpush1.xpose.msra.mxu0 0.0
    %840 = vmatprep.subr.mxu0 0.0
    %841 = vmatpush1.xpose.msra.mxu0 0.0
    %842 = vmatprep.subr.mxu0 0.0
    %843 = vmatpush1.xpose.msra.mxu0 0.0
    %844 = vmatprep.subr.mxu0 0.0
    %845 = vmatpush1.xpose.msra.mxu0 0.0
    %846 = vmatprep.subr.mxu0 0.0
    %847 = vmatpush1.xpose.msra.mxu0 0.0
    %848 = vmatprep.subr.mxu0 0.0
    %849 = vmatpush1.xpose.msra.mxu0 0.0
    %850 = vmatprep.subr.mxu0 0.0
    %851 = vmatpush1.xpose.msra.mxu0 0.0
    %852 = vmatprep.subr.mxu0 0.0
    %853 = vmatpush1.xpose.msra.mxu0 0.0
    %854 = vmatprep.subr.mxu0 0.0
    %855 = vmatpush1.xpose.msra.mxu0 0.0
    %856 = vmatprep.subr.mxu0 0.0
    %857 = vmatpush1.xpose.msra.mxu0 0.0
    %858 = vmatprep.subr.mxu0 0.0
    %859 = vmatpush1.xpose.msra.mxu0 0.0
    %860 = vmatprep.subr.mxu0 0.0
    %861 = vmatpush1.xpose.msra.mxu0 %v828
    %862 = vmatprep.subr.mxu0 0.0
    %863 = vmatpush2.xpose.msra.mxu0 0.0
    %864 = vmatprep.subr.mxu0 0.0
    %865 = vmatpush2.xpose.msra.mxu0 0.0
    %866 = vmatprep.subr.mxu0 0.0
    %867 = vmatpush2.xpose.msra.mxu0 0.0
    %868 = vmatprep.subr.mxu0 0.0
    %869 = vmatpush2.xpose.msra.mxu0 0.0
    %870 = vmatprep.subr.mxu0 0.0
    %871 = vmatpush2.xpose.msra.mxu0 0.0
    %872 = vmatprep.subr.mxu0 0.0
    %873 = vmatpush2.xpose.msra.mxu0 0.0
    %874 = vmatprep.subr.mxu0 0.0
    %875 = vmatpush2.xpose.msra.mxu0 0.0
    %876 = vmatprep.subr.mxu0 0.0
    %877 = vmatpush2.xpose.msra.mxu0 0.0
    %878 = vmatprep.subr.mxu0 0.0
    %879 = vmatpush2.xpose.msra.mxu0 0.0
    %880 = vmatprep.subr.mxu0 0.0
    %881 = vmatpush2.xpose.msra.mxu0 0.0
    %882 = vmatprep.subr.mxu0 0.0
    %883 = vmatpush2.xpose.msra.mxu0 0.0
    %884 = vmatprep.subr.mxu0 0.0
    %885 = vmatpush2.xpose.msra.mxu0 0.0
    %886 = vmatprep.subr.mxu0 0.0
    %887 = vmatpush2.xpose.msra.mxu0 0.0
    %888 = vmatprep.subr.mxu0 0.0
    %889 = vmatpush2.xpose.msra.mxu0 0.0
    %890 = vmatprep.subr.mxu0 0.0
    %891 = vmatpush2.xpose.msra.mxu0 0.0
    %892 = vmatprep.subr.mxu0 0.0
    %893 = vmatpush2.xpose.msra.mxu0 0.0
    %894 = vmatprep.mubr.f32.mxu0 0.0
    %895 = vmatmul.mubr.f32.gmra.mxu0 %v826
    %v896 = vpop.f32.mrf.mxu0
    %v897 = vadd.f32 %v582, %v896
    %v898 = vpop.f32.mrf.mxu0
    %899 = vdwg.mxu0
    %v900 = vsel %vm590, %v663, -inf
    %901 = vmax.xlane.f32.xlu0 %v900
    %v902 = vpop.xlane.xlu0 %901
    %v903 = vsel %vm590, %v741, -inf
    %904 = vmax.xlane.f32.xlu0 %v903
    %v905 = vpop.xlane.xlu0 %904
    %v906 = vsel %vm590, %v819, -inf
    %907 = vmax.xlane.f32.xlu0 %v906
    %v908 = vpop.xlane.xlu0 %907
    %v909 = vsel %vm590, %v897, -inf
    %910 = vmax.xlane.f32.xlu0 %v909
    %v911 = vpop.xlane.xlu0 %910
    %v912 = vsub.f32 %v663, %v902
    %v913 = vsub.f32 %v741, %v905
    %v914 = vsub.f32 %v819, %v908
    %v915 = vsub.f32 %v897, %v911
    %v916 = vmul.f32 %v912, 1.442695
    %v917 = vpow.pop %v916
    %v918 = vmul.f32 %v913, 1.442695
    %v919 = vpow.pop %v918
    %v920 = vmul.f32 %v914, 1.442695
    %v921 = vpow.pop %v920
    %v922 = vmul.f32 %v915, 1.442695
    %v923 = vpow.pop %v922
    %v924 = vsel %vm590, %v917, 0.0
    %925 = vadd.xlane.f32.xlu0 %v924
    %v926 = vpop.xlane.xlu0 %925
    %v927 = vsel %vm590, %v919, 0.0
    %928 = vadd.xlane.f32.xlu0 %v927
    %v929 = vpop.xlane.xlu0 %928
    %v930 = vsel %vm590, %v921, 0.0
    %931 = vadd.xlane.f32.xlu0 %v930
    %v932 = vpop.xlane.xlu0 %931
    %v933 = vsel %vm590, %v923, 0.0
    %934 = vadd.xlane.f32.xlu0 %v933
    %v935 = vpop.xlane.xlu0 %934
    %v936 = vrcp.pop %v926
    %v937 = vrcp.pop %v929
    %v938 = vrcp.pop %v932
    %v939 = vrcp.pop %v935
    %v940 = vmul.f32 %v917, %v936
    %v941 = vmul.f32 %v919, %v937
    %v942 = vmul.f32 %v921, %v938
    %v943 = vmul.f32 %v923, %v939
    %944 = vrot.lane.b32.xlu0 %v537, 64
    %v945 = vpop.permute.xlu0 %944
    %v948 = vsel %vm590, %v940, 0
    %950 = vmatprep.subr.mxu0 0.0
    %951 = vmatpush1.msra.mxu0 0.0
    %952 = vmatprep.subr.mxu0 0.0
    %953 = vmatpush1.msra.mxu0 0.0
    %954 = vmatprep.subr.mxu0 0.0
    %955 = vmatpush1.msra.mxu0 0.0
    %956 = vmatprep.subr.mxu0 0.0
    %957 = vmatpush1.msra.mxu0 0.0
    %958 = vmatprep.subr.mxu0 0.0
    %959 = vmatpush1.msra.mxu0 0.0
    %960 = vmatprep.subr.mxu0 0.0
    %961 = vmatpush1.msra.mxu0 0.0
    %962 = vmatprep.subr.mxu0 0.0
    %963 = vmatpush1.msra.mxu0 0.0
    %964 = vmatprep.subr.mxu0 0.0
    %965 = vmatpush1.msra.mxu0 0.0
    %966 = vmatprep.subr.mxu0 0.0
    %967 = vmatpush1.msra.mxu0 0.0
    %968 = vmatprep.subr.mxu0 0.0
    %969 = vmatpush1.msra.mxu0 0.0
    %970 = vmatprep.subr.mxu0 0.0
    %971 = vmatpush1.msra.mxu0 0.0
    %972 = vmatprep.subr.mxu0 0.0
    %973 = vmatpush1.msra.mxu0 0.0
    %974 = vmatprep.subr.mxu0 0.0
    %975 = vmatpush1.msra.mxu0 0.0
    %976 = vmatprep.subr.mxu0 0.0
    %977 = vmatpush1.msra.mxu0 0.0
    %978 = vmatprep.subr.mxu0 0.0
    %979 = vmatpush1.msra.mxu0 0.0
    %980 = vmatprep.subr.mxu0 0.0
    %981 = vmatpush1.msra.mxu0 %v945
    %982 = vmatprep.subr.mxu0 0.0
    %983 = vmatpush2.msra.mxu0 0.0
    %984 = vmatprep.subr.mxu0 0.0
    %985 = vmatpush2.msra.mxu0 0.0
    %986 = vmatprep.subr.mxu0 0.0
    %987 = vmatpush2.msra.mxu0 0.0
    %988 = vmatprep.subr.mxu0 0.0
    %989 = vmatpush2.msra.mxu0 0.0
    %990 = vmatprep.subr.mxu0 0.0
    %991 = vmatpush2.msra.mxu0 0.0
    %992 = vmatprep.subr.mxu0 0.0
    %993 = vmatpush2.msra.mxu0 0.0
    %994 = vmatprep.subr.mxu0 0.0
    %995 = vmatpush2.msra.mxu0 0.0
    %996 = vmatprep.subr.mxu0 0.0
    %997 = vmatpush2.msra.mxu0 0.0
    %998 = vmatprep.subr.mxu0 0.0
    %999 = vmatpush2.msra.mxu0 0.0
    %1000 = vmatprep.subr.mxu0 0.0
    %1001 = vmatpush2.msra.mxu0 0.0
    %1002 = vmatprep.subr.mxu0 0.0
    %1003 = vmatpush2.msra.mxu0 0.0
    %1004 = vmatprep.subr.mxu0 0.0
    %1005 = vmatpush2.msra.mxu0 0.0
    %1006 = vmatprep.subr.mxu0 0.0
    %1007 = vmatpush2.msra.mxu0 0.0
    %1008 = vmatprep.subr.mxu0 0.0
    %1009 = vmatpush2.msra.mxu0 0.0
    %1010 = vmatprep.subr.mxu0 0.0
    %1011 = vmatpush2.msra.mxu0 0.0
    %1012 = vmatprep.subr.mxu0 0.0
    %1013 = vmatpush2.msra.mxu0 0.0
    %1014 = vmatprep.mubr.f32.mxu0 0.0
    %1015 = vmatmul.mubr.f32.gmra.mxu0 %v948
    %v1016 = vpop.f32.mrf.mxu0
    %v1017 = vadd.f32 0.0, %v1016
    %v1018 = vpop.f32.mrf.mxu0
    %1019 = vdwg.mxu0
    %1020 = vrot.lane.b32.xlu0 %v542, 64
    %v1021 = vpop.permute.xlu0 %1020
    %v1024 = vsel %vm590, %v941, 0
    %1026 = vmatprep.subr.mxu0 0.0
    %1027 = vmatpush1.msra.mxu0 0.0
    %1028 = vmatprep.subr.mxu0 0.0
    %1029 = vmatpush1.msra.mxu0 0.0
    %1030 = vmatprep.subr.mxu0 0.0
    %1031 = vmatpush1.msra.mxu0 0.0
    %1032 = vmatprep.subr.mxu0 0.0
    %1033 = vmatpush1.msra.mxu0 0.0
    %1034 = vmatprep.subr.mxu0 0.0
    %1035 = vmatpush1.msra.mxu0 0.0
    %1036 = vmatprep.subr.mxu0 0.0
    %1037 = vmatpush1.msra.mxu0 0.0
    %1038 = vmatprep.subr.mxu0 0.0
    %1039 = vmatpush1.msra.mxu0 0.0
    %1040 = vmatprep.subr.mxu0 0.0
    %1041 = vmatpush1.msra.mxu0 0.0
    %1042 = vmatprep.subr.mxu0 0.0
    %1043 = vmatpush1.msra.mxu0 0.0
    %1044 = vmatprep.subr.mxu0 0.0
    %1045 = vmatpush1.msra.mxu0 0.0
    %1046 = vmatprep.subr.mxu0 0.0
    %1047 = vmatpush1.msra.mxu0 0.0
    %1048 = vmatprep.subr.mxu0 0.0
    %1049 = vmatpush1.msra.mxu0 0.0
    %1050 = vmatprep.subr.mxu0 0.0
    %1051 = vmatpush1.msra.mxu0 0.0
    %1052 = vmatprep.subr.mxu0 0.0
    %1053 = vmatpush1.msra.mxu0 0.0
    %1054 = vmatprep.subr.mxu0 0.0
    %1055 = vmatpush1.msra.mxu0 0.0
    %1056 = vmatprep.subr.mxu0 0.0
    %1057 = vmatpush1.msra.mxu0 %v1021
    %1058 = vmatprep.subr.mxu0 0.0
    %1059 = vmatpush2.msra.mxu0 0.0
    %1060 = vmatprep.subr.mxu0 0.0
    %1061 = vmatpush2.msra.mxu0 0.0
    %1062 = vmatprep.subr.mxu0 0.0
    %1063 = vmatpush2.msra.mxu0 0.0
    %1064 = vmatprep.subr.mxu0 0.0
    %1065 = vmatpush2.msra.mxu0 0.0
    %1066 = vmatprep.subr.mxu0 0.0
    %1067 = vmatpush2.msra.mxu0 0.0
    %1068 = vmatprep.subr.mxu0 0.0
    %1069 = vmatpush2.msra.mxu0 0.0
    %1070 = vmatprep.subr.mxu0 0.0
    %1071 = vmatpush2.msra.mxu0 0.0
    %1072 = vmatprep.subr.mxu0 0.0
    %1073 = vmatpush2.msra.mxu0 0.0
    %1074 = vmatprep.subr.mxu0 0.0
    %1075 = vmatpush2.msra.mxu0 0.0
    %1076 = vmatprep.subr.mxu0 0.0
    %1077 = vmatpush2.msra.mxu0 0.0
    %1078 = vmatprep.subr.mxu0 0.0
    %1079 = vmatpush2.msra.mxu0 0.0
    %1080 = vmatprep.subr.mxu0 0.0
    %1081 = vmatpush2.msra.mxu0 0.0
    %1082 = vmatprep.subr.mxu0 0.0
    %1083 = vmatpush2.msra.mxu0 0.0
    %1084 = vmatprep.subr.mxu0 0.0
    %1085 = vmatpush2.msra.mxu0 0.0
    %1086 = vmatprep.subr.mxu0 0.0
    %1087 = vmatpush2.msra.mxu0 0.0
    %1088 = vmatprep.subr.mxu0 0.0
    %1089 = vmatpush2.msra.mxu0 0.0
    %1090 = vmatprep.mubr.f32.mxu0 0.0
    %1091 = vmatmul.mubr.f32.gmra.mxu0 %v1024
    %v1092 = vpop.f32.mrf.mxu0
    %v1093 = vadd.f32 0.0, %v1092
    %v1094 = vpop.f32.mrf.mxu0
    %1095 = vdwg.mxu0
    %1096 = vrot.lane.b32.xlu0 %v547, 64
    %v1097 = vpop.permute.xlu0 %1096
    %v1100 = vsel %vm590, %v942, 0
    %1102 = vmatprep.subr.mxu0 0.0
    %1103 = vmatpush1.msra.mxu0 0.0
    %1104 = vmatprep.subr.mxu0 0.0
    %1105 = vmatpush1.msra.mxu0 0.0
    %1106 = vmatprep.subr.mxu0 0.0
    %1107 = vmatpush1.msra.mxu0 0.0
    %1108 = vmatprep.subr.mxu0 0.0
    %1109 = vmatpush1.msra.mxu0 0.0
    %1110 = vmatprep.subr.mxu0 0.0
    %1111 = vmatpush1.msra.mxu0 0.0
    %1112 = vmatprep.subr.mxu0 0.0
    %1113 = vmatpush1.msra.mxu0 0.0
    %1114 = vmatprep.subr.mxu0 0.0
    %1115 = vmatpush1.msra.mxu0 0.0
    %1116 = vmatprep.subr.mxu0 0.0
    %1117 = vmatpush1.msra.mxu0 0.0
    %1118 = vmatprep.subr.mxu0 0.0
    %1119 = vmatpush1.msra.mxu0 0.0
    %1120 = vmatprep.subr.mxu0 0.0
    %1121 = vmatpush1.msra.mxu0 0.0
    %1122 = vmatprep.subr.mxu0 0.0
    %1123 = vmatpush1.msra.mxu0 0.0
    %1124 = vmatprep.subr.mxu0 0.0
    %1125 = vmatpush1.msra.mxu0 0.0
    %1126 = vmatprep.subr.mxu0 0.0
    %1127 = vmatpush1.msra.mxu0 0.0
    %1128 = vmatprep.subr.mxu0 0.0
    %1129 = vmatpush1.msra.mxu0 0.0
    %1130 = vmatprep.subr.mxu0 0.0
    %1131 = vmatpush1.msra.mxu0 0.0
    %1132 = vmatprep.subr.mxu0 0.0
    %1133 = vmatpush1.msra.mxu0 %v1097
    %1134 = vmatprep.subr.mxu0 0.0
    %1135 = vmatpush2.msra.mxu0 0.0
    %1136 = vmatprep.subr.mxu0 0.0
    %1137 = vmatpush2.msra.mxu0 0.0
    %1138 = vmatprep.subr.mxu0 0.0
    %1139 = vmatpush2.msra.mxu0 0.0
    %1140 = vmatprep.subr.mxu0 0.0
    %1141 = vmatpush2.msra.mxu0 0.0
    %1142 = vmatprep.subr.mxu0 0.0
    %1143 = vmatpush2.msra.mxu0 0.0
    %1144 = vmatprep.subr.mxu0 0.0
    %1145 = vmatpush2.msra.mxu0 0.0
    %1146 = vmatprep.subr.mxu0 0.0
    %1147 = vmatpush2.msra.mxu0 0.0
    %1148 = vmatprep.subr.mxu0 0.0
    %1149 = vmatpush2.msra.mxu0 0.0
    %1150 = vmatprep.subr.mxu0 0.0
    %1151 = vmatpush2.msra.mxu0 0.0
    %1152 = vmatprep.subr.mxu0 0.0
    %1153 = vmatpush2.msra.mxu0 0.0
    %1154 = vmatprep.subr.mxu0 0.0
    %1155 = vmatpush2.msra.mxu0 0.0
    %1156 = vmatprep.subr.mxu0 0.0
    %1157 = vmatpush2.msra.mxu0 0.0
    %1158 = vmatprep.subr.mxu0 0.0
    %1159 = vmatpush2.msra.mxu0 0.0
    %1160 = vmatprep.subr.mxu0 0.0
    %1161 = vmatpush2.msra.mxu0 0.0
    %1162 = vmatprep.subr.mxu0 0.0
    %1163 = vmatpush2.msra.mxu0 0.0
    %1164 = vmatprep.subr.mxu0 0.0
    %1165 = vmatpush2.msra.mxu0 0.0
    %1166 = vmatprep.mubr.f32.mxu0 0.0
    %1167 = vmatmul.mubr.f32.gmra.mxu0 %v1100
    %v1168 = vpop.f32.mrf.mxu0
    %v1169 = vadd.f32 0.0, %v1168
    %v1170 = vpop.f32.mrf.mxu0
    %1171 = vdwg.mxu0
    %1172 = vrot.lane.b32.xlu0 %v552, 64
    %v1173 = vpop.permute.xlu0 %1172
    %v1176 = vsel %vm590, %v943, 0
    %1178 = vmatprep.subr.mxu0 0.0
    %1179 = vmatpush1.msra.mxu0 0.0
    %1180 = vmatprep.subr.mxu0 0.0
    %1181 = vmatpush1.msra.mxu0 0.0
    %1182 = vmatprep.subr.mxu0 0.0
    %1183 = vmatpush1.msra.mxu0 0.0
    %1184 = vmatprep.subr.mxu0 0.0
    %1185 = vmatpush1.msra.mxu0 0.0
    %1186 = vmatprep.subr.mxu0 0.0
    %1187 = vmatpush1.msra.mxu0 0.0
    %1188 = vmatprep.subr.mxu0 0.0
    %1189 = vmatpush1.msra.mxu0 0.0
    %1190 = vmatprep.subr.mxu0 0.0
    %1191 = vmatpush1.msra.mxu0 0.0
    %1192 = vmatprep.subr.mxu0 0.0
    %1193 = vmatpush1.msra.mxu0 0.0
    %1194 = vmatprep.subr.mxu0 0.0
    %1195 = vmatpush1.msra.mxu0 0.0
    %1196 = vmatprep.subr.mxu0 0.0
    %1197 = vmatpush1.msra.mxu0 0.0
    %1198 = vmatprep.subr.mxu0 0.0
    %1199 = vmatpush1.msra.mxu0 0.0
    %1200 = vmatprep.subr.mxu0 0.0
    %1201 = vmatpush1.msra.mxu0 0.0
    %1202 = vmatprep.subr.mxu0 0.0
    %1203 = vmatpush1.msra.mxu0 0.0
    %1204 = vmatprep.subr.mxu0 0.0
    %1205 = vmatpush1.msra.mxu0 0.0
    %1206 = vmatprep.subr.mxu0 0.0
    %1207 = vmatpush1.msra.mxu0 0.0
    %1208 = vmatprep.subr.mxu0 0.0
    %1209 = vmatpush1.msra.mxu0 %v1173
    %1210 = vmatprep.subr.mxu0 0.0
    %1211 = vmatpush2.msra.mxu0 0.0
    %1212 = vmatprep.subr.mxu0 0.0
    %1213 = vmatpush2.msra.mxu0 0.0
    %1214 = vmatprep.subr.mxu0 0.0
    %1215 = vmatpush2.msra.mxu0 0.0
    %1216 = vmatprep.subr.mxu0 0.0
    %1217 = vmatpush2.msra.mxu0 0.0
    %1218 = vmatprep.subr.mxu0 0.0
    %1219 = vmatpush2.msra.mxu0 0.0
    %1220 = vmatprep.subr.mxu0 0.0
    %1221 = vmatpush2.msra.mxu0 0.0
    %1222 = vmatprep.subr.mxu0 0.0
    %1223 = vmatpush2.msra.mxu0 0.0
    %1224 = vmatprep.subr.mxu0 0.0
    %1225 = vmatpush2.msra.mxu0 0.0
    %1226 = vmatprep.subr.mxu0 0.0
    %1227 = vmatpush2.msra.mxu0 0.0
    %1228 = vmatprep.subr.mxu0 0.0
    %1229 = vmatpush2.msra.mxu0 0.0
    %1230 = vmatprep.subr.mxu0 0.0
    %1231 = vmatpush2.msra.mxu0 0.0
    %1232 = vmatprep.subr.mxu0 0.0
    %1233 = vmatpush2.msra.mxu0 0.0
    %1234 = vmatprep.subr.mxu0 0.0
    %1235 = vmatpush2.msra.mxu0 0.0
    %1236 = vmatprep.subr.mxu0 0.0
    %1237 = vmatpush2.msra.mxu0 0.0
    %1238 = vmatprep.subr.mxu0 0.0
    %1239 = vmatpush2.msra.mxu0 0.0
    %1240 = vmatprep.subr.mxu0 0.0
    %1241 = vmatpush2.msra.mxu0 0.0
    %1242 = vmatprep.mubr.f32.mxu0 0.0
    %1243 = vmatmul.mubr.f32.gmra.mxu0 %v1176
    %v1244 = vpop.f32.mrf.mxu0
    %v1245 = vadd.f32 0.0, %v1244
    %v1246 = vpop.f32.mrf.mxu0
    %1247 = vdwg.mxu0
    %1248 = vrot.lane.b32.xlu0 %v555, 120
    %v1249 = vpop.permute.xlu0 %1248
    %1250 = vrot.lane.b32.xlu0 %v537, 88
    %v1251 = vpop.permute.xlu0 %1250
    %v1252 = vsel %vm590, %v1249, 0
    %v1254 = vsel %vm590, %v1251, 0
    %1256 = vmatprep.subr.mxu0 0.0
    %1257 = vmatpush1.xpose.msra.mxu0 0.0
    %1258 = vmatprep.subr.mxu0 0.0
    %1259 = vmatpush1.xpose.msra.mxu0 0.0
    %1260 = vmatprep.subr.mxu0 0.0
    %1261 = vmatpush1.xpose.msra.mxu0 0.0
    %1262 = vmatprep.subr.mxu0 0.0
    %1263 = vmatpush1.xpose.msra.mxu0 0.0
    %1264 = vmatprep.subr.mxu0 0.0
    %1265 = vmatpush1.xpose.msra.mxu0 0.0
    %1266 = vmatprep.subr.mxu0 0.0
    %1267 = vmatpush1.xpose.msra.mxu0 0.0
    %1268 = vmatprep.subr.mxu0 0.0
    %1269 = vmatpush1.xpose.msra.mxu0 0.0
    %1270 = vmatprep.subr.mxu0 0.0
    %1271 = vmatpush1.xpose.msra.mxu0 0.0
    %1272 = vmatprep.subr.mxu0 0.0
    %1273 = vmatpush1.xpose.msra.mxu0 0.0
    %1274 = vmatprep.subr.mxu0 0.0
    %1275 = vmatpush1.xpose.msra.mxu0 0.0
    %1276 = vmatprep.subr.mxu0 0.0
    %1277 = vmatpush1.xpose.msra.mxu0 0.0
    %1278 = vmatprep.subr.mxu0 0.0
    %1279 = vmatpush1.xpose.msra.mxu0 0.0
    %1280 = vmatprep.subr.mxu0 0.0
    %1281 = vmatpush1.xpose.msra.mxu0 0.0
    %1282 = vmatprep.subr.mxu0 0.0
    %1283 = vmatpush1.xpose.msra.mxu0 0.0
    %1284 = vmatprep.subr.mxu0 0.0
    %1285 = vmatpush1.xpose.msra.mxu0 0.0
    %1286 = vmatprep.subr.mxu0 0.0
    %1287 = vmatpush1.xpose.msra.mxu0 %v1254
    %1288 = vmatprep.subr.mxu0 0.0
    %1289 = vmatpush2.xpose.msra.mxu0 0.0
    %1290 = vmatprep.subr.mxu0 0.0
    %1291 = vmatpush2.xpose.msra.mxu0 0.0
    %1292 = vmatprep.subr.mxu0 0.0
    %1293 = vmatpush2.xpose.msra.mxu0 0.0
    %1294 = vmatprep.subr.mxu0 0.0
    %1295 = vmatpush2.xpose.msra.mxu0 0.0
    %1296 = vmatprep.subr.mxu0 0.0
    %1297 = vmatpush2.xpose.msra.mxu0 0.0
    %1298 = vmatprep.subr.mxu0 0.0
    %1299 = vmatpush2.xpose.msra.mxu0 0.0
    %1300 = vmatprep.subr.mxu0 0.0
    %1301 = vmatpush2.xpose.msra.mxu0 0.0
    %1302 = vmatprep.subr.mxu0 0.0
    %1303 = vmatpush2.xpose.msra.mxu0 0.0
    %1304 = vmatprep.subr.mxu0 0.0
    %1305 = vmatpush2.xpose.msra.mxu0 0.0
    %1306 = vmatprep.subr.mxu0 0.0
    %1307 = vmatpush2.xpose.msra.mxu0 0.0
    %1308 = vmatprep.subr.mxu0 0.0
    %1309 = vmatpush2.xpose.msra.mxu0 0.0
    %1310 = vmatprep.subr.mxu0 0.0
    %1311 = vmatpush2.xpose.msra.mxu0 0.0
    %1312 = vmatprep.subr.mxu0 0.0
    %1313 = vmatpush2.xpose.msra.mxu0 0.0
    %1314 = vmatprep.subr.mxu0 0.0
    %1315 = vmatpush2.xpose.msra.mxu0 0.0
    %1316 = vmatprep.subr.mxu0 0.0
    %1317 = vmatpush2.xpose.msra.mxu0 0.0
    %1318 = vmatprep.subr.mxu0 0.0
    %1319 = vmatpush2.xpose.msra.mxu0 0.0
    %1320 = vmatprep.mubr.f32.mxu0 0.0
    %1321 = vmatmul.mubr.f32.gmra.mxu0 %v1252
    %v1322 = vpop.f32.mrf.mxu0
    %v1323 = vadd.f32 %v570, %v1322
    %v1324 = vpop.f32.mrf.mxu0
    %1325 = vdwg.mxu0
    %1326 = vrot.lane.b32.xlu0 %v556, 120
    %v1327 = vpop.permute.xlu0 %1326
    %1328 = vrot.lane.b32.xlu0 %v542, 88
    %v1329 = vpop.permute.xlu0 %1328
    %v1330 = vsel %vm590, %v1327, 0
    %v1332 = vsel %vm590, %v1329, 0
    %1334 = vmatprep.subr.mxu0 0.0
    %1335 = vmatpush1.xpose.msra.mxu0 0.0
    %1336 = vmatprep.subr.mxu0 0.0
    %1337 = vmatpush1.xpose.msra.mxu0 0.0
    %1338 = vmatprep.subr.mxu0 0.0
    %1339 = vmatpush1.xpose.msra.mxu0 0.0
    %1340 = vmatprep.subr.mxu0 0.0
    %1341 = vmatpush1.xpose.msra.mxu0 0.0
    %1342 = vmatprep.subr.mxu0 0.0
    %1343 = vmatpush1.xpose.msra.mxu0 0.0
    %1344 = vmatprep.subr.mxu0 0.0
    %1345 = vmatpush1.xpose.msra.mxu0 0.0
    %1346 = vmatprep.subr.mxu0 0.0
    %1347 = vmatpush1.xpose.msra.mxu0 0.0
    %1348 = vmatprep.subr.mxu0 0.0
    %1349 = vmatpush1.xpose.msra.mxu0 0.0
    %1350 = vmatprep.subr.mxu0 0.0
    %1351 = vmatpush1.xpose.msra.mxu0 0.0
    %1352 = vmatprep.subr.mxu0 0.0
    %1353 = vmatpush1.xpose.msra.mxu0 0.0
    %1354 = vmatprep.subr.mxu0 0.0
    %1355 = vmatpush1.xpose.msra.mxu0 0.0
    %1356 = vmatprep.subr.mxu0 0.0
    %1357 = vmatpush1.xpose.msra.mxu0 0.0
    %1358 = vmatprep.subr.mxu0 0.0
    %1359 = vmatpush1.xpose.msra.mxu0 0.0
    %1360 = vmatprep.subr.mxu0 0.0
    %1361 = vmatpush1.xpose.msra.mxu0 0.0
    %1362 = vmatprep.subr.mxu0 0.0
    %1363 = vmatpush1.xpose.msra.mxu0 0.0
    %1364 = vmatprep.subr.mxu0 0.0
    %1365 = vmatpush1.xpose.msra.mxu0 %v1332
    %1366 = vmatprep.subr.mxu0 0.0
    %1367 = vmatpush2.xpose.msra.mxu0 0.0
    %1368 = vmatprep.subr.mxu0 0.0
    %1369 = vmatpush2.xpose.msra.mxu0 0.0
    %1370 = vmatprep.subr.mxu0 0.0
    %1371 = vmatpush2.xpose.msra.mxu0 0.0
    %1372 = vmatprep.subr.mxu0 0.0
    %1373 = vmatpush2.xpose.msra.mxu0 0.0
    %1374 = vmatprep.subr.mxu0 0.0
    %1375 = vmatpush2.xpose.msra.mxu0 0.0
    %1376 = vmatprep.subr.mxu0 0.0
    %1377 = vmatpush2.xpose.msra.mxu0 0.0
    %1378 = vmatprep.subr.mxu0 0.0
    %1379 = vmatpush2.xpose.msra.mxu0 0.0
    %1380 = vmatprep.subr.mxu0 0.0
    %1381 = vmatpush2.xpose.msra.mxu0 0.0
    %1382 = vmatprep.subr.mxu0 0.0
    %1383 = vmatpush2.xpose.msra.mxu0 0.0
    %1384 = vmatprep.subr.mxu0 0.0
    %1385 = vmatpush2.xpose.msra.mxu0 0.0
    %1386 = vmatprep.subr.mxu0 0.0
    %1387 = vmatpush2.xpose.msra.mxu0 0.0
    %1388 = vmatprep.subr.mxu0 0.0
    %1389 = vmatpush2.xpose.msra.mxu0 0.0
    %1390 = vmatprep.subr.mxu0 0.0
    %1391 = vmatpush2.xpose.msra.mxu0 0.0
    %1392 = vmatprep.subr.mxu0 0.0
    %1393 = vmatpush2.xpose.msra.mxu0 0.0
    %1394 = vmatprep.subr.mxu0 0.0
    %1395 = vmatpush2.xpose.msra.mxu0 0.0
    %1396 = vmatprep.subr.mxu0 0.0
    %1397 = vmatpush2.xpose.msra.mxu0 0.0
    %1398 = vmatprep.mubr.f32.mxu0 0.0
    %1399 = vmatmul.mubr.f32.gmra.mxu0 %v1330
    %v1400 = vpop.f32.mrf.mxu0
    %v1401 = vadd.f32 %v574, %v1400
    %v1402 = vpop.f32.mrf.mxu0
    %1403 = vdwg.mxu0
    %1404 = vrot.lane.b32.xlu0 %v557, 120
    %v1405 = vpop.permute.xlu0 %1404
    %1406 = vrot.lane.b32.xlu0 %v547, 88
    %v1407 = vpop.permute.xlu0 %1406
    %v1408 = vsel %vm590, %v1405, 0
    %v1410 = vsel %vm590, %v1407, 0
    %1412 = vmatprep.subr.mxu0 0.0
    %1413 = vmatpush1.xpose.msra.mxu0 0.0
    %1414 = vmatprep.subr.mxu0 0.0
    %1415 = vmatpush1.xpose.msra.mxu0 0.0
    %1416 = vmatprep.subr.mxu0 0.0
    %1417 = vmatpush1.xpose.msra.mxu0 0.0
    %1418 = vmatprep.subr.mxu0 0.0
    %1419 = vmatpush1.xpose.msra.mxu0 0.0
    %1420 = vmatprep.subr.mxu0 0.0
    %1421 = vmatpush1.xpose.msra.mxu0 0.0
    %1422 = vmatprep.subr.mxu0 0.0
    %1423 = vmatpush1.xpose.msra.mxu0 0.0
    %1424 = vmatprep.subr.mxu0 0.0
    %1425 = vmatpush1.xpose.msra.mxu0 0.0
    %1426 = vmatprep.subr.mxu0 0.0
    %1427 = vmatpush1.xpose.msra.mxu0 0.0
    %1428 = vmatprep.subr.mxu0 0.0
    %1429 = vmatpush1.xpose.msra.mxu0 0.0
    %1430 = vmatprep.subr.mxu0 0.0
    %1431 = vmatpush1.xpose.msra.mxu0 0.0
    %1432 = vmatprep.subr.mxu0 0.0
    %1433 = vmatpush1.xpose.msra.mxu0 0.0
    %1434 = vmatprep.subr.mxu0 0.0
    %1435 = vmatpush1.xpose.msra.mxu0 0.0
    %1436 = vmatprep.subr.mxu0 0.0
    %1437 = vmatpush1.xpose.msra.mxu0 0.0
    %1438 = vmatprep.subr.mxu0 0.0
    %1439 = vmatpush1.xpose.msra.mxu0 0.0
    %1440 = vmatprep.subr.mxu0 0.0
    %1441 = vmatpush1.xpose.msra.mxu0 0.0
    %1442 = vmatprep.subr.mxu0 0.0
    %1443 = vmatpush1.xpose.msra.mxu0 %v1410
    %1444 = vmatprep.subr.mxu0 0.0
    %1445 = vmatpush2.xpose.msra.mxu0 0.0
    %1446 = vmatprep.subr.mxu0 0.0
    %1447 = vmatpush2.xpose.msra.mxu0 0.0
    %1448 = vmatprep.subr.mxu0 0.0
    %1449 = vmatpush2.xpose.msra.mxu0 0.0
    %1450 = vmatprep.subr.mxu0 0.0
    %1451 = vmatpush2.xpose.msra.mxu0 0.0
    %1452 = vmatprep.subr.mxu0 0.0
    %1453 = vmatpush2.xpose.msra.mxu0 0.0
    %1454 = vmatprep.subr.mxu0 0.0
    %1455 = vmatpush2.xpose.msra.mxu0 0.0
    %1456 = vmatprep.subr.mxu0 0.0
    %1457 = vmatpush2.xpose.msra.mxu0 0.0
    %1458 = vmatprep.subr.mxu0 0.0
    %1459 = vmatpush2.xpose.msra.mxu0 0.0
    %1460 = vmatprep.subr.mxu0 0.0
    %1461 = vmatpush2.xpose.msra.mxu0 0.0
    %1462 = vmatprep.subr.mxu0 0.0
    %1463 = vmatpush2.xpose.msra.mxu0 0.0
    %1464 = vmatprep.subr.mxu0 0.0
    %1465 = vmatpush2.xpose.msra.mxu0 0.0
    %1466 = vmatprep.subr.mxu0 0.0
    %1467 = vmatpush2.xpose.msra.mxu0 0.0
    %1468 = vmatprep.subr.mxu0 0.0
    %1469 = vmatpush2.xpose.msra.mxu0 0.0
    %1470 = vmatprep.subr.mxu0 0.0
    %1471 = vmatpush2.xpose.msra.mxu0 0.0
    %1472 = vmatprep.subr.mxu0 0.0
    %1473 = vmatpush2.xpose.msra.mxu0 0.0
    %1474 = vmatprep.subr.mxu0 0.0
    %1475 = vmatpush2.xpose.msra.mxu0 0.0
    %1476 = vmatprep.mubr.f32.mxu0 0.0
    %1477 = vmatmul.mubr.f32.gmra.mxu0 %v1408
    %v1478 = vpop.f32.mrf.mxu0
    %v1479 = vadd.f32 %v578, %v1478
    %v1480 = vpop.f32.mrf.mxu0
    %1481 = vdwg.mxu0
    %1482 = vrot.lane.b32.xlu0 %v558, 120
    %v1483 = vpop.permute.xlu0 %1482
    %1484 = vrot.lane.b32.xlu0 %v552, 88
    %v1485 = vpop.permute.xlu0 %1484
    %v1486 = vsel %vm590, %v1483, 0
    %v1488 = vsel %vm590, %v1485, 0
    %1490 = vmatprep.subr.mxu0 0.0
    %1491 = vmatpush1.xpose.msra.mxu0 0.0
    %1492 = vmatprep.subr.mxu0 0.0
    %1493 = vmatpush1.xpose.msra.mxu0 0.0
    %1494 = vmatprep.subr.mxu0 0.0
    %1495 = vmatpush1.xpose.msra.mxu0 0.0
    %1496 = vmatprep.subr.mxu0 0.0
    %1497 = vmatpush1.xpose.msra.mxu0 0.0
    %1498 = vmatprep.subr.mxu0 0.0
    %1499 = vmatpush1.xpose.msra.mxu0 0.0
    %1500 = vmatprep.subr.mxu0 0.0
    %1501 = vmatpush1.xpose.msra.mxu0 0.0
    %1502 = vmatprep.subr.mxu0 0.0
    %1503 = vmatpush1.xpose.msra.mxu0 0.0
    %1504 = vmatprep.subr.mxu0 0.0
    %1505 = vmatpush1.xpose.msra.mxu0 0.0
    %1506 = vmatprep.subr.mxu0 0.0
    %1507 = vmatpush1.xpose.msra.mxu0 0.0
    %1508 = vmatprep.subr.mxu0 0.0
    %1509 = vmatpush1.xpose.msra.mxu0 0.0
    %1510 = vmatprep.subr.mxu0 0.0
    %1511 = vmatpush1.xpose.msra.mxu0 0.0
    %1512 = vmatprep.subr.mxu0 0.0
    %1513 = vmatpush1.xpose.msra.mxu0 0.0
    %1514 = vmatprep.subr.mxu0 0.0
    %1515 = vmatpush1.xpose.msra.mxu0 0.0
    %1516 = vmatprep.subr.mxu0 0.0
    %1517 = vmatpush1.xpose.msra.mxu0 0.0
    %1518 = vmatprep.subr.mxu0 0.0
    %1519 = vmatpush1.xpose.msra.mxu0 0.0
    %1520 = vmatprep.subr.mxu0 0.0
    %1521 = vmatpush1.xpose.msra.mxu0 %v1488
    %1522 = vmatprep.subr.mxu0 0.0
    %1523 = vmatpush2.xpose.msra.mxu0 0.0
    %1524 = vmatprep.subr.mxu0 0.0
    %1525 = vmatpush2.xpose.msra.mxu0 0.0
    %1526 = vmatprep.subr.mxu0 0.0
    %1527 = vmatpush2.xpose.msra.mxu0 0.0
    %1528 = vmatprep.subr.mxu0 0.0
    %1529 = vmatpush2.xpose.msra.mxu0 0.0
    %1530 = vmatprep.subr.mxu0 0.0
    %1531 = vmatpush2.xpose.msra.mxu0 0.0
    %1532 = vmatprep.subr.mxu0 0.0
    %1533 = vmatpush2.xpose.msra.mxu0 0.0
    %1534 = vmatprep.subr.mxu0 0.0
    %1535 = vmatpush2.xpose.msra.mxu0 0.0
    %1536 = vmatprep.subr.mxu0 0.0
    %1537 = vmatpush2.xpose.msra.mxu0 0.0
    %1538 = vmatprep.subr.mxu0 0.0
    %1539 = vmatpush2.xpose.msra.mxu0 0.0
    %1540 = vmatprep.subr.mxu0 0.0
    %1541 = vmatpush2.xpose.msra.mxu0 0.0
    %1542 = vmatprep.subr.mxu0 0.0
    %1543 = vmatpush2.xpose.msra.mxu0 0.0
    %1544 = vmatprep.subr.mxu0 0.0
    %1545 = vmatpush2.xpose.msra.mxu0 0.0
    %1546 = vmatprep.subr.mxu0 0.0
    %1547 = vmatpush2.xpose.msra.mxu0 0.0
    %1548 = vmatprep.subr.mxu0 0.0
    %1549 = vmatpush2.xpose.msra.mxu0 0.0
    %1550 = vmatprep.subr.mxu0 0.0
    %1551 = vmatpush2.xpose.msra.mxu0 0.0
    %1552 = vmatprep.subr.mxu0 0.0
    %1553 = vmatpush2.xpose.msra.mxu0 0.0
    %1554 = vmatprep.mubr.f32.mxu0 0.0
    %1555 = vmatmul.mubr.f32.gmra.mxu0 %v1486
    %v1556 = vpop.f32.mrf.mxu0
    %v1557 = vadd.f32 %v582, %v1556
    %v1558 = vpop.f32.mrf.mxu0
    %1559 = vdwg.mxu0
    %v1560 = vsel %vm590, %v1323, -inf
    %1561 = vmax.xlane.f32.xlu0 %v1560
    %v1562 = vpop.xlane.xlu0 %1561
    %v1563 = vsel %vm590, %v1401, -inf
    %1564 = vmax.xlane.f32.xlu0 %v1563
    %v1565 = vpop.xlane.xlu0 %1564
    %v1566 = vsel %vm590, %v1479, -inf
    %1567 = vmax.xlane.f32.xlu0 %v1566
    %v1568 = vpop.xlane.xlu0 %1567
    %v1569 = vsel %vm590, %v1557, -inf
    %1570 = vmax.xlane.f32.xlu0 %v1569
    %v1571 = vpop.xlane.xlu0 %1570
    %v1572 = vsub.f32 %v1323, %v1562
    %v1573 = vsub.f32 %v1401, %v1565
    %v1574 = vsub.f32 %v1479, %v1568
    %v1575 = vsub.f32 %v1557, %v1571
    %v1576 = vmul.f32 %v1572, 1.442695
    %v1577 = vpow.pop %v1576
    %v1578 = vmul.f32 %v1573, 1.442695
    %v1579 = vpow.pop %v1578
    %v1580 = vmul.f32 %v1574, 1.442695
    %v1581 = vpow.pop %v1580
    %v1582 = vmul.f32 %v1575, 1.442695
    %v1583 = vpow.pop %v1582
    %v1584 = vsel %vm590, %v1577, 0.0
    %1585 = vadd.xlane.f32.xlu0 %v1584
    %v1586 = vpop.xlane.xlu0 %1585
    %v1587 = vsel %vm590, %v1579, 0.0
    %1588 = vadd.xlane.f32.xlu0 %v1587
    %v1589 = vpop.xlane.xlu0 %1588
    %v1590 = vsel %vm590, %v1581, 0.0
    %1591 = vadd.xlane.f32.xlu0 %v1590
    %v1592 = vpop.xlane.xlu0 %1591
    %v1593 = vsel %vm590, %v1583, 0.0
    %1594 = vadd.xlane.f32.xlu0 %v1593
    %v1595 = vpop.xlane.xlu0 %1594
    %v1596 = vrcp.pop %v1586
    %v1597 = vrcp.pop %v1589
    %v1598 = vrcp.pop %v1592
    %v1599 = vrcp.pop %v1595
    %v1600 = vmul.f32 %v1577, %v1596
    %v1601 = vmul.f32 %v1579, %v1597
    %v1602 = vmul.f32 %v1581, %v1598
    %v1603 = vmul.f32 %v1583, %v1599
    %1604 = vrot.lane.b32.xlu0 %v537, 56
    %v1605 = vpop.permute.xlu0 %1604
    %v1608 = vsel %vm590, %v1600, 0
    %1610 = vmatprep.subr.mxu0 0.0
    %1611 = vmatpush1.msra.mxu0 0.0
    %1612 = vmatprep.subr.mxu0 0.0
    %1613 = vmatpush1.msra.mxu0 0.0
    %1614 = vmatprep.subr.mxu0 0.0
    %1615 = vmatpush1.msra.mxu0 0.0
    %1616 = vmatprep.subr.mxu0 0.0
    %1617 = vmatpush1.msra.mxu0 0.0
    %1618 = vmatprep.subr.mxu0 0.0
    %1619 = vmatpush1.msra.mxu0 0.0
    %1620 = vmatprep.subr.mxu0 0.0
    %1621 = vmatpush1.msra.mxu0 0.0
    %1622 = vmatprep.subr.mxu0 0.0
    %1623 = vmatpush1.msra.mxu0 0.0
    %1624 = vmatprep.subr.mxu0 0.0
    %1625 = vmatpush1.msra.mxu0 0.0
    %1626 = vmatprep.subr.mxu0 0.0
    %1627 = vmatpush1.msra.mxu0 0.0
    %1628 = vmatprep.subr.mxu0 0.0
    %1629 = vmatpush1.msra.mxu0 0.0
    %1630 = vmatprep.subr.mxu0 0.0
    %1631 = vmatpush1.msra.mxu0 0.0
    %1632 = vmatprep.subr.mxu0 0.0
    %1633 = vmatpush1.msra.mxu0 0.0
    %1634 = vmatprep.subr.mxu0 0.0
    %1635 = vmatpush1.msra.mxu0 0.0
    %1636 = vmatprep.subr.mxu0 0.0
    %1637 = vmatpush1.msra.mxu0 0.0
    %1638 = vmatprep.subr.mxu0 0.0
    %1639 = vmatpush1.msra.mxu0 0.0
    %1640 = vmatprep.subr.mxu0 0.0
    %1641 = vmatpush1.msra.mxu0 %v1605
    %1642 = vmatprep.subr.mxu0 0.0
    %1643 = vmatpush2.msra.mxu0 0.0
    %1644 = vmatprep.subr.mxu0 0.0
    %1645 = vmatpush2.msra.mxu0 0.0
    %1646 = vmatprep.subr.mxu0 0.0
    %1647 = vmatpush2.msra.mxu0 0.0
    %1648 = vmatprep.subr.mxu0 0.0
    %1649 = vmatpush2.msra.mxu0 0.0
    %1650 = vmatprep.subr.mxu0 0.0
    %1651 = vmatpush2.msra.mxu0 0.0
    %1652 = vmatprep.subr.mxu0 0.0
    %1653 = vmatpush2.msra.mxu0 0.0
    %1654 = vmatprep.subr.mxu0 0.0
    %1655 = vmatpush2.msra.mxu0 0.0
    %1656 = vmatprep.subr.mxu0 0.0
    %1657 = vmatpush2.msra.mxu0 0.0
    %1658 = vmatprep.subr.mxu0 0.0
    %1659 = vmatpush2.msra.mxu0 0.0
    %1660 = vmatprep.subr.mxu0 0.0
    %1661 = vmatpush2.msra.mxu0 0.0
    %1662 = vmatprep.subr.mxu0 0.0
    %1663 = vmatpush2.msra.mxu0 0.0
    %1664 = vmatprep.subr.mxu0 0.0
    %1665 = vmatpush2.msra.mxu0 0.0
    %1666 = vmatprep.subr.mxu0 0.0
    %1667 = vmatpush2.msra.mxu0 0.0
    %1668 = vmatprep.subr.mxu0 0.0
    %1669 = vmatpush2.msra.mxu0 0.0
    %1670 = vmatprep.subr.mxu0 0.0
    %1671 = vmatpush2.msra.mxu0 0.0
    %1672 = vmatprep.subr.mxu0 0.0
    %1673 = vmatpush2.msra.mxu0 0.0
    %1674 = vmatprep.mubr.f32.mxu0 0.0
    %1675 = vmatmul.mubr.f32.gmra.mxu0 %v1608
    %v1676 = vpop.f32.mrf.mxu0
    %v1677 = vadd.f32 0.0, %v1676
    %v1678 = vpop.f32.mrf.mxu0
    %1679 = vdwg.mxu0
    %1680 = vrot.lane.b32.xlu0 %v542, 56
    %v1681 = vpop.permute.xlu0 %1680
    %v1684 = vsel %vm590, %v1601, 0
    %1686 = vmatprep.subr.mxu0 0.0
    %1687 = vmatpush1.msra.mxu0 0.0
    %1688 = vmatprep.subr.mxu0 0.0
    %1689 = vmatpush1.msra.mxu0 0.0
    %1690 = vmatprep.subr.mxu0 0.0
    %1691 = vmatpush1.msra.mxu0 0.0
    %1692 = vmatprep.subr.mxu0 0.0
    %1693 = vmatpush1.msra.mxu0 0.0
    %1694 = vmatprep.subr.mxu0 0.0
    %1695 = vmatpush1.msra.mxu0 0.0
    %1696 = vmatprep.subr.mxu0 0.0
    %1697 = vmatpush1.msra.mxu0 0.0
    %1698 = vmatprep.subr.mxu0 0.0
    %1699 = vmatpush1.msra.mxu0 0.0
    %1700 = vmatprep.subr.mxu0 0.0
    %1701 = vmatpush1.msra.mxu0 0.0
    %1702 = vmatprep.subr.mxu0 0.0
    %1703 = vmatpush1.msra.mxu0 0.0
    %1704 = vmatprep.subr.mxu0 0.0
    %1705 = vmatpush1.msra.mxu0 0.0
    %1706 = vmatprep.subr.mxu0 0.0
    %1707 = vmatpush1.msra.mxu0 0.0
    %1708 = vmatprep.subr.mxu0 0.0
    %1709 = vmatpush1.msra.mxu0 0.0
    %1710 = vmatprep.subr.mxu0 0.0
    %1711 = vmatpush1.msra.mxu0 0.0
    %1712 = vmatprep.subr.mxu0 0.0
    %1713 = vmatpush1.msra.mxu0 0.0
    %1714 = vmatprep.subr.mxu0 0.0
    %1715 = vmatpush1.msra.mxu0 0.0
    %1716 = vmatprep.subr.mxu0 0.0
    %1717 = vmatpush1.msra.mxu0 %v1681
    %1718 = vmatprep.subr.mxu0 0.0
    %1719 = vmatpush2.msra.mxu0 0.0
    %1720 = vmatprep.subr.mxu0 0.0
    %1721 = vmatpush2.msra.mxu0 0.0
    %1722 = vmatprep.subr.mxu0 0.0
    %1723 = vmatpush2.msra.mxu0 0.0
    %1724 = vmatprep.subr.mxu0 0.0
    %1725 = vmatpush2.msra.mxu0 0.0
    %1726 = vmatprep.subr.mxu0 0.0
    %1727 = vmatpush2.msra.mxu0 0.0
    %1728 = vmatprep.subr.mxu0 0.0
    %1729 = vmatpush2.msra.mxu0 0.0
    %1730 = vmatprep.subr.mxu0 0.0
    %1731 = vmatpush2.msra.mxu0 0.0
    %1732 = vmatprep.subr.mxu0 0.0
    %1733 = vmatpush2.msra.mxu0 0.0
    %1734 = vmatprep.subr.mxu0 0.0
    %1735 = vmatpush2.msra.mxu0 0.0
    %1736 = vmatprep.subr.mxu0 0.0
    %1737 = vmatpush2.msra.mxu0 0.0
    %1738 = vmatprep.subr.mxu0 0.0
    %1739 = vmatpush2.msra.mxu0 0.0
    %1740 = vmatprep.subr.mxu0 0.0
    %1741 = vmatpush2.msra.mxu0 0.0
    %1742 = vmatprep.subr.mxu0 0.0
    %1743 = vmatpush2.msra.mxu0 0.0
    %1744 = vmatprep.subr.mxu0 0.0
    %1745 = vmatpush2.msra.mxu0 0.0
    %1746 = vmatprep.subr.mxu0 0.0
    %1747 = vmatpush2.msra.mxu0 0.0
    %1748 = vmatprep.subr.mxu0 0.0
    %1749 = vmatpush2.msra.mxu0 0.0
    %1750 = vmatprep.mubr.f32.mxu0 0.0
    %1751 = vmatmul.mubr.f32.gmra.mxu0 %v1684
    %v1752 = vpop.f32.mrf.mxu0
    %v1753 = vadd.f32 0.0, %v1752
    %v1754 = vpop.f32.mrf.mxu0
    %1755 = vdwg.mxu0
    %1756 = vrot.lane.b32.xlu0 %v547, 56
    %v1757 = vpop.permute.xlu0 %1756
    %v1760 = vsel %vm590, %v1602, 0
    %1762 = vmatprep.subr.mxu0 0.0
    %1763 = vmatpush1.msra.mxu0 0.0
    %1764 = vmatprep.subr.mxu0 0.0
    %1765 = vmatpush1.msra.mxu0 0.0
    %1766 = vmatprep.subr.mxu0 0.0
    %1767 = vmatpush1.msra.mxu0 0.0
    %1768 = vmatprep.subr.mxu0 0.0
    %1769 = vmatpush1.msra.mxu0 0.0
    %1770 = vmatprep.subr.mxu0 0.0
    %1771 = vmatpush1.msra.mxu0 0.0
    %1772 = vmatprep.subr.mxu0 0.0
    %1773 = vmatpush1.msra.mxu0 0.0
    %1774 = vmatprep.subr.mxu0 0.0
    %1775 = vmatpush1.msra.mxu0 0.0
    %1776 = vmatprep.subr.mxu0 0.0
    %1777 = vmatpush1.msra.mxu0 0.0
    %1778 = vmatprep.subr.mxu0 0.0
    %1779 = vmatpush1.msra.mxu0 0.0
    %1780 = vmatprep.subr.mxu0 0.0
    %1781 = vmatpush1.msra.mxu0 0.0
    %1782 = vmatprep.subr.mxu0 0.0
    %1783 = vmatpush1.msra.mxu0 0.0
    %1784 = vmatprep.subr.mxu0 0.0
    %1785 = vmatpush1.msra.mxu0 0.0
    %1786 = vmatprep.subr.mxu0 0.0
    %1787 = vmatpush1.msra.mxu0 0.0
    %1788 = vmatprep.subr.mxu0 0.0
    %1789 = vmatpush1.msra.mxu0 0.0
    %1790 = vmatprep.subr.mxu0 0.0
    %1791 = vmatpush1.msra.mxu0 0.0
    %1792 = vmatprep.subr.mxu0 0.0
    %1793 = vmatpush1.msra.mxu0 %v1757
    %1794 = vmatprep.subr.mxu0 0.0
    %1795 = vmatpush2.msra.mxu0 0.0
    %1796 = vmatprep.subr.mxu0 0.0
    %1797 = vmatpush2.msra.mxu0 0.0
    %1798 = vmatprep.subr.mxu0 0.0
    %1799 = vmatpush2.msra.mxu0 0.0
    %1800 = vmatprep.subr.mxu0 0.0
    %1801 = vmatpush2.msra.mxu0 0.0
    %1802 = vmatprep.subr.mxu0 0.0
    %1803 = vmatpush2.msra.mxu0 0.0
    %1804 = vmatprep.subr.mxu0 0.0
    %1805 = vmatpush2.msra.mxu0 0.0
    %1806 = vmatprep.subr.mxu0 0.0
    %1807 = vmatpush2.msra.mxu0 0.0
    %1808 = vmatprep.subr.mxu0 0.0
    %1809 = vmatpush2.msra.mxu0 0.0
    %1810 = vmatprep.subr.mxu0 0.0
    %1811 = vmatpush2.msra.mxu0 0.0
    %1812 = vmatprep.subr.mxu0 0.0
    %1813 = vmatpush2.msra.mxu0 0.0
    %1814 = vmatprep.subr.mxu0 0.0
    %1815 = vmatpush2.msra.mxu0 0.0
    %1816 = vmatprep.subr.mxu0 0.0
    %1817 = vmatpush2.msra.mxu0 0.0
    %1818 = vmatprep.subr.mxu0 0.0
    %1819 = vmatpush2.msra.mxu0 0.0
    %1820 = vmatprep.subr.mxu0 0.0
    %1821 = vmatpush2.msra.mxu0 0.0
    %1822 = vmatprep.subr.mxu0 0.0
    %1823 = vmatpush2.msra.mxu0 0.0
    %1824 = vmatprep.subr.mxu0 0.0
    %1825 = vmatpush2.msra.mxu0 0.0
    %1826 = vmatprep.mubr.f32.mxu0 0.0
    %1827 = vmatmul.mubr.f32.gmra.mxu0 %v1760
    %v1828 = vpop.f32.mrf.mxu0
    %v1829 = vadd.f32 0.0, %v1828
    %v1830 = vpop.f32.mrf.mxu0
    %1831 = vdwg.mxu0
    %1832 = vrot.lane.b32.xlu0 %v552, 56
    %v1833 = vpop.permute.xlu0 %1832
    %v1836 = vsel %vm590, %v1603, 0
    %1838 = vmatprep.subr.mxu0 0.0
    %1839 = vmatpush1.msra.mxu0 0.0
    %1840 = vmatprep.subr.mxu0 0.0
    %1841 = vmatpush1.msra.mxu0 0.0
    %1842 = vmatprep.subr.mxu0 0.0
    %1843 = vmatpush1.msra.mxu0 0.0
    %1844 = vmatprep.subr.mxu0 0.0
    %1845 = vmatpush1.msra.mxu0 0.0
    %1846 = vmatprep.subr.mxu0 0.0
    %1847 = vmatpush1.msra.mxu0 0.0
    %1848 = vmatprep.subr.mxu0 0.0
    %1849 = vmatpush1.msra.mxu0 0.0
    %1850 = vmatprep.subr.mxu0 0.0
    %1851 = vmatpush1.msra.mxu0 0.0
    %1852 = vmatprep.subr.mxu0 0.0
    %1853 = vmatpush1.msra.mxu0 0.0
    %1854 = vmatprep.subr.mxu0 0.0
    %1855 = vmatpush1.msra.mxu0 0.0
    %1856 = vmatprep.subr.mxu0 0.0
    %1857 = vmatpush1.msra.mxu0 0.0
    %1858 = vmatprep.subr.mxu0 0.0
    %1859 = vmatpush1.msra.mxu0 0.0
    %1860 = vmatprep.subr.mxu0 0.0
    %1861 = vmatpush1.msra.mxu0 0.0
    %1862 = vmatprep.subr.mxu0 0.0
    %1863 = vmatpush1.msra.mxu0 0.0
    %1864 = vmatprep.subr.mxu0 0.0
    %1865 = vmatpush1.msra.mxu0 0.0
    %1866 = vmatprep.subr.mxu0 0.0
    %1867 = vmatpush1.msra.mxu0 0.0
    %1868 = vmatprep.subr.mxu0 0.0
    %1869 = vmatpush1.msra.mxu0 %v1833
    %1870 = vmatprep.subr.mxu0 0.0
    %1871 = vmatpush2.msra.mxu0 0.0
    %1872 = vmatprep.subr.mxu0 0.0
    %1873 = vmatpush2.msra.mxu0 0.0
    %1874 = vmatprep.subr.mxu0 0.0
    %1875 = vmatpush2.msra.mxu0 0.0
    %1876 = vmatprep.subr.mxu0 0.0
    %1877 = vmatpush2.msra.mxu0 0.0
    %1878 = vmatprep.subr.mxu0 0.0
    %1879 = vmatpush2.msra.mxu0 0.0
    %1880 = vmatprep.subr.mxu0 0.0
    %1881 = vmatpush2.msra.mxu0 0.0
    %1882 = vmatprep.subr.mxu0 0.0
    %1883 = vmatpush2.msra.mxu0 0.0
    %1884 = vmatprep.subr.mxu0 0.0
    %1885 = vmatpush2.msra.mxu0 0.0
    %1886 = vmatprep.subr.mxu0 0.0
    %1887 = vmatpush2.msra.mxu0 0.0
    %1888 = vmatprep.subr.mxu0 0.0
    %1889 = vmatpush2.msra.mxu0 0.0
    %1890 = vmatprep.subr.mxu0 0.0
    %1891 = vmatpush2.msra.mxu0 0.0
    %1892 = vmatprep.subr.mxu0 0.0
    %1893 = vmatpush2.msra.mxu0 0.0
    %1894 = vmatprep.subr.mxu0 0.0
    %1895 = vmatpush2.msra.mxu0 0.0
    %1896 = vmatprep.subr.mxu0 0.0
    %1897 = vmatpush2.msra.mxu0 0.0
    %1898 = vmatprep.subr.mxu0 0.0
    %1899 = vmatpush2.msra.mxu0 0.0
    %1900 = vmatprep.subr.mxu0 0.0
    %1901 = vmatpush2.msra.mxu0 0.0
    %1902 = vmatprep.mubr.f32.mxu0 0.0
    %1903 = vmatmul.mubr.f32.gmra.mxu0 %v1836
    %v1904 = vpop.f32.mrf.mxu0
    %v1905 = vadd.f32 0.0, %v1904
    %v1906 = vpop.f32.mrf.mxu0
    %1907 = vdwg.mxu0
    %v1909 = vsel %vm590, %v1677, 0
    %v1912 = vsel %vm590, %v1753, 0
    %v1915 = vsel %vm590, %v1829, 0
    %v1918 = vsel %vm590, %v1905, 0
    %1920 = vmatprep.subr.mxu0 0.0
    %1921 = vmatpush1.msra.mxu0 0.0
    %1922 = vmatprep.subr.mxu0 0.0
    %1923 = vmatpush1.msra.mxu0 0.0
    %1924 = vmatprep.subr.mxu0 0.0
    %1925 = vmatpush1.msra.mxu0 0.0
    %1926 = vmatprep.subr.mxu0 0.0
    %1927 = vmatpush1.msra.mxu0 0.0
    %1928 = vmatprep.subr.mxu0 0.0
    %1929 = vmatpush1.msra.mxu0 0.0
    %1930 = vmatprep.subr.mxu0 0.0
    %1931 = vmatpush1.msra.mxu0 0.0
    %1932 = vmatprep.subr.mxu0 0.0
    %1933 = vmatpush1.msra.mxu0 0.0
    %1934 = vmatprep.subr.mxu0 0.0
    %1935 = vmatpush1.msra.mxu0 0.0
    %1936 = vmatprep.subr.mxu0 0.0
    %1937 = vmatpush1.msra.mxu0 0.0
    %1938 = vmatprep.subr.mxu0 0.0
    %1939 = vmatpush1.msra.mxu0 0.0
    %1940 = vmatprep.subr.mxu0 0.0
    %1941 = vmatpush1.msra.mxu0 0.0
    %1942 = vmatprep.subr.mxu0 0.0
    %1943 = vmatpush1.msra.mxu0 0.0
    %1944 = vmatprep.subr.mxu0 0.0
    %1945 = vmatpush1.msra.mxu0 0.0
    %1946 = vmatprep.subr.mxu0 0.0
    %1947 = vmatpush1.msra.mxu0 0.0
    %1948 = vmatprep.subr.mxu0 0.0
    %1949 = vmatpush1.msra.mxu0 0.0
    %1950 = vmatprep.subr.mxu0 0.0
    %1951 = vmatpush1.msra.mxu0 %v560
    %1952 = vmatprep.subr.mxu0 0.0
    %1953 = vmatpush2.msra.mxu0 0.0
    %1954 = vmatprep.subr.mxu0 0.0
    %1955 = vmatpush2.msra.mxu0 0.0
    %1956 = vmatprep.subr.mxu0 0.0
    %1957 = vmatpush2.msra.mxu0 0.0
    %1958 = vmatprep.subr.mxu0 0.0
    %1959 = vmatpush2.msra.mxu0 0.0
    %1960 = vmatprep.subr.mxu0 0.0
    %1961 = vmatpush2.msra.mxu0 0.0
    %1962 = vmatprep.subr.mxu0 0.0
    %1963 = vmatpush2.msra.mxu0 0.0
    %1964 = vmatprep.subr.mxu0 0.0
    %1965 = vmatpush2.msra.mxu0 0.0
    %1966 = vmatprep.subr.mxu0 0.0
    %1967 = vmatpush2.msra.mxu0 0.0
    %1968 = vmatprep.subr.mxu0 0.0
    %1969 = vmatpush2.msra.mxu0 0.0
    %1970 = vmatprep.subr.mxu0 0.0
    %1971 = vmatpush2.msra.mxu0 0.0
    %1972 = vmatprep.subr.mxu0 0.0
    %1973 = vmatpush2.msra.mxu0 0.0
    %1974 = vmatprep.subr.mxu0 0.0
    %1975 = vmatpush2.msra.mxu0 0.0
    %1976 = vmatprep.subr.mxu0 0.0
    %1977 = vmatpush2.msra.mxu0 0.0
    %1978 = vmatprep.subr.mxu0 0.0
    %1979 = vmatpush2.msra.mxu0 0.0
    %1980 = vmatprep.subr.mxu0 0.0
    %1981 = vmatpush2.msra.mxu0 0.0
    %1982 = vmatprep.subr.mxu0 0.0
    %1983 = vmatpush2.msra.mxu0 0.0
    %1984 = vmatprep.mubr.f32.mxu0 0.0
    %1985 = vmatmul.mubr.f32.gmra.mxu0 %v1909
    %v1986 = vpop.f32.mrf.mxu0
    %v1987 = vadd.f32 0.0, %v1986
    %v1988 = vpop.f32.mrf.mxu0
    %1989 = vmatprep.mubr.f32.mxu0 0.0
    %1990 = vmatmul.mubr.f32.gmra.mxu0 %v1912
    %v1991 = vpop.f32.mrf.mxu0
    %v1992 = vadd.f32 0.0, %v1991
    %v1993 = vpop.f32.mrf.mxu0
    %1994 = vmatprep.mubr.f32.mxu0 0.0
    %1995 = vmatmul.mubr.f32.gmra.mxu0 %v1915
    %v1996 = vpop.f32.mrf.mxu0
    %v1997 = vadd.f32 0.0, %v1996
    %v1998 = vpop.f32.mrf.mxu0
    %1999 = vmatprep.mubr.f32.mxu0 0.0
    %2000 = vmatmul.mubr.f32.gmra.mxu0 %v1918
    %v2001 = vpop.f32.mrf.mxu0
    %v2002 = vadd.f32 0.0, %v2001
    %v2003 = vpop.f32.mrf.mxu0
    %2004 = vdwg.mxu0
    %v2006 = vsel %vm590, %v1017, 0
    %v2009 = vsel %vm590, %v1093, 0
    %v2012 = vsel %vm590, %v1169, 0
    %v2015 = vsel %vm590, %v1245, 0
    %2017 = vmatprep.subr.mxu0 0.0
    %2018 = vmatpush1.msra.mxu0 0.0
    %2019 = vmatprep.subr.mxu0 0.0
    %2020 = vmatpush1.msra.mxu0 0.0
    %2021 = vmatprep.subr.mxu0 0.0
    %2022 = vmatpush1.msra.mxu0 0.0
    %2023 = vmatprep.subr.mxu0 0.0
    %2024 = vmatpush1.msra.mxu0 0.0
    %2025 = vmatprep.subr.mxu0 0.0
    %2026 = vmatpush1.msra.mxu0 0.0
    %2027 = vmatprep.subr.mxu0 0.0
    %2028 = vmatpush1.msra.mxu0 0.0
    %2029 = vmatprep.subr.mxu0 0.0
    %2030 = vmatpush1.msra.mxu0 0.0
    %2031 = vmatprep.subr.mxu0 0.0
    %2032 = vmatpush1.msra.mxu0 0.0
    %2033 = vmatprep.subr.mxu0 0.0
    %2034 = vmatpush1.msra.mxu0 0.0
    %2035 = vmatprep.subr.mxu0 0.0
    %2036 = vmatpush1.msra.mxu0 0.0
    %2037 = vmatprep.subr.mxu0 0.0
    %2038 = vmatpush1.msra.mxu0 0.0
    %2039 = vmatprep.subr.mxu0 0.0
    %2040 = vmatpush1.msra.mxu0 0.0
    %2041 = vmatprep.subr.mxu0 0.0
    %2042 = vmatpush1.msra.mxu0 0.0
    %2043 = vmatprep.subr.mxu0 0.0
    %2044 = vmatpush1.msra.mxu0 0.0
    %2045 = vmatprep.subr.mxu0 0.0
    %2046 = vmatpush1.msra.mxu0 0.0
    %2047 = vmatprep.subr.mxu0 0.0
    %2048 = vmatpush1.msra.mxu0 %v559
    %2049 = vmatprep.subr.mxu0 0.0
    %2050 = vmatpush2.msra.mxu0 0.0
    %2051 = vmatprep.subr.mxu0 0.0
    %2052 = vmatpush2.msra.mxu0 0.0
    %2053 = vmatprep.subr.mxu0 0.0
    %2054 = vmatpush2.msra.mxu0 0.0
    %2055 = vmatprep.subr.mxu0 0.0
    %2056 = vmatpush2.msra.mxu0 0.0
    %2057 = vmatprep.subr.mxu0 0.0
    %2058 = vmatpush2.msra.mxu0 0.0
    %2059 = vmatprep.subr.mxu0 0.0
    %2060 = vmatpush2.msra.mxu0 0.0
    %2061 = vmatprep.subr.mxu0 0.0
    %2062 = vmatpush2.msra.mxu0 0.0
    %2063 = vmatprep.subr.mxu0 0.0
    %2064 = vmatpush2.msra.mxu0 0.0
    %2065 = vmatprep.subr.mxu0 0.0
    %2066 = vmatpush2.msra.mxu0 0.0
    %2067 = vmatprep.subr.mxu0 0.0
    %2068 = vmatpush2.msra.mxu0 0.0
    %2069 = vmatprep.subr.mxu0 0.0
    %2070 = vmatpush2.msra.mxu0 0.0
    %2071 = vmatprep.subr.mxu0 0.0
    %2072 = vmatpush2.msra.mxu0 0.0
    %2073 = vmatprep.subr.mxu0 0.0
    %2074 = vmatpush2.msra.mxu0 0.0
    %2075 = vmatprep.subr.mxu0 0.0
    %2076 = vmatpush2.msra.mxu0 0.0
    %2077 = vmatprep.subr.mxu0 0.0
    %2078 = vmatpush2.msra.mxu0 0.0
    %2079 = vmatprep.subr.mxu0 0.0
    %2080 = vmatpush2.msra.mxu0 0.0
    %2081 = vmatprep.mubr.f32.mxu0 0.0
    %2082 = vmatmul.mubr.f32.gmra.mxu0 %v2006
    %v2083 = vpop.f32.mrf.mxu0
    %v2084 = vadd.f32 %v1987, %v2083
    %v2085 = vpop.f32.mrf.mxu0
    %2086 = vmatprep.mubr.f32.mxu0 0.0
    %2087 = vmatmul.mubr.f32.gmra.mxu0 %v2009
    %v2088 = vpop.f32.mrf.mxu0
    %v2089 = vadd.f32 %v1992, %v2088
    %v2090 = vpop.f32.mrf.mxu0
    %2091 = vmatprep.mubr.f32.mxu0 0.0
    %2092 = vmatmul.mubr.f32.gmra.mxu0 %v2012
    %v2093 = vpop.f32.mrf.mxu0
    %v2094 = vadd.f32 %v1997, %v2093
    %v2095 = vpop.f32.mrf.mxu0
    %2096 = vmatprep.mubr.f32.mxu0 0.0
    %2097 = vmatmul.mubr.f32.gmra.mxu0 %v2015
    %v2098 = vpop.f32.mrf.mxu0
    %v2099 = vadd.f32 %v2002, %v2098
    %v2100 = vpop.f32.mrf.mxu0
    %2101 = vdwg.mxu0
    %2102 = vrot.lane.b32.xlu0 %v555, 112
    %v2103 = vpop.permute.xlu0 %2102
    %2104 = vrot.lane.b32.xlu0 %v537, 80
    %v2105 = vpop.permute.xlu0 %2104
    %v2106 = vsel %vm590, %v2103, 0
    %v2108 = vsel %vm590, %v2105, 0
    %2110 = vmatprep.subr.mxu0 0.0
    %2111 = vmatpush1.xpose.msra.mxu0 0.0
    %2112 = vmatprep.subr.mxu0 0.0
    %2113 = vmatpush1.xpose.msra.mxu0 0.0
    %2114 = vmatprep.subr.mxu0 0.0
    %2115 = vmatpush1.xpose.msra.mxu0 0.0
    %2116 = vmatprep.subr.mxu0 0.0
    %2117 = vmatpush1.xpose.msra.mxu0 0.0
    %2118 = vmatprep.subr.mxu0 0.0
    %2119 = vmatpush1.xpose.msra.mxu0 0.0
    %2120 = vmatprep.subr.mxu0 0.0
    %2121 = vmatpush1.xpose.msra.mxu0 0.0
    %2122 = vmatprep.subr.mxu0 0.0
    %2123 = vmatpush1.xpose.msra.mxu0 0.0
    %2124 = vmatprep.subr.mxu0 0.0
    %2125 = vmatpush1.xpose.msra.mxu0 0.0
    %2126 = vmatprep.subr.mxu0 0.0
    %2127 = vmatpush1.xpose.msra.mxu0 0.0
    %2128 = vmatprep.subr.mxu0 0.0
    %2129 = vmatpush1.xpose.msra.mxu0 0.0
    %2130 = vmatprep.subr.mxu0 0.0
    %2131 = vmatpush1.xpose.msra.mxu0 0.0
    %2132 = vmatprep.subr.mxu0 0.0
    %2133 = vmatpush1.xpose.msra.mxu0 0.0
    %2134 = vmatprep.subr.mxu0 0.0
    %2135 = vmatpush1.xpose.msra.mxu0 0.0
    %2136 = vmatprep.subr.mxu0 0.0
    %2137 = vmatpush1.xpose.msra.mxu0 0.0
    %2138 = vmatprep.subr.mxu0 0.0
    %2139 = vmatpush1.xpose.msra.mxu0 0.0
    %2140 = vmatprep.subr.mxu0 0.0
    %2141 = vmatpush1.xpose.msra.mxu0 %v2108
    %2142 = vmatprep.subr.mxu0 0.0
    %2143 = vmatpush2.xpose.msra.mxu0 0.0
    %2144 = vmatprep.subr.mxu0 0.0
    %2145 = vmatpush2.xpose.msra.mxu0 0.0
    %2146 = vmatprep.subr.mxu0 0.0
    %2147 = vmatpush2.xpose.msra.mxu0 0.0
    %2148 = vmatprep.subr.mxu0 0.0
    %2149 = vmatpush2.xpose.msra.mxu0 0.0
    %2150 = vmatprep.subr.mxu0 0.0
    %2151 = vmatpush2.xpose.msra.mxu0 0.0
    %2152 = vmatprep.subr.mxu0 0.0
    %2153 = vmatpush2.xpose.msra.mxu0 0.0
    %2154 = vmatprep.subr.mxu0 0.0
    %2155 = vmatpush2.xpose.msra.mxu0 0.0
    %2156 = vmatprep.subr.mxu0 0.0
    %2157 = vmatpush2.xpose.msra.mxu0 0.0
    %2158 = vmatprep.subr.mxu0 0.0
    %2159 = vmatpush2.xpose.msra.mxu0 0.0
    %2160 = vmatprep.subr.mxu0 0.0
    %2161 = vmatpush2.xpose.msra.mxu0 0.0
    %2162 = vmatprep.subr.mxu0 0.0
    %2163 = vmatpush2.xpose.msra.mxu0 0.0
    %2164 = vmatprep.subr.mxu0 0.0
    %2165 = vmatpush2.xpose.msra.mxu0 0.0
    %2166 = vmatprep.subr.mxu0 0.0
    %2167 = vmatpush2.xpose.msra.mxu0 0.0
    %2168 = vmatprep.subr.mxu0 0.0
    %2169 = vmatpush2.xpose.msra.mxu0 0.0
    %2170 = vmatprep.subr.mxu0 0.0
    %2171 = vmatpush2.xpose.msra.mxu0 0.0
    %2172 = vmatprep.subr.mxu0 0.0
    %2173 = vmatpush2.xpose.msra.mxu0 0.0
    %2174 = vmatprep.mubr.f32.mxu0 0.0
    %2175 = vmatmul.mubr.f32.gmra.mxu0 %v2106
    %v2176 = vpop.f32.mrf.mxu0
    %v2177 = vadd.f32 %v570, %v2176
    %v2178 = vpop.f32.mrf.mxu0
    %2179 = vdwg.mxu0
    %2180 = vrot.lane.b32.xlu0 %v556, 112
    %v2181 = vpop.permute.xlu0 %2180
    %2182 = vrot.lane.b32.xlu0 %v542, 80
    %v2183 = vpop.permute.xlu0 %2182
    %v2184 = vsel %vm590, %v2181, 0
    %v2186 = vsel %vm590, %v2183, 0
    %2188 = vmatprep.subr.mxu0 0.0
    %2189 = vmatpush1.xpose.msra.mxu0 0.0
    %2190 = vmatprep.subr.mxu0 0.0
    %2191 = vmatpush1.xpose.msra.mxu0 0.0
    %2192 = vmatprep.subr.mxu0 0.0
    %2193 = vmatpush1.xpose.msra.mxu0 0.0
    %2194 = vmatprep.subr.mxu0 0.0
    %2195 = vmatpush1.xpose.msra.mxu0 0.0
    %2196 = vmatprep.subr.mxu0 0.0
    %2197 = vmatpush1.xpose.msra.mxu0 0.0
    %2198 = vmatprep.subr.mxu0 0.0
    %2199 = vmatpush1.xpose.msra.mxu0 0.0
    %2200 = vmatprep.subr.mxu0 0.0
    %2201 = vmatpush1.xpose.msra.mxu0 0.0
    %2202 = vmatprep.subr.mxu0 0.0
    %2203 = vmatpush1.xpose.msra.mxu0 0.0
    %2204 = vmatprep.subr.mxu0 0.0
    %2205 = vmatpush1.xpose.msra.mxu0 0.0
    %2206 = vmatprep.subr.mxu0 0.0
    %2207 = vmatpush1.xpose.msra.mxu0 0.0
    %2208 = vmatprep.subr.mxu0 0.0
    %2209 = vmatpush1.xpose.msra.mxu0 0.0
    %2210 = vmatprep.subr.mxu0 0.0
    %2211 = vmatpush1.xpose.msra.mxu0 0.0
    %2212 = vmatprep.subr.mxu0 0.0
    %2213 = vmatpush1.xpose.msra.mxu0 0.0
    %2214 = vmatprep.subr.mxu0 0.0
    %2215 = vmatpush1.xpose.msra.mxu0 0.0
    %2216 = vmatprep.subr.mxu0 0.0
    %2217 = vmatpush1.xpose.msra.mxu0 0.0
    %2218 = vmatprep.subr.mxu0 0.0
    %2219 = vmatpush1.xpose.msra.mxu0 %v2186
    %2220 = vmatprep.subr.mxu0 0.0
    %2221 = vmatpush2.xpose.msra.mxu0 0.0
    %2222 = vmatprep.subr.mxu0 0.0
    %2223 = vmatpush2.xpose.msra.mxu0 0.0
    %2224 = vmatprep.subr.mxu0 0.0
    %2225 = vmatpush2.xpose.msra.mxu0 0.0
    %2226 = vmatprep.subr.mxu0 0.0
    %2227 = vmatpush2.xpose.msra.mxu0 0.0
    %2228 = vmatprep.subr.mxu0 0.0
    %2229 = vmatpush2.xpose.msra.mxu0 0.0
    %2230 = vmatprep.subr.mxu0 0.0
    %2231 = vmatpush2.xpose.msra.mxu0 0.0
    %2232 = vmatprep.subr.mxu0 0.0
    %2233 = vmatpush2.xpose.msra.mxu0 0.0
    %2234 = vmatprep.subr.mxu0 0.0
    %2235 = vmatpush2.xpose.msra.mxu0 0.0
    %2236 = vmatprep.subr.mxu0 0.0
    %2237 = vmatpush2.xpose.msra.mxu0 0.0
    %2238 = vmatprep.subr.mxu0 0.0
    %2239 = vmatpush2.xpose.msra.mxu0 0.0
    %2240 = vmatprep.subr.mxu0 0.0
    %2241 = vmatpush2.xpose.msra.mxu0 0.0
    %2242 = vmatprep.subr.mxu0 0.0
    %2243 = vmatpush2.xpose.msra.mxu0 0.0
    %2244 = vmatprep.subr.mxu0 0.0
    %2245 = vmatpush2.xpose.msra.mxu0 0.0
    %2246 = vmatprep.subr.mxu0 0.0
    %2247 = vmatpush2.xpose.msra.mxu0 0.0
    %2248 = vmatprep.subr.mxu0 0.0
    %2249 = vmatpush2.xpose.msra.mxu0 0.0
    %2250 = vmatprep.subr.mxu0 0.0
    %2251 = vmatpush2.xpose.msra.mxu0 0.0
    %2252 = vmatprep.mubr.f32.mxu0 0.0
    %2253 = vmatmul.mubr.f32.gmra.mxu0 %v2184
    %v2254 = vpop.f32.mrf.mxu0
    %v2255 = vadd.f32 %v574, %v2254
    %v2256 = vpop.f32.mrf.mxu0
    %2257 = vdwg.mxu0
    %2258 = vrot.lane.b32.xlu0 %v557, 112
    %v2259 = vpop.permute.xlu0 %2258
    %2260 = vrot.lane.b32.xlu0 %v547, 80
    %v2261 = vpop.permute.xlu0 %2260
    %v2262 = vsel %vm590, %v2259, 0
    %v2264 = vsel %vm590, %v2261, 0
    %2266 = vmatprep.subr.mxu0 0.0
    %2267 = vmatpush1.xpose.msra.mxu0 0.0
    %2268 = vmatprep.subr.mxu0 0.0
    %2269 = vmatpush1.xpose.msra.mxu0 0.0
    %2270 = vmatprep.subr.mxu0 0.0
    %2271 = vmatpush1.xpose.msra.mxu0 0.0
    %2272 = vmatprep.subr.mxu0 0.0
    %2273 = vmatpush1.xpose.msra.mxu0 0.0
    %2274 = vmatprep.subr.mxu0 0.0
    %2275 = vmatpush1.xpose.msra.mxu0 0.0
    %2276 = vmatprep.subr.mxu0 0.0
    %2277 = vmatpush1.xpose.msra.mxu0 0.0
    %2278 = vmatprep.subr.mxu0 0.0
    %2279 = vmatpush1.xpose.msra.mxu0 0.0
    %2280 = vmatprep.subr.mxu0 0.0
    %2281 = vmatpush1.xpose.msra.mxu0 0.0
    %2282 = vmatprep.subr.mxu0 0.0
    %2283 = vmatpush1.xpose.msra.mxu0 0.0
    %2284 = vmatprep.subr.mxu0 0.0
    %2285 = vmatpush1.xpose.msra.mxu0 0.0
    %2286 = vmatprep.subr.mxu0 0.0
    %2287 = vmatpush1.xpose.msra.mxu0 0.0
    %2288 = vmatprep.subr.mxu0 0.0
    %2289 = vmatpush1.xpose.msra.mxu0 0.0
    %2290 = vmatprep.subr.mxu0 0.0
    %2291 = vmatpush1.xpose.msra.mxu0 0.0
    %2292 = vmatprep.subr.mxu0 0.0
    %2293 = vmatpush1.xpose.msra.mxu0 0.0
    %2294 = vmatprep.subr.mxu0 0.0
    %2295 = vmatpush1.xpose.msra.mxu0 0.0
    %2296 = vmatprep.subr.mxu0 0.0
    %2297 = vmatpush1.xpose.msra.mxu0 %v2264
    %2298 = vmatprep.subr.mxu0 0.0
    %2299 = vmatpush2.xpose.msra.mxu0 0.0
    %2300 = vmatprep.subr.mxu0 0.0
    %2301 = vmatpush2.xpose.msra.mxu0 0.0
    %2302 = vmatprep.subr.mxu0 0.0
    %2303 = vmatpush2.xpose.msra.mxu0 0.0
    %2304 = vmatprep.subr.mxu0 0.0
    %2305 = vmatpush2.xpose.msra.mxu0 0.0
    %2306 = vmatprep.subr.mxu0 0.0
    %2307 = vmatpush2.xpose.msra.mxu0 0.0
    %2308 = vmatprep.subr.mxu0 0.0
    %2309 = vmatpush2.xpose.msra.mxu0 0.0
    %2310 = vmatprep.subr.mxu0 0.0
    %2311 = vmatpush2.xpose.msra.mxu0 0.0
    %2312 = vmatprep.subr.mxu0 0.0
    %2313 = vmatpush2.xpose.msra.mxu0 0.0
    %2314 = vmatprep.subr.mxu0 0.0
    %2315 = vmatpush2.xpose.msra.mxu0 0.0
    %2316 = vmatprep.subr.mxu0 0.0
    %2317 = vmatpush2.xpose.msra.mxu0 0.0
    %2318 = vmatprep.subr.mxu0 0.0
    %2319 = vmatpush2.xpose.msra.mxu0 0.0
    %2320 = vmatprep.subr.mxu0 0.0
    %2321 = vmatpush2.xpose.msra.mxu0 0.0
    %2322 = vmatprep.subr.mxu0 0.0
    %2323 = vmatpush2.xpose.msra.mxu0 0.0
    %2324 = vmatprep.subr.mxu0 0.0
    %2325 = vmatpush2.xpose.msra.mxu0 0.0
    %2326 = vmatprep.subr.mxu0 0.0
    %2327 = vmatpush2.xpose.msra.mxu0 0.0
    %2328 = vmatprep.subr.mxu0 0.0
    %2329 = vmatpush2.xpose.msra.mxu0 0.0
    %2330 = vmatprep.mubr.f32.mxu0 0.0
    %2331 = vmatmul.mubr.f32.gmra.mxu0 %v2262
    %v2332 = vpop.f32.mrf.mxu0
    %v2333 = vadd.f32 %v578, %v2332
    %v2334 = vpop.f32.mrf.mxu0
    %2335 = vdwg.mxu0
    %2336 = vrot.lane.b32.xlu0 %v558, 112
    %v2337 = vpop.permute.xlu0 %2336
    %2338 = vrot.lane.b32.xlu0 %v552, 80
    %v2339 = vpop.permute.xlu0 %2338
    %v2340 = vsel %vm590, %v2337, 0
    %v2342 = vsel %vm590, %v2339, 0
    %2344 = vmatprep.subr.mxu0 0.0
    %2345 = vmatpush1.xpose.msra.mxu0 0.0
    %2346 = vmatprep.subr.mxu0 0.0
    %2347 = vmatpush1.xpose.msra.mxu0 0.0
    %2348 = vmatprep.subr.mxu0 0.0
    %2349 = vmatpush1.xpose.msra.mxu0 0.0
    %2350 = vmatprep.subr.mxu0 0.0
    %2351 = vmatpush1.xpose.msra.mxu0 0.0
    %2352 = vmatprep.subr.mxu0 0.0
    %2353 = vmatpush1.xpose.msra.mxu0 0.0
    %2354 = vmatprep.subr.mxu0 0.0
    %2355 = vmatpush1.xpose.msra.mxu0 0.0
    %2356 = vmatprep.subr.mxu0 0.0
    %2357 = vmatpush1.xpose.msra.mxu0 0.0
    %2358 = vmatprep.subr.mxu0 0.0
    %2359 = vmatpush1.xpose.msra.mxu0 0.0
    %2360 = vmatprep.subr.mxu0 0.0
    %2361 = vmatpush1.xpose.msra.mxu0 0.0
    %2362 = vmatprep.subr.mxu0 0.0
    %2363 = vmatpush1.xpose.msra.mxu0 0.0
    %2364 = vmatprep.subr.mxu0 0.0
    %2365 = vmatpush1.xpose.msra.mxu0 0.0
    %2366 = vmatprep.subr.mxu0 0.0
    %2367 = vmatpush1.xpose.msra.mxu0 0.0
    %2368 = vmatprep.subr.mxu0 0.0
    %2369 = vmatpush1.xpose.msra.mxu0 0.0
    %2370 = vmatprep.subr.mxu0 0.0
    %2371 = vmatpush1.xpose.msra.mxu0 0.0
    %2372 = vmatprep.subr.mxu0 0.0
    %2373 = vmatpush1.xpose.msra.mxu0 0.0
    %2374 = vmatprep.subr.mxu0 0.0
    %2375 = vmatpush1.xpose.msra.mxu0 %v2342
    %2376 = vmatprep.subr.mxu0 0.0
    %2377 = vmatpush2.xpose.msra.mxu0 0.0
    %2378 = vmatprep.subr.mxu0 0.0
    %2379 = vmatpush2.xpose.msra.mxu0 0.0
    %2380 = vmatprep.subr.mxu0 0.0
    %2381 = vmatpush2.xpose.msra.mxu0 0.0
    %2382 = vmatprep.subr.mxu0 0.0
    %2383 = vmatpush2.xpose.msra.mxu0 0.0
    %2384 = vmatprep.subr.mxu0 0.0
    %2385 = vmatpush2.xpose.msra.mxu0 0.0
    %2386 = vmatprep.subr.mxu0 0.0
    %2387 = vmatpush2.xpose.msra.mxu0 0.0
    %2388 = vmatprep.subr.mxu0 0.0
    %2389 = vmatpush2.xpose.msra.mxu0 0.0
    %2390 = vmatprep.subr.mxu0 0.0
    %2391 = vmatpush2.xpose.msra.mxu0 0.0
    %2392 = vmatprep.subr.mxu0 0.0
    %2393 = vmatpush2.xpose.msra.mxu0 0.0
    %2394 = vmatprep.subr.mxu0 0.0
    %2395 = vmatpush2.xpose.msra.mxu0 0.0
    %2396 = vmatprep.subr.mxu0 0.0
    %2397 = vmatpush2.xpose.msra.mxu0 0.0
    %2398 = vmatprep.subr.mxu0 0.0
    %2399 = vmatpush2.xpose.msra.mxu0 0.0
    %2400 = vmatprep.subr.mxu0 0.0
    %2401 = vmatpush2.xpose.msra.mxu0 0.0
    %2402 = vmatprep.subr.mxu0 0.0
    %2403 = vmatpush2.xpose.msra.mxu0 0.0
    %2404 = vmatprep.subr.mxu0 0.0
    %2405 = vmatpush2.xpose.msra.mxu0 0.0
    %2406 = vmatprep.subr.mxu0 0.0
    %2407 = vmatpush2.xpose.msra.mxu0 0.0
    %2408 = vmatprep.mubr.f32.mxu0 0.0
    %2409 = vmatmul.mubr.f32.gmra.mxu0 %v2340
    %v2410 = vpop.f32.mrf.mxu0
    %v2411 = vadd.f32 %v582, %v2410
    %v2412 = vpop.f32.mrf.mxu0
    %2413 = vdwg.mxu0
    %v2414 = vsel %vm590, %v2177, -inf
    %2415 = vmax.xlane.f32.xlu0 %v2414
    %v2416 = vpop.xlane.xlu0 %2415
    %v2417 = vsel %vm590, %v2255, -inf
    %2418 = vmax.xlane.f32.xlu0 %v2417
    %v2419 = vpop.xlane.xlu0 %2418
    %v2420 = vsel %vm590, %v2333, -inf
    %2421 = vmax.xlane.f32.xlu0 %v2420
    %v2422 = vpop.xlane.xlu0 %2421
    %v2423 = vsel %vm590, %v2411, -inf
    %2424 = vmax.xlane.f32.xlu0 %v2423
    %v2425 = vpop.xlane.xlu0 %2424
    %v2426 = vsub.f32 %v2177, %v2416
    %v2427 = vsub.f32 %v2255, %v2419
    %v2428 = vsub.f32 %v2333, %v2422
    %v2429 = vsub.f32 %v2411, %v2425
    %v2430 = vmul.f32 %v2426, 1.442695
    %v2431 = vpow.pop %v2430
    %v2432 = vmul.f32 %v2427, 1.442695
    %v2433 = vpow.pop %v2432
    %v2434 = vmul.f32 %v2428, 1.442695
    %v2435 = vpow.pop %v2434
    %v2436 = vmul.f32 %v2429, 1.442695
    %v2437 = vpow.pop %v2436
    %v2438 = vsel %vm590, %v2431, 0.0
    %2439 = vadd.xlane.f32.xlu0 %v2438
    %v2440 = vpop.xlane.xlu0 %2439
    %v2441 = vsel %vm590, %v2433, 0.0
    %2442 = vadd.xlane.f32.xlu0 %v2441
    %v2443 = vpop.xlane.xlu0 %2442
    %v2444 = vsel %vm590, %v2435, 0.0
    %2445 = vadd.xlane.f32.xlu0 %v2444
    %v2446 = vpop.xlane.xlu0 %2445
    %v2447 = vsel %vm590, %v2437, 0.0
    %2448 = vadd.xlane.f32.xlu0 %v2447
    %v2449 = vpop.xlane.xlu0 %2448
    %v2450 = vrcp.pop %v2440
    %v2451 = vrcp.pop %v2443
    %v2452 = vrcp.pop %v2446
    %v2453 = vrcp.pop %v2449
    %v2454 = vmul.f32 %v2431, %v2450
    %v2455 = vmul.f32 %v2433, %v2451
    %v2456 = vmul.f32 %v2435, %v2452
    %v2457 = vmul.f32 %v2437, %v2453
    %2458 = vrot.lane.b32.xlu0 %v537, 48
    %v2459 = vpop.permute.xlu0 %2458
    %v2462 = vsel %vm590, %v2454, 0
    %2464 = vmatprep.subr.mxu0 0.0
    %2465 = vmatpush1.msra.mxu0 0.0
    %2466 = vmatprep.subr.mxu0 0.0
    %2467 = vmatpush1.msra.mxu0 0.0
    %2468 = vmatprep.subr.mxu0 0.0
    %2469 = vmatpush1.msra.mxu0 0.0
    %2470 = vmatprep.subr.mxu0 0.0
    %2471 = vmatpush1.msra.mxu0 0.0
    %2472 = vmatprep.subr.mxu0 0.0
    %2473 = vmatpush1.msra.mxu0 0.0
    %2474 = vmatprep.subr.mxu0 0.0
    %2475 = vmatpush1.msra.mxu0 0.0
    %2476 = vmatprep.subr.mxu0 0.0
    %2477 = vmatpush1.msra.mxu0 0.0
    %2478 = vmatprep.subr.mxu0 0.0
    %2479 = vmatpush1.msra.mxu0 0.0
    %2480 = vmatprep.subr.mxu0 0.0
    %2481 = vmatpush1.msra.mxu0 0.0
    %2482 = vmatprep.subr.mxu0 0.0
    %2483 = vmatpush1.msra.mxu0 0.0
    %2484 = vmatprep.subr.mxu0 0.0
    %2485 = vmatpush1.msra.mxu0 0.0
    %2486 = vmatprep.subr.mxu0 0.0
    %2487 = vmatpush1.msra.mxu0 0.0
    %2488 = vmatprep.subr.mxu0 0.0
    %2489 = vmatpush1.msra.mxu0 0.0
    %2490 = vmatprep.subr.mxu0 0.0
    %2491 = vmatpush1.msra.mxu0 0.0
    %2492 = vmatprep.subr.mxu0 0.0
    %2493 = vmatpush1.msra.mxu0 0.0
    %2494 = vmatprep.subr.mxu0 0.0
    %2495 = vmatpush1.msra.mxu0 %v2459
    %2496 = vmatprep.subr.mxu0 0.0
    %2497 = vmatpush2.msra.mxu0 0.0
    %2498 = vmatprep.subr.mxu0 0.0
    %2499 = vmatpush2.msra.mxu0 0.0
    %2500 = vmatprep.subr.mxu0 0.0
    %2501 = vmatpush2.msra.mxu0 0.0
    %2502 = vmatprep.subr.mxu0 0.0
    %2503 = vmatpush2.msra.mxu0 0.0
    %2504 = vmatprep.subr.mxu0 0.0
    %2505 = vmatpush2.msra.mxu0 0.0
    %2506 = vmatprep.subr.mxu0 0.0
    %2507 = vmatpush2.msra.mxu0 0.0
    %2508 = vmatprep.subr.mxu0 0.0
    %2509 = vmatpush2.msra.mxu0 0.0
    %2510 = vmatprep.subr.mxu0 0.0
    %2511 = vmatpush2.msra.mxu0 0.0
    %2512 = vmatprep.subr.mxu0 0.0
    %2513 = vmatpush2.msra.mxu0 0.0
    %2514 = vmatprep.subr.mxu0 0.0
    %2515 = vmatpush2.msra.mxu0 0.0
    %2516 = vmatprep.subr.mxu0 0.0
    %2517 = vmatpush2.msra.mxu0 0.0
    %2518 = vmatprep.subr.mxu0 0.0
    %2519 = vmatpush2.msra.mxu0 0.0
    %2520 = vmatprep.subr.mxu0 0.0
    %2521 = vmatpush2.msra.mxu0 0.0
    %2522 = vmatprep.subr.mxu0 0.0
    %2523 = vmatpush2.msra.mxu0 0.0
    %2524 = vmatprep.subr.mxu0 0.0
    %2525 = vmatpush2.msra.mxu0 0.0
    %2526 = vmatprep.subr.mxu0 0.0
    %2527 = vmatpush2.msra.mxu0 0.0
    %2528 = vmatprep.mubr.f32.mxu0 0.0
    %2529 = vmatmul.mubr.f32.gmra.mxu0 %v2462
    %v2530 = vpop.f32.mrf.mxu0
    %v2531 = vadd.f32 0.0, %v2530
    %v2532 = vpop.f32.mrf.mxu0
    %2533 = vdwg.mxu0
    %2534 = vrot.lane.b32.xlu0 %v542, 48
    %v2535 = vpop.permute.xlu0 %2534
    %v2538 = vsel %vm590, %v2455, 0
    %2540 = vmatprep.subr.mxu0 0.0
    %2541 = vmatpush1.msra.mxu0 0.0
    %2542 = vmatprep.subr.mxu0 0.0
    %2543 = vmatpush1.msra.mxu0 0.0
    %2544 = vmatprep.subr.mxu0 0.0
    %2545 = vmatpush1.msra.mxu0 0.0
    %2546 = vmatprep.subr.mxu0 0.0
    %2547 = vmatpush1.msra.mxu0 0.0
    %2548 = vmatprep.subr.mxu0 0.0
    %2549 = vmatpush1.msra.mxu0 0.0
    %2550 = vmatprep.subr.mxu0 0.0
    %2551 = vmatpush1.msra.mxu0 0.0
    %2552 = vmatprep.subr.mxu0 0.0
    %2553 = vmatpush1.msra.mxu0 0.0
    %2554 = vmatprep.subr.mxu0 0.0
    %2555 = vmatpush1.msra.mxu0 0.0
    %2556 = vmatprep.subr.mxu0 0.0
    %2557 = vmatpush1.msra.mxu0 0.0
    %2558 = vmatprep.subr.mxu0 0.0
    %2559 = vmatpush1.msra.mxu0 0.0
    %2560 = vmatprep.subr.mxu0 0.0
    %2561 = vmatpush1.msra.mxu0 0.0
    %2562 = vmatprep.subr.mxu0 0.0
    %2563 = vmatpush1.msra.mxu0 0.0
    %2564 = vmatprep.subr.mxu0 0.0
    %2565 = vmatpush1.msra.mxu0 0.0
    %2566 = vmatprep.subr.mxu0 0.0
    %2567 = vmatpush1.msra.mxu0 0.0
    %2568 = vmatprep.subr.mxu0 0.0
    %2569 = vmatpush1.msra.mxu0 0.0
    %2570 = vmatprep.subr.mxu0 0.0
    %2571 = vmatpush1.msra.mxu0 %v2535
    %2572 = vmatprep.subr.mxu0 0.0
    %2573 = vmatpush2.msra.mxu0 0.0
    %2574 = vmatprep.subr.mxu0 0.0
    %2575 = vmatpush2.msra.mxu0 0.0
    %2576 = vmatprep.subr.mxu0 0.0
    %2577 = vmatpush2.msra.mxu0 0.0
    %2578 = vmatprep.subr.mxu0 0.0
    %2579 = vmatpush2.msra.mxu0 0.0
    %2580 = vmatprep.subr.mxu0 0.0
    %2581 = vmatpush2.msra.mxu0 0.0
    %2582 = vmatprep.subr.mxu0 0.0
    %2583 = vmatpush2.msra.mxu0 0.0
    %2584 = vmatprep.subr.mxu0 0.0
    %2585 = vmatpush2.msra.mxu0 0.0
    %2586 = vmatprep.subr.mxu0 0.0
    %2587 = vmatpush2.msra.mxu0 0.0
    %2588 = vmatprep.subr.mxu0 0.0
    %2589 = vmatpush2.msra.mxu0 0.0
    %2590 = vmatprep.subr.mxu0 0.0
    %2591 = vmatpush2.msra.mxu0 0.0
    %2592 = vmatprep.subr.mxu0 0.0
    %2593 = vmatpush2.msra.mxu0 0.0
    %2594 = vmatprep.subr.mxu0 0.0
    %2595 = vmatpush2.msra.mxu0 0.0
    %2596 = vmatprep.subr.mxu0 0.0
    %2597 = vmatpush2.msra.mxu0 0.0
    %2598 = vmatprep.subr.mxu0 0.0
    %2599 = vmatpush2.msra.mxu0 0.0
    %2600 = vmatprep.subr.mxu0 0.0
    %2601 = vmatpush2.msra.mxu0 0.0
    %2602 = vmatprep.subr.mxu0 0.0
    %2603 = vmatpush2.msra.mxu0 0.0
    %2604 = vmatprep.mubr.f32.mxu0 0.0
    %2605 = vmatmul.mubr.f32.gmra.mxu0 %v2538
    %v2606 = vpop.f32.mrf.mxu0
    %v2607 = vadd.f32 0.0, %v2606
    %v2608 = vpop.f32.mrf.mxu0
    %2609 = vdwg.mxu0
    %2610 = vrot.lane.b32.xlu0 %v547, 48
    %v2611 = vpop.permute.xlu0 %2610
    %v2614 = vsel %vm590, %v2456, 0
    %2616 = vmatprep.subr.mxu0 0.0
    %2617 = vmatpush1.msra.mxu0 0.0
    %2618 = vmatprep.subr.mxu0 0.0
    %2619 = vmatpush1.msra.mxu0 0.0
    %2620 = vmatprep.subr.mxu0 0.0
    %2621 = vmatpush1.msra.mxu0 0.0
    %2622 = vmatprep.subr.mxu0 0.0
    %2623 = vmatpush1.msra.mxu0 0.0
    %2624 = vmatprep.subr.mxu0 0.0
    %2625 = vmatpush1.msra.mxu0 0.0
    %2626 = vmatprep.subr.mxu0 0.0
    %2627 = vmatpush1.msra.mxu0 0.0
    %2628 = vmatprep.subr.mxu0 0.0
    %2629 = vmatpush1.msra.mxu0 0.0
    %2630 = vmatprep.subr.mxu0 0.0
    %2631 = vmatpush1.msra.mxu0 0.0
    %2632 = vmatprep.subr.mxu0 0.0
    %2633 = vmatpush1.msra.mxu0 0.0
    %2634 = vmatprep.subr.mxu0 0.0
    %2635 = vmatpush1.msra.mxu0 0.0
    %2636 = vmatprep.subr.mxu0 0.0
    %2637 = vmatpush1.msra.mxu0 0.0
    %2638 = vmatprep.subr.mxu0 0.0
    %2639 = vmatpush1.msra.mxu0 0.0
    %2640 = vmatprep.subr.mxu0 0.0
    %2641 = vmatpush1.msra.mxu0 0.0
    %2642 = vmatprep.subr.mxu0 0.0
    %2643 = vmatpush1.msra.mxu0 0.0
    %2644 = vmatprep.subr.mxu0 0.0
    %2645 = vmatpush1.msra.mxu0 0.0
    %2646 = vmatprep.subr.mxu0 0.0
    %2647 = vmatpush1.msra.mxu0 %v2611
    %2648 = vmatprep.subr.mxu0 0.0
    %2649 = vmatpush2.msra.mxu0 0.0
    %2650 = vmatprep.subr.mxu0 0.0
    %2651 = vmatpush2.msra.mxu0 0.0
    %2652 = vmatprep.subr.mxu0 0.0
    %2653 = vmatpush2.msra.mxu0 0.0
    %2654 = vmatprep.subr.mxu0 0.0
    %2655 = vmatpush2.msra.mxu0 0.0
    %2656 = vmatprep.subr.mxu0 0.0
    %2657 = vmatpush2.msra.mxu0 0.0
    %2658 = vmatprep.subr.mxu0 0.0
    %2659 = vmatpush2.msra.mxu0 0.0
    %2660 = vmatprep.subr.mxu0 0.0
    %2661 = vmatpush2.msra.mxu0 0.0
    %2662 = vmatprep.subr.mxu0 0.0
    %2663 = vmatpush2.msra.mxu0 0.0
    %2664 = vmatprep.subr.mxu0 0.0
    %2665 = vmatpush2.msra.mxu0 0.0
    %2666 = vmatprep.subr.mxu0 0.0
    %2667 = vmatpush2.msra.mxu0 0.0
    %2668 = vmatprep.subr.mxu0 0.0
    %2669 = vmatpush2.msra.mxu0 0.0
    %2670 = vmatprep.subr.mxu0 0.0
    %2671 = vmatpush2.msra.mxu0 0.0
    %2672 = vmatprep.subr.mxu0 0.0
    %2673 = vmatpush2.msra.mxu0 0.0
    %2674 = vmatprep.subr.mxu0 0.0
    %2675 = vmatpush2.msra.mxu0 0.0
    %2676 = vmatprep.subr.mxu0 0.0
    %2677 = vmatpush2.msra.mxu0 0.0
    %2678 = vmatprep.subr.mxu0 0.0
    %2679 = vmatpush2.msra.mxu0 0.0
    %2680 = vmatprep.mubr.f32.mxu0 0.0
    %2681 = vmatmul.mubr.f32.gmra.mxu0 %v2614
    %v2682 = vpop.f32.mrf.mxu0
    %v2683 = vadd.f32 0.0, %v2682
    %v2684 = vpop.f32.mrf.mxu0
    %2685 = vdwg.mxu0
    %2686 = vrot.lane.b32.xlu0 %v552, 48
    %v2687 = vpop.permute.xlu0 %2686
    %v2690 = vsel %vm590, %v2457, 0
    %2692 = vmatprep.subr.mxu0 0.0
    %2693 = vmatpush1.msra.mxu0 0.0
    %2694 = vmatprep.subr.mxu0 0.0
    %2695 = vmatpush1.msra.mxu0 0.0
    %2696 = vmatprep.subr.mxu0 0.0
    %2697 = vmatpush1.msra.mxu0 0.0
    %2698 = vmatprep.subr.mxu0 0.0
    %2699 = vmatpush1.msra.mxu0 0.0
    %2700 = vmatprep.subr.mxu0 0.0
    %2701 = vmatpush1.msra.mxu0 0.0
    %2702 = vmatprep.subr.mxu0 0.0
    %2703 = vmatpush1.msra.mxu0 0.0
    %2704 = vmatprep.subr.mxu0 0.0
    %2705 = vmatpush1.msra.mxu0 0.0
    %2706 = vmatprep.subr.mxu0 0.0
    %2707 = vmatpush1.msra.mxu0 0.0
    %2708 = vmatprep.subr.mxu0 0.0
    %2709 = vmatpush1.msra.mxu0 0.0
    %2710 = vmatprep.subr.mxu0 0.0
    %2711 = vmatpush1.msra.mxu0 0.0
    %2712 = vmatprep.subr.mxu0 0.0
    %2713 = vmatpush1.msra.mxu0 0.0
    %2714 = vmatprep.subr.mxu0 0.0
    %2715 = vmatpush1.msra.mxu0 0.0
    %2716 = vmatprep.subr.mxu0 0.0
    %2717 = vmatpush1.msra.mxu0 0.0
    %2718 = vmatprep.subr.mxu0 0.0
    %2719 = vmatpush1.msra.mxu0 0.0
    %2720 = vmatprep.subr.mxu0 0.0
    %2721 = vmatpush1.msra.mxu0 0.0
    %2722 = vmatprep.subr.mxu0 0.0
    %2723 = vmatpush1.msra.mxu0 %v2687
    %2724 = vmatprep.subr.mxu0 0.0
    %2725 = vmatpush2.msra.mxu0 0.0
    %2726 = vmatprep.subr.mxu0 0.0
    %2727 = vmatpush2.msra.mxu0 0.0
    %2728 = vmatprep.subr.mxu0 0.0
    %2729 = vmatpush2.msra.mxu0 0.0
    %2730 = vmatprep.subr.mxu0 0.0
    %2731 = vmatpush2.msra.mxu0 0.0
    %2732 = vmatprep.subr.mxu0 0.0
    %2733 = vmatpush2.msra.mxu0 0.0
    %2734 = vmatprep.subr.mxu0 0.0
    %2735 = vmatpush2.msra.mxu0 0.0
    %2736 = vmatprep.subr.mxu0 0.0
    %2737 = vmatpush2.msra.mxu0 0.0
    %2738 = vmatprep.subr.mxu0 0.0
    %2739 = vmatpush2.msra.mxu0 0.0
    %2740 = vmatprep.subr.mxu0 0.0
    %2741 = vmatpush2.msra.mxu0 0.0
    %2742 = vmatprep.subr.mxu0 0.0
    %2743 = vmatpush2.msra.mxu0 0.0
    %2744 = vmatprep.subr.mxu0 0.0
    %2745 = vmatpush2.msra.mxu0 0.0
    %2746 = vmatprep.subr.mxu0 0.0
    %2747 = vmatpush2.msra.mxu0 0.0
    %2748 = vmatprep.subr.mxu0 0.0
    %2749 = vmatpush2.msra.mxu0 0.0
    %2750 = vmatprep.subr.mxu0 0.0
    %2751 = vmatpush2.msra.mxu0 0.0
    %2752 = vmatprep.subr.mxu0 0.0
    %2753 = vmatpush2.msra.mxu0 0.0
    %2754 = vmatprep.subr.mxu0 0.0
    %2755 = vmatpush2.msra.mxu0 0.0
    %2756 = vmatprep.mubr.f32.mxu0 0.0
    %2757 = vmatmul.mubr.f32.gmra.mxu0 %v2690
    %v2758 = vpop.f32.mrf.mxu0
    %v2759 = vadd.f32 0.0, %v2758
    %v2760 = vpop.f32.mrf.mxu0
    %2761 = vdwg.mxu0
    %v2763 = vsel %vm590, %v2531, 0
    %v2766 = vsel %vm590, %v2607, 0
    %v2769 = vsel %vm590, %v2683, 0
    %v2772 = vsel %vm590, %v2759, 0
    %2774 = vmatprep.subr.mxu0 0.0
    %2775 = vmatpush1.msra.mxu0 0.0
    %2776 = vmatprep.subr.mxu0 0.0
    %2777 = vmatpush1.msra.mxu0 0.0
    %2778 = vmatprep.subr.mxu0 0.0
    %2779 = vmatpush1.msra.mxu0 0.0
    %2780 = vmatprep.subr.mxu0 0.0
    %2781 = vmatpush1.msra.mxu0 0.0
    %2782 = vmatprep.subr.mxu0 0.0
    %2783 = vmatpush1.msra.mxu0 0.0
    %2784 = vmatprep.subr.mxu0 0.0
    %2785 = vmatpush1.msra.mxu0 0.0
    %2786 = vmatprep.subr.mxu0 0.0
    %2787 = vmatpush1.msra.mxu0 0.0
    %2788 = vmatprep.subr.mxu0 0.0
    %2789 = vmatpush1.msra.mxu0 0.0
    %2790 = vmatprep.subr.mxu0 0.0
    %2791 = vmatpush1.msra.mxu0 0.0
    %2792 = vmatprep.subr.mxu0 0.0
    %2793 = vmatpush1.msra.mxu0 0.0
    %2794 = vmatprep.subr.mxu0 0.0
    %2795 = vmatpush1.msra.mxu0 0.0
    %2796 = vmatprep.subr.mxu0 0.0
    %2797 = vmatpush1.msra.mxu0 0.0
    %2798 = vmatprep.subr.mxu0 0.0
    %2799 = vmatpush1.msra.mxu0 0.0
    %2800 = vmatprep.subr.mxu0 0.0
    %2801 = vmatpush1.msra.mxu0 0.0
    %2802 = vmatprep.subr.mxu0 0.0
    %2803 = vmatpush1.msra.mxu0 0.0
    %2804 = vmatprep.subr.mxu0 0.0
    %2805 = vmatpush1.msra.mxu0 %v561
    %2806 = vmatprep.subr.mxu0 0.0
    %2807 = vmatpush2.msra.mxu0 0.0
    %2808 = vmatprep.subr.mxu0 0.0
    %2809 = vmatpush2.msra.mxu0 0.0
    %2810 = vmatprep.subr.mxu0 0.0
    %2811 = vmatpush2.msra.mxu0 0.0
    %2812 = vmatprep.subr.mxu0 0.0
    %2813 = vmatpush2.msra.mxu0 0.0
    %2814 = vmatprep.subr.mxu0 0.0
    %2815 = vmatpush2.msra.mxu0 0.0
    %2816 = vmatprep.subr.mxu0 0.0
    %2817 = vmatpush2.msra.mxu0 0.0
    %2818 = vmatprep.subr.mxu0 0.0
    %2819 = vmatpush2.msra.mxu0 0.0
    %2820 = vmatprep.subr.mxu0 0.0
    %2821 = vmatpush2.msra.mxu0 0.0
    %2822 = vmatprep.subr.mxu0 0.0
    %2823 = vmatpush2.msra.mxu0 0.0
    %2824 = vmatprep.subr.mxu0 0.0
    %2825 = vmatpush2.msra.mxu0 0.0
    %2826 = vmatprep.subr.mxu0 0.0
    %2827 = vmatpush2.msra.mxu0 0.0
    %2828 = vmatprep.subr.mxu0 0.0
    %2829 = vmatpush2.msra.mxu0 0.0
    %2830 = vmatprep.subr.mxu0 0.0
    %2831 = vmatpush2.msra.mxu0 0.0
    %2832 = vmatprep.subr.mxu0 0.0
    %2833 = vmatpush2.msra.mxu0 0.0
    %2834 = vmatprep.subr.mxu0 0.0
    %2835 = vmatpush2.msra.mxu0 0.0
    %2836 = vmatprep.subr.mxu0 0.0
    %2837 = vmatpush2.msra.mxu0 0.0
    %2838 = vmatprep.mubr.f32.mxu0 0.0
    %2839 = vmatmul.mubr.f32.gmra.mxu0 %v2763
    %v2840 = vpop.f32.mrf.mxu0
    %v2841 = vadd.f32 0.0, %v2840
    %v2842 = vpop.f32.mrf.mxu0
    %2843 = vmatprep.mubr.f32.mxu0 0.0
    %2844 = vmatmul.mubr.f32.gmra.mxu0 %v2766
    %v2845 = vpop.f32.mrf.mxu0
    %v2846 = vadd.f32 0.0, %v2845
    %v2847 = vpop.f32.mrf.mxu0
    %2848 = vmatprep.mubr.f32.mxu0 0.0
    %2849 = vmatmul.mubr.f32.gmra.mxu0 %v2769
    %v2850 = vpop.f32.mrf.mxu0
    %v2851 = vadd.f32 0.0, %v2850
    %v2852 = vpop.f32.mrf.mxu0
    %2853 = vmatprep.mubr.f32.mxu0 0.0
    %2854 = vmatmul.mubr.f32.gmra.mxu0 %v2772
    %v2855 = vpop.f32.mrf.mxu0
    %v2856 = vadd.f32 0.0, %v2855
    %v2857 = vpop.f32.mrf.mxu0
    %2858 = vdwg.mxu0
    %v2859 = vadd.f32 %v2084, %v2841
    %v2860 = vadd.f32 %v2089, %v2846
    %v2861 = vadd.f32 %v2094, %v2851
    %v2862 = vadd.f32 %v2099, %v2856
    %2863 = vrot.lane.b32.xlu0 %v555, 104
    %v2864 = vpop.permute.xlu0 %2863
    %2865 = vrot.lane.b32.xlu0 %v537, 72
    %v2866 = vpop.permute.xlu0 %2865
    %v2867 = vsel %vm590, %v2864, 0
    %v2869 = vsel %vm590, %v2866, 0
    %2871 = vmatprep.subr.mxu0 0.0
    %2872 = vmatpush1.xpose.msra.mxu0 0.0
    %2873 = vmatprep.subr.mxu0 0.0
    %2874 = vmatpush1.xpose.msra.mxu0 0.0
    %2875 = vmatprep.subr.mxu0 0.0
    %2876 = vmatpush1.xpose.msra.mxu0 0.0
    %2877 = vmatprep.subr.mxu0 0.0
    %2878 = vmatpush1.xpose.msra.mxu0 0.0
    %2879 = vmatprep.subr.mxu0 0.0
    %2880 = vmatpush1.xpose.msra.mxu0 0.0
    %2881 = vmatprep.subr.mxu0 0.0
    %2882 = vmatpush1.xpose.msra.mxu0 0.0
    %2883 = vmatprep.subr.mxu0 0.0
    %2884 = vmatpush1.xpose.msra.mxu0 0.0
    %2885 = vmatprep.subr.mxu0 0.0
    %2886 = vmatpush1.xpose.msra.mxu0 0.0
    %2887 = vmatprep.subr.mxu0 0.0
    %2888 = vmatpush1.xpose.msra.mxu0 0.0
    %2889 = vmatprep.subr.mxu0 0.0
    %2890 = vmatpush1.xpose.msra.mxu0 0.0
    %2891 = vmatprep.subr.mxu0 0.0
    %2892 = vmatpush1.xpose.msra.mxu0 0.0
    %2893 = vmatprep.subr.mxu0 0.0
    %2894 = vmatpush1.xpose.msra.mxu0 0.0
    %2895 = vmatprep.subr.mxu0 0.0
    %2896 = vmatpush1.xpose.msra.mxu0 0.0
    %2897 = vmatprep.subr.mxu0 0.0
    %2898 = vmatpush1.xpose.msra.mxu0 0.0
    %2899 = vmatprep.subr.mxu0 0.0
    %2900 = vmatpush1.xpose.msra.mxu0 0.0
    %2901 = vmatprep.subr.mxu0 0.0
    %2902 = vmatpush1.xpose.msra.mxu0 %v2869
    %2903 = vmatprep.subr.mxu0 0.0
    %2904 = vmatpush2.xpose.msra.mxu0 0.0
    %2905 = vmatprep.subr.mxu0 0.0
    %2906 = vmatpush2.xpose.msra.mxu0 0.0
    %2907 = vmatprep.subr.mxu0 0.0
    %2908 = vmatpush2.xpose.msra.mxu0 0.0
    %2909 = vmatprep.subr.mxu0 0.0
    %2910 = vmatpush2.xpose.msra.mxu0 0.0
    %2911 = vmatprep.subr.mxu0 0.0
    %2912 = vmatpush2.xpose.msra.mxu0 0.0
    %2913 = vmatprep.subr.mxu0 0.0
    %2914 = vmatpush2.xpose.msra.mxu0 0.0
    %2915 = vmatprep.subr.mxu0 0.0
    %2916 = vmatpush2.xpose.msra.mxu0 0.0
    %2917 = vmatprep.subr.mxu0 0.0
    %2918 = vmatpush2.xpose.msra.mxu0 0.0
    %2919 = vmatprep.subr.mxu0 0.0
    %2920 = vmatpush2.xpose.msra.mxu0 0.0
    %2921 = vmatprep.subr.mxu0 0.0
    %2922 = vmatpush2.xpose.msra.mxu0 0.0
    %2923 = vmatprep.subr.mxu0 0.0
    %2924 = vmatpush2.xpose.msra.mxu0 0.0
    %2925 = vmatprep.subr.mxu0 0.0
    %2926 = vmatpush2.xpose.msra.mxu0 0.0
    %2927 = vmatprep.subr.mxu0 0.0
    %2928 = vmatpush2.xpose.msra.mxu0 0.0
    %2929 = vmatprep.subr.mxu0 0.0
    %2930 = vmatpush2.xpose.msra.mxu0 0.0
    %2931 = vmatprep.subr.mxu0 0.0
    %2932 = vmatpush2.xpose.msra.mxu0 0.0
    %2933 = vmatprep.subr.mxu0 0.0
    %2934 = vmatpush2.xpose.msra.mxu0 0.0
    %2935 = vmatprep.mubr.f32.mxu0 0.0
    %2936 = vmatmul.mubr.f32.gmra.mxu0 %v2867
    %v2937 = vpop.f32.mrf.mxu0
    %v2938 = vadd.f32 %v570, %v2937
    %v2939 = vpop.f32.mrf.mxu0
    %2940 = vdwg.mxu0
    %2941 = vrot.lane.b32.xlu0 %v556, 104
    %v2942 = vpop.permute.xlu0 %2941
    %2943 = vrot.lane.b32.xlu0 %v542, 72
    %v2944 = vpop.permute.xlu0 %2943
    %v2945 = vsel %vm590, %v2942, 0
    %v2947 = vsel %vm590, %v2944, 0
    %2949 = vmatprep.subr.mxu0 0.0
    %2950 = vmatpush1.xpose.msra.mxu0 0.0
    %2951 = vmatprep.subr.mxu0 0.0
    %2952 = vmatpush1.xpose.msra.mxu0 0.0
    %2953 = vmatprep.subr.mxu0 0.0
    %2954 = vmatpush1.xpose.msra.mxu0 0.0
    %2955 = vmatprep.subr.mxu0 0.0
    %2956 = vmatpush1.xpose.msra.mxu0 0.0
    %2957 = vmatprep.subr.mxu0 0.0
    %2958 = vmatpush1.xpose.msra.mxu0 0.0
    %2959 = vmatprep.subr.mxu0 0.0
    %2960 = vmatpush1.xpose.msra.mxu0 0.0
    %2961 = vmatprep.subr.mxu0 0.0
    %2962 = vmatpush1.xpose.msra.mxu0 0.0
    %2963 = vmatprep.subr.mxu0 0.0
    %2964 = vmatpush1.xpose.msra.mxu0 0.0
    %2965 = vmatprep.subr.mxu0 0.0
    %2966 = vmatpush1.xpose.msra.mxu0 0.0
    %2967 = vmatprep.subr.mxu0 0.0
    %2968 = vmatpush1.xpose.msra.mxu0 0.0
    %2969 = vmatprep.subr.mxu0 0.0
    %2970 = vmatpush1.xpose.msra.mxu0 0.0
    %2971 = vmatprep.subr.mxu0 0.0
    %2972 = vmatpush1.xpose.msra.mxu0 0.0
    %2973 = vmatprep.subr.mxu0 0.0
    %2974 = vmatpush1.xpose.msra.mxu0 0.0
    %2975 = vmatprep.subr.mxu0 0.0
    %2976 = vmatpush1.xpose.msra.mxu0 0.0
    %2977 = vmatprep.subr.mxu0 0.0
    %2978 = vmatpush1.xpose.msra.mxu0 0.0
    %2979 = vmatprep.subr.mxu0 0.0
    %2980 = vmatpush1.xpose.msra.mxu0 %v2947
    %2981 = vmatprep.subr.mxu0 0.0
    %2982 = vmatpush2.xpose.msra.mxu0 0.0
    %2983 = vmatprep.subr.mxu0 0.0
    %2984 = vmatpush2.xpose.msra.mxu0 0.0
    %2985 = vmatprep.subr.mxu0 0.0
    %2986 = vmatpush2.xpose.msra.mxu0 0.0
    %2987 = vmatprep.subr.mxu0 0.0
    %2988 = vmatpush2.xpose.msra.mxu0 0.0
    %2989 = vmatprep.subr.mxu0 0.0
    %2990 = vmatpush2.xpose.msra.mxu0 0.0
    %2991 = vmatprep.subr.mxu0 0.0
    %2992 = vmatpush2.xpose.msra.mxu0 0.0
    %2993 = vmatprep.subr.mxu0 0.0
    %2994 = vmatpush2.xpose.msra.mxu0 0.0
    %2995 = vmatprep.subr.mxu0 0.0
    %2996 = vmatpush2.xpose.msra.mxu0 0.0
    %2997 = vmatprep.subr.mxu0 0.0
    %2998 = vmatpush2.xpose.msra.mxu0 0.0
    %2999 = vmatprep.subr.mxu0 0.0
    %3000 = vmatpush2.xpose.msra.mxu0 0.0
    %3001 = vmatprep.subr.mxu0 0.0
    %3002 = vmatpush2.xpose.msra.mxu0 0.0
    %3003 = vmatprep.subr.mxu0 0.0
    %3004 = vmatpush2.xpose.msra.mxu0 0.0
    %3005 = vmatprep.subr.mxu0 0.0
    %3006 = vmatpush2.xpose.msra.mxu0 0.0
    %3007 = vmatprep.subr.mxu0 0.0
    %3008 = vmatpush2.xpose.msra.mxu0 0.0
    %3009 = vmatprep.subr.mxu0 0.0
    %3010 = vmatpush2.xpose.msra.mxu0 0.0
    %3011 = vmatprep.subr.mxu0 0.0
    %3012 = vmatpush2.xpose.msra.mxu0 0.0
    %3013 = vmatprep.mubr.f32.mxu0 0.0
    %3014 = vmatmul.mubr.f32.gmra.mxu0 %v2945
    %v3015 = vpop.f32.mrf.mxu0
    %v3016 = vadd.f32 %v574, %v3015
    %v3017 = vpop.f32.mrf.mxu0
    %3018 = vdwg.mxu0
    %3019 = vrot.lane.b32.xlu0 %v557, 104
    %v3020 = vpop.permute.xlu0 %3019
    %3021 = vrot.lane.b32.xlu0 %v547, 72
    %v3022 = vpop.permute.xlu0 %3021
    %v3023 = vsel %vm590, %v3020, 0
    %v3025 = vsel %vm590, %v3022, 0
    %3027 = vmatprep.subr.mxu0 0.0
    %3028 = vmatpush1.xpose.msra.mxu0 0.0
    %3029 = vmatprep.subr.mxu0 0.0
    %3030 = vmatpush1.xpose.msra.mxu0 0.0
    %3031 = vmatprep.subr.mxu0 0.0
    %3032 = vmatpush1.xpose.msra.mxu0 0.0
    %3033 = vmatprep.subr.mxu0 0.0
    %3034 = vmatpush1.xpose.msra.mxu0 0.0
    %3035 = vmatprep.subr.mxu0 0.0
    %3036 = vmatpush1.xpose.msra.mxu0 0.0
    %3037 = vmatprep.subr.mxu0 0.0
    %3038 = vmatpush1.xpose.msra.mxu0 0.0
    %3039 = vmatprep.subr.mxu0 0.0
    %3040 = vmatpush1.xpose.msra.mxu0 0.0
    %3041 = vmatprep.subr.mxu0 0.0
    %3042 = vmatpush1.xpose.msra.mxu0 0.0
    %3043 = vmatprep.subr.mxu0 0.0
    %3044 = vmatpush1.xpose.msra.mxu0 0.0
    %3045 = vmatprep.subr.mxu0 0.0
    %3046 = vmatpush1.xpose.msra.mxu0 0.0
    %3047 = vmatprep.subr.mxu0 0.0
    %3048 = vmatpush1.xpose.msra.mxu0 0.0
    %3049 = vmatprep.subr.mxu0 0.0
    %3050 = vmatpush1.xpose.msra.mxu0 0.0
    %3051 = vmatprep.subr.mxu0 0.0
    %3052 = vmatpush1.xpose.msra.mxu0 0.0
    %3053 = vmatprep.subr.mxu0 0.0
    %3054 = vmatpush1.xpose.msra.mxu0 0.0
    %3055 = vmatprep.subr.mxu0 0.0
    %3056 = vmatpush1.xpose.msra.mxu0 0.0
    %3057 = vmatprep.subr.mxu0 0.0
    %3058 = vmatpush1.xpose.msra.mxu0 %v3025
    %3059 = vmatprep.subr.mxu0 0.0
    %3060 = vmatpush2.xpose.msra.mxu0 0.0
    %3061 = vmatprep.subr.mxu0 0.0
    %3062 = vmatpush2.xpose.msra.mxu0 0.0
    %3063 = vmatprep.subr.mxu0 0.0
    %3064 = vmatpush2.xpose.msra.mxu0 0.0
    %3065 = vmatprep.subr.mxu0 0.0
    %3066 = vmatpush2.xpose.msra.mxu0 0.0
    %3067 = vmatprep.subr.mxu0 0.0
    %3068 = vmatpush2.xpose.msra.mxu0 0.0
    %3069 = vmatprep.subr.mxu0 0.0
    %3070 = vmatpush2.xpose.msra.mxu0 0.0
    %3071 = vmatprep.subr.mxu0 0.0
    %3072 = vmatpush2.xpose.msra.mxu0 0.0
    %3073 = vmatprep.subr.mxu0 0.0
    %3074 = vmatpush2.xpose.msra.mxu0 0.0
    %3075 = vmatprep.subr.mxu0 0.0
    %3076 = vmatpush2.xpose.msra.mxu0 0.0
    %3077 = vmatprep.subr.mxu0 0.0
    %3078 = vmatpush2.xpose.msra.mxu0 0.0
    %3079 = vmatprep.subr.mxu0 0.0
    %3080 = vmatpush2.xpose.msra.mxu0 0.0
    %3081 = vmatprep.subr.mxu0 0.0
    %3082 = vmatpush2.xpose.msra.mxu0 0.0
    %3083 = vmatprep.subr.mxu0 0.0
    %3084 = vmatpush2.xpose.msra.mxu0 0.0
    %3085 = vmatprep.subr.mxu0 0.0
    %3086 = vmatpush2.xpose.msra.mxu0 0.0
    %3087 = vmatprep.subr.mxu0 0.0
    %3088 = vmatpush2.xpose.msra.mxu0 0.0
    %3089 = vmatprep.subr.mxu0 0.0
    %3090 = vmatpush2.xpose.msra.mxu0 0.0
    %3091 = vmatprep.mubr.f32.mxu0 0.0
    %3092 = vmatmul.mubr.f32.gmra.mxu0 %v3023
    %v3093 = vpop.f32.mrf.mxu0
    %v3094 = vadd.f32 %v578, %v3093
    %v3095 = vpop.f32.mrf.mxu0
    %3096 = vdwg.mxu0
    %3097 = vrot.lane.b32.xlu0 %v558, 104
    %v3098 = vpop.permute.xlu0 %3097
    %3099 = vrot.lane.b32.xlu0 %v552, 72
    %v3100 = vpop.permute.xlu0 %3099
    %v3101 = vsel %vm590, %v3098, 0
    %v3103 = vsel %vm590, %v3100, 0
    %3105 = vmatprep.subr.mxu0 0.0
    %3106 = vmatpush1.xpose.msra.mxu0 0.0
    %3107 = vmatprep.subr.mxu0 0.0
    %3108 = vmatpush1.xpose.msra.mxu0 0.0
    %3109 = vmatprep.subr.mxu0 0.0
    %3110 = vmatpush1.xpose.msra.mxu0 0.0
    %3111 = vmatprep.subr.mxu0 0.0
    %3112 = vmatpush1.xpose.msra.mxu0 0.0
    %3113 = vmatprep.subr.mxu0 0.0
    %3114 = vmatpush1.xpose.msra.mxu0 0.0
    %3115 = vmatprep.subr.mxu0 0.0
    %3116 = vmatpush1.xpose.msra.mxu0 0.0
    %3117 = vmatprep.subr.mxu0 0.0
    %3118 = vmatpush1.xpose.msra.mxu0 0.0
    %3119 = vmatprep.subr.mxu0 0.0
    %3120 = vmatpush1.xpose.msra.mxu0 0.0
    %3121 = vmatprep.subr.mxu0 0.0
    %3122 = vmatpush1.xpose.msra.mxu0 0.0
    %3123 = vmatprep.subr.mxu0 0.0
    %3124 = vmatpush1.xpose.msra.mxu0 0.0
    %3125 = vmatprep.subr.mxu0 0.0
    %3126 = vmatpush1.xpose.msra.mxu0 0.0
    %3127 = vmatprep.subr.mxu0 0.0
    %3128 = vmatpush1.xpose.msra.mxu0 0.0
    %3129 = vmatprep.subr.mxu0 0.0
    %3130 = vmatpush1.xpose.msra.mxu0 0.0
    %3131 = vmatprep.subr.mxu0 0.0
    %3132 = vmatpush1.xpose.msra.mxu0 0.0
    %3133 = vmatprep.subr.mxu0 0.0
    %3134 = vmatpush1.xpose.msra.mxu0 0.0
    %3135 = vmatprep.subr.mxu0 0.0
    %3136 = vmatpush1.xpose.msra.mxu0 %v3103
    %3137 = vmatprep.subr.mxu0 0.0
    %3138 = vmatpush2.xpose.msra.mxu0 0.0
    %3139 = vmatprep.subr.mxu0 0.0
    %3140 = vmatpush2.xpose.msra.mxu0 0.0
    %3141 = vmatprep.subr.mxu0 0.0
    %3142 = vmatpush2.xpose.msra.mxu0 0.0
    %3143 = vmatprep.subr.mxu0 0.0
    %3144 = vmatpush2.xpose.msra.mxu0 0.0
    %3145 = vmatprep.subr.mxu0 0.0
    %3146 = vmatpush2.xpose.msra.mxu0 0.0
    %3147 = vmatprep.subr.mxu0 0.0
    %3148 = vmatpush2.xpose.msra.mxu0 0.0
    %3149 = vmatprep.subr.mxu0 0.0
    %3150 = vmatpush2.xpose.msra.mxu0 0.0
    %3151 = vmatprep.subr.mxu0 0.0
    %3152 = vmatpush2.xpose.msra.mxu0 0.0
    %3153 = vmatprep.subr.mxu0 0.0
    %3154 = vmatpush2.xpose.msra.mxu0 0.0
    %3155 = vmatprep.subr.mxu0 0.0
    %3156 = vmatpush2.xpose.msra.mxu0 0.0
    %3157 = vmatprep.subr.mxu0 0.0
    %3158 = vmatpush2.xpose.msra.mxu0 0.0
    %3159 = vmatprep.subr.mxu0 0.0
    %3160 = vmatpush2.xpose.msra.mxu0 0.0
    %3161 = vmatprep.subr.mxu0 0.0
    %3162 = vmatpush2.xpose.msra.mxu0 0.0
    %3163 = vmatprep.subr.mxu0 0.0
    %3164 = vmatpush2.xpose.msra.mxu0 0.0
    %3165 = vmatprep.subr.mxu0 0.0
    %3166 = vmatpush2.xpose.msra.mxu0 0.0
    %3167 = vmatprep.subr.mxu0 0.0
    %3168 = vmatpush2.xpose.msra.mxu0 0.0
    %3169 = vmatprep.mubr.f32.mxu0 0.0
    %3170 = vmatmul.mubr.f32.gmra.mxu0 %v3101
    %v3171 = vpop.f32.mrf.mxu0
    %v3172 = vadd.f32 %v582, %v3171
    %v3173 = vpop.f32.mrf.mxu0
    %3174 = vdwg.mxu0
    %v3175 = vsel %vm590, %v2938, -inf
    %3176 = vmax.xlane.f32.xlu0 %v3175
    %v3177 = vpop.xlane.xlu0 %3176
    %v3178 = vsel %vm590, %v3016, -inf
    %3179 = vmax.xlane.f32.xlu0 %v3178
    %v3180 = vpop.xlane.xlu0 %3179
    %v3181 = vsel %vm590, %v3094, -inf
    %3182 = vmax.xlane.f32.xlu0 %v3181
    %v3183 = vpop.xlane.xlu0 %3182
    %v3184 = vsel %vm590, %v3172, -inf
    %3185 = vmax.xlane.f32.xlu0 %v3184
    %v3186 = vpop.xlane.xlu0 %3185
    %v3187 = vsub.f32 %v2938, %v3177
    %v3188 = vsub.f32 %v3016, %v3180
    %v3189 = vsub.f32 %v3094, %v3183
    %v3190 = vsub.f32 %v3172, %v3186
    %v3191 = vmul.f32 %v3187, 1.442695
    %v3192 = vpow.pop %v3191
    %v3193 = vmul.f32 %v3188, 1.442695
    %v3194 = vpow.pop %v3193
    %v3195 = vmul.f32 %v3189, 1.442695
    %v3196 = vpow.pop %v3195
    %v3197 = vmul.f32 %v3190, 1.442695
    %v3198 = vpow.pop %v3197
    %v3199 = vsel %vm590, %v3192, 0.0
    %3200 = vadd.xlane.f32.xlu0 %v3199
    %v3201 = vpop.xlane.xlu0 %3200
    %v3202 = vsel %vm590, %v3194, 0.0
    %3203 = vadd.xlane.f32.xlu0 %v3202
    %v3204 = vpop.xlane.xlu0 %3203
    %v3205 = vsel %vm590, %v3196, 0.0
    %3206 = vadd.xlane.f32.xlu0 %v3205
    %v3207 = vpop.xlane.xlu0 %3206
    %v3208 = vsel %vm590, %v3198, 0.0
    %3209 = vadd.xlane.f32.xlu0 %v3208
    %v3210 = vpop.xlane.xlu0 %3209
    %v3211 = vrcp.pop %v3201
    %v3212 = vrcp.pop %v3204
    %v3213 = vrcp.pop %v3207
    %v3214 = vrcp.pop %v3210
    %v3215 = vmul.f32 %v3192, %v3211
    %v3216 = vmul.f32 %v3194, %v3212
    %v3217 = vmul.f32 %v3196, %v3213
    %v3218 = vmul.f32 %v3198, %v3214
    %3219 = vrot.lane.b32.xlu0 %v537, 40
    %v3220 = vpop.permute.xlu0 %3219
    %v3223 = vsel %vm590, %v3215, 0
    %3225 = vmatprep.subr.mxu0 0.0
    %3226 = vmatpush1.msra.mxu0 0.0
    %3227 = vmatprep.subr.mxu0 0.0
    %3228 = vmatpush1.msra.mxu0 0.0
    %3229 = vmatprep.subr.mxu0 0.0
    %3230 = vmatpush1.msra.mxu0 0.0
    %3231 = vmatprep.subr.mxu0 0.0
    %3232 = vmatpush1.msra.mxu0 0.0
    %3233 = vmatprep.subr.mxu0 0.0
    %3234 = vmatpush1.msra.mxu0 0.0
    %3235 = vmatprep.subr.mxu0 0.0
    %3236 = vmatpush1.msra.mxu0 0.0
    %3237 = vmatprep.subr.mxu0 0.0
    %3238 = vmatpush1.msra.mxu0 0.0
    %3239 = vmatprep.subr.mxu0 0.0
    %3240 = vmatpush1.msra.mxu0 0.0
    %3241 = vmatprep.subr.mxu0 0.0
    %3242 = vmatpush1.msra.mxu0 0.0
    %3243 = vmatprep.subr.mxu0 0.0
    %3244 = vmatpush1.msra.mxu0 0.0
    %3245 = vmatprep.subr.mxu0 0.0
    %3246 = vmatpush1.msra.mxu0 0.0
    %3247 = vmatprep.subr.mxu0 0.0
    %3248 = vmatpush1.msra.mxu0 0.0
    %3249 = vmatprep.subr.mxu0 0.0
    %3250 = vmatpush1.msra.mxu0 0.0
    %3251 = vmatprep.subr.mxu0 0.0
    %3252 = vmatpush1.msra.mxu0 0.0
    %3253 = vmatprep.subr.mxu0 0.0
    %3254 = vmatpush1.msra.mxu0 0.0
    %3255 = vmatprep.subr.mxu0 0.0
    %3256 = vmatpush1.msra.mxu0 %v3220
    %3257 = vmatprep.subr.mxu0 0.0
    %3258 = vmatpush2.msra.mxu0 0.0
    %3259 = vmatprep.subr.mxu0 0.0
    %3260 = vmatpush2.msra.mxu0 0.0
    %3261 = vmatprep.subr.mxu0 0.0
    %3262 = vmatpush2.msra.mxu0 0.0
    %3263 = vmatprep.subr.mxu0 0.0
    %3264 = vmatpush2.msra.mxu0 0.0
    %3265 = vmatprep.subr.mxu0 0.0
    %3266 = vmatpush2.msra.mxu0 0.0
    %3267 = vmatprep.subr.mxu0 0.0
    %3268 = vmatpush2.msra.mxu0 0.0
    %3269 = vmatprep.subr.mxu0 0.0
    %3270 = vmatpush2.msra.mxu0 0.0
    %3271 = vmatprep.subr.mxu0 0.0
    %3272 = vmatpush2.msra.mxu0 0.0
    %3273 = vmatprep.subr.mxu0 0.0
    %3274 = vmatpush2.msra.mxu0 0.0
    %3275 = vmatprep.subr.mxu0 0.0
    %3276 = vmatpush2.msra.mxu0 0.0
    %3277 = vmatprep.subr.mxu0 0.0
    %3278 = vmatpush2.msra.mxu0 0.0
    %3279 = vmatprep.subr.mxu0 0.0
    %3280 = vmatpush2.msra.mxu0 0.0
    %3281 = vmatprep.subr.mxu0 0.0
    %3282 = vmatpush2.msra.mxu0 0.0
    %3283 = vmatprep.subr.mxu0 0.0
    %3284 = vmatpush2.msra.mxu0 0.0
    %3285 = vmatprep.subr.mxu0 0.0
    %3286 = vmatpush2.msra.mxu0 0.0
    %3287 = vmatprep.subr.mxu0 0.0
    %3288 = vmatpush2.msra.mxu0 0.0
    %3289 = vmatprep.mubr.f32.mxu0 0.0
    %3290 = vmatmul.mubr.f32.gmra.mxu0 %v3223
    %v3291 = vpop.f32.mrf.mxu0
    %v3292 = vadd.f32 0.0, %v3291
    %v3293 = vpop.f32.mrf.mxu0
    %3294 = vdwg.mxu0
    %3295 = vrot.lane.b32.xlu0 %v542, 40
    %v3296 = vpop.permute.xlu0 %3295
    %v3299 = vsel %vm590, %v3216, 0
    %3301 = vmatprep.subr.mxu0 0.0
    %3302 = vmatpush1.msra.mxu0 0.0
    %3303 = vmatprep.subr.mxu0 0.0
    %3304 = vmatpush1.msra.mxu0 0.0
    %3305 = vmatprep.subr.mxu0 0.0
    %3306 = vmatpush1.msra.mxu0 0.0
    %3307 = vmatprep.subr.mxu0 0.0
    %3308 = vmatpush1.msra.mxu0 0.0
    %3309 = vmatprep.subr.mxu0 0.0
    %3310 = vmatpush1.msra.mxu0 0.0
    %3311 = vmatprep.subr.mxu0 0.0
    %3312 = vmatpush1.msra.mxu0 0.0
    %3313 = vmatprep.subr.mxu0 0.0
    %3314 = vmatpush1.msra.mxu0 0.0
    %3315 = vmatprep.subr.mxu0 0.0
    %3316 = vmatpush1.msra.mxu0 0.0
    %3317 = vmatprep.subr.mxu0 0.0
    %3318 = vmatpush1.msra.mxu0 0.0
    %3319 = vmatprep.subr.mxu0 0.0
    %3320 = vmatpush1.msra.mxu0 0.0
    %3321 = vmatprep.subr.mxu0 0.0
    %3322 = vmatpush1.msra.mxu0 0.0
    %3323 = vmatprep.subr.mxu0 0.0
    %3324 = vmatpush1.msra.mxu0 0.0
    %3325 = vmatprep.subr.mxu0 0.0
    %3326 = vmatpush1.msra.mxu0 0.0
    %3327 = vmatprep.subr.mxu0 0.0
    %3328 = vmatpush1.msra.mxu0 0.0
    %3329 = vmatprep.subr.mxu0 0.0
    %3330 = vmatpush1.msra.mxu0 0.0
    %3331 = vmatprep.subr.mxu0 0.0
    %3332 = vmatpush1.msra.mxu0 %v3296
    %3333 = vmatprep.subr.mxu0 0.0
    %3334 = vmatpush2.msra.mxu0 0.0
    %3335 = vmatprep.subr.mxu0 0.0
    %3336 = vmatpush2.msra.mxu0 0.0
    %3337 = vmatprep.subr.mxu0 0.0
    %3338 = vmatpush2.msra.mxu0 0.0
    %3339 = vmatprep.subr.mxu0 0.0
    %3340 = vmatpush2.msra.mxu0 0.0
    %3341 = vmatprep.subr.mxu0 0.0
    %3342 = vmatpush2.msra.mxu0 0.0
    %3343 = vmatprep.subr.mxu0 0.0
    %3344 = vmatpush2.msra.mxu0 0.0
    %3345 = vmatprep.subr.mxu0 0.0
    %3346 = vmatpush2.msra.mxu0 0.0
    %3347 = vmatprep.subr.mxu0 0.0
    %3348 = vmatpush2.msra.mxu0 0.0
    %3349 = vmatprep.subr.mxu0 0.0
    %3350 = vmatpush2.msra.mxu0 0.0
    %3351 = vmatprep.subr.mxu0 0.0
    %3352 = vmatpush2.msra.mxu0 0.0
    %3353 = vmatprep.subr.mxu0 0.0
    %3354 = vmatpush2.msra.mxu0 0.0
    %3355 = vmatprep.subr.mxu0 0.0
    %3356 = vmatpush2.msra.mxu0 0.0
    %3357 = vmatprep.subr.mxu0 0.0
    %3358 = vmatpush2.msra.mxu0 0.0
    %3359 = vmatprep.subr.mxu0 0.0
    %3360 = vmatpush2.msra.mxu0 0.0
    %3361 = vmatprep.subr.mxu0 0.0
    %3362 = vmatpush2.msra.mxu0 0.0
    %3363 = vmatprep.subr.mxu0 0.0
    %3364 = vmatpush2.msra.mxu0 0.0
    %3365 = vmatprep.mubr.f32.mxu0 0.0
    %3366 = vmatmul.mubr.f32.gmra.mxu0 %v3299
    %v3367 = vpop.f32.mrf.mxu0
    %v3368 = vadd.f32 0.0, %v3367
    %v3369 = vpop.f32.mrf.mxu0
    %3370 = vdwg.mxu0
    %3371 = vrot.lane.b32.xlu0 %v547, 40
    %v3372 = vpop.permute.xlu0 %3371
    %v3375 = vsel %vm590, %v3217, 0
    %3377 = vmatprep.subr.mxu0 0.0
    %3378 = vmatpush1.msra.mxu0 0.0
    %3379 = vmatprep.subr.mxu0 0.0
    %3380 = vmatpush1.msra.mxu0 0.0
    %3381 = vmatprep.subr.mxu0 0.0
    %3382 = vmatpush1.msra.mxu0 0.0
    %3383 = vmatprep.subr.mxu0 0.0
    %3384 = vmatpush1.msra.mxu0 0.0
    %3385 = vmatprep.subr.mxu0 0.0
    %3386 = vmatpush1.msra.mxu0 0.0
    %3387 = vmatprep.subr.mxu0 0.0
    %3388 = vmatpush1.msra.mxu0 0.0
    %3389 = vmatprep.subr.mxu0 0.0
    %3390 = vmatpush1.msra.mxu0 0.0
    %3391 = vmatprep.subr.mxu0 0.0
    %3392 = vmatpush1.msra.mxu0 0.0
    %3393 = vmatprep.subr.mxu0 0.0
    %3394 = vmatpush1.msra.mxu0 0.0
    %3395 = vmatprep.subr.mxu0 0.0
    %3396 = vmatpush1.msra.mxu0 0.0
    %3397 = vmatprep.subr.mxu0 0.0
    %3398 = vmatpush1.msra.mxu0 0.0
    %3399 = vmatprep.subr.mxu0 0.0
    %3400 = vmatpush1.msra.mxu0 0.0
    %3401 = vmatprep.subr.mxu0 0.0
    %3402 = vmatpush1.msra.mxu0 0.0
    %3403 = vmatprep.subr.mxu0 0.0
    %3404 = vmatpush1.msra.mxu0 0.0
    %3405 = vmatprep.subr.mxu0 0.0
    %3406 = vmatpush1.msra.mxu0 0.0
    %3407 = vmatprep.subr.mxu0 0.0
    %3408 = vmatpush1.msra.mxu0 %v3372
    %3409 = vmatprep.subr.mxu0 0.0
    %3410 = vmatpush2.msra.mxu0 0.0
    %3411 = vmatprep.subr.mxu0 0.0
    %3412 = vmatpush2.msra.mxu0 0.0
    %3413 = vmatprep.subr.mxu0 0.0
    %3414 = vmatpush2.msra.mxu0 0.0
    %3415 = vmatprep.subr.mxu0 0.0
    %3416 = vmatpush2.msra.mxu0 0.0
    %3417 = vmatprep.subr.mxu0 0.0
    %3418 = vmatpush2.msra.mxu0 0.0
    %3419 = vmatprep.subr.mxu0 0.0
    %3420 = vmatpush2.msra.mxu0 0.0
    %3421 = vmatprep.subr.mxu0 0.0
    %3422 = vmatpush2.msra.mxu0 0.0
    %3423 = vmatprep.subr.mxu0 0.0
    %3424 = vmatpush2.msra.mxu0 0.0
    %3425 = vmatprep.subr.mxu0 0.0
    %3426 = vmatpush2.msra.mxu0 0.0
    %3427 = vmatprep.subr.mxu0 0.0
    %3428 = vmatpush2.msra.mxu0 0.0
    %3429 = vmatprep.subr.mxu0 0.0
    %3430 = vmatpush2.msra.mxu0 0.0
    %3431 = vmatprep.subr.mxu0 0.0
    %3432 = vmatpush2.msra.mxu0 0.0
    %3433 = vmatprep.subr.mxu0 0.0
    %3434 = vmatpush2.msra.mxu0 0.0
    %3435 = vmatprep.subr.mxu0 0.0
    %3436 = vmatpush2.msra.mxu0 0.0
    %3437 = vmatprep.subr.mxu0 0.0
    %3438 = vmatpush2.msra.mxu0 0.0
    %3439 = vmatprep.subr.mxu0 0.0
    %3440 = vmatpush2.msra.mxu0 0.0
    %3441 = vmatprep.mubr.f32.mxu0 0.0
    %3442 = vmatmul.mubr.f32.gmra.mxu0 %v3375
    %v3443 = vpop.f32.mrf.mxu0
    %v3444 = vadd.f32 0.0, %v3443
    %v3445 = vpop.f32.mrf.mxu0
    %3446 = vdwg.mxu0
    %3447 = vrot.lane.b32.xlu0 %v552, 40
    %v3448 = vpop.permute.xlu0 %3447
    %v3451 = vsel %vm590, %v3218, 0
    %3453 = vmatprep.subr.mxu0 0.0
    %3454 = vmatpush1.msra.mxu0 0.0
    %3455 = vmatprep.subr.mxu0 0.0
    %3456 = vmatpush1.msra.mxu0 0.0
    %3457 = vmatprep.subr.mxu0 0.0
    %3458 = vmatpush1.msra.mxu0 0.0
    %3459 = vmatprep.subr.mxu0 0.0
    %3460 = vmatpush1.msra.mxu0 0.0
    %3461 = vmatprep.subr.mxu0 0.0
    %3462 = vmatpush1.msra.mxu0 0.0
    %3463 = vmatprep.subr.mxu0 0.0
    %3464 = vmatpush1.msra.mxu0 0.0
    %3465 = vmatprep.subr.mxu0 0.0
    %3466 = vmatpush1.msra.mxu0 0.0
    %3467 = vmatprep.subr.mxu0 0.0
    %3468 = vmatpush1.msra.mxu0 0.0
    %3469 = vmatprep.subr.mxu0 0.0
    %3470 = vmatpush1.msra.mxu0 0.0
    %3471 = vmatprep.subr.mxu0 0.0
    %3472 = vmatpush1.msra.mxu0 0.0
    %3473 = vmatprep.subr.mxu0 0.0
    %3474 = vmatpush1.msra.mxu0 0.0
    %3475 = vmatprep.subr.mxu0 0.0
    %3476 = vmatpush1.msra.mxu0 0.0
    %3477 = vmatprep.subr.mxu0 0.0
    %3478 = vmatpush1.msra.mxu0 0.0
    %3479 = vmatprep.subr.mxu0 0.0
    %3480 = vmatpush1.msra.mxu0 0.0
    %3481 = vmatprep.subr.mxu0 0.0
    %3482 = vmatpush1.msra.mxu0 0.0
    %3483 = vmatprep.subr.mxu0 0.0
    %3484 = vmatpush1.msra.mxu0 %v3448
    %3485 = vmatprep.subr.mxu0 0.0
    %3486 = vmatpush2.msra.mxu0 0.0
    %3487 = vmatprep.subr.mxu0 0.0
    %3488 = vmatpush2.msra.mxu0 0.0
    %3489 = vmatprep.subr.mxu0 0.0
    %3490 = vmatpush2.msra.mxu0 0.0
    %3491 = vmatprep.subr.mxu0 0.0
    %3492 = vmatpush2.msra.mxu0 0.0
    %3493 = vmatprep.subr.mxu0 0.0
    %3494 = vmatpush2.msra.mxu0 0.0
    %3495 = vmatprep.subr.mxu0 0.0
    %3496 = vmatpush2.msra.mxu0 0.0
    %3497 = vmatprep.subr.mxu0 0.0
    %3498 = vmatpush2.msra.mxu0 0.0
    %3499 = vmatprep.subr.mxu0 0.0
    %3500 = vmatpush2.msra.mxu0 0.0
    %3501 = vmatprep.subr.mxu0 0.0
    %3502 = vmatpush2.msra.mxu0 0.0
    %3503 = vmatprep.subr.mxu0 0.0
    %3504 = vmatpush2.msra.mxu0 0.0
    %3505 = vmatprep.subr.mxu0 0.0
    %3506 = vmatpush2.msra.mxu0 0.0
    %3507 = vmatprep.subr.mxu0 0.0
    %3508 = vmatpush2.msra.mxu0 0.0
    %3509 = vmatprep.subr.mxu0 0.0
    %3510 = vmatpush2.msra.mxu0 0.0
    %3511 = vmatprep.subr.mxu0 0.0
    %3512 = vmatpush2.msra.mxu0 0.0
    %3513 = vmatprep.subr.mxu0 0.0
    %3514 = vmatpush2.msra.mxu0 0.0
    %3515 = vmatprep.subr.mxu0 0.0
    %3516 = vmatpush2.msra.mxu0 0.0
    %3517 = vmatprep.mubr.f32.mxu0 0.0
    %3518 = vmatmul.mubr.f32.gmra.mxu0 %v3451
    %v3519 = vpop.f32.mrf.mxu0
    %v3520 = vadd.f32 0.0, %v3519
    %v3521 = vpop.f32.mrf.mxu0
    %3522 = vdwg.mxu0
    %v3524 = vsel %vm590, %v3292, 0
    %v3527 = vsel %vm590, %v3368, 0
    %v3530 = vsel %vm590, %v3444, 0
    %v3533 = vsel %vm590, %v3520, 0
    %3535 = vmatprep.subr.mxu0 0.0
    %3536 = vmatpush1.msra.mxu0 0.0
    %3537 = vmatprep.subr.mxu0 0.0
    %3538 = vmatpush1.msra.mxu0 0.0
    %3539 = vmatprep.subr.mxu0 0.0
    %3540 = vmatpush1.msra.mxu0 0.0
    %3541 = vmatprep.subr.mxu0 0.0
    %3542 = vmatpush1.msra.mxu0 0.0
    %3543 = vmatprep.subr.mxu0 0.0
    %3544 = vmatpush1.msra.mxu0 0.0
    %3545 = vmatprep.subr.mxu0 0.0
    %3546 = vmatpush1.msra.mxu0 0.0
    %3547 = vmatprep.subr.mxu0 0.0
    %3548 = vmatpush1.msra.mxu0 0.0
    %3549 = vmatprep.subr.mxu0 0.0
    %3550 = vmatpush1.msra.mxu0 0.0
    %3551 = vmatprep.subr.mxu0 0.0
    %3552 = vmatpush1.msra.mxu0 0.0
    %3553 = vmatprep.subr.mxu0 0.0
    %3554 = vmatpush1.msra.mxu0 0.0
    %3555 = vmatprep.subr.mxu0 0.0
    %3556 = vmatpush1.msra.mxu0 0.0
    %3557 = vmatprep.subr.mxu0 0.0
    %3558 = vmatpush1.msra.mxu0 0.0
    %3559 = vmatprep.subr.mxu0 0.0
    %3560 = vmatpush1.msra.mxu0 0.0
    %3561 = vmatprep.subr.mxu0 0.0
    %3562 = vmatpush1.msra.mxu0 0.0
    %3563 = vmatprep.subr.mxu0 0.0
    %3564 = vmatpush1.msra.mxu0 0.0
    %3565 = vmatprep.subr.mxu0 0.0
    %3566 = vmatpush1.msra.mxu0 %v562
    %3567 = vmatprep.subr.mxu0 0.0
    %3568 = vmatpush2.msra.mxu0 0.0
    %3569 = vmatprep.subr.mxu0 0.0
    %3570 = vmatpush2.msra.mxu0 0.0
    %3571 = vmatprep.subr.mxu0 0.0
    %3572 = vmatpush2.msra.mxu0 0.0
    %3573 = vmatprep.subr.mxu0 0.0
    %3574 = vmatpush2.msra.mxu0 0.0
    %3575 = vmatprep.subr.mxu0 0.0
    %3576 = vmatpush2.msra.mxu0 0.0
    %3577 = vmatprep.subr.mxu0 0.0
    %3578 = vmatpush2.msra.mxu0 0.0
    %3579 = vmatprep.subr.mxu0 0.0
    %3580 = vmatpush2.msra.mxu0 0.0
    %3581 = vmatprep.subr.mxu0 0.0
    %3582 = vmatpush2.msra.mxu0 0.0
    %3583 = vmatprep.subr.mxu0 0.0
    %3584 = vmatpush2.msra.mxu0 0.0
    %3585 = vmatprep.subr.mxu0 0.0
    %3586 = vmatpush2.msra.mxu0 0.0
    %3587 = vmatprep.subr.mxu0 0.0
    %3588 = vmatpush2.msra.mxu0 0.0
    %3589 = vmatprep.subr.mxu0 0.0
    %3590 = vmatpush2.msra.mxu0 0.0
    %3591 = vmatprep.subr.mxu0 0.0
    %3592 = vmatpush2.msra.mxu0 0.0
    %3593 = vmatprep.subr.mxu0 0.0
    %3594 = vmatpush2.msra.mxu0 0.0
    %3595 = vmatprep.subr.mxu0 0.0
    %3596 = vmatpush2.msra.mxu0 0.0
    %3597 = vmatprep.subr.mxu0 0.0
    %3598 = vmatpush2.msra.mxu0 0.0
    %3599 = vmatprep.mubr.f32.mxu0 0.0
    %3600 = vmatmul.mubr.f32.gmra.mxu0 %v3524
    %v3601 = vpop.f32.mrf.mxu0
    %v3602 = vadd.f32 0.0, %v3601
    %v3603 = vpop.f32.mrf.mxu0
    %3604 = vmatprep.mubr.f32.mxu0 0.0
    %3605 = vmatmul.mubr.f32.gmra.mxu0 %v3527
    %v3606 = vpop.f32.mrf.mxu0
    %v3607 = vadd.f32 0.0, %v3606
    %v3608 = vpop.f32.mrf.mxu0
    %3609 = vmatprep.mubr.f32.mxu0 0.0
    %3610 = vmatmul.mubr.f32.gmra.mxu0 %v3530
    %v3611 = vpop.f32.mrf.mxu0
    %v3612 = vadd.f32 0.0, %v3611
    %v3613 = vpop.f32.mrf.mxu0
    %3614 = vmatprep.mubr.f32.mxu0 0.0
    %3615 = vmatmul.mubr.f32.gmra.mxu0 %v3533
    %v3616 = vpop.f32.mrf.mxu0
    %v3617 = vadd.f32 0.0, %v3616
    %v3618 = vpop.f32.mrf.mxu0
    %3619 = vdwg.mxu0
    %v3620 = vadd.f32 %v2859, %v3602
    %v3621 = vadd.f32 %v2860, %v3607
    %v3622 = vadd.f32 %v2861, %v3612
    %v3623 = vadd.f32 %v2862, %v3617
    %v3624 = vld [vmem:[#allocation9] sm:$0x1]
    %v3626 = vlaneseq
    %v3627 = vshrl.u32 %v3626, 7
    %v3628 = vsub.s32 0, %v3627
    %v3629 = vrot.slane %v3624, %v3628
    %v3631 = vadd.f32 %v3620, %v3629
    %v3632 = vadd.f32 %v3621, %v3629
    %v3633 = vadd.f32 %v3622, %v3629
    %v3634 = vadd.f32 %v3623, %v3629
    %v3635 = vadd.f32 %v439, %v3631
    %v3636 = vadd.f32 %v440, %v3632
    %v3637 = vadd.f32 %v441, %v3633
    %v3638 = vadd.f32 %v442, %v3634
    %v3639 = vld [vmem:[#allocation11] sm:$0x1]
    %v3640 = vld [vmem:[#allocation12] sm:$0x1]
    %v3641 = vsel %vm369, %v3635, 0.0
    %3642 = vadd.xlane.f32.xlu0 %v3641
    %v3643 = vpop.xlane.xlu0 %3642
    %v3644 = vsel %vm369, %v3636, 0.0
    %3645 = vadd.xlane.f32.xlu0 %v3644
    %v3646 = vpop.xlane.xlu0 %3645
    %v3647 = vsel %vm369, %v3637, 0.0
    %3648 = vadd.xlane.f32.xlu0 %v3647
    %v3649 = vpop.xlane.xlu0 %3648
    %v3650 = vsel %vm369, %v3638, 0.0
    %3651 = vadd.xlane.f32.xlu0 %v3650
    %v3652 = vpop.xlane.xlu0 %3651
    %v3653 = vmul.f32 %v3643, %v382
    %v3654 = vmul.f32 %v3646, %v382
    %v3655 = vmul.f32 %v3649, %v382
    %v3656 = vmul.f32 %v3652, %v382
    %v3657 = vsub.f32 %v3635, %v3653
    %v3658 = vsub.f32 %v3636, %v3654
    %v3659 = vsub.f32 %v3637, %v3655
    %v3660 = vsub.f32 %v3638, %v3656
    %v3661 = vmul.f32 %v3657, %v3657
    %v3662 = vmul.f32 %v3658, %v3658
    %v3663 = vmul.f32 %v3659, %v3659
    %v3664 = vmul.f32 %v3660, %v3660
    %v3665 = vsel %vm369, %v3661, 0.0
    %3666 = vadd.xlane.f32.xlu0 %v3665
    %v3667 = vpop.xlane.xlu0 %3666
    %v3668 = vsel %vm369, %v3662, 0.0
    %3669 = vadd.xlane.f32.xlu0 %v3668
    %v3670 = vpop.xlane.xlu0 %3669
    %v3671 = vsel %vm369, %v3663, 0.0
    %3672 = vadd.xlane.f32.xlu0 %v3671
    %v3673 = vpop.xlane.xlu0 %3672
    %v3674 = vsel %vm369, %v3664, 0.0
    %3675 = vadd.xlane.f32.xlu0 %v3674
    %v3676 = vpop.xlane.xlu0 %3675
    %v3677 = vmul.f32 %v3667, %v382
    %v3678 = vmul.f32 %v3670, %v382
    %v3679 = vmul.f32 %v3673, %v382
    %v3680 = vmul.f32 %v3676, %v382
    %v3681 = vadd.f32 %v3677, 1e-12
    %v3682 = vadd.f32 %v3678, 1e-12
    %v3683 = vadd.f32 %v3679, 1e-12
    %v3684 = vadd.f32 %v3680, 1e-12
    %v3685 = vrsqrt.pop %v3681
    %v3686 = vrsqrt.pop %v3682
    %v3687 = vrsqrt.pop %v3683
    %v3688 = vrsqrt.pop %v3684
    %v3689 = vmul.f32 %v3657, %v3685
    %v3690 = vmul.f32 %v3658, %v3686
    %v3691 = vmul.f32 %v3659, %v3687
    %v3692 = vmul.f32 %v3660, %v3688
    %v3694 = vlaneseq
    %v3695 = vshrl.u32 %v3694, 7
    %v3696 = vsub.s32 0, %v3695
    %v3697 = vrot.slane %v3639, %v3696
    %v3699 = vmul.f32 %v3689, %v3697
    %v3700 = vmul.f32 %v3690, %v3697
    %v3701 = vmul.f32 %v3691, %v3697
    %v3702 = vmul.f32 %v3692, %v3697
    %v3704 = vlaneseq
    %v3705 = vshrl.u32 %v3704, 7
    %v3706 = vsub.s32 0, %v3705
    %v3707 = vrot.slane %v3640, %v3706
    %v3709 = vadd.f32 %v3699, %v3707
    %v3710 = vadd.f32 %v3700, %v3707
    %v3711 = vadd.f32 %v3701, %v3707
    %v3712 = vadd.f32 %v3702, %v3707
    %v3713 = vld [vmem:[%s25] sm:$0xff]
    %v3714 = vld [vmem:[%s25 + $0x8] sm:$0xff]
    %v3715 = vld [vmem:[%s25 + $0x10] sm:$0xff]
    %v3716 = vld [vmem:[%s25 + $0x18] sm:$0xff]
    %v3717 = vld [vmem:[%s27] sm:$0x1]
    %v3719 = vlaneseq
    %v3720 = vshrl.u32 %v3719, 7
    %v3721 = vsub.s32 0, %v3720
    %v3722 = vrot.slane %v3717, %v3721
    %v3725 = vsel %vm369, %v3709, 0
    %v3728 = vsel %vm369, %v3710, 0
    %v3731 = vsel %vm369, %v3711, 0
    %v3734 = vsel %vm369, %v3712, 0
    %3736 = vmatprep.subr.mxu0 0.0
    %3737 = vmatpush1.msra.mxu0 0.0
    %3738 = vmatprep.subr.mxu0 0.0
    %3739 = vmatpush1.msra.mxu0 0.0
    %3740 = vmatprep.subr.mxu0 0.0
    %3741 = vmatpush1.msra.mxu0 0.0
    %3742 = vmatprep.subr.mxu0 0.0
    %3743 = vmatpush1.msra.mxu0 0.0
    %3744 = vmatprep.subr.mxu0 0.0
    %3745 = vmatpush1.msra.mxu0 0.0
    %3746 = vmatprep.subr.mxu0 0.0
    %3747 = vmatpush1.msra.mxu0 0.0
    %3748 = vmatprep.subr.mxu0 0.0
    %3749 = vmatpush1.msra.mxu0 0.0
    %3750 = vmatprep.subr.mxu0 0.0
    %3751 = vmatpush1.msra.mxu0 0.0
    %3752 = vmatprep.subr.mxu0 0.0
    %3753 = vmatpush1.msra.mxu0 0.0
    %3754 = vmatprep.subr.mxu0 0.0
    %3755 = vmatpush1.msra.mxu0 0.0
    %3756 = vmatprep.subr.mxu0 0.0
    %3757 = vmatpush1.msra.mxu0 0.0
    %3758 = vmatprep.subr.mxu0 0.0
    %3759 = vmatpush1.msra.mxu0 0.0
    %3760 = vmatprep.subr.mxu0 0.0
    %3761 = vmatpush1.msra.mxu0 %v3716
    %3762 = vmatprep.subr.mxu0 0.0
    %3763 = vmatpush1.msra.mxu0 %v3715
    %3764 = vmatprep.subr.mxu0 0.0
    %3765 = vmatpush1.msra.mxu0 %v3714
    %3766 = vmatprep.subr.mxu0 0.0
    %3767 = vmatpush1.msra.mxu0 %v3713
    %3768 = vmatprep.subr.mxu0 0.0
    %3769 = vmatpush2.msra.mxu0 0.0
    %3770 = vmatprep.subr.mxu0 0.0
    %3771 = vmatpush2.msra.mxu0 0.0
    %3772 = vmatprep.subr.mxu0 0.0
    %3773 = vmatpush2.msra.mxu0 0.0
    %3774 = vmatprep.subr.mxu0 0.0
    %3775 = vmatpush2.msra.mxu0 0.0
    %3776 = vmatprep.subr.mxu0 0.0
    %3777 = vmatpush2.msra.mxu0 0.0
    %3778 = vmatprep.subr.mxu0 0.0
    %3779 = vmatpush2.msra.mxu0 0.0
    %3780 = vmatprep.subr.mxu0 0.0
    %3781 = vmatpush2.msra.mxu0 0.0
    %3782 = vmatprep.subr.mxu0 0.0
    %3783 = vmatpush2.msra.mxu0 0.0
    %3784 = vmatprep.subr.mxu0 0.0
    %3785 = vmatpush2.msra.mxu0 0.0
    %3786 = vmatprep.subr.mxu0 0.0
    %3787 = vmatpush2.msra.mxu0 0.0
    %3788 = vmatprep.subr.mxu0 0.0
    %3789 = vmatpush2.msra.mxu0 0.0
    %3790 = vmatprep.subr.mxu0 0.0
    %3791 = vmatpush2.msra.mxu0 0.0
    %3792 = vmatprep.subr.mxu0 0.0
    %3793 = vmatpush2.msra.mxu0 0.0
    %3794 = vmatprep.subr.mxu0 0.0
    %3795 = vmatpush2.msra.mxu0 0.0
    %3796 = vmatprep.subr.mxu0 0.0
    %3797 = vmatpush2.msra.mxu0 0.0
    %3798 = vmatprep.subr.mxu0 0.0
    %3799 = vmatpush2.msra.mxu0 0.0
    %3800 = vmatprep.mubr.f32.mxu0 0.0
    %3801 = vmatmul.mubr.f32.gmra.mxu0 %v3725
    %v3802 = vpop.f32.mrf.mxu0
    %v3803 = vadd.f32 %v3722, %v3802
    %v3804 = vpop.f32.mrf.mxu0
    %3805 = vmatprep.mubr.f32.mxu0 0.0
    %3806 = vmatmul.mubr.f32.gmra.mxu0 %v3728
    %v3807 = vpop.f32.mrf.mxu0
    %v3808 = vadd.f32 %v3722, %v3807
    %v3809 = vpop.f32.mrf.mxu0
    %3810 = vmatprep.mubr.f32.mxu0 0.0
    %3811 = vmatmul.mubr.f32.gmra.mxu0 %v3731
    %v3812 = vpop.f32.mrf.mxu0
    %v3813 = vadd.f32 %v3722, %v3812
    %v3814 = vpop.f32.mrf.mxu0
    %3815 = vmatprep.mubr.f32.mxu0 0.0
    %3816 = vmatmul.mubr.f32.gmra.mxu0 %v3734
    %v3817 = vpop.f32.mrf.mxu0
    %v3818 = vadd.f32 %v3722, %v3817
    %v3819 = vpop.f32.mrf.mxu0
    %3820 = vdwg.mxu0
    %v3821 = vmul.f32 %v3803, 0.5
    %v3822 = vmul.f32 %v3808, 0.5
    %v3823 = vmul.f32 %v3813, 0.5
    %v3824 = vmul.f32 %v3818, 0.5
    %v3825 = vmul.f32 %v3803, 0.70710677
    %v3826 = vmul.f32 %v3808, 0.70710677
    %v3827 = vmul.f32 %v3813, 0.70710677
    %v3828 = vmul.f32 %v3818, 0.70710677
    %vm3829 = vcmp.ge.f32.partialorder %v3825, 0.0
    %vm3830 = vcmp.ge.f32.partialorder %v3826, 0.0
    %vm3831 = vcmp.ge.f32.partialorder %v3827, 0.0
    %vm3832 = vcmp.ge.f32.partialorder %v3828, 0.0
    %v3833 = vsel %vm3829, 1.0, -1.0
    %v3834 = vsel %vm3830, 1.0, -1.0
    %v3835 = vsel %vm3831, 1.0, -1.0
    %v3836 = vsel %vm3832, 1.0, -1.0
    %v3837 = vand.u32 2147483647, %v3825
    %v3838 = vand.u32 2147483647, %v3826
    %v3839 = vand.u32 2147483647, %v3827
    %v3840 = vand.u32 2147483647, %v3828
    %v3841 = vmul.f32 %v3837, 0.3275911
    %v3842 = vmul.f32 %v3838, 0.3275911
    %v3843 = vmul.f32 %v3839, 0.3275911
    %v3844 = vmul.f32 %v3840, 0.3275911
    %v3845 = vadd.f32 %v3841, 1.0
    %v3846 = vadd.f32 %v3842, 1.0
    %v3847 = vadd.f32 %v3843, 1.0
    %v3848 = vadd.f32 %v3844, 1.0
    %v3849 = vrcp.pop %v3845
    %v3850 = vmul.f32 1.0, %v3849
    %v3851 = vrcp.pop %v3846
    %v3852 = vmul.f32 1.0, %v3851
    %v3853 = vrcp.pop %v3847
    %v3854 = vmul.f32 1.0, %v3853
    %v3855 = vrcp.pop %v3848
    %v3856 = vmul.f32 1.0, %v3855
    %v3857 = vmul.f32 %v3850, 1.0614054
    %v3858 = vmul.f32 %v3852, 1.0614054
    %v3859 = vmul.f32 %v3854, 1.0614054
    %v3860 = vmul.f32 %v3856, 1.0614054
    %v3861 = vadd.f32 %v3857, -1.4531521
    %v3862 = vadd.f32 %v3858, -1.4531521
    %v3863 = vadd.f32 %v3859, -1.4531521
    %v3864 = vadd.f32 %v3860, -1.4531521
    %v3865 = vmul.f32 %v3861, %v3850
    %v3866 = vmul.f32 %v3862, %v3852
    %v3867 = vmul.f32 %v3863, %v3854
    %v3868 = vmul.f32 %v3864, %v3856
    %v3869 = vadd.f32 %v3865, 1.4214138
    %v3870 = vadd.f32 %v3866, 1.4214138
    %v3871 = vadd.f32 %v3867, 1.4214138
    %v3872 = vadd.f32 %v3868, 1.4214138
    %v3873 = vmul.f32 %v3869, %v3850
    %v3874 = vmul.f32 %v3870, %v3852
    %v3875 = vmul.f32 %v3871, %v3854
    %v3876 = vmul.f32 %v3872, %v3856
    %v3877 = vadd.f32 %v3873, -0.28449672
    %v3878 = vadd.f32 %v3874, -0.28449672
    %v3879 = vadd.f32 %v3875, -0.28449672
    %v3880 = vadd.f32 %v3876, -0.28449672
    %v3881 = vmul.f32 %v3877, %v3850
    %v3882 = vmul.f32 %v3878, %v3852
    %v3883 = vmul.f32 %v3879, %v3854
    %v3884 = vmul.f32 %v3880, %v3856
    %v3885 = vadd.f32 %v3881, 0.2548296
    %v3886 = vadd.f32 %v3882, 0.2548296
    %v3887 = vadd.f32 %v3883, 0.2548296
    %v3888 = vadd.f32 %v3884, 0.2548296
    %v3889 = vmul.f32 %v3885, %v3850
    %v3890 = vmul.f32 %v3886, %v3852
    %v3891 = vmul.f32 %v3887, %v3854
    %v3892 = vmul.f32 %v3888, %v3856
    %v3893 = vsub.f32 0.0, %v3837
    %v3894 = vsub.f32 0.0, %v3838
    %v3895 = vsub.f32 0.0, %v3839
    %v3896 = vsub.f32 0.0, %v3840
    %v3897 = vmul.f32 %v3893, %v3837
    %v3898 = vmul.f32 %v3894, %v3838
    %v3899 = vmul.f32 %v3895, %v3839
    %v3900 = vmul.f32 %v3896, %v3840
    %v3901 = vmul.f32 %v3897, 1.442695
    %v3902 = vpow.pop %v3901
    %v3903 = vmul.f32 %v3898, 1.442695
    %v3904 = vpow.pop %v3903
    %v3905 = vmul.f32 %v3899, 1.442695
    %v3906 = vpow.pop %v3905
    %v3907 = vmul.f32 %v3900, 1.442695
    %v3908 = vpow.pop %v3907
    %v3909 = vmul.f32 %v3889, %v3902
    %v3910 = vmul.f32 %v3890, %v3904
    %v3911 = vmul.f32 %v3891, %v3906
    %v3912 = vmul.f32 %v3892, %v3908
    %v3913 = vsub.f32 1.0, %v3909
    %v3914 = vsub.f32 1.0, %v3910
    %v3915 = vsub.f32 1.0, %v3911
    %v3916 = vsub.f32 1.0, %v3912
    %v3917 = vmul.f32 %v3833, %v3913
    %v3918 = vmul.f32 %v3834, %v3914
    %v3919 = vmul.f32 %v3835, %v3915
    %v3920 = vmul.f32 %v3836, %v3916
    %v3921 = vadd.f32 %v3917, 1.0
    %v3922 = vadd.f32 %v3918, 1.0
    %v3923 = vadd.f32 %v3919, 1.0
    %v3924 = vadd.f32 %v3920, 1.0
    %v3925 = vmul.f32 %v3821, %v3921
    %v3926 = vmul.f32 %v3822, %v3922
    %v3927 = vmul.f32 %v3823, %v3923
    %v3928 = vmul.f32 %v3824, %v3924
    %v3929 = vld [vmem:[%s29] sm:$0xff]
    %v3930 = vld [vmem:[%s29 + $0x8] sm:$0xff]
    %v3931 = vld [vmem:[%s29 + $0x10] sm:$0xff]
    %v3932 = vld [vmem:[%s29 + $0x18] sm:$0xff]
    %v3933 = vld [vmem:[%s29 + $0x20] sm:$0xff]
    %v3934 = vld [vmem:[%s29 + $0x28] sm:$0xff]
    %v3935 = vld [vmem:[%s29 + $0x30] sm:$0xff]
    %v3936 = vld [vmem:[%s29 + $0x38] sm:$0xff]
    %v3937 = vld [vmem:[#allocation14] sm:$0x1]
    %v3939 = vlaneseq
    %v3940 = vshrl.u32 %v3939, 7
    %v3941 = vsub.s32 0, %v3940
    %v3942 = vrot.slane %v3937, %v3941
    %vm3944 = vcmask 523264
    %v3946 = vsel %vm3944, %v3925, 0
    %v3949 = vsel %vm3944, %v3926, 0
    %v3952 = vsel %vm3944, %v3927, 0
    %v3955 = vsel %vm3944, %v3928, 0
    %3957 = vmatprep.subr.mxu0 0.0
    %3958 = vmatpush1.msra.mxu0 0.0
    %3959 = vmatprep.subr.mxu0 0.0
    %3960 = vmatpush1.msra.mxu0 0.0
    %3961 = vmatprep.subr.mxu0 0.0
    %3962 = vmatpush1.msra.mxu0 0.0
    %3963 = vmatprep.subr.mxu0 0.0
    %3964 = vmatpush1.msra.mxu0 0.0
    %3965 = vmatprep.subr.mxu0 0.0
    %3966 = vmatpush1.msra.mxu0 0.0
    %3967 = vmatprep.subr.mxu0 0.0
    %3968 = vmatpush1.msra.mxu0 0.0
    %3969 = vmatprep.subr.mxu0 0.0
    %3970 = vmatpush1.msra.mxu0 0.0
    %3971 = vmatprep.subr.mxu0 0.0
    %3972 = vmatpush1.msra.mxu0 0.0
    %3973 = vmatprep.subr.mxu0 0.0
    %3974 = vmatpush1.msra.mxu0 %v3936
    %3975 = vmatprep.subr.mxu0 0.0
    %3976 = vmatpush1.msra.mxu0 %v3935
    %3977 = vmatprep.subr.mxu0 0.0
    %3978 = vmatpush1.msra.mxu0 %v3934
    %3979 = vmatprep.subr.mxu0 0.0
    %3980 = vmatpush1.msra.mxu0 %v3933
    %3981 = vmatprep.subr.mxu0 0.0
    %3982 = vmatpush1.msra.mxu0 %v3932
    %3983 = vmatprep.subr.mxu0 0.0
    %3984 = vmatpush1.msra.mxu0 %v3931
    %3985 = vmatprep.subr.mxu0 0.0
    %3986 = vmatpush1.msra.mxu0 %v3930
    %3987 = vmatprep.subr.mxu0 0.0
    %3988 = vmatpush1.msra.mxu0 %v3929
    %3989 = vmatprep.subr.mxu0 0.0
    %3990 = vmatpush2.msra.mxu0 0.0
    %3991 = vmatprep.subr.mxu0 0.0
    %3992 = vmatpush2.msra.mxu0 0.0
    %3993 = vmatprep.subr.mxu0 0.0
    %3994 = vmatpush2.msra.mxu0 0.0
    %3995 = vmatprep.subr.mxu0 0.0
    %3996 = vmatpush2.msra.mxu0 0.0
    %3997 = vmatprep.subr.mxu0 0.0
    %3998 = vmatpush2.msra.mxu0 0.0
    %3999 = vmatprep.subr.mxu0 0.0
    %4000 = vmatpush2.msra.mxu0 0.0
    %4001 = vmatprep.subr.mxu0 0.0
    %4002 = vmatpush2.msra.mxu0 0.0
    %4003 = vmatprep.subr.mxu0 0.0
    %4004 = vmatpush2.msra.mxu0 0.0
    %4005 = vmatprep.subr.mxu0 0.0
    %4006 = vmatpush2.msra.mxu0 0.0
    %4007 = vmatprep.subr.mxu0 0.0
    %4008 = vmatpush2.msra.mxu0 0.0
    %4009 = vmatprep.subr.mxu0 0.0
    %4010 = vmatpush2.msra.mxu0 0.0
    %4011 = vmatprep.subr.mxu0 0.0
    %4012 = vmatpush2.msra.mxu0 0.0
    %4013 = vmatprep.subr.mxu0 0.0
    %4014 = vmatpush2.msra.mxu0 0.0
    %4015 = vmatprep.subr.mxu0 0.0
    %4016 = vmatpush2.msra.mxu0 0.0
    %4017 = vmatprep.subr.mxu0 0.0
    %4018 = vmatpush2.msra.mxu0 0.0
    %4019 = vmatprep.subr.mxu0 0.0
    %4020 = vmatpush2.msra.mxu0 0.0
    %4021 = vmatprep.mubr.f32.mxu0 0.0
    %4022 = vmatmul.mubr.f32.gmra.mxu0 %v3946
    %v4023 = vpop.f32.mrf.mxu0
    %v4024 = vadd.f32 %v3942, %v4023
    %v4025 = vpop.f32.mrf.mxu0
    %4026 = vmatprep.mubr.f32.mxu0 0.0
    %4027 = vmatmul.mubr.f32.gmra.mxu0 %v3949
    %v4028 = vpop.f32.mrf.mxu0
    %v4029 = vadd.f32 %v3942, %v4028
    %v4030 = vpop.f32.mrf.mxu0
    %4031 = vmatprep.mubr.f32.mxu0 0.0
    %4032 = vmatmul.mubr.f32.gmra.mxu0 %v3952
    %v4033 = vpop.f32.mrf.mxu0
    %v4034 = vadd.f32 %v3942, %v4033
    %v4035 = vpop.f32.mrf.mxu0
    %4036 = vmatprep.mubr.f32.mxu0 0.0
    %4037 = vmatmul.mubr.f32.gmra.mxu0 %v3955
    %v4038 = vpop.f32.mrf.mxu0
    %v4039 = vadd.f32 %v3942, %v4038
    %v4040 = vpop.f32.mrf.mxu0
    %4041 = vdwg.mxu0
    %v4042 = vadd.f32 %v3709, %v4024
    %v4043 = vadd.f32 %v3710, %v4029
    %v4044 = vadd.f32 %v3711, %v4034
    %v4045 = vadd.f32 %v3712, %v4039
    %v4046 = vld [vmem:[#allocation15] sm:$0x1]
    %v4047 = vld [vmem:[#allocation17] sm:$0x1]
    %v4048 = vsel %vm369, %v4042, 0.0
    %4049 = vadd.xlane.f32.xlu0 %v4048
    %v4050 = vpop.xlane.xlu0 %4049
    %v4051 = vsel %vm369, %v4043, 0.0
    %4052 = vadd.xlane.f32.xlu0 %v4051
    %v4053 = vpop.xlane.xlu0 %4052
    %v4054 = vsel %vm369, %v4044, 0.0
    %4055 = vadd.xlane.f32.xlu0 %v4054
    %v4056 = vpop.xlane.xlu0 %4055
    %v4057 = vsel %vm369, %v4045, 0.0
    %4058 = vadd.xlane.f32.xlu0 %v4057
    %v4059 = vpop.xlane.xlu0 %4058
    %v4060 = vmul.f32 %v4050, %v382
    %v4061 = vmul.f32 %v4053, %v382
    %v4062 = vmul.f32 %v4056, %v382
    %v4063 = vmul.f32 %v4059, %v382
    %v4064 = vsub.f32 %v4042, %v4060
    %v4065 = vsub.f32 %v4043, %v4061
    %v4066 = vsub.f32 %v4044, %v4062
    %v4067 = vsub.f32 %v4045, %v4063
    %v4068 = vmul.f32 %v4064, %v4064
    %v4069 = vmul.f32 %v4065, %v4065
    %v4070 = vmul.f32 %v4066, %v4066
    %v4071 = vmul.f32 %v4067, %v4067
    %v4072 = vsel %vm369, %v4068, 0.0
    %4073 = vadd.xlane.f32.xlu0 %v4072
    %v4074 = vpop.xlane.xlu0 %4073
    %v4075 = vsel %vm369, %v4069, 0.0
    %4076 = vadd.xlane.f32.xlu0 %v4075
    %v4077 = vpop.xlane.xlu0 %4076
    %v4078 = vsel %vm369, %v4070, 0.0
    %4079 = vadd.xlane.f32.xlu0 %v4078
    %v4080 = vpop.xlane.xlu0 %4079
    %v4081 = vsel %vm369, %v4071, 0.0
    %4082 = vadd.xlane.f32.xlu0 %v4081
    %v4083 = vpop.xlane.xlu0 %4082
    %v4084 = vmul.f32 %v4074, %v382
    %v4085 = vmul.f32 %v4077, %v382
    %v4086 = vmul.f32 %v4080, %v382
    %v4087 = vmul.f32 %v4083, %v382
    %v4088 = vadd.f32 %v4084, 1e-12
    %v4089 = vadd.f32 %v4085, 1e-12
    %v4090 = vadd.f32 %v4086, 1e-12
    %v4091 = vadd.f32 %v4087, 1e-12
    %v4092 = vrsqrt.pop %v4088
    %v4093 = vrsqrt.pop %v4089
    %v4094 = vrsqrt.pop %v4090
    %v4095 = vrsqrt.pop %v4091
    %v4096 = vmul.f32 %v4064, %v4092
    %v4097 = vmul.f32 %v4065, %v4093
    %v4098 = vmul.f32 %v4066, %v4094
    %v4099 = vmul.f32 %v4067, %v4095
    %v4101 = vlaneseq
    %v4102 = vshrl.u32 %v4101, 7
    %v4103 = vsub.s32 0, %v4102
    %v4104 = vrot.slane %v4046, %v4103
    %v4106 = vmul.f32 %v4096, %v4104
    %v4107 = vmul.f32 %v4097, %v4104
    %v4108 = vmul.f32 %v4098, %v4104
    %v4109 = vmul.f32 %v4099, %v4104
    %v4111 = vlaneseq
    %v4112 = vshrl.u32 %v4111, 7
    %v4113 = vsub.s32 0, %v4112
    %v4114 = vrot.slane %v4047, %v4113
    %v4116 = vadd.f32 %v4106, %v4114
    %v4117 = vadd.f32 %v4107, %v4114
    %v4118 = vadd.f32 %v4108, %v4114
    %v4119 = vadd.f32 %v4109, %v4114
    %v4120 = vld [vmem:[%s37] sm:$0xff]
    %v4121 = vld [vmem:[%s37 + $0x8] sm:$0xff]
    %v4122 = vld [vmem:[%s37 + $0x10] sm:$0xff]
    %v4123 = vld [vmem:[%s37 + $0x18] sm:$0xff]
    %v4124 = vld [vmem:[#allocation18] sm:$0x1]
    %v4126 = vlaneseq
    %v4127 = vshrl.u32 %v4126, 7
    %v4128 = vsub.s32 0, %v4127
    %v4129 = vrot.slane %v4124, %v4128
    %v4132 = vsel %vm369, %v4116, 0
    %v4135 = vsel %vm369, %v4117, 0
    %v4138 = vsel %vm369, %v4118, 0
    %v4141 = vsel %vm369, %v4119, 0
    %4143 = vmatprep.subr.mxu0 0.0
    %4144 = vmatpush1.msra.mxu0 0.0
    %4145 = vmatprep.subr.mxu0 0.0
    %4146 = vmatpush1.msra.mxu0 0.0
    %4147 = vmatprep.subr.mxu0 0.0
    %4148 = vmatpush1.msra.mxu0 0.0
    %4149 = vmatprep.subr.mxu0 0.0
    %4150 = vmatpush1.msra.mxu0 0.0
    %4151 = vmatprep.subr.mxu0 0.0
    %4152 = vmatpush1.msra.mxu0 0.0
    %4153 = vmatprep.subr.mxu0 0.0
    %4154 = vmatpush1.msra.mxu0 0.0
    %4155 = vmatprep.subr.mxu0 0.0
    %4156 = vmatpush1.msra.mxu0 0.0
    %4157 = vmatprep.subr.mxu0 0.0
    %4158 = vmatpush1.msra.mxu0 0.0
    %4159 = vmatprep.subr.mxu0 0.0
    %4160 = vmatpush1.msra.mxu0 0.0
    %4161 = vmatprep.subr.mxu0 0.0
    %4162 = vmatpush1.msra.mxu0 0.0
    %4163 = vmatprep.subr.mxu0 0.0
    %4164 = vmatpush1.msra.mxu0 0.0
    %4165 = vmatprep.subr.mxu0 0.0
    %4166 = vmatpush1.msra.mxu0 0.0
    %4167 = vmatprep.subr.mxu0 0.0
    %4168 = vmatpush1.msra.mxu0 %v4123
    %4169 = vmatprep.subr.mxu0 0.0
    %4170 = vmatpush1.msra.mxu0 %v4122
    %4171 = vmatprep.subr.mxu0 0.0
    %4172 = vmatpush1.msra.mxu0 %v4121
    %4173 = vmatprep.subr.mxu0 0.0
    %4174 = vmatpush1.msra.mxu0 %v4120
    %4175 = vmatprep.subr.mxu0 0.0
    %4176 = vmatpush2.msra.mxu0 0.0
    %4177 = vmatprep.subr.mxu0 0.0
    %4178 = vmatpush2.msra.mxu0 0.0
    %4179 = vmatprep.subr.mxu0 0.0
    %4180 = vmatpush2.msra.mxu0 0.0
    %4181 = vmatprep.subr.mxu0 0.0
    %4182 = vmatpush2.msra.mxu0 0.0
    %4183 = vmatprep.subr.mxu0 0.0
    %4184 = vmatpush2.msra.mxu0 0.0
    %4185 = vmatprep.subr.mxu0 0.0
    %4186 = vmatpush2.msra.mxu0 0.0
    %4187 = vmatprep.subr.mxu0 0.0
    %4188 = vmatpush2.msra.mxu0 0.0
    %4189 = vmatprep.subr.mxu0 0.0
    %4190 = vmatpush2.msra.mxu0 0.0
    %4191 = vmatprep.subr.mxu0 0.0
    %4192 = vmatpush2.msra.mxu0 0.0
    %4193 = vmatprep.subr.mxu0 0.0
    %4194 = vmatpush2.msra.mxu0 0.0
    %4195 = vmatprep.subr.mxu0 0.0
    %4196 = vmatpush2.msra.mxu0 0.0
    %4197 = vmatprep.subr.mxu0 0.0
    %4198 = vmatpush2.msra.mxu0 0.0
    %4199 = vmatprep.subr.mxu0 0.0
    %4200 = vmatpush2.msra.mxu0 0.0
    %4201 = vmatprep.subr.mxu0 0.0
    %4202 = vmatpush2.msra.mxu0 0.0
    %4203 = vmatprep.subr.mxu0 0.0
    %4204 = vmatpush2.msra.mxu0 0.0
    %4205 = vmatprep.subr.mxu0 0.0
    %4206 = vmatpush2.msra.mxu0 0.0
    %4207 = vmatprep.mubr.f32.mxu0 0.0
    %4208 = vmatmul.mubr.f32.gmra.mxu0 %v4132
    %v4209 = vpop.f32.mrf.mxu0
    %v4210 = vadd.f32 %v4129, %v4209
    %v4211 = vpop.f32.mrf.mxu0
    %4212 = vmatprep.mubr.f32.mxu0 0.0
    %4213 = vmatmul.mubr.f32.gmra.mxu0 %v4135
    %v4214 = vpop.f32.mrf.mxu0
    %v4215 = vadd.f32 %v4129, %v4214
    %v4216 = vpop.f32.mrf.mxu0
    %4217 = vmatprep.mubr.f32.mxu0 0.0
    %4218 = vmatmul.mubr.f32.gmra.mxu0 %v4138
    %v4219 = vpop.f32.mrf.mxu0
    %v4220 = vadd.f32 %v4129, %v4219
    %v4221 = vpop.f32.mrf.mxu0
    %4222 = vmatprep.mubr.f32.mxu0 0.0
    %4223 = vmatmul.mubr.f32.gmra.mxu0 %v4141
    %v4224 = vpop.f32.mrf.mxu0
    %v4225 = vadd.f32 %v4129, %v4224
    %v4226 = vpop.f32.mrf.mxu0
    %4227 = vdwg.mxu0
    %v4228 = vmul.f32 %v4210, 0.35355338
    %v4229 = vmul.f32 %v4215, 0.35355338
    %v4230 = vmul.f32 %v4220, 0.35355338
    %v4231 = vmul.f32 %v4225, 0.35355338
    %v4232 = vld [vmem:[%s41] sm:$0xff]
    %v4233 = vld [vmem:[%s41 + $0x8] sm:$0xff]
    %v4234 = vld [vmem:[%s41 + $0x10] sm:$0xff]
    %v4235 = vld [vmem:[%s41 + $0x18] sm:$0xff]
    %4237 = vrot.lane.b32.xlu0 %v4210, 96
    %v4238 = vpop.permute.xlu0 %4237
    %v4240 = vsel %vm590, %v4228, 0
    %v4242 = vsel %vm590, %v4238, 0
    %4244 = vmatprep.subr.mxu0 0.0
    %4245 = vmatpush1.xpose.msra.mxu0 0.0
    %4246 = vmatprep.subr.mxu0 0.0
    %4247 = vmatpush1.xpose.msra.mxu0 0.0
    %4248 = vmatprep.subr.mxu0 0.0
    %4249 = vmatpush1.xpose.msra.mxu0 0.0
    %4250 = vmatprep.subr.mxu0 0.0
    %4251 = vmatpush1.xpose.msra.mxu0 0.0
    %4252 = vmatprep.subr.mxu0 0.0
    %4253 = vmatpush1.xpose.msra.mxu0 0.0
    %4254 = vmatprep.subr.mxu0 0.0
    %4255 = vmatpush1.xpose.msra.mxu0 0.0
    %4256 = vmatprep.subr.mxu0 0.0
    %4257 = vmatpush1.xpose.msra.mxu0 0.0
    %4258 = vmatprep.subr.mxu0 0.0
    %4259 = vmatpush1.xpose.msra.mxu0 0.0
    %4260 = vmatprep.subr.mxu0 0.0
    %4261 = vmatpush1.xpose.msra.mxu0 0.0
    %4262 = vmatprep.subr.mxu0 0.0
    %4263 = vmatpush1.xpose.msra.mxu0 0.0
    %4264 = vmatprep.subr.mxu0 0.0
    %4265 = vmatpush1.xpose.msra.mxu0 0.0
    %4266 = vmatprep.subr.mxu0 0.0
    %4267 = vmatpush1.xpose.msra.mxu0 0.0
    %4268 = vmatprep.subr.mxu0 0.0
    %4269 = vmatpush1.xpose.msra.mxu0 0.0
    %4270 = vmatprep.subr.mxu0 0.0
    %4271 = vmatpush1.xpose.msra.mxu0 0.0
    %4272 = vmatprep.subr.mxu0 0.0
    %4273 = vmatpush1.xpose.msra.mxu0 0.0
    %4274 = vmatprep.subr.mxu0 0.0
    %4275 = vmatpush1.xpose.msra.mxu0 %v4242
    %4276 = vmatprep.subr.mxu0 0.0
    %4277 = vmatpush2.xpose.msra.mxu0 0.0
    %4278 = vmatprep.subr.mxu0 0.0
    %4279 = vmatpush2.xpose.msra.mxu0 0.0
    %4280 = vmatprep.subr.mxu0 0.0
    %4281 = vmatpush2.xpose.msra.mxu0 0.0
    %4282 = vmatprep.subr.mxu0 0.0
    %4283 = vmatpush2.xpose.msra.mxu0 0.0
    %4284 = vmatprep.subr.mxu0 0.0
    %4285 = vmatpush2.xpose.msra.mxu0 0.0
    %4286 = vmatprep.subr.mxu0 0.0
    %4287 = vmatpush2.xpose.msra.mxu0 0.0
    %4288 = vmatprep.subr.mxu0 0.0
    %4289 = vmatpush2.xpose.msra.mxu0 0.0
    %4290 = vmatprep.subr.mxu0 0.0
    %4291 = vmatpush2.xpose.msra.mxu0 0.0
    %4292 = vmatprep.subr.mxu0 0.0
    %4293 = vmatpush2.xpose.msra.mxu0 0.0
    %4294 = vmatprep.subr.mxu0 0.0
    %4295 = vmatpush2.xpose.msra.mxu0 0.0
    %4296 = vmatprep.subr.mxu0 0.0
    %4297 = vmatpush2.xpose.msra.mxu0 0.0
    %4298 = vmatprep.subr.mxu0 0.0
    %4299 = vmatpush2.xpose.msra.mxu0 0.0
    %4300 = vmatprep.subr.mxu0 0.0
    %4301 = vmatpush2.xpose.msra.mxu0 0.0
    %4302 = vmatprep.subr.mxu0 0.0
    %4303 = vmatpush2.xpose.msra.mxu0 0.0
    %4304 = vmatprep.subr.mxu0 0.0
    %4305 = vmatpush2.xpose.msra.mxu0 0.0
    %4306 = vmatprep.subr.mxu0 0.0
    %4307 = vmatpush2.xpose.msra.mxu0 0.0
    %4308 = vmatprep.mubr.f32.mxu0 0.0
    %4309 = vmatmul.mubr.f32.gmra.mxu0 %v4240
    %v4310 = vpop.f32.mrf.mxu0
    %v4311 = vadd.f32 %v570, %v4310
    %v4312 = vpop.f32.mrf.mxu0
    %4313 = vdwg.mxu0
    %4315 = vrot.lane.b32.xlu0 %v4215, 96
    %v4316 = vpop.permute.xlu0 %4315
    %v4318 = vsel %vm590, %v4229, 0
    %v4320 = vsel %vm590, %v4316, 0
    %4322 = vmatprep.subr.mxu0 0.0
    %4323 = vmatpush1.xpose.msra.mxu0 0.0
    %4324 = vmatprep.subr.mxu0 0.0
    %4325 = vmatpush1.xpose.msra.mxu0 0.0
    %4326 = vmatprep.subr.mxu0 0.0
    %4327 = vmatpush1.xpose.msra.mxu0 0.0
    %4328 = vmatprep.subr.mxu0 0.0
    %4329 = vmatpush1.xpose.msra.mxu0 0.0
    %4330 = vmatprep.subr.mxu0 0.0
    %4331 = vmatpush1.xpose.msra.mxu0 0.0
    %4332 = vmatprep.subr.mxu0 0.0
    %4333 = vmatpush1.xpose.msra.mxu0 0.0
    %4334 = vmatprep.subr.mxu0 0.0
    %4335 = vmatpush1.xpose.msra.mxu0 0.0
    %4336 = vmatprep.subr.mxu0 0.0
    %4337 = vmatpush1.xpose.msra.mxu0 0.0
    %4338 = vmatprep.subr.mxu0 0.0
    %4339 = vmatpush1.xpose.msra.mxu0 0.0
    %4340 = vmatprep.subr.mxu0 0.0
    %4341 = vmatpush1.xpose.msra.mxu0 0.0
    %4342 = vmatprep.subr.mxu0 0.0
    %4343 = vmatpush1.xpose.msra.mxu0 0.0
    %4344 = vmatprep.subr.mxu0 0.0
    %4345 = vmatpush1.xpose.msra.mxu0 0.0
    %4346 = vmatprep.subr.mxu0 0.0
    %4347 = vmatpush1.xpose.msra.mxu0 0.0
    %4348 = vmatprep.subr.mxu0 0.0
    %4349 = vmatpush1.xpose.msra.mxu0 0.0
    %4350 = vmatprep.subr.mxu0 0.0
    %4351 = vmatpush1.xpose.msra.mxu0 0.0
    %4352 = vmatprep.subr.mxu0 0.0
    %4353 = vmatpush1.xpose.msra.mxu0 %v4320
    %4354 = vmatprep.subr.mxu0 0.0
    %4355 = vmatpush2.xpose.msra.mxu0 0.0
    %4356 = vmatprep.subr.mxu0 0.0
    %4357 = vmatpush2.xpose.msra.mxu0 0.0
    %4358 = vmatprep.subr.mxu0 0.0
    %4359 = vmatpush2.xpose.msra.mxu0 0.0
    %4360 = vmatprep.subr.mxu0 0.0
    %4361 = vmatpush2.xpose.msra.mxu0 0.0
    %4362 = vmatprep.subr.mxu0 0.0
    %4363 = vmatpush2.xpose.msra.mxu0 0.0
    %4364 = vmatprep.subr.mxu0 0.0
    %4365 = vmatpush2.xpose.msra.mxu0 0.0
    %4366 = vmatprep.subr.mxu0 0.0
    %4367 = vmatpush2.xpose.msra.mxu0 0.0
    %4368 = vmatprep.subr.mxu0 0.0
    %4369 = vmatpush2.xpose.msra.mxu0 0.0
    %4370 = vmatprep.subr.mxu0 0.0
    %4371 = vmatpush2.xpose.msra.mxu0 0.0
    %4372 = vmatprep.subr.mxu0 0.0
    %4373 = vmatpush2.xpose.msra.mxu0 0.0
    %4374 = vmatprep.subr.mxu0 0.0
    %4375 = vmatpush2.xpose.msra.mxu0 0.0
    %4376 = vmatprep.subr.mxu0 0.0
    %4377 = vmatpush2.xpose.msra.mxu0 0.0
    %4378 = vmatprep.subr.mxu0 0.0
    %4379 = vmatpush2.xpose.msra.mxu0 0.0
    %4380 = vmatprep.subr.mxu0 0.0
    %4381 = vmatpush2.xpose.msra.mxu0 0.0
    %4382 = vmatprep.subr.mxu0 0.0
    %4383 = vmatpush2.xpose.msra.mxu0 0.0
    %4384 = vmatprep.subr.mxu0 0.0
    %4385 = vmatpush2.xpose.msra.mxu0 0.0
    %4386 = vmatprep.mubr.f32.mxu0 0.0
    %4387 = vmatmul.mubr.f32.gmra.mxu0 %v4318
    %v4388 = vpop.f32.mrf.mxu0
    %v4389 = vadd.f32 %v574, %v4388
    %v4390 = vpop.f32.mrf.mxu0
    %4391 = vdwg.mxu0
    %4393 = vrot.lane.b32.xlu0 %v4220, 96
    %v4394 = vpop.permute.xlu0 %4393
    %v4396 = vsel %vm590, %v4230, 0
    %v4398 = vsel %vm590, %v4394, 0
    %4400 = vmatprep.subr.mxu0 0.0
    %4401 = vmatpush1.xpose.msra.mxu0 0.0
    %4402 = vmatprep.subr.mxu0 0.0
    %4403 = vmatpush1.xpose.msra.mxu0 0.0
    %4404 = vmatprep.subr.mxu0 0.0
    %4405 = vmatpush1.xpose.msra.mxu0 0.0
    %4406 = vmatprep.subr.mxu0 0.0
    %4407 = vmatpush1.xpose.msra.mxu0 0.0
    %4408 = vmatprep.subr.mxu0 0.0
    %4409 = vmatpush1.xpose.msra.mxu0 0.0
    %4410 = vmatprep.subr.mxu0 0.0
    %4411 = vmatpush1.xpose.msra.mxu0 0.0
    %4412 = vmatprep.subr.mxu0 0.0
    %4413 = vmatpush1.xpose.msra.mxu0 0.0
    %4414 = vmatprep.subr.mxu0 0.0
    %4415 = vmatpush1.xpose.msra.mxu0 0.0
    %4416 = vmatprep.subr.mxu0 0.0
    %4417 = vmatpush1.xpose.msra.mxu0 0.0
    %4418 = vmatprep.subr.mxu0 0.0
    %4419 = vmatpush1.xpose.msra.mxu0 0.0
    %4420 = vmatprep.subr.mxu0 0.0
    %4421 = vmatpush1.xpose.msra.mxu0 0.0
    %4422 = vmatprep.subr.mxu0 0.0
    %4423 = vmatpush1.xpose.msra.mxu0 0.0
    %4424 = vmatprep.subr.mxu0 0.0
    %4425 = vmatpush1.xpose.msra.mxu0 0.0
    %4426 = vmatprep.subr.mxu0 0.0
    %4427 = vmatpush1.xpose.msra.mxu0 0.0
    %4428 = vmatprep.subr.mxu0 0.0
    %4429 = vmatpush1.xpose.msra.mxu0 0.0
    %4430 = vmatprep.subr.mxu0 0.0
    %4431 = vmatpush1.xpose.msra.mxu0 %v4398
    %4432 = vmatprep.subr.mxu0 0.0
    %4433 = vmatpush2.xpose.msra.mxu0 0.0
    %4434 = vmatprep.subr.mxu0 0.0
    %4435 = vmatpush2.xpose.msra.mxu0 0.0
    %4436 = vmatprep.subr.mxu0 0.0
    %4437 = vmatpush2.xpose.msra.mxu0 0.0
    %4438 = vmatprep.subr.mxu0 0.0
    %4439 = vmatpush2.xpose.msra.mxu0 0.0
    %4440 = vmatprep.subr.mxu0 0.0
    %4441 = vmatpush2.xpose.msra.mxu0 0.0
    %4442 = vmatprep.subr.mxu0 0.0
    %4443 = vmatpush2.xpose.msra.mxu0 0.0
    %4444 = vmatprep.subr.mxu0 0.0
    %4445 = vmatpush2.xpose.msra.mxu0 0.0
    %4446 = vmatprep.subr.mxu0 0.0
    %4447 = vmatpush2.xpose.msra.mxu0 0.0
    %4448 = vmatprep.subr.mxu0 0.0
    %4449 = vmatpush2.xpose.msra.mxu0 0.0
    %4450 = vmatprep.subr.mxu0 0.0
    %4451 = vmatpush2.xpose.msra.mxu0 0.0
    %4452 = vmatprep.subr.mxu0 0.0
    %4453 = vmatpush2.xpose.msra.mxu0 0.0
    %4454 = vmatprep.subr.mxu0 0.0
    %4455 = vmatpush2.xpose.msra.mxu0 0.0
    %4456 = vmatprep.subr.mxu0 0.0
    %4457 = vmatpush2.xpose.msra.mxu0 0.0
    %4458 = vmatprep.subr.mxu0 0.0
    %4459 = vmatpush2.xpose.msra.mxu0 0.0
    %4460 = vmatprep.subr.mxu0 0.0
    %4461 = vmatpush2.xpose.msra.mxu0 0.0
    %4462 = vmatprep.subr.mxu0 0.0
    %4463 = vmatpush2.xpose.msra.mxu0 0.0
    %4464 = vmatprep.mubr.f32.mxu0 0.0
    %4465 = vmatmul.mubr.f32.gmra.mxu0 %v4396
    %v4466 = vpop.f32.mrf.mxu0
    %v4467 = vadd.f32 %v578, %v4466
    %v4468 = vpop.f32.mrf.mxu0
    %4469 = vdwg.mxu0
    %4471 = vrot.lane.b32.xlu0 %v4225, 96
    %v4472 = vpop.permute.xlu0 %4471
    %v4474 = vsel %vm590, %v4231, 0
    %v4476 = vsel %vm590, %v4472, 0
    %4478 = vmatprep.subr.mxu0 0.0
    %4479 = vmatpush1.xpose.msra.mxu0 0.0
    %4480 = vmatprep.subr.mxu0 0.0
    %4481 = vmatpush1.xpose.msra.mxu0 0.0
    %4482 = vmatprep.subr.mxu0 0.0
    %4483 = vmatpush1.xpose.msra.mxu0 0.0
    %4484 = vmatprep.subr.mxu0 0.0
    %4485 = vmatpush1.xpose.msra.mxu0 0.0
    %4486 = vmatprep.subr.mxu0 0.0
    %4487 = vmatpush1.xpose.msra.mxu0 0.0
    %4488 = vmatprep.subr.mxu0 0.0
    %4489 = vmatpush1.xpose.msra.mxu0 0.0
    %4490 = vmatprep.subr.mxu0 0.0
    %4491 = vmatpush1.xpose.msra.mxu0 0.0
    %4492 = vmatprep.subr.mxu0 0.0
    %4493 = vmatpush1.xpose.msra.mxu0 0.0
    %4494 = vmatprep.subr.mxu0 0.0
    %4495 = vmatpush1.xpose.msra.mxu0 0.0
    %4496 = vmatprep.subr.mxu0 0.0
    %4497 = vmatpush1.xpose.msra.mxu0 0.0
    %4498 = vmatprep.subr.mxu0 0.0
    %4499 = vmatpush1.xpose.msra.mxu0 0.0
    %4500 = vmatprep.subr.mxu0 0.0
    %4501 = vmatpush1.xpose.msra.mxu0 0.0
    %4502 = vmatprep.subr.mxu0 0.0
    %4503 = vmatpush1.xpose.msra.mxu0 0.0
    %4504 = vmatprep.subr.mxu0 0.0
    %4505 = vmatpush1.xpose.msra.mxu0 0.0
    %4506 = vmatprep.subr.mxu0 0.0
    %4507 = vmatpush1.xpose.msra.mxu0 0.0
    %4508 = vmatprep.subr.mxu0 0.0
    %4509 = vmatpush1.xpose.msra.mxu0 %v4476
    %4510 = vmatprep.subr.mxu0 0.0
    %4511 = vmatpush2.xpose.msra.mxu0 0.0
    %4512 = vmatprep.subr.mxu0 0.0
    %4513 = vmatpush2.xpose.msra.mxu0 0.0
    %4514 = vmatprep.subr.mxu0 0.0
    %4515 = vmatpush2.xpose.msra.mxu0 0.0
    %4516 = vmatprep.subr.mxu0 0.0
    %4517 = vmatpush2.xpose.msra.mxu0 0.0
    %4518 = vmatprep.subr.mxu0 0.0
    %4519 = vmatpush2.xpose.msra.mxu0 0.0
    %4520 = vmatprep.subr.mxu0 0.0
    %4521 = vmatpush2.xpose.msra.mxu0 0.0
    %4522 = vmatprep.subr.mxu0 0.0
    %4523 = vmatpush2.xpose.msra.mxu0 0.0
    %4524 = vmatprep.subr.mxu0 0.0
    %4525 = vmatpush2.xpose.msra.mxu0 0.0
    %4526 = vmatprep.subr.mxu0 0.0
    %4527 = vmatpush2.xpose.msra.mxu0 0.0
    %4528 = vmatprep.subr.mxu0 0.0
    %4529 = vmatpush2.xpose.msra.mxu0 0.0
    %4530 = vmatprep.subr.mxu0 0.0
    %4531 = vmatpush2.xpose.msra.mxu0 0.0
    %4532 = vmatprep.subr.mxu0 0.0
    %4533 = vmatpush2.xpose.msra.mxu0 0.0
    %4534 = vmatprep.subr.mxu0 0.0
    %4535 = vmatpush2.xpose.msra.mxu0 0.0
    %4536 = vmatprep.subr.mxu0 0.0
    %4537 = vmatpush2.xpose.msra.mxu0 0.0
    %4538 = vmatprep.subr.mxu0 0.0
    %4539 = vmatpush2.xpose.msra.mxu0 0.0
    %4540 = vmatprep.subr.mxu0 0.0
    %4541 = vmatpush2.xpose.msra.mxu0 0.0
    %4542 = vmatprep.mubr.f32.mxu0 0.0
    %4543 = vmatmul.mubr.f32.gmra.mxu0 %v4474
    %v4544 = vpop.f32.mrf.mxu0
    %v4545 = vadd.f32 %v582, %v4544
    %v4546 = vpop.f32.mrf.mxu0
    %4547 = vdwg.mxu0
    %v4548 = vsel %vm590, %v4311, -inf
    %4549 = vmax.xlane.f32.xlu0 %v4548
    %v4550 = vpop.xlane.xlu0 %4549
    %v4551 = vsel %vm590, %v4389, -inf
    %4552 = vmax.xlane.f32.xlu0 %v4551
    %v4553 = vpop.xlane.xlu0 %4552
    %v4554 = vsel %vm590, %v4467, -inf
    %4555 = vmax.xlane.f32.xlu0 %v4554
    %v4556 = vpop.xlane.xlu0 %4555
    %v4557 = vsel %vm590, %v4545, -inf
    %4558 = vmax.xlane.f32.xlu0 %v4557
    %v4559 = vpop.xlane.xlu0 %4558
    %v4560 = vsub.f32 %v4311, %v4550
    %v4561 = vsub.f32 %v4389, %v4553
    %v4562 = vsub.f32 %v4467, %v4556
    %v4563 = vsub.f32 %v4545, %v4559
    %v4564 = vmul.f32 %v4560, 1.442695
    %v4565 = vpow.pop %v4564
    %v4566 = vmul.f32 %v4561, 1.442695
    %v4567 = vpow.pop %v4566
    %v4568 = vmul.f32 %v4562, 1.442695
    %v4569 = vpow.pop %v4568
    %v4570 = vmul.f32 %v4563, 1.442695
    %v4571 = vpow.pop %v4570
    %v4572 = vsel %vm590, %v4565, 0.0
    %4573 = vadd.xlane.f32.xlu0 %v4572
    %v4574 = vpop.xlane.xlu0 %4573
    %v4575 = vsel %vm590, %v4567, 0.0
    %4576 = vadd.xlane.f32.xlu0 %v4575
    %v4577 = vpop.xlane.xlu0 %4576
    %v4578 = vsel %vm590, %v4569, 0.0
    %4579 = vadd.xlane.f32.xlu0 %v4578
    %v4580 = vpop.xlane.xlu0 %4579
    %v4581 = vsel %vm590, %v4571, 0.0
    %4582 = vadd.xlane.f32.xlu0 %v4581
    %v4583 = vpop.xlane.xlu0 %4582
    %v4584 = vrcp.pop %v4574
    %v4585 = vrcp.pop %v4577
    %v4586 = vrcp.pop %v4580
    %v4587 = vrcp.pop %v4583
    %v4588 = vmul.f32 %v4565, %v4584
    %v4589 = vmul.f32 %v4567, %v4585
    %v4590 = vmul.f32 %v4569, %v4586
    %v4591 = vmul.f32 %v4571, %v4587
    %4592 = vrot.lane.b32.xlu0 %v4210, 64
    %v4593 = vpop.permute.xlu0 %4592
    %v4596 = vsel %vm590, %v4588, 0
    %4598 = vmatprep.subr.mxu0 0.0
    %4599 = vmatpush1.msra.mxu0 0.0
    %4600 = vmatprep.subr.mxu0 0.0
    %4601 = vmatpush1.msra.mxu0 0.0
    %4602 = vmatprep.subr.mxu0 0.0
    %4603 = vmatpush1.msra.mxu0 0.0
    %4604 = vmatprep.subr.mxu0 0.0
    %4605 = vmatpush1.msra.mxu0 0.0
    %4606 = vmatprep.subr.mxu0 0.0
    %4607 = vmatpush1.msra.mxu0 0.0
    %4608 = vmatprep.subr.mxu0 0.0
    %4609 = vmatpush1.msra.mxu0 0.0
    %4610 = vmatprep.subr.mxu0 0.0
    %4611 = vmatpush1.msra.mxu0 0.0
    %4612 = vmatprep.subr.mxu0 0.0
    %4613 = vmatpush1.msra.mxu0 0.0
    %4614 = vmatprep.subr.mxu0 0.0
    %4615 = vmatpush1.msra.mxu0 0.0
    %4616 = vmatprep.subr.mxu0 0.0
    %4617 = vmatpush1.msra.mxu0 0.0
    %4618 = vmatprep.subr.mxu0 0.0
    %4619 = vmatpush1.msra.mxu0 0.0
    %4620 = vmatprep.subr.mxu0 0.0
    %4621 = vmatpush1.msra.mxu0 0.0
    %4622 = vmatprep.subr.mxu0 0.0
    %4623 = vmatpush1.msra.mxu0 0.0
    %4624 = vmatprep.subr.mxu0 0.0
    %4625 = vmatpush1.msra.mxu0 0.0
    %4626 = vmatprep.subr.mxu0 0.0
    %4627 = vmatpush1.msra.mxu0 0.0
    %4628 = vmatprep.subr.mxu0 0.0
    %4629 = vmatpush1.msra.mxu0 %v4593
    %4630 = vmatprep.subr.mxu0 0.0
    %4631 = vmatpush2.msra.mxu0 0.0
    %4632 = vmatprep.subr.mxu0 0.0
    %4633 = vmatpush2.msra.mxu0 0.0
    %4634 = vmatprep.subr.mxu0 0.0
    %4635 = vmatpush2.msra.mxu0 0.0
    %4636 = vmatprep.subr.mxu0 0.0
    %4637 = vmatpush2.msra.mxu0 0.0
    %4638 = vmatprep.subr.mxu0 0.0
    %4639 = vmatpush2.msra.mxu0 0.0
    %4640 = vmatprep.subr.mxu0 0.0
    %4641 = vmatpush2.msra.mxu0 0.0
    %4642 = vmatprep.subr.mxu0 0.0
    %4643 = vmatpush2.msra.mxu0 0.0
    %4644 = vmatprep.subr.mxu0 0.0
    %4645 = vmatpush2.msra.mxu0 0.0
    %4646 = vmatprep.subr.mxu0 0.0
    %4647 = vmatpush2.msra.mxu0 0.0
    %4648 = vmatprep.subr.mxu0 0.0
    %4649 = vmatpush2.msra.mxu0 0.0
    %4650 = vmatprep.subr.mxu0 0.0
    %4651 = vmatpush2.msra.mxu0 0.0
    %4652 = vmatprep.subr.mxu0 0.0
    %4653 = vmatpush2.msra.mxu0 0.0
    %4654 = vmatprep.subr.mxu0 0.0
    %4655 = vmatpush2.msra.mxu0 0.0
    %4656 = vmatprep.subr.mxu0 0.0
    %4657 = vmatpush2.msra.mxu0 0.0
    %4658 = vmatprep.subr.mxu0 0.0
    %4659 = vmatpush2.msra.mxu0 0.0
    %4660 = vmatprep.subr.mxu0 0.0
    %4661 = vmatpush2.msra.mxu0 0.0
    %4662 = vmatprep.mubr.f32.mxu0 0.0
    %4663 = vmatmul.mubr.f32.gmra.mxu0 %v4596
    %v4664 = vpop.f32.mrf.mxu0
    %v4665 = vadd.f32 0.0, %v4664
    %v4666 = vpop.f32.mrf.mxu0
    %4667 = vdwg.mxu0
    %4668 = vrot.lane.b32.xlu0 %v4215, 64
    %v4669 = vpop.permute.xlu0 %4668
    %v4672 = vsel %vm590, %v4589, 0
    %4674 = vmatprep.subr.mxu0 0.0
    %4675 = vmatpush1.msra.mxu0 0.0
    %4676 = vmatprep.subr.mxu0 0.0
    %4677 = vmatpush1.msra.mxu0 0.0
    %4678 = vmatprep.subr.mxu0 0.0
    %4679 = vmatpush1.msra.mxu0 0.0
    %4680 = vmatprep.subr.mxu0 0.0
    %4681 = vmatpush1.msra.mxu0 0.0
    %4682 = vmatprep.subr.mxu0 0.0
    %4683 = vmatpush1.msra.mxu0 0.0
    %4684 = vmatprep.subr.mxu0 0.0
    %4685 = vmatpush1.msra.mxu0 0.0
    %4686 = vmatprep.subr.mxu0 0.0
    %4687 = vmatpush1.msra.mxu0 0.0
    %4688 = vmatprep.subr.mxu0 0.0
    %4689 = vmatpush1.msra.mxu0 0.0
    %4690 = vmatprep.subr.mxu0 0.0
    %4691 = vmatpush1.msra.mxu0 0.0
    %4692 = vmatprep.subr.mxu0 0.0
    %4693 = vmatpush1.msra.mxu0 0.0
    %4694 = vmatprep.subr.mxu0 0.0
    %4695 = vmatpush1.msra.mxu0 0.0
    %4696 = vmatprep.subr.mxu0 0.0
    %4697 = vmatpush1.msra.mxu0 0.0
    %4698 = vmatprep.subr.mxu0 0.0
    %4699 = vmatpush1.msra.mxu0 0.0
    %4700 = vmatprep.subr.mxu0 0.0
    %4701 = vmatpush1.msra.mxu0 0.0
    %4702 = vmatprep.subr.mxu0 0.0
    %4703 = vmatpush1.msra.mxu0 0.0
    %4704 = vmatprep.subr.mxu0 0.0
    %4705 = vmatpush1.msra.mxu0 %v4669
    %4706 = vmatprep.subr.mxu0 0.0
    %4707 = vmatpush2.msra.mxu0 0.0
    %4708 = vmatprep.subr.mxu0 0.0
    %4709 = vmatpush2.msra.mxu0 0.0
    %4710 = vmatprep.subr.mxu0 0.0
    %4711 = vmatpush2.msra.mxu0 0.0
    %4712 = vmatprep.subr.mxu0 0.0
    %4713 = vmatpush2.msra.mxu0 0.0
    %4714 = vmatprep.subr.mxu0 0.0
    %4715 = vmatpush2.msra.mxu0 0.0
    %4716 = vmatprep.subr.mxu0 0.0
    %4717 = vmatpush2.msra.mxu0 0.0
    %4718 = vmatprep.subr.mxu0 0.0
    %4719 = vmatpush2.msra.mxu0 0.0
    %4720 = vmatprep.subr.mxu0 0.0
    %4721 = vmatpush2.msra.mxu0 0.0
    %4722 = vmatprep.subr.mxu0 0.0
    %4723 = vmatpush2.msra.mxu0 0.0
    %4724 = vmatprep.subr.mxu0 0.0
    %4725 = vmatpush2.msra.mxu0 0.0
    %4726 = vmatprep.subr.mxu0 0.0
    %4727 = vmatpush2.msra.mxu0 0.0
    %4728 = vmatprep.subr.mxu0 0.0
    %4729 = vmatpush2.msra.mxu0 0.0
    %4730 = vmatprep.subr.mxu0 0.0
    %4731 = vmatpush2.msra.mxu0 0.0
    %4732 = vmatprep.subr.mxu0 0.0
    %4733 = vmatpush2.msra.mxu0 0.0
    %4734 = vmatprep.subr.mxu0 0.0
    %4735 = vmatpush2.msra.mxu0 0.0
    %4736 = vmatprep.subr.mxu0 0.0
    %4737 = vmatpush2.msra.mxu0 0.0
    %4738 = vmatprep.mubr.f32.mxu0 0.0
    %4739 = vmatmul.mubr.f32.gmra.mxu0 %v4672
    %v4740 = vpop.f32.mrf.mxu0
    %v4741 = vadd.f32 0.0, %v4740
    %v4742 = vpop.f32.mrf.mxu0
    %4743 = vdwg.mxu0
    %4744 = vrot.lane.b32.xlu0 %v4220, 64
    %v4745 = vpop.permute.xlu0 %4744
    %v4748 = vsel %vm590, %v4590, 0
    %4750 = vmatprep.subr.mxu0 0.0
    %4751 = vmatpush1.msra.mxu0 0.0
    %4752 = vmatprep.subr.mxu0 0.0
    %4753 = vmatpush1.msra.mxu0 0.0
    %4754 = vmatprep.subr.mxu0 0.0
    %4755 = vmatpush1.msra.mxu0 0.0
    %4756 = vmatprep.subr.mxu0 0.0
    %4757 = vmatpush1.msra.mxu0 0.0
    %4758 = vmatprep.subr.mxu0 0.0
    %4759 = vmatpush1.msra.mxu0 0.0
    %4760 = vmatprep.subr.mxu0 0.0
    %4761 = vmatpush1.msra.mxu0 0.0
    %4762 = vmatprep.subr.mxu0 0.0
    %4763 = vmatpush1.msra.mxu0 0.0
    %4764 = vmatprep.subr.mxu0 0.0
    %4765 = vmatpush1.msra.mxu0 0.0
    %4766 = vmatprep.subr.mxu0 0.0
    %4767 = vmatpush1.msra.mxu0 0.0
    %4768 = vmatprep.subr.mxu0 0.0
    %4769 = vmatpush1.msra.mxu0 0.0
    %4770 = vmatprep.subr.mxu0 0.0
    %4771 = vmatpush1.msra.mxu0 0.0
    %4772 = vmatprep.subr.mxu0 0.0
    %4773 = vmatpush1.msra.mxu0 0.0
    %4774 = vmatprep.subr.mxu0 0.0
    %4775 = vmatpush1.msra.mxu0 0.0
    %4776 = vmatprep.subr.mxu0 0.0
    %4777 = vmatpush1.msra.mxu0 0.0
    %4778 = vmatprep.subr.mxu0 0.0
    %4779 = vmatpush1.msra.mxu0 0.0
    %4780 = vmatprep.subr.mxu0 0.0
    %4781 = vmatpush1.msra.mxu0 %v4745
    %4782 = vmatprep.subr.mxu0 0.0
    %4783 = vmatpush2.msra.mxu0 0.0
    %4784 = vmatprep.subr.mxu0 0.0
    %4785 = vmatpush2.msra.mxu0 0.0
    %4786 = vmatprep.subr.mxu0 0.0
    %4787 = vmatpush2.msra.mxu0 0.0
    %4788 = vmatprep.subr.mxu0 0.0
    %4789 = vmatpush2.msra.mxu0 0.0
    %4790 = vmatprep.subr.mxu0 0.0
    %4791 = vmatpush2.msra.mxu0 0.0
    %4792 = vmatprep.subr.mxu0 0.0
    %4793 = vmatpush2.msra.mxu0 0.0
    %4794 = vmatprep.subr.mxu0 0.0
    %4795 = vmatpush2.msra.mxu0 0.0
    %4796 = vmatprep.subr.mxu0 0.0
    %4797 = vmatpush2.msra.mxu0 0.0
    %4798 = vmatprep.subr.mxu0 0.0
    %4799 = vmatpush2.msra.mxu0 0.0
    %4800 = vmatprep.subr.mxu0 0.0
    %4801 = vmatpush2.msra.mxu0 0.0
    %4802 = vmatprep.subr.mxu0 0.0
    %4803 = vmatpush2.msra.mxu0 0.0
    %4804 = vmatprep.subr.mxu0 0.0
    %4805 = vmatpush2.msra.mxu0 0.0
    %4806 = vmatprep.subr.mxu0 0.0
    %4807 = vmatpush2.msra.mxu0 0.0
    %4808 = vmatprep.subr.mxu0 0.0
    %4809 = vmatpush2.msra.mxu0 0.0
    %4810 = vmatprep.subr.mxu0 0.0
    %4811 = vmatpush2.msra.mxu0 0.0
    %4812 = vmatprep.subr.mxu0 0.0
    %4813 = vmatpush2.msra.mxu0 0.0
    %4814 = vmatprep.mubr.f32.mxu0 0.0
    %4815 = vmatmul.mubr.f32.gmra.mxu0 %v4748
    %v4816 = vpop.f32.mrf.mxu0
    %v4817 = vadd.f32 0.0, %v4816
    %v4818 = vpop.f32.mrf.mxu0
    %4819 = vdwg.mxu0
    %4820 = vrot.lane.b32.xlu0 %v4225, 64
    %v4821 = vpop.permute.xlu0 %4820
    %v4824 = vsel %vm590, %v4591, 0
    %4826 = vmatprep.subr.mxu0 0.0
    %4827 = vmatpush1.msra.mxu0 0.0
    %4828 = vmatprep.subr.mxu0 0.0
    %4829 = vmatpush1.msra.mxu0 0.0
    %4830 = vmatprep.subr.mxu0 0.0
    %4831 = vmatpush1.msra.mxu0 0.0
    %4832 = vmatprep.subr.mxu0 0.0
    %4833 = vmatpush1.msra.mxu0 0.0
    %4834 = vmatprep.subr.mxu0 0.0
    %4835 = vmatpush1.msra.mxu0 0.0
    %4836 = vmatprep.subr.mxu0 0.0
    %4837 = vmatpush1.msra.mxu0 0.0
    %4838 = vmatprep.subr.mxu0 0.0
    %4839 = vmatpush1.msra.mxu0 0.0
    %4840 = vmatprep.subr.mxu0 0.0
    %4841 = vmatpush1.msra.mxu0 0.0
    %4842 = vmatprep.subr.mxu0 0.0
    %4843 = vmatpush1.msra.mxu0 0.0
    %4844 = vmatprep.subr.mxu0 0.0
    %4845 = vmatpush1.msra.mxu0 0.0
    %4846 = vmatprep.subr.mxu0 0.0
    %4847 = vmatpush1.msra.mxu0 0.0
    %4848 = vmatprep.subr.mxu0 0.0
    %4849 = vmatpush1.msra.mxu0 0.0
    %4850 = vmatprep.subr.mxu0 0.0
    %4851 = vmatpush1.msra.mxu0 0.0
    %4852 = vmatprep.subr.mxu0 0.0
    %4853 = vmatpush1.msra.mxu0 0.0
    %4854 = vmatprep.subr.mxu0 0.0
    %4855 = vmatpush1.msra.mxu0 0.0
    %4856 = vmatprep.subr.mxu0 0.0
    %4857 = vmatpush1.msra.mxu0 %v4821
    %4858 = vmatprep.subr.mxu0 0.0
    %4859 = vmatpush2.msra.mxu0 0.0
    %4860 = vmatprep.subr.mxu0 0.0
    %4861 = vmatpush2.msra.mxu0 0.0
    %4862 = vmatprep.subr.mxu0 0.0
    %4863 = vmatpush2.msra.mxu0 0.0
    %4864 = vmatprep.subr.mxu0 0.0
    %4865 = vmatpush2.msra.mxu0 0.0
    %4866 = vmatprep.subr.mxu0 0.0
    %4867 = vmatpush2.msra.mxu0 0.0
    %4868 = vmatprep.subr.mxu0 0.0
    %4869 = vmatpush2.msra.mxu0 0.0
    %4870 = vmatprep.subr.mxu0 0.0
    %4871 = vmatpush2.msra.mxu0 0.0
    %4872 = vmatprep.subr.mxu0 0.0
    %4873 = vmatpush2.msra.mxu0 0.0
    %4874 = vmatprep.subr.mxu0 0.0
    %4875 = vmatpush2.msra.mxu0 0.0
    %4876 = vmatprep.subr.mxu0 0.0
    %4877 = vmatpush2.msra.mxu0 0.0
    %4878 = vmatprep.subr.mxu0 0.0
    %4879 = vmatpush2.msra.mxu0 0.0
    %4880 = vmatprep.subr.mxu0 0.0
    %4881 = vmatpush2.msra.mxu0 0.0
    %4882 = vmatprep.subr.mxu0 0.0
    %4883 = vmatpush2.msra.mxu0 0.0
    %4884 = vmatprep.subr.mxu0 0.0
    %4885 = vmatpush2.msra.mxu0 0.0
    %4886 = vmatprep.subr.mxu0 0.0
    %4887 = vmatpush2.msra.mxu0 0.0
    %4888 = vmatprep.subr.mxu0 0.0
    %4889 = vmatpush2.msra.mxu0 0.0
    %4890 = vmatprep.mubr.f32.mxu0 0.0
    %4891 = vmatmul.mubr.f32.gmra.mxu0 %v4824
    %v4892 = vpop.f32.mrf.mxu0
    %v4893 = vadd.f32 0.0, %v4892
    %v4894 = vpop.f32.mrf.mxu0
    %4895 = vdwg.mxu0
    %4896 = vrot.lane.b32.xlu0 %v4228, 120
    %v4897 = vpop.permute.xlu0 %4896
    %4898 = vrot.lane.b32.xlu0 %v4210, 88
    %v4899 = vpop.permute.xlu0 %4898
    %v4900 = vsel %vm590, %v4897, 0
    %v4902 = vsel %vm590, %v4899, 0
    %4904 = vmatprep.subr.mxu0 0.0
    %4905 = vmatpush1.xpose.msra.mxu0 0.0
    %4906 = vmatprep.subr.mxu0 0.0
    %4907 = vmatpush1.xpose.msra.mxu0 0.0
    %4908 = vmatprep.subr.mxu0 0.0
    %4909 = vmatpush1.xpose.msra.mxu0 0.0
    %4910 = vmatprep.subr.mxu0 0.0
    %4911 = vmatpush1.xpose.msra.mxu0 0.0
    %4912 = vmatprep.subr.mxu0 0.0
    %4913 = vmatpush1.xpose.msra.mxu0 0.0
    %4914 = vmatprep.subr.mxu0 0.0
    %4915 = vmatpush1.xpose.msra.mxu0 0.0
    %4916 = vmatprep.subr.mxu0 0.0
    %4917 = vmatpush1.xpose.msra.mxu0 0.0
    %4918 = vmatprep.subr.mxu0 0.0
    %4919 = vmatpush1.xpose.msra.mxu0 0.0
    %4920 = vmatprep.subr.mxu0 0.0
    %4921 = vmatpush1.xpose.msra.mxu0 0.0
    %4922 = vmatprep.subr.mxu0 0.0
    %4923 = vmatpush1.xpose.msra.mxu0 0.0
    %4924 = vmatprep.subr.mxu0 0.0
    %4925 = vmatpush1.xpose.msra.mxu0 0.0
    %4926 = vmatprep.subr.mxu0 0.0
    %4927 = vmatpush1.xpose.msra.mxu0 0.0
    %4928 = vmatprep.subr.mxu0 0.0
    %4929 = vmatpush1.xpose.msra.mxu0 0.0
    %4930 = vmatprep.subr.mxu0 0.0
    %4931 = vmatpush1.xpose.msra.mxu0 0.0
    %4932 = vmatprep.subr.mxu0 0.0
    %4933 = vmatpush1.xpose.msra.mxu0 0.0
    %4934 = vmatprep.subr.mxu0 0.0
    %4935 = vmatpush1.xpose.msra.mxu0 %v4902
    %4936 = vmatprep.subr.mxu0 0.0
    %4937 = vmatpush2.xpose.msra.mxu0 0.0
    %4938 = vmatprep.subr.mxu0 0.0
    %4939 = vmatpush2.xpose.msra.mxu0 0.0
    %4940 = vmatprep.subr.mxu0 0.0
    %4941 = vmatpush2.xpose.msra.mxu0 0.0
    %4942 = vmatprep.subr.mxu0 0.0
    %4943 = vmatpush2.xpose.msra.mxu0 0.0
    %4944 = vmatprep.subr.mxu0 0.0
    %4945 = vmatpush2.xpose.msra.mxu0 0.0
    %4946 = vmatprep.subr.mxu0 0.0
    %4947 = vmatpush2.xpose.msra.mxu0 0.0
    %4948 = vmatprep.subr.mxu0 0.0
    %4949 = vmatpush2.xpose.msra.mxu0 0.0
    %4950 = vmatprep.subr.mxu0 0.0
    %4951 = vmatpush2.xpose.msra.mxu0 0.0
    %4952 = vmatprep.subr.mxu0 0.0
    %4953 = vmatpush2.xpose.msra.mxu0 0.0
    %4954 = vmatprep.subr.mxu0 0.0
    %4955 = vmatpush2.xpose.msra.mxu0 0.0
    %4956 = vmatprep.subr.mxu0 0.0
    %4957 = vmatpush2.xpose.msra.mxu0 0.0
    %4958 = vmatprep.subr.mxu0 0.0
    %4959 = vmatpush2.xpose.msra.mxu0 0.0
    %4960 = vmatprep.subr.mxu0 0.0
    %4961 = vmatpush2.xpose.msra.mxu0 0.0
    %4962 = vmatprep.subr.mxu0 0.0
    %4963 = vmatpush2.xpose.msra.mxu0 0.0
    %4964 = vmatprep.subr.mxu0 0.0
    %4965 = vmatpush2.xpose.msra.mxu0 0.0
    %4966 = vmatprep.subr.mxu0 0.0
    %4967 = vmatpush2.xpose.msra.mxu0 0.0
    %4968 = vmatprep.mubr.f32.mxu0 0.0
    %4969 = vmatmul.mubr.f32.gmra.mxu0 %v4900
    %v4970 = vpop.f32.mrf.mxu0
    %v4971 = vadd.f32 %v570, %v4970
    %v4972 = vpop.f32.mrf.mxu0
    %4973 = vdwg.mxu0
    %4974 = vrot.lane.b32.xlu0 %v4229, 120
    %v4975 = vpop.permute.xlu0 %4974
    %4976 = vrot.lane.b32.xlu0 %v4215, 88
    %v4977 = vpop.permute.xlu0 %4976
    %v4978 = vsel %vm590, %v4975, 0
    %v4980 = vsel %vm590, %v4977, 0
    %4982 = vmatprep.subr.mxu0 0.0
    %4983 = vmatpush1.xpose.msra.mxu0 0.0
    %4984 = vmatprep.subr.mxu0 0.0
    %4985 = vmatpush1.xpose.msra.mxu0 0.0
    %4986 = vmatprep.subr.mxu0 0.0
    %4987 = vmatpush1.xpose.msra.mxu0 0.0
    %4988 = vmatprep.subr.mxu0 0.0
    %4989 = vmatpush1.xpose.msra.mxu0 0.0
    %4990 = vmatprep.subr.mxu0 0.0
    %4991 = vmatpush1.xpose.msra.mxu0 0.0
    %4992 = vmatprep.subr.mxu0 0.0
    %4993 = vmatpush1.xpose.msra.mxu0 0.0
    %4994 = vmatprep.subr.mxu0 0.0
    %4995 = vmatpush1.xpose.msra.mxu0 0.0
    %4996 = vmatprep.subr.mxu0 0.0
    %4997 = vmatpush1.xpose.msra.mxu0 0.0
    %4998 = vmatprep.subr.mxu0 0.0
    %4999 = vmatpush1.xpose.msra.mxu0 0.0
    %5000 = vmatprep.subr.mxu0 0.0
    %5001 = vmatpush1.xpose.msra.mxu0 0.0
    %5002 = vmatprep.subr.mxu0 0.0
    %5003 = vmatpush1.xpose.msra.mxu0 0.0
    %5004 = vmatprep.subr.mxu0 0.0
    %5005 = vmatpush1.xpose.msra.mxu0 0.0
    %5006 = vmatprep.subr.mxu0 0.0
    %5007 = vmatpush1.xpose.msra.mxu0 0.0
    %5008 = vmatprep.subr.mxu0 0.0
    %5009 = vmatpush1.xpose.msra.mxu0 0.0
    %5010 = vmatprep.subr.mxu0 0.0
    %5011 = vmatpush1.xpose.msra.mxu0 0.0
    %5012 = vmatprep.subr.mxu0 0.0
    %5013 = vmatpush1.xpose.msra.mxu0 %v4980
    %5014 = vmatprep.subr.mxu0 0.0
    %5015 = vmatpush2.xpose.msra.mxu0 0.0
    %5016 = vmatprep.subr.mxu0 0.0
    %5017 = vmatpush2.xpose.msra.mxu0 0.0
    %5018 = vmatprep.subr.mxu0 0.0
    %5019 = vmatpush2.xpose.msra.mxu0 0.0
    %5020 = vmatprep.subr.mxu0 0.0
    %5021 = vmatpush2.xpose.msra.mxu0 0.0
    %5022 = vmatprep.subr.mxu0 0.0
    %5023 = vmatpush2.xpose.msra.mxu0 0.0
    %5024 = vmatprep.subr.mxu0 0.0
    %5025 = vmatpush2.xpose.msra.mxu0 0.0
    %5026 = vmatprep.subr.mxu0 0.0
    %5027 = vmatpush2.xpose.msra.mxu0 0.0
    %5028 = vmatprep.subr.mxu0 0.0
    %5029 = vmatpush2.xpose.msra.mxu0 0.0
    %5030 = vmatprep.subr.mxu0 0.0
    %5031 = vmatpush2.xpose.msra.mxu0 0.0
    %5032 = vmatprep.subr.mxu0 0.0
    %5033 = vmatpush2.xpose.msra.mxu0 0.0
    %5034 = vmatprep.subr.mxu0 0.0
    %5035 = vmatpush2.xpose.msra.mxu0 0.0
    %5036 = vmatprep.subr.mxu0 0.0
    %5037 = vmatpush2.xpose.msra.mxu0 0.0
    %5038 = vmatprep.subr.mxu0 0.0
    %5039 = vmatpush2.xpose.msra.mxu0 0.0
    %5040 = vmatprep.subr.mxu0 0.0
    %5041 = vmatpush2.xpose.msra.mxu0 0.0
    %5042 = vmatprep.subr.mxu0 0.0
    %5043 = vmatpush2.xpose.msra.mxu0 0.0
    %5044 = vmatprep.subr.mxu0 0.0
    %5045 = vmatpush2.xpose.msra.mxu0 0.0
    %5046 = vmatprep.mubr.f32.mxu0 0.0
    %5047 = vmatmul.mubr.f32.gmra.mxu0 %v4978
    %v5048 = vpop.f32.mrf.mxu0
    %v5049 = vadd.f32 %v574, %v5048
    %v5050 = vpop.f32.mrf.mxu0
    %5051 = vdwg.mxu0
    %5052 = vrot.lane.b32.xlu0 %v4230, 120
    %v5053 = vpop.permute.xlu0 %5052
    %5054 = vrot.lane.b32.xlu0 %v4220, 88
    %v5055 = vpop.permute.xlu0 %5054
    %v5056 = vsel %vm590, %v5053, 0
    %v5058 = vsel %vm590, %v5055, 0
    %5060 = vmatprep.subr.mxu0 0.0
    %5061 = vmatpush1.xpose.msra.mxu0 0.0
    %5062 = vmatprep.subr.mxu0 0.0
    %5063 = vmatpush1.xpose.msra.mxu0 0.0
    %5064 = vmatprep.subr.mxu0 0.0
    %5065 = vmatpush1.xpose.msra.mxu0 0.0
    %5066 = vmatprep.subr.mxu0 0.0
    %5067 = vmatpush1.xpose.msra.mxu0 0.0
    %5068 = vmatprep.subr.mxu0 0.0
    %5069 = vmatpush1.xpose.msra.mxu0 0.0
    %5070 = vmatprep.subr.mxu0 0.0
    %5071 = vmatpush1.xpose.msra.mxu0 0.0
    %5072 = vmatprep.subr.mxu0 0.0
    %5073 = vmatpush1.xpose.msra.mxu0 0.0
    %5074 = vmatprep.subr.mxu0 0.0
    %5075 = vmatpush1.xpose.msra.mxu0 0.0
    %5076 = vmatprep.subr.mxu0 0.0
    %5077 = vmatpush1.xpose.msra.mxu0 0.0
    %5078 = vmatprep.subr.mxu0 0.0
    %5079 = vmatpush1.xpose.msra.mxu0 0.0
    %5080 = vmatprep.subr.mxu0 0.0
    %5081 = vmatpush1.xpose.msra.mxu0 0.0
    %5082 = vmatprep.subr.mxu0 0.0
    %5083 = vmatpush1.xpose.msra.mxu0 0.0
    %5084 = vmatprep.subr.mxu0 0.0
    %5085 = vmatpush1.xpose.msra.mxu0 0.0
    %5086 = vmatprep.subr.mxu0 0.0
    %5087 = vmatpush1.xpose.msra.mxu0 0.0
    %5088 = vmatprep.subr.mxu0 0.0
    %5089 = vmatpush1.xpose.msra.mxu0 0.0
    %5090 = vmatprep.subr.mxu0 0.0
    %5091 = vmatpush1.xpose.msra.mxu0 %v5058
    %5092 = vmatprep.subr.mxu0 0.0
    %5093 = vmatpush2.xpose.msra.mxu0 0.0
    %5094 = vmatprep.subr.mxu0 0.0
    %5095 = vmatpush2.xpose.msra.mxu0 0.0
    %5096 = vmatprep.subr.mxu0 0.0
    %5097 = vmatpush2.xpose.msra.mxu0 0.0
    %5098 = vmatprep.subr.mxu0 0.0
    %5099 = vmatpush2.xpose.msra.mxu0 0.0
    %5100 = vmatprep.subr.mxu0 0.0
    %5101 = vmatpush2.xpose.msra.mxu0 0.0
    %5102 = vmatprep.subr.mxu0 0.0
    %5103 = vmatpush2.xpose.msra.mxu0 0.0
    %5104 = vmatprep.subr.mxu0 0.0
    %5105 = vmatpush2.xpose.msra.mxu0 0.0
    %5106 = vmatprep.subr.mxu0 0.0
    %5107 = vmatpush2.xpose.msra.mxu0 0.0
    %5108 = vmatprep.subr.mxu0 0.0
    %5109 = vmatpush2.xpose.msra.mxu0 0.0
    %5110 = vmatprep.subr.mxu0 0.0
    %5111 = vmatpush2.xpose.msra.mxu0 0.0
    %5112 = vmatprep.subr.mxu0 0.0
    %5113 = vmatpush2.xpose.msra.mxu0 0.0
    %5114 = vmatprep.subr.mxu0 0.0
    %5115 = vmatpush2.xpose.msra.mxu0 0.0
    %5116 = vmatprep.subr.mxu0 0.0
    %5117 = vmatpush2.xpose.msra.mxu0 0.0
    %5118 = vmatprep.subr.mxu0 0.0
    %5119 = vmatpush2.xpose.msra.mxu0 0.0
    %5120 = vmatprep.subr.mxu0 0.0
    %5121 = vmatpush2.xpose.msra.mxu0 0.0
    %5122 = vmatprep.subr.mxu0 0.0
    %5123 = vmatpush2.xpose.msra.mxu0 0.0
    %5124 = vmatprep.mubr.f32.mxu0 0.0
    %5125 = vmatmul.mubr.f32.gmra.mxu0 %v5056
    %v5126 = vpop.f32.mrf.mxu0
    %v5127 = vadd.f32 %v578, %v5126
    %v5128 = vpop.f32.mrf.mxu0
    %5129 = vdwg.mxu0
    %5130 = vrot.lane.b32.xlu0 %v4231, 120
    %v5131 = vpop.permute.xlu0 %5130
    %5132 = vrot.lane.b32.xlu0 %v4225, 88
    %v5133 = vpop.permute.xlu0 %5132
    %v5134 = vsel %vm590, %v5131, 0
    %v5136 = vsel %vm590, %v5133, 0
    %5138 = vmatprep.subr.mxu0 0.0
    %5139 = vmatpush1.xpose.msra.mxu0 0.0
    %5140 = vmatprep.subr.mxu0 0.0
    %5141 = vmatpush1.xpose.msra.mxu0 0.0
    %5142 = vmatprep.subr.mxu0 0.0
    %5143 = vmatpush1.xpose.msra.mxu0 0.0
    %5144 = vmatprep.subr.mxu0 0.0
    %5145 = vmatpush1.xpose.msra.mxu0 0.0
    %5146 = vmatprep.subr.mxu0 0.0
    %5147 = vmatpush1.xpose.msra.mxu0 0.0
    %5148 = vmatprep.subr.mxu0 0.0
    %5149 = vmatpush1.xpose.msra.mxu0 0.0
    %5150 = vmatprep.subr.mxu0 0.0
    %5151 = vmatpush1.xpose.msra.mxu0 0.0
    %5152 = vmatprep.subr.mxu0 0.0
    %5153 = vmatpush1.xpose.msra.mxu0 0.0
    %5154 = vmatprep.subr.mxu0 0.0
    %5155 = vmatpush1.xpose.msra.mxu0 0.0
    %5156 = vmatprep.subr.mxu0 0.0
    %5157 = vmatpush1.xpose.msra.mxu0 0.0
    %5158 = vmatprep.subr.mxu0 0.0
    %5159 = vmatpush1.xpose.msra.mxu0 0.0
    %5160 = vmatprep.subr.mxu0 0.0
    %5161 = vmatpush1.xpose.msra.mxu0 0.0
    %5162 = vmatprep.subr.mxu0 0.0
    %5163 = vmatpush1.xpose.msra.mxu0 0.0
    %5164 = vmatprep.subr.mxu0 0.0
    %5165 = vmatpush1.xpose.msra.mxu0 0.0
    %5166 = vmatprep.subr.mxu0 0.0
    %5167 = vmatpush1.xpose.msra.mxu0 0.0
    %5168 = vmatprep.subr.mxu0 0.0
    %5169 = vmatpush1.xpose.msra.mxu0 %v5136
    %5170 = vmatprep.subr.mxu0 0.0
    %5171 = vmatpush2.xpose.msra.mxu0 0.0
    %5172 = vmatprep.subr.mxu0 0.0
    %5173 = vmatpush2.xpose.msra.mxu0 0.0
    %5174 = vmatprep.subr.mxu0 0.0
    %5175 = vmatpush2.xpose.msra.mxu0 0.0
    %5176 = vmatprep.subr.mxu0 0.0
    %5177 = vmatpush2.xpose.msra.mxu0 0.0
    %5178 = vmatprep.subr.mxu0 0.0
    %5179 = vmatpush2.xpose.msra.mxu0 0.0
    %5180 = vmatprep.subr.mxu0 0.0
    %5181 = vmatpush2.xpose.msra.mxu0 0.0
    %5182 = vmatprep.subr.mxu0 0.0
    %5183 = vmatpush2.xpose.msra.mxu0 0.0
    %5184 = vmatprep.subr.mxu0 0.0
    %5185 = vmatpush2.xpose.msra.mxu0 0.0
    %5186 = vmatprep.subr.mxu0 0.0
    %5187 = vmatpush2.xpose.msra.mxu0 0.0
    %5188 = vmatprep.subr.mxu0 0.0
    %5189 = vmatpush2.xpose.msra.mxu0 0.0
    %5190 = vmatprep.subr.mxu0 0.0
    %5191 = vmatpush2.xpose.msra.mxu0 0.0
    %5192 = vmatprep.subr.mxu0 0.0
    %5193 = vmatpush2.xpose.msra.mxu0 0.0
    %5194 = vmatprep.subr.mxu0 0.0
    %5195 = vmatpush2.xpose.msra.mxu0 0.0
    %5196 = vmatprep.subr.mxu0 0.0
    %5197 = vmatpush2.xpose.msra.mxu0 0.0
    %5198 = vmatprep.subr.mxu0 0.0
    %5199 = vmatpush2.xpose.msra.mxu0 0.0
    %5200 = vmatprep.subr.mxu0 0.0
    %5201 = vmatpush2.xpose.msra.mxu0 0.0
    %5202 = vmatprep.mubr.f32.mxu0 0.0
    %5203 = vmatmul.mubr.f32.gmra.mxu0 %v5134
    %v5204 = vpop.f32.mrf.mxu0
    %v5205 = vadd.f32 %v582, %v5204
    %v5206 = vpop.f32.mrf.mxu0
    %5207 = vdwg.mxu0
    %v5208 = vsel %vm590, %v4971, -inf
    %5209 = vmax.xlane.f32.xlu0 %v5208
    %v5210 = vpop.xlane.xlu0 %5209
    %v5211 = vsel %vm590, %v5049, -inf
    %5212 = vmax.xlane.f32.xlu0 %v5211
    %v5213 = vpop.xlane.xlu0 %5212
    %v5214 = vsel %vm590, %v5127, -inf
    %5215 = vmax.xlane.f32.xlu0 %v5214
    %v5216 = vpop.xlane.xlu0 %5215
    %v5217 = vsel %vm590, %v5205, -inf
    %5218 = vmax.xlane.f32.xlu0 %v5217
    %v5219 = vpop.xlane.xlu0 %5218
    %v5220 = vsub.f32 %v4971, %v5210
    %v5221 = vsub.f32 %v5049, %v5213
    %v5222 = vsub.f32 %v5127, %v5216
    %v5223 = vsub.f32 %v5205, %v5219
    %v5224 = vmul.f32 %v5220, 1.442695
    %v5225 = vpow.pop %v5224
    %v5226 = vmul.f32 %v5221, 1.442695
    %v5227 = vpow.pop %v5226
    %v5228 = vmul.f32 %v5222, 1.442695
    %v5229 = vpow.pop %v5228
    %v5230 = vmul.f32 %v5223, 1.442695
    %v5231 = vpow.pop %v5230
    %v5232 = vsel %vm590, %v5225, 0.0
    %5233 = vadd.xlane.f32.xlu0 %v5232
    %v5234 = vpop.xlane.xlu0 %5233
    %v5235 = vsel %vm590, %v5227, 0.0
    %5236 = vadd.xlane.f32.xlu0 %v5235
    %v5237 = vpop.xlane.xlu0 %5236
    %v5238 = vsel %vm590, %v5229, 0.0
    %5239 = vadd.xlane.f32.xlu0 %v5238
    %v5240 = vpop.xlane.xlu0 %5239
    %v5241 = vsel %vm590, %v5231, 0.0
    %5242 = vadd.xlane.f32.xlu0 %v5241
    %v5243 = vpop.xlane.xlu0 %5242
    %v5244 = vrcp.pop %v5234
    %v5245 = vrcp.pop %v5237
    %v5246 = vrcp.pop %v5240
    %v5247 = vrcp.pop %v5243
    %v5248 = vmul.f32 %v5225, %v5244
    %v5249 = vmul.f32 %v5227, %v5245
    %v5250 = vmul.f32 %v5229, %v5246
    %v5251 = vmul.f32 %v5231, %v5247
    %5252 = vrot.lane.b32.xlu0 %v4210, 56
    %v5253 = vpop.permute.xlu0 %5252
    %v5256 = vsel %vm590, %v5248, 0
    %5258 = vmatprep.subr.mxu0 0.0
    %5259 = vmatpush1.msra.mxu0 0.0
    %5260 = vmatprep.subr.mxu0 0.0
    %5261 = vmatpush1.msra.mxu0 0.0
    %5262 = vmatprep.subr.mxu0 0.0
    %5263 = vmatpush1.msra.mxu0 0.0
    %5264 = vmatprep.subr.mxu0 0.0
    %5265 = vmatpush1.msra.mxu0 0.0
    %5266 = vmatprep.subr.mxu0 0.0
    %5267 = vmatpush1.msra.mxu0 0.0
    %5268 = vmatprep.subr.mxu0 0.0
    %5269 = vmatpush1.msra.mxu0 0.0
    %5270 = vmatprep.subr.mxu0 0.0
    %5271 = vmatpush1.msra.mxu0 0.0
    %5272 = vmatprep.subr.mxu0 0.0
    %5273 = vmatpush1.msra.mxu0 0.0
    %5274 = vmatprep.subr.mxu0 0.0
    %5275 = vmatpush1.msra.mxu0 0.0
    %5276 = vmatprep.subr.mxu0 0.0
    %5277 = vmatpush1.msra.mxu0 0.0
    %5278 = vmatprep.subr.mxu0 0.0
    %5279 = vmatpush1.msra.mxu0 0.0
    %5280 = vmatprep.subr.mxu0 0.0
    %5281 = vmatpush1.msra.mxu0 0.0
    %5282 = vmatprep.subr.mxu0 0.0
    %5283 = vmatpush1.msra.mxu0 0.0
    %5284 = vmatprep.subr.mxu0 0.0
    %5285 = vmatpush1.msra.mxu0 0.0
    %5286 = vmatprep.subr.mxu0 0.0
    %5287 = vmatpush1.msra.mxu0 0.0
    %5288 = vmatprep.subr.mxu0 0.0
    %5289 = vmatpush1.msra.mxu0 %v5253
    %5290 = vmatprep.subr.mxu0 0.0
    %5291 = vmatpush2.msra.mxu0 0.0
    %5292 = vmatprep.subr.mxu0 0.0
    %5293 = vmatpush2.msra.mxu0 0.0
    %5294 = vmatprep.subr.mxu0 0.0
    %5295 = vmatpush2.msra.mxu0 0.0
    %5296 = vmatprep.subr.mxu0 0.0
    %5297 = vmatpush2.msra.mxu0 0.0
    %5298 = vmatprep.subr.mxu0 0.0
    %5299 = vmatpush2.msra.mxu0 0.0
    %5300 = vmatprep.subr.mxu0 0.0
    %5301 = vmatpush2.msra.mxu0 0.0
    %5302 = vmatprep.subr.mxu0 0.0
    %5303 = vmatpush2.msra.mxu0 0.0
    %5304 = vmatprep.subr.mxu0 0.0
    %5305 = vmatpush2.msra.mxu0 0.0
    %5306 = vmatprep.subr.mxu0 0.0
    %5307 = vmatpush2.msra.mxu0 0.0
    %5308 = vmatprep.subr.mxu0 0.0
    %5309 = vmatpush2.msra.mxu0 0.0
    %5310 = vmatprep.subr.mxu0 0.0
    %5311 = vmatpush2.msra.mxu0 0.0
    %5312 = vmatprep.subr.mxu0 0.0
    %5313 = vmatpush2.msra.mxu0 0.0
    %5314 = vmatprep.subr.mxu0 0.0
    %5315 = vmatpush2.msra.mxu0 0.0
    %5316 = vmatprep.subr.mxu0 0.0
    %5317 = vmatpush2.msra.mxu0 0.0
    %5318 = vmatprep.subr.mxu0 0.0
    %5319 = vmatpush2.msra.mxu0 0.0
    %5320 = vmatprep.subr.mxu0 0.0
    %5321 = vmatpush2.msra.mxu0 0.0
    %5322 = vmatprep.mubr.f32.mxu0 0.0
    %5323 = vmatmul.mubr.f32.gmra.mxu0 %v5256
    %v5324 = vpop.f32.mrf.mxu0
    %v5325 = vadd.f32 0.0, %v5324
    %v5326 = vpop.f32.mrf.mxu0
    %5327 = vdwg.mxu0
    %5328 = vrot.lane.b32.xlu0 %v4215, 56
    %v5329 = vpop.permute.xlu0 %5328
    %v5332 = vsel %vm590, %v5249, 0
    %5334 = vmatprep.subr.mxu0 0.0
    %5335 = vmatpush1.msra.mxu0 0.0
    %5336 = vmatprep.subr.mxu0 0.0
    %5337 = vmatpush1.msra.mxu0 0.0
    %5338 = vmatprep.subr.mxu0 0.0
    %5339 = vmatpush1.msra.mxu0 0.0
    %5340 = vmatprep.subr.mxu0 0.0
    %5341 = vmatpush1.msra.mxu0 0.0
    %5342 = vmatprep.subr.mxu0 0.0
    %5343 = vmatpush1.msra.mxu0 0.0
    %5344 = vmatprep.subr.mxu0 0.0
    %5345 = vmatpush1.msra.mxu0 0.0
    %5346 = vmatprep.subr.mxu0 0.0
    %5347 = vmatpush1.msra.mxu0 0.0
    %5348 = vmatprep.subr.mxu0 0.0
    %5349 = vmatpush1.msra.mxu0 0.0
    %5350 = vmatprep.subr.mxu0 0.0
    %5351 = vmatpush1.msra.mxu0 0.0
    %5352 = vmatprep.subr.mxu0 0.0
    %5353 = vmatpush1.msra.mxu0 0.0
    %5354 = vmatprep.subr.mxu0 0.0
    %5355 = vmatpush1.msra.mxu0 0.0
    %5356 = vmatprep.subr.mxu0 0.0
    %5357 = vmatpush1.msra.mxu0 0.0
    %5358 = vmatprep.subr.mxu0 0.0
    %5359 = vmatpush1.msra.mxu0 0.0
    %5360 = vmatprep.subr.mxu0 0.0
    %5361 = vmatpush1.msra.mxu0 0.0
    %5362 = vmatprep.subr.mxu0 0.0
    %5363 = vmatpush1.msra.mxu0 0.0
    %5364 = vmatprep.subr.mxu0 0.0
    %5365 = vmatpush1.msra.mxu0 %v5329
    %5366 = vmatprep.subr.mxu0 0.0
    %5367 = vmatpush2.msra.mxu0 0.0
    %5368 = vmatprep.subr.mxu0 0.0
    %5369 = vmatpush2.msra.mxu0 0.0
    %5370 = vmatprep.subr.mxu0 0.0
    %5371 = vmatpush2.msra.mxu0 0.0
    %5372 = vmatprep.subr.mxu0 0.0
    %5373 = vmatpush2.msra.mxu0 0.0
    %5374 = vmatprep.subr.mxu0 0.0
    %5375 = vmatpush2.msra.mxu0 0.0
    %5376 = vmatprep.subr.mxu0 0.0
    %5377 = vmatpush2.msra.mxu0 0.0
    %5378 = vmatprep.subr.mxu0 0.0
    %5379 = vmatpush2.msra.mxu0 0.0
    %5380 = vmatprep.subr.mxu0 0.0
    %5381 = vmatpush2.msra.mxu0 0.0
    %5382 = vmatprep.subr.mxu0 0.0
    %5383 = vmatpush2.msra.mxu0 0.0
    %5384 = vmatprep.subr.mxu0 0.0
    %5385 = vmatpush2.msra.mxu0 0.0
    %5386 = vmatprep.subr.mxu0 0.0
    %5387 = vmatpush2.msra.mxu0 0.0
    %5388 = vmatprep.subr.mxu0 0.0
    %5389 = vmatpush2.msra.mxu0 0.0
    %5390 = vmatprep.subr.mxu0 0.0
    %5391 = vmatpush2.msra.mxu0 0.0
    %5392 = vmatprep.subr.mxu0 0.0
    %5393 = vmatpush2.msra.mxu0 0.0
    %5394 = vmatprep.subr.mxu0 0.0
    %5395 = vmatpush2.msra.mxu0 0.0
    %5396 = vmatprep.subr.mxu0 0.0
    %5397 = vmatpush2.msra.mxu0 0.0
    %5398 = vmatprep.mubr.f32.mxu0 0.0
    %5399 = vmatmul.mubr.f32.gmra.mxu0 %v5332
    %v5400 = vpop.f32.mrf.mxu0
    %v5401 = vadd.f32 0.0, %v5400
    %v5402 = vpop.f32.mrf.mxu0
    %5403 = vdwg.mxu0
    %5404 = vrot.lane.b32.xlu0 %v4220, 56
    %v5405 = vpop.permute.xlu0 %5404
    %v5408 = vsel %vm590, %v5250, 0
    %5410 = vmatprep.subr.mxu0 0.0
    %5411 = vmatpush1.msra.mxu0 0.0
    %5412 = vmatprep.subr.mxu0 0.0
    %5413 = vmatpush1.msra.mxu0 0.0
    %5414 = vmatprep.subr.mxu0 0.0
    %5415 = vmatpush1.msra.mxu0 0.0
    %5416 = vmatprep.subr.mxu0 0.0
    %5417 = vmatpush1.msra.mxu0 0.0
    %5418 = vmatprep.subr.mxu0 0.0
    %5419 = vmatpush1.msra.mxu0 0.0
    %5420 = vmatprep.subr.mxu0 0.0
    %5421 = vmatpush1.msra.mxu0 0.0
    %5422 = vmatprep.subr.mxu0 0.0
    %5423 = vmatpush1.msra.mxu0 0.0
    %5424 = vmatprep.subr.mxu0 0.0
    %5425 = vmatpush1.msra.mxu0 0.0
    %5426 = vmatprep.subr.mxu0 0.0
    %5427 = vmatpush1.msra.mxu0 0.0
    %5428 = vmatprep.subr.mxu0 0.0
    %5429 = vmatpush1.msra.mxu0 0.0
    %5430 = vmatprep.subr.mxu0 0.0
    %5431 = vmatpush1.msra.mxu0 0.0
    %5432 = vmatprep.subr.mxu0 0.0
    %5433 = vmatpush1.msra.mxu0 0.0
    %5434 = vmatprep.subr.mxu0 0.0
    %5435 = vmatpush1.msra.mxu0 0.0
    %5436 = vmatprep.subr.mxu0 0.0
    %5437 = vmatpush1.msra.mxu0 0.0
    %5438 = vmatprep.subr.mxu0 0.0
    %5439 = vmatpush1.msra.mxu0 0.0
    %5440 = vmatprep.subr.mxu0 0.0
    %5441 = vmatpush1.msra.mxu0 %v5405
    %5442 = vmatprep.subr.mxu0 0.0
    %5443 = vmatpush2.msra.mxu0 0.0
    %5444 = vmatprep.subr.mxu0 0.0
    %5445 = vmatpush2.msra.mxu0 0.0
    %5446 = vmatprep.subr.mxu0 0.0
    %5447 = vmatpush2.msra.mxu0 0.0
    %5448 = vmatprep.subr.mxu0 0.0
    %5449 = vmatpush2.msra.mxu0 0.0
    %5450 = vmatprep.subr.mxu0 0.0
    %5451 = vmatpush2.msra.mxu0 0.0
    %5452 = vmatprep.subr.mxu0 0.0
    %5453 = vmatpush2.msra.mxu0 0.0
    %5454 = vmatprep.subr.mxu0 0.0
    %5455 = vmatpush2.msra.mxu0 0.0
    %5456 = vmatprep.subr.mxu0 0.0
    %5457 = vmatpush2.msra.mxu0 0.0
    %5458 = vmatprep.subr.mxu0 0.0
    %5459 = vmatpush2.msra.mxu0 0.0
    %5460 = vmatprep.subr.mxu0 0.0
    %5461 = vmatpush2.msra.mxu0 0.0
    %5462 = vmatprep.subr.mxu0 0.0
    %5463 = vmatpush2.msra.mxu0 0.0
    %5464 = vmatprep.subr.mxu0 0.0
    %5465 = vmatpush2.msra.mxu0 0.0
    %5466 = vmatprep.subr.mxu0 0.0
    %5467 = vmatpush2.msra.mxu0 0.0
    %5468 = vmatprep.subr.mxu0 0.0
    %5469 = vmatpush2.msra.mxu0 0.0
    %5470 = vmatprep.subr.mxu0 0.0
    %5471 = vmatpush2.msra.mxu0 0.0
    %5472 = vmatprep.subr.mxu0 0.0
    %5473 = vmatpush2.msra.mxu0 0.0
    %5474 = vmatprep.mubr.f32.mxu0 0.0
    %5475 = vmatmul.mubr.f32.gmra.mxu0 %v5408
    %v5476 = vpop.f32.mrf.mxu0
    %v5477 = vadd.f32 0.0, %v5476
    %v5478 = vpop.f32.mrf.mxu0
    %5479 = vdwg.mxu0
    %5480 = vrot.lane.b32.xlu0 %v4225, 56
    %v5481 = vpop.permute.xlu0 %5480
    %v5484 = vsel %vm590, %v5251, 0
    %5486 = vmatprep.subr.mxu0 0.0
    %5487 = vmatpush1.msra.mxu0 0.0
    %5488 = vmatprep.subr.mxu0 0.0
    %5489 = vmatpush1.msra.mxu0 0.0
    %5490 = vmatprep.subr.mxu0 0.0
    %5491 = vmatpush1.msra.mxu0 0.0
    %5492 = vmatprep.subr.mxu0 0.0
    %5493 = vmatpush1.msra.mxu0 0.0
    %5494 = vmatprep.subr.mxu0 0.0
    %5495 = vmatpush1.msra.mxu0 0.0
    %5496 = vmatprep.subr.mxu0 0.0
    %5497 = vmatpush1.msra.mxu0 0.0
    %5498 = vmatprep.subr.mxu0 0.0
    %5499 = vmatpush1.msra.mxu0 0.0
    %5500 = vmatprep.subr.mxu0 0.0
    %5501 = vmatpush1.msra.mxu0 0.0
    %5502 = vmatprep.subr.mxu0 0.0
    %5503 = vmatpush1.msra.mxu0 0.0
    %5504 = vmatprep.subr.mxu0 0.0
    %5505 = vmatpush1.msra.mxu0 0.0
    %5506 = vmatprep.subr.mxu0 0.0
    %5507 = vmatpush1.msra.mxu0 0.0
    %5508 = vmatprep.subr.mxu0 0.0
    %5509 = vmatpush1.msra.mxu0 0.0
    %5510 = vmatprep.subr.mxu0 0.0
    %5511 = vmatpush1.msra.mxu0 0.0
    %5512 = vmatprep.subr.mxu0 0.0
    %5513 = vmatpush1.msra.mxu0 0.0
    %5514 = vmatprep.subr.mxu0 0.0
    %5515 = vmatpush1.msra.mxu0 0.0
    %5516 = vmatprep.subr.mxu0 0.0
    %5517 = vmatpush1.msra.mxu0 %v5481
    %5518 = vmatprep.subr.mxu0 0.0
    %5519 = vmatpush2.msra.mxu0 0.0
    %5520 = vmatprep.subr.mxu0 0.0
    %5521 = vmatpush2.msra.mxu0 0.0
    %5522 = vmatprep.subr.mxu0 0.0
    %5523 = vmatpush2.msra.mxu0 0.0
    %5524 = vmatprep.subr.mxu0 0.0
    %5525 = vmatpush2.msra.mxu0 0.0
    %5526 = vmatprep.subr.mxu0 0.0
    %5527 = vmatpush2.msra.mxu0 0.0
    %5528 = vmatprep.subr.mxu0 0.0
    %5529 = vmatpush2.msra.mxu0 0.0
    %5530 = vmatprep.subr.mxu0 0.0
    %5531 = vmatpush2.msra.mxu0 0.0
    %5532 = vmatprep.subr.mxu0 0.0
    %5533 = vmatpush2.msra.mxu0 0.0
    %5534 = vmatprep.subr.mxu0 0.0
    %5535 = vmatpush2.msra.mxu0 0.0
    %5536 = vmatprep.subr.mxu0 0.0
    %5537 = vmatpush2.msra.mxu0 0.0
    %5538 = vmatprep.subr.mxu0 0.0
    %5539 = vmatpush2.msra.mxu0 0.0
    %5540 = vmatprep.subr.mxu0 0.0
    %5541 = vmatpush2.msra.mxu0 0.0
    %5542 = vmatprep.subr.mxu0 0.0
    %5543 = vmatpush2.msra.mxu0 0.0
    %5544 = vmatprep.subr.mxu0 0.0
    %5545 = vmatpush2.msra.mxu0 0.0
    %5546 = vmatprep.subr.mxu0 0.0
    %5547 = vmatpush2.msra.mxu0 0.0
    %5548 = vmatprep.subr.mxu0 0.0
    %5549 = vmatpush2.msra.mxu0 0.0
    %5550 = vmatprep.mubr.f32.mxu0 0.0
    %5551 = vmatmul.mubr.f32.gmra.mxu0 %v5484
    %v5552 = vpop.f32.mrf.mxu0
    %v5553 = vadd.f32 0.0, %v5552
    %v5554 = vpop.f32.mrf.mxu0
    %5555 = vdwg.mxu0
    %v5557 = vsel %vm590, %v5325, 0
    %v5560 = vsel %vm590, %v5401, 0
    %v5563 = vsel %vm590, %v5477, 0
    %v5566 = vsel %vm590, %v5553, 0
    %5568 = vmatprep.subr.mxu0 0.0
    %5569 = vmatpush1.msra.mxu0 0.0
    %5570 = vmatprep.subr.mxu0 0.0
    %5571 = vmatpush1.msra.mxu0 0.0
    %5572 = vmatprep.subr.mxu0 0.0
    %5573 = vmatpush1.msra.mxu0 0.0
    %5574 = vmatprep.subr.mxu0 0.0
    %5575 = vmatpush1.msra.mxu0 0.0
    %5576 = vmatprep.subr.mxu0 0.0
    %5577 = vmatpush1.msra.mxu0 0.0
    %5578 = vmatprep.subr.mxu0 0.0
    %5579 = vmatpush1.msra.mxu0 0.0
    %5580 = vmatprep.subr.mxu0 0.0
    %5581 = vmatpush1.msra.mxu0 0.0
    %5582 = vmatprep.subr.mxu0 0.0
    %5583 = vmatpush1.msra.mxu0 0.0
    %5584 = vmatprep.subr.mxu0 0.0
    %5585 = vmatpush1.msra.mxu0 0.0
    %5586 = vmatprep.subr.mxu0 0.0
    %5587 = vmatpush1.msra.mxu0 0.0
    %5588 = vmatprep.subr.mxu0 0.0
    %5589 = vmatpush1.msra.mxu0 0.0
    %5590 = vmatprep.subr.mxu0 0.0
    %5591 = vmatpush1.msra.mxu0 0.0
    %5592 = vmatprep.subr.mxu0 0.0
    %5593 = vmatpush1.msra.mxu0 0.0
    %5594 = vmatprep.subr.mxu0 0.0
    %5595 = vmatpush1.msra.mxu0 0.0
    %5596 = vmatprep.subr.mxu0 0.0
    %5597 = vmatpush1.msra.mxu0 0.0
    %5598 = vmatprep.subr.mxu0 0.0
    %5599 = vmatpush1.msra.mxu0 %v4233
    %5600 = vmatprep.subr.mxu0 0.0
    %5601 = vmatpush2.msra.mxu0 0.0
    %5602 = vmatprep.subr.mxu0 0.0
    %5603 = vmatpush2.msra.mxu0 0.0
    %5604 = vmatprep.subr.mxu0 0.0
    %5605 = vmatpush2.msra.mxu0 0.0
    %5606 = vmatprep.subr.mxu0 0.0
    %5607 = vmatpush2.msra.mxu0 0.0
    %5608 = vmatprep.subr.mxu0 0.0
    %5609 = vmatpush2.msra.mxu0 0.0
    %5610 = vmatprep.subr.mxu0 0.0
    %5611 = vmatpush2.msra.mxu0 0.0
    %5612 = vmatprep.subr.mxu0 0.0
    %5613 = vmatpush2.msra.mxu0 0.0
    %5614 = vmatprep.subr.mxu0 0.0
    %5615 = vmatpush2.msra.mxu0 0.0
    %5616 = vmatprep.subr.mxu0 0.0
    %5617 = vmatpush2.msra.mxu0 0.0
    %5618 = vmatprep.subr.mxu0 0.0
    %5619 = vmatpush2.msra.mxu0 0.0
    %5620 = vmatprep.subr.mxu0 0.0
    %5621 = vmatpush2.msra.mxu0 0.0
    %5622 = vmatprep.subr.mxu0 0.0
    %5623 = vmatpush2.msra.mxu0 0.0
    %5624 = vmatprep.subr.mxu0 0.0
    %5625 = vmatpush2.msra.mxu0 0.0
    %5626 = vmatprep.subr.mxu0 0.0
    %5627 = vmatpush2.msra.mxu0 0.0
    %5628 = vmatprep.subr.mxu0 0.0
    %5629 = vmatpush2.msra.mxu0 0.0
    %5630 = vmatprep.subr.mxu0 0.0
    %5631 = vmatpush2.msra.mxu0 0.0
    %5632 = vmatprep.mubr.f32.mxu0 0.0
    %5633 = vmatmul.mubr.f32.gmra.mxu0 %v5557
    %v5634 = vpop.f32.mrf.mxu0
    %v5635 = vadd.f32 0.0, %v5634
    %v5636 = vpop.f32.mrf.mxu0
    %5637 = vmatprep.mubr.f32.mxu0 0.0
    %5638 = vmatmul.mubr.f32.gmra.mxu0 %v5560
    %v5639 = vpop.f32.mrf.mxu0
    %v5640 = vadd.f32 0.0, %v5639
    %v5641 = vpop.f32.mrf.mxu0
    %5642 = vmatprep.mubr.f32.mxu0 0.0
    %5643 = vmatmul.mubr.f32.gmra.mxu0 %v5563
    %v5644 = vpop.f32.mrf.mxu0
    %v5645 = vadd.f32 0.0, %v5644
    %v5646 = vpop.f32.mrf.mxu0
    %5647 = vmatprep.mubr.f32.mxu0 0.0
    %5648 = vmatmul.mubr.f32.gmra.mxu0 %v5566
    %v5649 = vpop.f32.mrf.mxu0
    %v5650 = vadd.f32 0.0, %v5649
    %v5651 = vpop.f32.mrf.mxu0
    %5652 = vdwg.mxu0
    %v5654 = vsel %vm590, %v4665, 0
    %v5657 = vsel %vm590, %v4741, 0
    %v5660 = vsel %vm590, %v4817, 0
    %v5663 = vsel %vm590, %v4893, 0
    %5665 = vmatprep.subr.mxu0 0.0
    %5666 = vmatpush1.msra.mxu0 0.0
    %5667 = vmatprep.subr.mxu0 0.0
    %5668 = vmatpush1.msra.mxu0 0.0
    %5669 = vmatprep.subr.mxu0 0.0
    %5670 = vmatpush1.msra.mxu0 0.0
    %5671 = vmatprep.subr.mxu0 0.0
    %5672 = vmatpush1.msra.mxu0 0.0
    %5673 = vmatprep.subr.mxu0 0.0
    %5674 = vmatpush1.msra.mxu0 0.0
    %5675 = vmatprep.subr.mxu0 0.0
    %5676 = vmatpush1.msra.mxu0 0.0
    %5677 = vmatprep.subr.mxu0 0.0
    %5678 = vmatpush1.msra.mxu0 0.0
    %5679 = vmatprep.subr.mxu0 0.0
    %5680 = vmatpush1.msra.mxu0 0.0
    %5681 = vmatprep.subr.mxu0 0.0
    %5682 = vmatpush1.msra.mxu0 0.0
    %5683 = vmatprep.subr.mxu0 0.0
    %5684 = vmatpush1.msra.mxu0 0.0
    %5685 = vmatprep.subr.mxu0 0.0
    %5686 = vmatpush1.msra.mxu0 0.0
    %5687 = vmatprep.subr.mxu0 0.0
    %5688 = vmatpush1.msra.mxu0 0.0
    %5689 = vmatprep.subr.mxu0 0.0
    %5690 = vmatpush1.msra.mxu0 0.0
    %5691 = vmatprep.subr.mxu0 0.0
    %5692 = vmatpush1.msra.mxu0 0.0
    %5693 = vmatprep.subr.mxu0 0.0
    %5694 = vmatpush1.msra.mxu0 0.0
    %5695 = vmatprep.subr.mxu0 0.0
    %5696 = vmatpush1.msra.mxu0 %v4232
    %5697 = vmatprep.subr.mxu0 0.0
    %5698 = vmatpush2.msra.mxu0 0.0
    %5699 = vmatprep.subr.mxu0 0.0
    %5700 = vmatpush2.msra.mxu0 0.0
    %5701 = vmatprep.subr.mxu0 0.0
    %5702 = vmatpush2.msra.mxu0 0.0
    %5703 = vmatprep.subr.mxu0 0.0
    %5704 = vmatpush2.msra.mxu0 0.0
    %5705 = vmatprep.subr.mxu0 0.0
    %5706 = vmatpush2.msra.mxu0 0.0
    %5707 = vmatprep.subr.mxu0 0.0
    %5708 = vmatpush2.msra.mxu0 0.0
    %5709 = vmatprep.subr.mxu0 0.0
    %5710 = vmatpush2.msra.mxu0 0.0
    %5711 = vmatprep.subr.mxu0 0.0
    %5712 = vmatpush2.msra.mxu0 0.0
    %5713 = vmatprep.subr.mxu0 0.0
    %5714 = vmatpush2.msra.mxu0 0.0
    %5715 = vmatprep.subr.mxu0 0.0
    %5716 = vmatpush2.msra.mxu0 0.0
    %5717 = vmatprep.subr.mxu0 0.0
    %5718 = vmatpush2.msra.mxu0 0.0
    %5719 = vmatprep.subr.mxu0 0.0
    %5720 = vmatpush2.msra.mxu0 0.0
    %5721 = vmatprep.subr.mxu0 0.0
    %5722 = vmatpush2.msra.mxu0 0.0
    %5723 = vmatprep.subr.mxu0 0.0
    %5724 = vmatpush2.msra.mxu0 0.0
    %5725 = vmatprep.subr.mxu0 0.0
    %5726 = vmatpush2.msra.mxu0 0.0
    %5727 = vmatprep.subr.mxu0 0.0
    %5728 = vmatpush2.msra.mxu0 0.0
    %5729 = vmatprep.mubr.f32.mxu0 0.0
    %5730 = vmatmul.mubr.f32.gmra.mxu0 %v5654
    %v5731 = vpop.f32.mrf.mxu0
    %v5732 = vadd.f32 %v5635, %v5731
    %v5733 = vpop.f32.mrf.mxu0
    %5734 = vmatprep.mubr.f32.mxu0 0.0
    %5735 = vmatmul.mubr.f32.gmra.mxu0 %v5657
    %v5736 = vpop.f32.mrf.mxu0
    %v5737 = vadd.f32 %v5640, %v5736
    %v5738 = vpop.f32.mrf.mxu0
    %5739 = vmatprep.mubr.f32.mxu0 0.0
    %5740 = vmatmul.mubr.f32.gmra.mxu0 %v5660
    %v5741 = vpop.f32.mrf.mxu0
    %v5742 = vadd.f32 %v5645, %v5741
    %v5743 = vpop.f32.mrf.mxu0
    %5744 = vmatprep.mubr.f32.mxu0 0.0
    %5745 = vmatmul.mubr.f32.gmra.mxu0 %v5663
    %v5746 = vpop.f32.mrf.mxu0
    %v5747 = vadd.f32 %v5650, %v5746
    %v5748 = vpop.f32.mrf.mxu0
    %5749 = vdwg.mxu0
    %5750 = vrot.lane.b32.xlu0 %v4228, 112
    %v5751 = vpop.permute.xlu0 %5750
    %5752 = vrot.lane.b32.xlu0 %v4210, 80
    %v5753 = vpop.permute.xlu0 %5752
    %v5754 = vsel %vm590, %v5751, 0
    %v5756 = vsel %vm590, %v5753, 0
    %5758 = vmatprep.subr.mxu0 0.0
    %5759 = vmatpush1.xpose.msra.mxu0 0.0
    %5760 = vmatprep.subr.mxu0 0.0
    %5761 = vmatpush1.xpose.msra.mxu0 0.0
    %5762 = vmatprep.subr.mxu0 0.0
    %5763 = vmatpush1.xpose.msra.mxu0 0.0
    %5764 = vmatprep.subr.mxu0 0.0
    %5765 = vmatpush1.xpose.msra.mxu0 0.0
    %5766 = vmatprep.subr.mxu0 0.0
    %5767 = vmatpush1.xpose.msra.mxu0 0.0
    %5768 = vmatprep.subr.mxu0 0.0
    %5769 = vmatpush1.xpose.msra.mxu0 0.0
    %5770 = vmatprep.subr.mxu0 0.0
    %5771 = vmatpush1.xpose.msra.mxu0 0.0
    %5772 = vmatprep.subr.mxu0 0.0
    %5773 = vmatpush1.xpose.msra.mxu0 0.0
    %5774 = vmatprep.subr.mxu0 0.0
    %5775 = vmatpush1.xpose.msra.mxu0 0.0
    %5776 = vmatprep.subr.mxu0 0.0
    %5777 = vmatpush1.xpose.msra.mxu0 0.0
    %5778 = vmatprep.subr.mxu0 0.0
    %5779 = vmatpush1.xpose.msra.mxu0 0.0
    %5780 = vmatprep.subr.mxu0 0.0
    %5781 = vmatpush1.xpose.msra.mxu0 0.0
    %5782 = vmatprep.subr.mxu0 0.0
    %5783 = vmatpush1.xpose.msra.mxu0 0.0
    %5784 = vmatprep.subr.mxu0 0.0
    %5785 = vmatpush1.xpose.msra.mxu0 0.0
    %5786 = vmatprep.subr.mxu0 0.0
    %5787 = vmatpush1.xpose.msra.mxu0 0.0
    %5788 = vmatprep.subr.mxu0 0.0
    %5789 = vmatpush1.xpose.msra.mxu0 %v5756
    %5790 = vmatprep.subr.mxu0 0.0
    %5791 = vmatpush2.xpose.msra.mxu0 0.0
    %5792 = vmatprep.subr.mxu0 0.0
    %5793 = vmatpush2.xpose.msra.mxu0 0.0
    %5794 = vmatprep.subr.mxu0 0.0
    %5795 = vmatpush2.xpose.msra.mxu0 0.0
    %5796 = vmatprep.subr.mxu0 0.0
    %5797 = vmatpush2.xpose.msra.mxu0 0.0
    %5798 = vmatprep.subr.mxu0 0.0
    %5799 = vmatpush2.xpose.msra.mxu0 0.0
    %5800 = vmatprep.subr.mxu0 0.0
    %5801 = vmatpush2.xpose.msra.mxu0 0.0
    %5802 = vmatprep.subr.mxu0 0.0
    %5803 = vmatpush2.xpose.msra.mxu0 0.0
    %5804 = vmatprep.subr.mxu0 0.0
    %5805 = vmatpush2.xpose.msra.mxu0 0.0
    %5806 = vmatprep.subr.mxu0 0.0
    %5807 = vmatpush2.xpose.msra.mxu0 0.0
    %5808 = vmatprep.subr.mxu0 0.0
    %5809 = vmatpush2.xpose.msra.mxu0 0.0
    %5810 = vmatprep.subr.mxu0 0.0
    %5811 = vmatpush2.xpose.msra.mxu0 0.0
    %5812 = vmatprep.subr.mxu0 0.0
    %5813 = vmatpush2.xpose.msra.mxu0 0.0
    %5814 = vmatprep.subr.mxu0 0.0
    %5815 = vmatpush2.xpose.msra.mxu0 0.0
    %5816 = vmatprep.subr.mxu0 0.0
    %5817 = vmatpush2.xpose.msra.mxu0 0.0
    %5818 = vmatprep.subr.mxu0 0.0
    %5819 = vmatpush2.xpose.msra.mxu0 0.0
    %5820 = vmatprep.subr.mxu0 0.0
    %5821 = vmatpush2.xpose.msra.mxu0 0.0
    %5822 = vmatprep.mubr.f32.mxu0 0.0
    %5823 = vmatmul.mubr.f32.gmra.mxu0 %v5754
    %v5824 = vpop.f32.mrf.mxu0
    %v5825 = vadd.f32 %v570, %v5824
    %v5826 = vpop.f32.mrf.mxu0
    %5827 = vdwg.mxu0
    %5828 = vrot.lane.b32.xlu0 %v4229, 112
    %v5829 = vpop.permute.xlu0 %5828
    %5830 = vrot.lane.b32.xlu0 %v4215, 80
    %v5831 = vpop.permute.xlu0 %5830
    %v5832 = vsel %vm590, %v5829, 0
    %v5834 = vsel %vm590, %v5831, 0
    %5836 = vmatprep.subr.mxu0 0.0
    %5837 = vmatpush1.xpose.msra.mxu0 0.0
    %5838 = vmatprep.subr.mxu0 0.0
    %5839 = vmatpush1.xpose.msra.mxu0 0.0
    %5840 = vmatprep.subr.mxu0 0.0
    %5841 = vmatpush1.xpose.msra.mxu0 0.0
    %5842 = vmatprep.subr.mxu0 0.0
    %5843 = vmatpush1.xpose.msra.mxu0 0.0
    %5844 = vmatprep.subr.mxu0 0.0
    %5845 = vmatpush1.xpose.msra.mxu0 0.0
    %5846 = vmatprep.subr.mxu0 0.0
    %5847 = vmatpush1.xpose.msra.mxu0 0.0
    %5848 = vmatprep.subr.mxu0 0.0
    %5849 = vmatpush1.xpose.msra.mxu0 0.0
    %5850 = vmatprep.subr.mxu0 0.0
    %5851 = vmatpush1.xpose.msra.mxu0 0.0
    %5852 = vmatprep.subr.mxu0 0.0
    %5853 = vmatpush1.xpose.msra.mxu0 0.0
    %5854 = vmatprep.subr.mxu0 0.0
    %5855 = vmatpush1.xpose.msra.mxu0 0.0
    %5856 = vmatprep.subr.mxu0 0.0
    %5857 = vmatpush1.xpose.msra.mxu0 0.0
    %5858 = vmatprep.subr.mxu0 0.0
    %5859 = vmatpush1.xpose.msra.mxu0 0.0
    %5860 = vmatprep.subr.mxu0 0.0
    %5861 = vmatpush1.xpose.msra.mxu0 0.0
    %5862 = vmatprep.subr.mxu0 0.0
    %5863 = vmatpush1.xpose.msra.mxu0 0.0
    %5864 = vmatprep.subr.mxu0 0.0
    %5865 = vmatpush1.xpose.msra.mxu0 0.0
    %5866 = vmatprep.subr.mxu0 0.0
    %5867 = vmatpush1.xpose.msra.mxu0 %v5834
    %5868 = vmatprep.subr.mxu0 0.0
    %5869 = vmatpush2.xpose.msra.mxu0 0.0
    %5870 = vmatprep.subr.mxu0 0.0
    %5871 = vmatpush2.xpose.msra.mxu0 0.0
    %5872 = vmatprep.subr.mxu0 0.0
    %5873 = vmatpush2.xpose.msra.mxu0 0.0
    %5874 = vmatprep.subr.mxu0 0.0
    %5875 = vmatpush2.xpose.msra.mxu0 0.0
    %5876 = vmatprep.subr.mxu0 0.0
    %5877 = vmatpush2.xpose.msra.mxu0 0.0
    %5878 = vmatprep.subr.mxu0 0.0
    %5879 = vmatpush2.xpose.msra.mxu0 0.0
    %5880 = vmatprep.subr.mxu0 0.0
    %5881 = vmatpush2.xpose.msra.mxu0 0.0
    %5882 = vmatprep.subr.mxu0 0.0
    %5883 = vmatpush2.xpose.msra.mxu0 0.0
    %5884 = vmatprep.subr.mxu0 0.0
    %5885 = vmatpush2.xpose.msra.mxu0 0.0
    %5886 = vmatprep.subr.mxu0 0.0
    %5887 = vmatpush2.xpose.msra.mxu0 0.0
    %5888 = vmatprep.subr.mxu0 0.0
    %5889 = vmatpush2.xpose.msra.mxu0 0.0
    %5890 = vmatprep.subr.mxu0 0.0
    %5891 = vmatpush2.xpose.msra.mxu0 0.0
    %5892 = vmatprep.subr.mxu0 0.0
    %5893 = vmatpush2.xpose.msra.mxu0 0.0
    %5894 = vmatprep.subr.mxu0 0.0
    %5895 = vmatpush2.xpose.msra.mxu0 0.0
    %5896 = vmatprep.subr.mxu0 0.0
    %5897 = vmatpush2.xpose.msra.mxu0 0.0
    %5898 = vmatprep.subr.mxu0 0.0
    %5899 = vmatpush2.xpose.msra.mxu0 0.0
    %5900 = vmatprep.mubr.f32.mxu0 0.0
    %5901 = vmatmul.mubr.f32.gmra.mxu0 %v5832
    %v5902 = vpop.f32.mrf.mxu0
    %v5903 = vadd.f32 %v574, %v5902
    %v5904 = vpop.f32.mrf.mxu0
    %5905 = vdwg.mxu0
    %5906 = vrot.lane.b32.xlu0 %v4230, 112
    %v5907 = vpop.permute.xlu0 %5906
    %5908 = vrot.lane.b32.xlu0 %v4220, 80
    %v5909 = vpop.permute.xlu0 %5908
    %v5910 = vsel %vm590, %v5907, 0
    %v5912 = vsel %vm590, %v5909, 0
    %5914 = vmatprep.subr.mxu0 0.0
    %5915 = vmatpush1.xpose.msra.mxu0 0.0
    %5916 = vmatprep.subr.mxu0 0.0
    %5917 = vmatpush1.xpose.msra.mxu0 0.0
    %5918 = vmatprep.subr.mxu0 0.0
    %5919 = vmatpush1.xpose.msra.mxu0 0.0
    %5920 = vmatprep.subr.mxu0 0.0
    %5921 = vmatpush1.xpose.msra.mxu0 0.0
    %5922 = vmatprep.subr.mxu0 0.0
    %5923 = vmatpush1.xpose.msra.mxu0 0.0
    %5924 = vmatprep.subr.mxu0 0.0
    %5925 = vmatpush1.xpose.msra.mxu0 0.0
    %5926 = vmatprep.subr.mxu0 0.0
    %5927 = vmatpush1.xpose.msra.mxu0 0.0
    %5928 = vmatprep.subr.mxu0 0.0
    %5929 = vmatpush1.xpose.msra.mxu0 0.0
    %5930 = vmatprep.subr.mxu0 0.0
    %5931 = vmatpush1.xpose.msra.mxu0 0.0
    %5932 = vmatprep.subr.mxu0 0.0
    %5933 = vmatpush1.xpose.msra.mxu0 0.0
    %5934 = vmatprep.subr.mxu0 0.0
    %5935 = vmatpush1.xpose.msra.mxu0 0.0
    %5936 = vmatprep.subr.mxu0 0.0
    %5937 = vmatpush1.xpose.msra.mxu0 0.0
    %5938 = vmatprep.subr.mxu0 0.0
    %5939 = vmatpush1.xpose.msra.mxu0 0.0
    %5940 = vmatprep.subr.mxu0 0.0
    %5941 = vmatpush1.xpose.msra.mxu0 0.0
    %5942 = vmatprep.subr.mxu0 0.0
    %5943 = vmatpush1.xpose.msra.mxu0 0.0
    %5944 = vmatprep.subr.mxu0 0.0
    %5945 = vmatpush1.xpose.msra.mxu0 %v5912
    %5946 = vmatprep.subr.mxu0 0.0
    %5947 = vmatpush2.xpose.msra.mxu0 0.0
    %5948 = vmatprep.subr.mxu0 0.0
    %5949 = vmatpush2.xpose.msra.mxu0 0.0
    %5950 = vmatprep.subr.mxu0 0.0
    %5951 = vmatpush2.xpose.msra.mxu0 0.0
    %5952 = vmatprep.subr.mxu0 0.0
    %5953 = vmatpush2.xpose.msra.mxu0 0.0
    %5954 = vmatprep.subr.mxu0 0.0
    %5955 = vmatpush2.xpose.msra.mxu0 0.0
    %5956 = vmatprep.subr.mxu0 0.0
    %5957 = vmatpush2.xpose.msra.mxu0 0.0
    %5958 = vmatprep.subr.mxu0 0.0
    %5959 = vmatpush2.xpose.msra.mxu0 0.0
    %5960 = vmatprep.subr.mxu0 0.0
    %5961 = vmatpush2.xpose.msra.mxu0 0.0
    %5962 = vmatprep.subr.mxu0 0.0
    %5963 = vmatpush2.xpose.msra.mxu0 0.0
    %5964 = vmatprep.subr.mxu0 0.0
    %5965 = vmatpush2.xpose.msra.mxu0 0.0
    %5966 = vmatprep.subr.mxu0 0.0
    %5967 = vmatpush2.xpose.msra.mxu0 0.0
    %5968 = vmatprep.subr.mxu0 0.0
    %5969 = vmatpush2.xpose.msra.mxu0 0.0
    %5970 = vmatprep.subr.mxu0 0.0
    %5971 = vmatpush2.xpose.msra.mxu0 0.0
    %5972 = vmatprep.subr.mxu0 0.0
    %5973 = vmatpush2.xpose.msra.mxu0 0.0
    %5974 = vmatprep.subr.mxu0 0.0
    %5975 = vmatpush2.xpose.msra.mxu0 0.0
    %5976 = vmatprep.subr.mxu0 0.0
    %5977 = vmatpush2.xpose.msra.mxu0 0.0
    %5978 = vmatprep.mubr.f32.mxu0 0.0
    %5979 = vmatmul.mubr.f32.gmra.mxu0 %v5910
    %v5980 = vpop.f32.mrf.mxu0
    %v5981 = vadd.f32 %v578, %v5980
    %v5982 = vpop.f32.mrf.mxu0
    %5983 = vdwg.mxu0
    %5984 = vrot.lane.b32.xlu0 %v4231, 112
    %v5985 = vpop.permute.xlu0 %5984
    %5986 = vrot.lane.b32.xlu0 %v4225, 80
    %v5987 = vpop.permute.xlu0 %5986
    %v5988 = vsel %vm590, %v5985, 0
    %v5990 = vsel %vm590, %v5987, 0
    %5992 = vmatprep.subr.mxu0 0.0
    %5993 = vmatpush1.xpose.msra.mxu0 0.0
    %5994 = vmatprep.subr.mxu0 0.0
    %5995 = vmatpush1.xpose.msra.mxu0 0.0
    %5996 = vmatprep.subr.mxu0 0.0
    %5997 = vmatpush1.xpose.msra.mxu0 0.0
    %5998 = vmatprep.subr.mxu0 0.0
    %5999 = vmatpush1.xpose.msra.mxu0 0.0
    %6000 = vmatprep.subr.mxu0 0.0
    %6001 = vmatpush1.xpose.msra.mxu0 0.0
    %6002 = vmatprep.subr.mxu0 0.0
    %6003 = vmatpush1.xpose.msra.mxu0 0.0
    %6004 = vmatprep.subr.mxu0 0.0
    %6005 = vmatpush1.xpose.msra.mxu0 0.0
    %6006 = vmatprep.subr.mxu0 0.0
    %6007 = vmatpush1.xpose.msra.mxu0 0.0
    %6008 = vmatprep.subr.mxu0 0.0
    %6009 = vmatpush1.xpose.msra.mxu0 0.0
    %6010 = vmatprep.subr.mxu0 0.0
    %6011 = vmatpush1.xpose.msra.mxu0 0.0
    %6012 = vmatprep.subr.mxu0 0.0
    %6013 = vmatpush1.xpose.msra.mxu0 0.0
    %6014 = vmatprep.subr.mxu0 0.0
    %6015 = vmatpush1.xpose.msra.mxu0 0.0
    %6016 = vmatprep.subr.mxu0 0.0
    %6017 = vmatpush1.xpose.msra.mxu0 0.0
    %6018 = vmatprep.subr.mxu0 0.0
    %6019 = vmatpush1.xpose.msra.mxu0 0.0
    %6020 = vmatprep.subr.mxu0 0.0
    %6021 = vmatpush1.xpose.msra.mxu0 0.0
    %6022 = vmatprep.subr.mxu0 0.0
    %6023 = vmatpush1.xpose.msra.mxu0 %v5990
    %6024 = vmatprep.subr.mxu0 0.0
    %6025 = vmatpush2.xpose.msra.mxu0 0.0
    %6026 = vmatprep.subr.mxu0 0.0
    %6027 = vmatpush2.xpose.msra.mxu0 0.0
    %6028 = vmatprep.subr.mxu0 0.0
    %6029 = vmatpush2.xpose.msra.mxu0 0.0
    %6030 = vmatprep.subr.mxu0 0.0
    %6031 = vmatpush2.xpose.msra.mxu0 0.0
    %6032 = vmatprep.subr.mxu0 0.0
    %6033 = vmatpush2.xpose.msra.mxu0 0.0
    %6034 = vmatprep.subr.mxu0 0.0
    %6035 = vmatpush2.xpose.msra.mxu0 0.0
    %6036 = vmatprep.subr.mxu0 0.0
    %6037 = vmatpush2.xpose.msra.mxu0 0.0
    %6038 = vmatprep.subr.mxu0 0.0
    %6039 = vmatpush2.xpose.msra.mxu0 0.0
    %6040 = vmatprep.subr.mxu0 0.0
    %6041 = vmatpush2.xpose.msra.mxu0 0.0
    %6042 = vmatprep.subr.mxu0 0.0
    %6043 = vmatpush2.xpose.msra.mxu0 0.0
    %6044 = vmatprep.subr.mxu0 0.0
    %6045 = vmatpush2.xpose.msra.mxu0 0.0
    %6046 = vmatprep.subr.mxu0 0.0
    %6047 = vmatpush2.xpose.msra.mxu0 0.0
    %6048 = vmatprep.subr.mxu0 0.0
    %6049 = vmatpush2.xpose.msra.mxu0 0.0
    %6050 = vmatprep.subr.mxu0 0.0
    %6051 = vmatpush2.xpose.msra.mxu0 0.0
    %6052 = vmatprep.subr.mxu0 0.0
    %6053 = vmatpush2.xpose.msra.mxu0 0.0
    %6054 = vmatprep.subr.mxu0 0.0
    %6055 = vmatpush2.xpose.msra.mxu0 0.0
    %6056 = vmatprep.mubr.f32.mxu0 0.0
    %6057 = vmatmul.mubr.f32.gmra.mxu0 %v5988
    %v6058 = vpop.f32.mrf.mxu0
    %v6059 = vadd.f32 %v582, %v6058
    %v6060 = vpop.f32.mrf.mxu0
    %6061 = vdwg.mxu0
    %v6062 = vsel %vm590, %v5825, -inf
    %6063 = vmax.xlane.f32.xlu0 %v6062
    %v6064 = vpop.xlane.xlu0 %6063
    %v6065 = vsel %vm590, %v5903, -inf
    %6066 = vmax.xlane.f32.xlu0 %v6065
    %v6067 = vpop.xlane.xlu0 %6066
    %v6068 = vsel %vm590, %v5981, -inf
    %6069 = vmax.xlane.f32.xlu0 %v6068
    %v6070 = vpop.xlane.xlu0 %6069
    %v6071 = vsel %vm590, %v6059, -inf
    %6072 = vmax.xlane.f32.xlu0 %v6071
    %v6073 = vpop.xlane.xlu0 %6072
    %v6074 = vsub.f32 %v5825, %v6064
    %v6075 = vsub.f32 %v5903, %v6067
    %v6076 = vsub.f32 %v5981, %v6070
    %v6077 = vsub.f32 %v6059, %v6073
    %v6078 = vmul.f32 %v6074, 1.442695
    %v6079 = vpow.pop %v6078
    %v6080 = vmul.f32 %v6075, 1.442695
    %v6081 = vpow.pop %v6080
    %v6082 = vmul.f32 %v6076, 1.442695
    %v6083 = vpow.pop %v6082
    %v6084 = vmul.f32 %v6077, 1.442695
    %v6085 = vpow.pop %v6084
    %v6086 = vsel %vm590, %v6079, 0.0
    %6087 = vadd.xlane.f32.xlu0 %v6086
    %v6088 = vpop.xlane.xlu0 %6087
    %v6089 = vsel %vm590, %v6081, 0.0
    %6090 = vadd.xlane.f32.xlu0 %v6089
    %v6091 = vpop.xlane.xlu0 %6090
    %v6092 = vsel %vm590, %v6083, 0.0
    %6093 = vadd.xlane.f32.xlu0 %v6092
    %v6094 = vpop.xlane.xlu0 %6093
    %v6095 = vsel %vm590, %v6085, 0.0
    %6096 = vadd.xlane.f32.xlu0 %v6095
    %v6097 = vpop.xlane.xlu0 %6096
    %v6098 = vrcp.pop %v6088
    %v6099 = vrcp.pop %v6091
    %v6100 = vrcp.pop %v6094
    %v6101 = vrcp.pop %v6097
    %v6102 = vmul.f32 %v6079, %v6098
    %v6103 = vmul.f32 %v6081, %v6099
    %v6104 = vmul.f32 %v6083, %v6100
    %v6105 = vmul.f32 %v6085, %v6101
    %6106 = vrot.lane.b32.xlu0 %v4210, 48
    %v6107 = vpop.permute.xlu0 %6106
    %v6110 = vsel %vm590, %v6102, 0
    %6112 = vmatprep.subr.mxu0 0.0
    %6113 = vmatpush1.msra.mxu0 0.0
    %6114 = vmatprep.subr.mxu0 0.0
    %6115 = vmatpush1.msra.mxu0 0.0
    %6116 = vmatprep.subr.mxu0 0.0
    %6117 = vmatpush1.msra.mxu0 0.0
    %6118 = vmatprep.subr.mxu0 0.0
    %6119 = vmatpush1.msra.mxu0 0.0
    %6120 = vmatprep.subr.mxu0 0.0
    %6121 = vmatpush1.msra.mxu0 0.0
    %6122 = vmatprep.subr.mxu0 0.0
    %6123 = vmatpush1.msra.mxu0 0.0
    %6124 = vmatprep.subr.mxu0 0.0
    %6125 = vmatpush1.msra.mxu0 0.0
    %6126 = vmatprep.subr.mxu0 0.0
    %6127 = vmatpush1.msra.mxu0 0.0
    %6128 = vmatprep.subr.mxu0 0.0
    %6129 = vmatpush1.msra.mxu0 0.0
    %6130 = vmatprep.subr.mxu0 0.0
    %6131 = vmatpush1.msra.mxu0 0.0
    %6132 = vmatprep.subr.mxu0 0.0
    %6133 = vmatpush1.msra.mxu0 0.0
    %6134 = vmatprep.subr.mxu0 0.0
    %6135 = vmatpush1.msra.mxu0 0.0
    %6136 = vmatprep.subr.mxu0 0.0
    %6137 = vmatpush1.msra.mxu0 0.0
    %6138 = vmatprep.subr.mxu0 0.0
    %6139 = vmatpush1.msra.mxu0 0.0
    %6140 = vmatprep.subr.mxu0 0.0
    %6141 = vmatpush1.msra.mxu0 0.0
    %6142 = vmatprep.subr.mxu0 0.0
    %6143 = vmatpush1.msra.mxu0 %v6107
    %6144 = vmatprep.subr.mxu0 0.0
    %6145 = vmatpush2.msra.mxu0 0.0
    %6146 = vmatprep.subr.mxu0 0.0
    %6147 = vmatpush2.msra.mxu0 0.0
    %6148 = vmatprep.subr.mxu0 0.0
    %6149 = vmatpush2.msra.mxu0 0.0
    %6150 = vmatprep.subr.mxu0 0.0
    %6151 = vmatpush2.msra.mxu0 0.0
    %6152 = vmatprep.subr.mxu0 0.0
    %6153 = vmatpush2.msra.mxu0 0.0
    %6154 = vmatprep.subr.mxu0 0.0
    %6155 = vmatpush2.msra.mxu0 0.0
    %6156 = vmatprep.subr.mxu0 0.0
    %6157 = vmatpush2.msra.mxu0 0.0
    %6158 = vmatprep.subr.mxu0 0.0
    %6159 = vmatpush2.msra.mxu0 0.0
    %6160 = vmatprep.subr.mxu0 0.0
    %6161 = vmatpush2.msra.mxu0 0.0
    %6162 = vmatprep.subr.mxu0 0.0
    %6163 = vmatpush2.msra.mxu0 0.0
    %6164 = vmatprep.subr.mxu0 0.0
    %6165 = vmatpush2.msra.mxu0 0.0
    %6166 = vmatprep.subr.mxu0 0.0
    %6167 = vmatpush2.msra.mxu0 0.0
    %6168 = vmatprep.subr.mxu0 0.0
    %6169 = vmatpush2.msra.mxu0 0.0
    %6170 = vmatprep.subr.mxu0 0.0
    %6171 = vmatpush2.msra.mxu0 0.0
    %6172 = vmatprep.subr.mxu0 0.0
    %6173 = vmatpush2.msra.mxu0 0.0
    %6174 = vmatprep.subr.mxu0 0.0
    %6175 = vmatpush2.msra.mxu0 0.0
    %6176 = vmatprep.mubr.f32.mxu0 0.0
    %6177 = vmatmul.mubr.f32.gmra.mxu0 %v6110
    %v6178 = vpop.f32.mrf.mxu0
    %v6179 = vadd.f32 0.0, %v6178
    %v6180 = vpop.f32.mrf.mxu0
    %6181 = vdwg.mxu0
    %6182 = vrot.lane.b32.xlu0 %v4215, 48
    %v6183 = vpop.permute.xlu0 %6182
    %v6186 = vsel %vm590, %v6103, 0
    %6188 = vmatprep.subr.mxu0 0.0
    %6189 = vmatpush1.msra.mxu0 0.0
    %6190 = vmatprep.subr.mxu0 0.0
    %6191 = vmatpush1.msra.mxu0 0.0
    %6192 = vmatprep.subr.mxu0 0.0
    %6193 = vmatpush1.msra.mxu0 0.0
    %6194 = vmatprep.subr.mxu0 0.0
    %6195 = vmatpush1.msra.mxu0 0.0
    %6196 = vmatprep.subr.mxu0 0.0
    %6197 = vmatpush1.msra.mxu0 0.0
    %6198 = vmatprep.subr.mxu0 0.0
    %6199 = vmatpush1.msra.mxu0 0.0
    %6200 = vmatprep.subr.mxu0 0.0
    %6201 = vmatpush1.msra.mxu0 0.0
    %6202 = vmatprep.subr.mxu0 0.0
    %6203 = vmatpush1.msra.mxu0 0.0
    %6204 = vmatprep.subr.mxu0 0.0
    %6205 = vmatpush1.msra.mxu0 0.0
    %6206 = vmatprep.subr.mxu0 0.0
    %6207 = vmatpush1.msra.mxu0 0.0
    %6208 = vmatprep.subr.mxu0 0.0
    %6209 = vmatpush1.msra.mxu0 0.0
    %6210 = vmatprep.subr.mxu0 0.0
    %6211 = vmatpush1.msra.mxu0 0.0
    %6212 = vmatprep.subr.mxu0 0.0
    %6213 = vmatpush1.msra.mxu0 0.0
    %6214 = vmatprep.subr.mxu0 0.0
    %6215 = vmatpush1.msra.mxu0 0.0
    %6216 = vmatprep.subr.mxu0 0.0
    %6217 = vmatpush1.msra.mxu0 0.0
    %6218 = vmatprep.subr.mxu0 0.0
    %6219 = vmatpush1.msra.mxu0 %v6183
    %6220 = vmatprep.subr.mxu0 0.0
    %6221 = vmatpush2.msra.mxu0 0.0
    %6222 = vmatprep.subr.mxu0 0.0
    %6223 = vmatpush2.msra.mxu0 0.0
    %6224 = vmatprep.subr.mxu0 0.0
    %6225 = vmatpush2.msra.mxu0 0.0
    %6226 = vmatprep.subr.mxu0 0.0
    %6227 = vmatpush2.msra.mxu0 0.0
    %6228 = vmatprep.subr.mxu0 0.0
    %6229 = vmatpush2.msra.mxu0 0.0
    %6230 = vmatprep.subr.mxu0 0.0
    %6231 = vmatpush2.msra.mxu0 0.0
    %6232 = vmatprep.subr.mxu0 0.0
    %6233 = vmatpush2.msra.mxu0 0.0
    %6234 = vmatprep.subr.mxu0 0.0
    %6235 = vmatpush2.msra.mxu0 0.0
    %6236 = vmatprep.subr.mxu0 0.0
    %6237 = vmatpush2.msra.mxu0 0.0
    %6238 = vmatprep.subr.mxu0 0.0
    %6239 = vmatpush2.msra.mxu0 0.0
    %6240 = vmatprep.subr.mxu0 0.0
    %6241 = vmatpush2.msra.mxu0 0.0
    %6242 = vmatprep.subr.mxu0 0.0
    %6243 = vmatpush2.msra.mxu0 0.0
    %6244 = vmatprep.subr.mxu0 0.0
    %6245 = vmatpush2.msra.mxu0 0.0
    %6246 = vmatprep.subr.mxu0 0.0
    %6247 = vmatpush2.msra.mxu0 0.0
    %6248 = vmatprep.subr.mxu0 0.0
    %6249 = vmatpush2.msra.mxu0 0.0
    %6250 = vmatprep.subr.mxu0 0.0
    %6251 = vmatpush2.msra.mxu0 0.0
    %6252 = vmatprep.mubr.f32.mxu0 0.0
    %6253 = vmatmul.mubr.f32.gmra.mxu0 %v6186
    %v6254 = vpop.f32.mrf.mxu0
    %v6255 = vadd.f32 0.0, %v6254
    %v6256 = vpop.f32.mrf.mxu0
    %6257 = vdwg.mxu0
    %6258 = vrot.lane.b32.xlu0 %v4220, 48
    %v6259 = vpop.permute.xlu0 %6258
    %v6262 = vsel %vm590, %v6104, 0
    %6264 = vmatprep.subr.mxu0 0.0
    %6265 = vmatpush1.msra.mxu0 0.0
    %6266 = vmatprep.subr.mxu0 0.0
    %6267 = vmatpush1.msra.mxu0 0.0
    %6268 = vmatprep.subr.mxu0 0.0
    %6269 = vmatpush1.msra.mxu0 0.0
    %6270 = vmatprep.subr.mxu0 0.0
    %6271 = vmatpush1.msra.mxu0 0.0
    %6272 = vmatprep.subr.mxu0 0.0
    %6273 = vmatpush1.msra.mxu0 0.0
    %6274 = vmatprep.subr.mxu0 0.0
    %6275 = vmatpush1.msra.mxu0 0.0
    %6276 = vmatprep.subr.mxu0 0.0
    %6277 = vmatpush1.msra.mxu0 0.0
    %6278 = vmatprep.subr.mxu0 0.0
    %6279 = vmatpush1.msra.mxu0 0.0
    %6280 = vmatprep.subr.mxu0 0.0
    %6281 = vmatpush1.msra.mxu0 0.0
    %6282 = vmatprep.subr.mxu0 0.0
    %6283 = vmatpush1.msra.mxu0 0.0
    %6284 = vmatprep.subr.mxu0 0.0
    %6285 = vmatpush1.msra.mxu0 0.0
    %6286 = vmatprep.subr.mxu0 0.0
    %6287 = vmatpush1.msra.mxu0 0.0
    %6288 = vmatprep.subr.mxu0 0.0
    %6289 = vmatpush1.msra.mxu0 0.0
    %6290 = vmatprep.subr.mxu0 0.0
    %6291 = vmatpush1.msra.mxu0 0.0
    %6292 = vmatprep.subr.mxu0 0.0
    %6293 = vmatpush1.msra.mxu0 0.0
    %6294 = vmatprep.subr.mxu0 0.0
    %6295 = vmatpush1.msra.mxu0 %v6259
    %6296 = vmatprep.subr.mxu0 0.0
    %6297 = vmatpush2.msra.mxu0 0.0
    %6298 = vmatprep.subr.mxu0 0.0
    %6299 = vmatpush2.msra.mxu0 0.0
    %6300 = vmatprep.subr.mxu0 0.0
    %6301 = vmatpush2.msra.mxu0 0.0
    %6302 = vmatprep.subr.mxu0 0.0
    %6303 = vmatpush2.msra.mxu0 0.0
    %6304 = vmatprep.subr.mxu0 0.0
    %6305 = vmatpush2.msra.mxu0 0.0
    %6306 = vmatprep.subr.mxu0 0.0
    %6307 = vmatpush2.msra.mxu0 0.0
    %6308 = vmatprep.subr.mxu0 0.0
    %6309 = vmatpush2.msra.mxu0 0.0
    %6310 = vmatprep.subr.mxu0 0.0
    %6311 = vmatpush2.msra.mxu0 0.0
    %6312 = vmatprep.subr.mxu0 0.0
    %6313 = vmatpush2.msra.mxu0 0.0
    %6314 = vmatprep.subr.mxu0 0.0
    %6315 = vmatpush2.msra.mxu0 0.0
    %6316 = vmatprep.subr.mxu0 0.0
    %6317 = vmatpush2.msra.mxu0 0.0
    %6318 = vmatprep.subr.mxu0 0.0
    %6319 = vmatpush2.msra.mxu0 0.0
    %6320 = vmatprep.subr.mxu0 0.0
    %6321 = vmatpush2.msra.mxu0 0.0
    %6322 = vmatprep.subr.mxu0 0.0
    %6323 = vmatpush2.msra.mxu0 0.0
    %6324 = vmatprep.subr.mxu0 0.0
    %6325 = vmatpush2.msra.mxu0 0.0
    %6326 = vmatprep.subr.mxu0 0.0
    %6327 = vmatpush2.msra.mxu0 0.0
    %6328 = vmatprep.mubr.f32.mxu0 0.0
    %6329 = vmatmul.mubr.f32.gmra.mxu0 %v6262
    %v6330 = vpop.f32.mrf.mxu0
    %v6331 = vadd.f32 0.0, %v6330
    %v6332 = vpop.f32.mrf.mxu0
    %6333 = vdwg.mxu0
    %6334 = vrot.lane.b32.xlu0 %v4225, 48
    %v6335 = vpop.permute.xlu0 %6334
    %v6338 = vsel %vm590, %v6105, 0
    %6340 = vmatprep.subr.mxu0 0.0
    %6341 = vmatpush1.msra.mxu0 0.0
    %6342 = vmatprep.subr.mxu0 0.0
    %6343 = vmatpush1.msra.mxu0 0.0
    %6344 = vmatprep.subr.mxu0 0.0
    %6345 = vmatpush1.msra.mxu0 0.0
    %6346 = vmatprep.subr.mxu0 0.0
    %6347 = vmatpush1.msra.mxu0 0.0
    %6348 = vmatprep.subr.mxu0 0.0
    %6349 = vmatpush1.msra.mxu0 0.0
    %6350 = vmatprep.subr.mxu0 0.0
    %6351 = vmatpush1.msra.mxu0 0.0
    %6352 = vmatprep.subr.mxu0 0.0
    %6353 = vmatpush1.msra.mxu0 0.0
    %6354 = vmatprep.subr.mxu0 0.0
    %6355 = vmatpush1.msra.mxu0 0.0
    %6356 = vmatprep.subr.mxu0 0.0
    %6357 = vmatpush1.msra.mxu0 0.0
    %6358 = vmatprep.subr.mxu0 0.0
    %6359 = vmatpush1.msra.mxu0 0.0
    %6360 = vmatprep.subr.mxu0 0.0
    %6361 = vmatpush1.msra.mxu0 0.0
    %6362 = vmatprep.subr.mxu0 0.0
    %6363 = vmatpush1.msra.mxu0 0.0
    %6364 = vmatprep.subr.mxu0 0.0
    %6365 = vmatpush1.msra.mxu0 0.0
    %6366 = vmatprep.subr.mxu0 0.0
    %6367 = vmatpush1.msra.mxu0 0.0
    %6368 = vmatprep.subr.mxu0 0.0
    %6369 = vmatpush1.msra.mxu0 0.0
    %6370 = vmatprep.subr.mxu0 0.0
    %6371 = vmatpush1.msra.mxu0 %v6335
    %6372 = vmatprep.subr.mxu0 0.0
    %6373 = vmatpush2.msra.mxu0 0.0
    %6374 = vmatprep.subr.mxu0 0.0
    %6375 = vmatpush2.msra.mxu0 0.0
    %6376 = vmatprep.subr.mxu0 0.0
    %6377 = vmatpush2.msra.mxu0 0.0
    %6378 = vmatprep.subr.mxu0 0.0
    %6379 = vmatpush2.msra.mxu0 0.0
    %6380 = vmatprep.subr.mxu0 0.0
    %6381 = vmatpush2.msra.mxu0 0.0
    %6382 = vmatprep.subr.mxu0 0.0
    %6383 = vmatpush2.msra.mxu0 0.0
    %6384 = vmatprep.subr.mxu0 0.0
    %6385 = vmatpush2.msra.mxu0 0.0
    %6386 = vmatprep.subr.mxu0 0.0
    %6387 = vmatpush2.msra.mxu0 0.0
    %6388 = vmatprep.subr.mxu0 0.0
    %6389 = vmatpush2.msra.mxu0 0.0
    %6390 = vmatprep.subr.mxu0 0.0
    %6391 = vmatpush2.msra.mxu0 0.0
    %6392 = vmatprep.subr.mxu0 0.0
    %6393 = vmatpush2.msra.mxu0 0.0
    %6394 = vmatprep.subr.mxu0 0.0
    %6395 = vmatpush2.msra.mxu0 0.0
    %6396 = vmatprep.subr.mxu0 0.0
    %6397 = vmatpush2.msra.mxu0 0.0
    %6398 = vmatprep.subr.mxu0 0.0
    %6399 = vmatpush2.msra.mxu0 0.0
    %6400 = vmatprep.subr.mxu0 0.0
    %6401 = vmatpush2.msra.mxu0 0.0
    %6402 = vmatprep.subr.mxu0 0.0
    %6403 = vmatpush2.msra.mxu0 0.0
    %6404 = vmatprep.mubr.f32.mxu0 0.0
    %6405 = vmatmul.mubr.f32.gmra.mxu0 %v6338
    %v6406 = vpop.f32.mrf.mxu0
    %v6407 = vadd.f32 0.0, %v6406
    %v6408 = vpop.f32.mrf.mxu0
    %6409 = vdwg.mxu0
    %v6411 = vsel %vm590, %v6179, 0
    %v6414 = vsel %vm590, %v6255, 0
    %v6417 = vsel %vm590, %v6331, 0
    %v6420 = vsel %vm590, %v6407, 0
    %6422 = vmatprep.subr.mxu0 0.0
    %6423 = vmatpush1.msra.mxu0 0.0
    %6424 = vmatprep.subr.mxu0 0.0
    %6425 = vmatpush1.msra.mxu0 0.0
    %6426 = vmatprep.subr.mxu0 0.0
    %6427 = vmatpush1.msra.mxu0 0.0
    %6428 = vmatprep.subr.mxu0 0.0
    %6429 = vmatpush1.msra.mxu0 0.0
    %6430 = vmatprep.subr.mxu0 0.0
    %6431 = vmatpush1.msra.mxu0 0.0
    %6432 = vmatprep.subr.mxu0 0.0
    %6433 = vmatpush1.msra.mxu0 0.0
    %6434 = vmatprep.subr.mxu0 0.0
    %6435 = vmatpush1.msra.mxu0 0.0
    %6436 = vmatprep.subr.mxu0 0.0
    %6437 = vmatpush1.msra.mxu0 0.0
    %6438 = vmatprep.subr.mxu0 0.0
    %6439 = vmatpush1.msra.mxu0 0.0
    %6440 = vmatprep.subr.mxu0 0.0
    %6441 = vmatpush1.msra.mxu0 0.0
    %6442 = vmatprep.subr.mxu0 0.0
    %6443 = vmatpush1.msra.mxu0 0.0
    %6444 = vmatprep.subr.mxu0 0.0
    %6445 = vmatpush1.msra.mxu0 0.0
    %6446 = vmatprep.subr.mxu0 0.0
    %6447 = vmatpush1.msra.mxu0 0.0
    %6448 = vmatprep.subr.mxu0 0.0
    %6449 = vmatpush1.msra.mxu0 0.0
    %6450 = vmatprep.subr.mxu0 0.0
    %6451 = vmatpush1.msra.mxu0 0.0
    %6452 = vmatprep.subr.mxu0 0.0
    %6453 = vmatpush1.msra.mxu0 %v4234
    %6454 = vmatprep.subr.mxu0 0.0
    %6455 = vmatpush2.msra.mxu0 0.0
    %6456 = vmatprep.subr.mxu0 0.0
    %6457 = vmatpush2.msra.mxu0 0.0
    %6458 = vmatprep.subr.mxu0 0.0
    %6459 = vmatpush2.msra.mxu0 0.0
    %6460 = vmatprep.subr.mxu0 0.0
    %6461 = vmatpush2.msra.mxu0 0.0
    %6462 = vmatprep.subr.mxu0 0.0
    %6463 = vmatpush2.msra.mxu0 0.0
    %6464 = vmatprep.subr.mxu0 0.0
    %6465 = vmatpush2.msra.mxu0 0.0
    %6466 = vmatprep.subr.mxu0 0.0
    %6467 = vmatpush2.msra.mxu0 0.0
    %6468 = vmatprep.subr.mxu0 0.0
    %6469 = vmatpush2.msra.mxu0 0.0
    %6470 = vmatprep.subr.mxu0 0.0
    %6471 = vmatpush2.msra.mxu0 0.0
    %6472 = vmatprep.subr.mxu0 0.0
    %6473 = vmatpush2.msra.mxu0 0.0
    %6474 = vmatprep.subr.mxu0 0.0
    %6475 = vmatpush2.msra.mxu0 0.0
    %6476 = vmatprep.subr.mxu0 0.0
    %6477 = vmatpush2.msra.mxu0 0.0
    %6478 = vmatprep.subr.mxu0 0.0
    %6479 = vmatpush2.msra.mxu0 0.0
    %6480 = vmatprep.subr.mxu0 0.0
    %6481 = vmatpush2.msra.mxu0 0.0
    %6482 = vmatprep.subr.mxu0 0.0
    %6483 = vmatpush2.msra.mxu0 0.0
    %6484 = vmatprep.subr.mxu0 0.0
    %6485 = vmatpush2.msra.mxu0 0.0
    %6486 = vmatprep.mubr.f32.mxu0 0.0
    %6487 = vmatmul.mubr.f32.gmra.mxu0 %v6411
    %v6488 = vpop.f32.mrf.mxu0
    %v6489 = vadd.f32 0.0, %v6488
    %v6490 = vpop.f32.mrf.mxu0
    %6491 = vmatprep.mubr.f32.mxu0 0.0
    %6492 = vmatmul.mubr.f32.gmra.mxu0 %v6414
    %v6493 = vpop.f32.mrf.mxu0
    %v6494 = vadd.f32 0.0, %v6493
    %v6495 = vpop.f32.mrf.mxu0
    %6496 = vmatprep.mubr.f32.mxu0 0.0
    %6497 = vmatmul.mubr.f32.gmra.mxu0 %v6417
    %v6498 = vpop.f32.mrf.mxu0
    %v6499 = vadd.f32 0.0, %v6498
    %v6500 = vpop.f32.mrf.mxu0
    %6501 = vmatprep.mubr.f32.mxu0 0.0
    %6502 = vmatmul.mubr.f32.gmra.mxu0 %v6420
    %v6503 = vpop.f32.mrf.mxu0
    %v6504 = vadd.f32 0.0, %v6503
    %v6505 = vpop.f32.mrf.mxu0
    %6506 = vdwg.mxu0
    %v6507 = vadd.f32 %v5732, %v6489
    %v6508 = vadd.f32 %v5737, %v6494
    %v6509 = vadd.f32 %v5742, %v6499
    %v6510 = vadd.f32 %v5747, %v6504
    %6511 = vrot.lane.b32.xlu0 %v4228, 104
    %v6512 = vpop.permute.xlu0 %6511
    %6513 = vrot.lane.b32.xlu0 %v4210, 72
    %v6514 = vpop.permute.xlu0 %6513
    %v6515 = vsel %vm590, %v6512, 0
    %v6517 = vsel %vm590, %v6514, 0
    %6519 = vmatprep.subr.mxu0 0.0
    %6520 = vmatpush1.xpose.msra.mxu0 0.0
    %6521 = vmatprep.subr.mxu0 0.0
    %6522 = vmatpush1.xpose.msra.mxu0 0.0
    %6523 = vmatprep.subr.mxu0 0.0
    %6524 = vmatpush1.xpose.msra.mxu0 0.0
    %6525 = vmatprep.subr.mxu0 0.0
    %6526 = vmatpush1.xpose.msra.mxu0 0.0
    %6527 = vmatprep.subr.mxu0 0.0
    %6528 = vmatpush1.xpose.msra.mxu0 0.0
    %6529 = vmatprep.subr.mxu0 0.0
    %6530 = vmatpush1.xpose.msra.mxu0 0.0
    %6531 = vmatprep.subr.mxu0 0.0
    %6532 = vmatpush1.xpose.msra.mxu0 0.0
    %6533 = vmatprep.subr.mxu0 0.0
    %6534 = vmatpush1.xpose.msra.mxu0 0.0
    %6535 = vmatprep.subr.mxu0 0.0
    %6536 = vmatpush1.xpose.msra.mxu0 0.0
    %6537 = vmatprep.subr.mxu0 0.0
    %6538 = vmatpush1.xpose.msra.mxu0 0.0
    %6539 = vmatprep.subr.mxu0 0.0
    %6540 = vmatpush1.xpose.msra.mxu0 0.0
    %6541 = vmatprep.subr.mxu0 0.0
    %6542 = vmatpush1.xpose.msra.mxu0 0.0
    %6543 = vmatprep.subr.mxu0 0.0
    %6544 = vmatpush1.xpose.msra.mxu0 0.0
    %6545 = vmatprep.subr.mxu0 0.0
    %6546 = vmatpush1.xpose.msra.mxu0 0.0
    %6547 = vmatprep.subr.mxu0 0.0
    %6548 = vmatpush1.xpose.msra.mxu0 0.0
    %6549 = vmatprep.subr.mxu0 0.0
    %6550 = vmatpush1.xpose.msra.mxu0 %v6517
    %6551 = vmatprep.subr.mxu0 0.0
    %6552 = vmatpush2.xpose.msra.mxu0 0.0
    %6553 = vmatprep.subr.mxu0 0.0
    %6554 = vmatpush2.xpose.msra.mxu0 0.0
    %6555 = vmatprep.subr.mxu0 0.0
    %6556 = vmatpush2.xpose.msra.mxu0 0.0
    %6557 = vmatprep.subr.mxu0 0.0
    %6558 = vmatpush2.xpose.msra.mxu0 0.0
    %6559 = vmatprep.subr.mxu0 0.0
    %6560 = vmatpush2.xpose.msra.mxu0 0.0
    %6561 = vmatprep.subr.mxu0 0.0
    %6562 = vmatpush2.xpose.msra.mxu0 0.0
    %6563 = vmatprep.subr.mxu0 0.0
    %6564 = vmatpush2.xpose.msra.mxu0 0.0
    %6565 = vmatprep.subr.mxu0 0.0
    %6566 = vmatpush2.xpose.msra.mxu0 0.0
    %6567 = vmatprep.subr.mxu0 0.0
    %6568 = vmatpush2.xpose.msra.mxu0 0.0
    %6569 = vmatprep.subr.mxu0 0.0
    %6570 = vmatpush2.xpose.msra.mxu0 0.0
    %6571 = vmatprep.subr.mxu0 0.0
    %6572 = vmatpush2.xpose.msra.mxu0 0.0
    %6573 = vmatprep.subr.mxu0 0.0
    %6574 = vmatpush2.xpose.msra.mxu0 0.0
    %6575 = vmatprep.subr.mxu0 0.0
    %6576 = vmatpush2.xpose.msra.mxu0 0.0
    %6577 = vmatprep.subr.mxu0 0.0
    %6578 = vmatpush2.xpose.msra.mxu0 0.0
    %6579 = vmatprep.subr.mxu0 0.0
    %6580 = vmatpush2.xpose.msra.mxu0 0.0
    %6581 = vmatprep.subr.mxu0 0.0
    %6582 = vmatpush2.xpose.msra.mxu0 0.0
    %6583 = vmatprep.mubr.f32.mxu0 0.0
    %6584 = vmatmul.mubr.f32.gmra.mxu0 %v6515
    %v6585 = vpop.f32.mrf.mxu0
    %v6586 = vadd.f32 %v570, %v6585
    %v6587 = vpop.f32.mrf.mxu0
    %6588 = vdwg.mxu0
    %6589 = vrot.lane.b32.xlu0 %v4229, 104
    %v6590 = vpop.permute.xlu0 %6589
    %6591 = vrot.lane.b32.xlu0 %v4215, 72
    %v6592 = vpop.permute.xlu0 %6591
    %v6593 = vsel %vm590, %v6590, 0
    %v6595 = vsel %vm590, %v6592, 0
    %6597 = vmatprep.subr.mxu0 0.0
    %6598 = vmatpush1.xpose.msra.mxu0 0.0
    %6599 = vmatprep.subr.mxu0 0.0
    %6600 = vmatpush1.xpose.msra.mxu0 0.0
    %6601 = vmatprep.subr.mxu0 0.0
    %6602 = vmatpush1.xpose.msra.mxu0 0.0
    %6603 = vmatprep.subr.mxu0 0.0
    %6604 = vmatpush1.xpose.msra.mxu0 0.0
    %6605 = vmatprep.subr.mxu0 0.0
    %6606 = vmatpush1.xpose.msra.mxu0 0.0
    %6607 = vmatprep.subr.mxu0 0.0
    %6608 = vmatpush1.xpose.msra.mxu0 0.0
    %6609 = vmatprep.subr.mxu0 0.0
    %6610 = vmatpush1.xpose.msra.mxu0 0.0
    %6611 = vmatprep.subr.mxu0 0.0
    %6612 = vmatpush1.xpose.msra.mxu0 0.0
    %6613 = vmatprep.subr.mxu0 0.0
    %6614 = vmatpush1.xpose.msra.mxu0 0.0
    %6615 = vmatprep.subr.mxu0 0.0
    %6616 = vmatpush1.xpose.msra.mxu0 0.0
    %6617 = vmatprep.subr.mxu0 0.0
    %6618 = vmatpush1.xpose.msra.mxu0 0.0
    %6619 = vmatprep.subr.mxu0 0.0
    %6620 = vmatpush1.xpose.msra.mxu0 0.0
    %6621 = vmatprep.subr.mxu0 0.0
    %6622 = vmatpush1.xpose.msra.mxu0 0.0
    %6623 = vmatprep.subr.mxu0 0.0
    %6624 = vmatpush1.xpose.msra.mxu0 0.0
    %6625 = vmatprep.subr.mxu0 0.0
    %6626 = vmatpush1.xpose.msra.mxu0 0.0
    %6627 = vmatprep.subr.mxu0 0.0
    %6628 = vmatpush1.xpose.msra.mxu0 %v6595
    %6629 = vmatprep.subr.mxu0 0.0
    %6630 = vmatpush2.xpose.msra.mxu0 0.0
    %6631 = vmatprep.subr.mxu0 0.0
    %6632 = vmatpush2.xpose.msra.mxu0 0.0
    %6633 = vmatprep.subr.mxu0 0.0
    %6634 = vmatpush2.xpose.msra.mxu0 0.0
    %6635 = vmatprep.subr.mxu0 0.0
    %6636 = vmatpush2.xpose.msra.mxu0 0.0
    %6637 = vmatprep.subr.mxu0 0.0
    %6638 = vmatpush2.xpose.msra.mxu0 0.0
    %6639 = vmatprep.subr.mxu0 0.0
    %6640 = vmatpush2.xpose.msra.mxu0 0.0
    %6641 = vmatprep.subr.mxu0 0.0
    %6642 = vmatpush2.xpose.msra.mxu0 0.0
    %6643 = vmatprep.subr.mxu0 0.0
    %6644 = vmatpush2.xpose.msra.mxu0 0.0
    %6645 = vmatprep.subr.mxu0 0.0
    %6646 = vmatpush2.xpose.msra.mxu0 0.0
    %6647 = vmatprep.subr.mxu0 0.0
    %6648 = vmatpush2.xpose.msra.mxu0 0.0
    %6649 = vmatprep.subr.mxu0 0.0
    %6650 = vmatpush2.xpose.msra.mxu0 0.0
    %6651 = vmatprep.subr.mxu0 0.0
    %6652 = vmatpush2.xpose.msra.mxu0 0.0
    %6653 = vmatprep.subr.mxu0 0.0
    %6654 = vmatpush2.xpose.msra.mxu0 0.0
    %6655 = vmatprep.subr.mxu0 0.0
    %6656 = vmatpush2.xpose.msra.mxu0 0.0
    %6657 = vmatprep.subr.mxu0 0.0
    %6658 = vmatpush2.xpose.msra.mxu0 0.0
    %6659 = vmatprep.subr.mxu0 0.0
    %6660 = vmatpush2.xpose.msra.mxu0 0.0
    %6661 = vmatprep.mubr.f32.mxu0 0.0
    %6662 = vmatmul.mubr.f32.gmra.mxu0 %v6593
    %v6663 = vpop.f32.mrf.mxu0
    %v6664 = vadd.f32 %v574, %v6663
    %v6665 = vpop.f32.mrf.mxu0
    %6666 = vdwg.mxu0
    %6667 = vrot.lane.b32.xlu0 %v4230, 104
    %v6668 = vpop.permute.xlu0 %6667
    %6669 = vrot.lane.b32.xlu0 %v4220, 72
    %v6670 = vpop.permute.xlu0 %6669
    %v6671 = vsel %vm590, %v6668, 0
    %v6673 = vsel %vm590, %v6670, 0
    %6675 = vmatprep.subr.mxu0 0.0
    %6676 = vmatpush1.xpose.msra.mxu0 0.0
    %6677 = vmatprep.subr.mxu0 0.0
    %6678 = vmatpush1.xpose.msra.mxu0 0.0
    %6679 = vmatprep.subr.mxu0 0.0
    %6680 = vmatpush1.xpose.msra.mxu0 0.0
    %6681 = vmatprep.subr.mxu0 0.0
    %6682 = vmatpush1.xpose.msra.mxu0 0.0
    %6683 = vmatprep.subr.mxu0 0.0
    %6684 = vmatpush1.xpose.msra.mxu0 0.0
    %6685 = vmatprep.subr.mxu0 0.0
    %6686 = vmatpush1.xpose.msra.mxu0 0.0
    %6687 = vmatprep.subr.mxu0 0.0
    %6688 = vmatpush1.xpose.msra.mxu0 0.0
    %6689 = vmatprep.subr.mxu0 0.0
    %6690 = vmatpush1.xpose.msra.mxu0 0.0
    %6691 = vmatprep.subr.mxu0 0.0
    %6692 = vmatpush1.xpose.msra.mxu0 0.0
    %6693 = vmatprep.subr.mxu0 0.0
    %6694 = vmatpush1.xpose.msra.mxu0 0.0
    %6695 = vmatprep.subr.mxu0 0.0
    %6696 = vmatpush1.xpose.msra.mxu0 0.0
    %6697 = vmatprep.subr.mxu0 0.0
    %6698 = vmatpush1.xpose.msra.mxu0 0.0
    %6699 = vmatprep.subr.mxu0 0.0
    %6700 = vmatpush1.xpose.msra.mxu0 0.0
    %6701 = vmatprep.subr.mxu0 0.0
    %6702 = vmatpush1.xpose.msra.mxu0 0.0
    %6703 = vmatprep.subr.mxu0 0.0
    %6704 = vmatpush1.xpose.msra.mxu0 0.0
    %6705 = vmatprep.subr.mxu0 0.0
    %6706 = vmatpush1.xpose.msra.mxu0 %v6673
    %6707 = vmatprep.subr.mxu0 0.0
    %6708 = vmatpush2.xpose.msra.mxu0 0.0
    %6709 = vmatprep.subr.mxu0 0.0
    %6710 = vmatpush2.xpose.msra.mxu0 0.0
    %6711 = vmatprep.subr.mxu0 0.0
    %6712 = vmatpush2.xpose.msra.mxu0 0.0
    %6713 = vmatprep.subr.mxu0 0.0
    %6714 = vmatpush2.xpose.msra.mxu0 0.0
    %6715 = vmatprep.subr.mxu0 0.0
    %6716 = vmatpush2.xpose.msra.mxu0 0.0
    %6717 = vmatprep.subr.mxu0 0.0
    %6718 = vmatpush2.xpose.msra.mxu0 0.0
    %6719 = vmatprep.subr.mxu0 0.0
    %6720 = vmatpush2.xpose.msra.mxu0 0.0
    %6721 = vmatprep.subr.mxu0 0.0
    %6722 = vmatpush2.xpose.msra.mxu0 0.0
    %6723 = vmatprep.subr.mxu0 0.0
    %6724 = vmatpush2.xpose.msra.mxu0 0.0
    %6725 = vmatprep.subr.mxu0 0.0
    %6726 = vmatpush2.xpose.msra.mxu0 0.0
    %6727 = vmatprep.subr.mxu0 0.0
    %6728 = vmatpush2.xpose.msra.mxu0 0.0
    %6729 = vmatprep.subr.mxu0 0.0
    %6730 = vmatpush2.xpose.msra.mxu0 0.0
    %6731 = vmatprep.subr.mxu0 0.0
    %6732 = vmatpush2.xpose.msra.mxu0 0.0
    %6733 = vmatprep.subr.mxu0 0.0
    %6734 = vmatpush2.xpose.msra.mxu0 0.0
    %6735 = vmatprep.subr.mxu0 0.0
    %6736 = vmatpush2.xpose.msra.mxu0 0.0
    %6737 = vmatprep.subr.mxu0 0.0
    %6738 = vmatpush2.xpose.msra.mxu0 0.0
    %6739 = vmatprep.mubr.f32.mxu0 0.0
    %6740 = vmatmul.mubr.f32.gmra.mxu0 %v6671
    %v6741 = vpop.f32.mrf.mxu0
    %v6742 = vadd.f32 %v578, %v6741
    %v6743 = vpop.f32.mrf.mxu0
    %6744 = vdwg.mxu0
    %6745 = vrot.lane.b32.xlu0 %v4231, 104
    %v6746 = vpop.permute.xlu0 %6745
    %6747 = vrot.lane.b32.xlu0 %v4225, 72
    %v6748 = vpop.permute.xlu0 %6747
    %v6749 = vsel %vm590, %v6746, 0
    %v6751 = vsel %vm590, %v6748, 0
    %6753 = vmatprep.subr.mxu0 0.0
    %6754 = vmatpush1.xpose.msra.mxu0 0.0
    %6755 = vmatprep.subr.mxu0 0.0
    %6756 = vmatpush1.xpose.msra.mxu0 0.0
    %6757 = vmatprep.subr.mxu0 0.0
    %6758 = vmatpush1.xpose.msra.mxu0 0.0
    %6759 = vmatprep.subr.mxu0 0.0
    %6760 = vmatpush1.xpose.msra.mxu0 0.0
    %6761 = vmatprep.subr.mxu0 0.0
    %6762 = vmatpush1.xpose.msra.mxu0 0.0
    %6763 = vmatprep.subr.mxu0 0.0
    %6764 = vmatpush1.xpose.msra.mxu0 0.0
    %6765 = vmatprep.subr.mxu0 0.0
    %6766 = vmatpush1.xpose.msra.mxu0 0.0
    %6767 = vmatprep.subr.mxu0 0.0
    %6768 = vmatpush1.xpose.msra.mxu0 0.0
    %6769 = vmatprep.subr.mxu0 0.0
    %6770 = vmatpush1.xpose.msra.mxu0 0.0
    %6771 = vmatprep.subr.mxu0 0.0
    %6772 = vmatpush1.xpose.msra.mxu0 0.0
    %6773 = vmatprep.subr.mxu0 0.0
    %6774 = vmatpush1.xpose.msra.mxu0 0.0
    %6775 = vmatprep.subr.mxu0 0.0
    %6776 = vmatpush1.xpose.msra.mxu0 0.0
    %6777 = vmatprep.subr.mxu0 0.0
    %6778 = vmatpush1.xpose.msra.mxu0 0.0
    %6779 = vmatprep.subr.mxu0 0.0
    %6780 = vmatpush1.xpose.msra.mxu0 0.0
    %6781 = vmatprep.subr.mxu0 0.0
    %6782 = vmatpush1.xpose.msra.mxu0 0.0
    %6783 = vmatprep.subr.mxu0 0.0
    %6784 = vmatpush1.xpose.msra.mxu0 %v6751
    %6785 = vmatprep.subr.mxu0 0.0
    %6786 = vmatpush2.xpose.msra.mxu0 0.0
    %6787 = vmatprep.subr.mxu0 0.0
    %6788 = vmatpush2.xpose.msra.mxu0 0.0
    %6789 = vmatprep.subr.mxu0 0.0
    %6790 = vmatpush2.xpose.msra.mxu0 0.0
    %6791 = vmatprep.subr.mxu0 0.0
    %6792 = vmatpush2.xpose.msra.mxu0 0.0
    %6793 = vmatprep.subr.mxu0 0.0
    %6794 = vmatpush2.xpose.msra.mxu0 0.0
    %6795 = vmatprep.subr.mxu0 0.0
    %6796 = vmatpush2.xpose.msra.mxu0 0.0
    %6797 = vmatprep.subr.mxu0 0.0
    %6798 = vmatpush2.xpose.msra.mxu0 0.0
    %6799 = vmatprep.subr.mxu0 0.0
    %6800 = vmatpush2.xpose.msra.mxu0 0.0
    %6801 = vmatprep.subr.mxu0 0.0
    %6802 = vmatpush2.xpose.msra.mxu0 0.0
    %6803 = vmatprep.subr.mxu0 0.0
    %6804 = vmatpush2.xpose.msra.mxu0 0.0
    %6805 = vmatprep.subr.mxu0 0.0
    %6806 = vmatpush2.xpose.msra.mxu0 0.0
    %6807 = vmatprep.subr.mxu0 0.0
    %6808 = vmatpush2.xpose.msra.mxu0 0.0
    %6809 = vmatprep.subr.mxu0 0.0
    %6810 = vmatpush2.xpose.msra.mxu0 0.0
    %6811 = vmatprep.subr.mxu0 0.0
    %6812 = vmatpush2.xpose.msra.mxu0 0.0
    %6813 = vmatprep.subr.mxu0 0.0
    %6814 = vmatpush2.xpose.msra.mxu0 0.0
    %6815 = vmatprep.subr.mxu0 0.0
    %6816 = vmatpush2.xpose.msra.mxu0 0.0
    %6817 = vmatprep.mubr.f32.mxu0 0.0
    %6818 = vmatmul.mubr.f32.gmra.mxu0 %v6749
    %v6819 = vpop.f32.mrf.mxu0
    %v6820 = vadd.f32 %v582, %v6819
    %v6821 = vpop.f32.mrf.mxu0
    %6822 = vdwg.mxu0
    %v6823 = vsel %vm590, %v6586, -inf
    %6824 = vmax.xlane.f32.xlu0 %v6823
    %v6825 = vpop.xlane.xlu0 %6824
    %v6826 = vsel %vm590, %v6664, -inf
    %6827 = vmax.xlane.f32.xlu0 %v6826
    %v6828 = vpop.xlane.xlu0 %6827
    %v6829 = vsel %vm590, %v6742, -inf
    %6830 = vmax.xlane.f32.xlu0 %v6829
    %v6831 = vpop.xlane.xlu0 %6830
    %v6832 = vsel %vm590, %v6820, -inf
    %6833 = vmax.xlane.f32.xlu0 %v6832
    %v6834 = vpop.xlane.xlu0 %6833
    %v6835 = vsub.f32 %v6586, %v6825
    %v6836 = vsub.f32 %v6664, %v6828
    %v6837 = vsub.f32 %v6742, %v6831
    %v6838 = vsub.f32 %v6820, %v6834
    %v6839 = vmul.f32 %v6835, 1.442695
    %v6840 = vpow.pop %v6839
    %v6841 = vmul.f32 %v6836, 1.442695
    %v6842 = vpow.pop %v6841
    %v6843 = vmul.f32 %v6837, 1.442695
    %v6844 = vpow.pop %v6843
    %v6845 = vmul.f32 %v6838, 1.442695
    %v6846 = vpow.pop %v6845
    %v6847 = vsel %vm590, %v6840, 0.0
    %6848 = vadd.xlane.f32.xlu0 %v6847
    %v6849 = vpop.xlane.xlu0 %6848
    %v6850 = vsel %vm590, %v6842, 0.0
    %6851 = vadd.xlane.f32.xlu0 %v6850
    %v6852 = vpop.xlane.xlu0 %6851
    %v6853 = vsel %vm590, %v6844, 0.0
    %6854 = vadd.xlane.f32.xlu0 %v6853
    %v6855 = vpop.xlane.xlu0 %6854
    %v6856 = vsel %vm590, %v6846, 0.0
    %6857 = vadd.xlane.f32.xlu0 %v6856
    %v6858 = vpop.xlane.xlu0 %6857
    %v6859 = vrcp.pop %v6849
    %v6860 = vrcp.pop %v6852
    %v6861 = vrcp.pop %v6855
    %v6862 = vrcp.pop %v6858
    %v6863 = vmul.f32 %v6840, %v6859
    %v6864 = vmul.f32 %v6842, %v6860
    %v6865 = vmul.f32 %v6844, %v6861
    %v6866 = vmul.f32 %v6846, %v6862
    %6867 = vrot.lane.b32.xlu0 %v4210, 40
    %v6868 = vpop.permute.xlu0 %6867
    %v6871 = vsel %vm590, %v6863, 0
    %6873 = vmatprep.subr.mxu0 0.0
    %6874 = vmatpush1.msra.mxu0 0.0
    %6875 = vmatprep.subr.mxu0 0.0
    %6876 = vmatpush1.msra.mxu0 0.0
    %6877 = vmatprep.subr.mxu0 0.0
    %6878 = vmatpush1.msra.mxu0 0.0
    %6879 = vmatprep.subr.mxu0 0.0
    %6880 = vmatpush1.msra.mxu0 0.0
    %6881 = vmatprep.subr.mxu0 0.0
    %6882 = vmatpush1.msra.mxu0 0.0
    %6883 = vmatprep.subr.mxu0 0.0
    %6884 = vmatpush1.msra.mxu0 0.0
    %6885 = vmatprep.subr.mxu0 0.0
    %6886 = vmatpush1.msra.mxu0 0.0
    %6887 = vmatprep.subr.mxu0 0.0
    %6888 = vmatpush1.msra.mxu0 0.0
    %6889 = vmatprep.subr.mxu0 0.0
    %6890 = vmatpush1.msra.mxu0 0.0
    %6891 = vmatprep.subr.mxu0 0.0
    %6892 = vmatpush1.msra.mxu0 0.0
    %6893 = vmatprep.subr.mxu0 0.0
    %6894 = vmatpush1.msra.mxu0 0.0
    %6895 = vmatprep.subr.mxu0 0.0
    %6896 = vmatpush1.msra.mxu0 0.0
    %6897 = vmatprep.subr.mxu0 0.0
    %6898 = vmatpush1.msra.mxu0 0.0
    %6899 = vmatprep.subr.mxu0 0.0
    %6900 = vmatpush1.msra.mxu0 0.0
    %6901 = vmatprep.subr.mxu0 0.0
    %6902 = vmatpush1.msra.mxu0 0.0
    %6903 = vmatprep.subr.mxu0 0.0
    %6904 = vmatpush1.msra.mxu0 %v6868
    %6905 = vmatprep.subr.mxu0 0.0
    %6906 = vmatpush2.msra.mxu0 0.0
    %6907 = vmatprep.subr.mxu0 0.0
    %6908 = vmatpush2.msra.mxu0 0.0
    %6909 = vmatprep.subr.mxu0 0.0
    %6910 = vmatpush2.msra.mxu0 0.0
    %6911 = vmatprep.subr.mxu0 0.0
    %6912 = vmatpush2.msra.mxu0 0.0
    %6913 = vmatprep.subr.mxu0 0.0
    %6914 = vmatpush2.msra.mxu0 0.0
    %6915 = vmatprep.subr.mxu0 0.0
    %6916 = vmatpush2.msra.mxu0 0.0
    %6917 = vmatprep.subr.mxu0 0.0
    %6918 = vmatpush2.msra.mxu0 0.0
    %6919 = vmatprep.subr.mxu0 0.0
    %6920 = vmatpush2.msra.mxu0 0.0
    %6921 = vmatprep.subr.mxu0 0.0
    %6922 = vmatpush2.msra.mxu0 0.0
    %6923 = vmatprep.subr.mxu0 0.0
    %6924 = vmatpush2.msra.mxu0 0.0
    %6925 = vmatprep.subr.mxu0 0.0
    %6926 = vmatpush2.msra.mxu0 0.0
    %6927 = vmatprep.subr.mxu0 0.0
    %6928 = vmatpush2.msra.mxu0 0.0
    %6929 = vmatprep.subr.mxu0 0.0
    %6930 = vmatpush2.msra.mxu0 0.0
    %6931 = vmatprep.subr.mxu0 0.0
    %6932 = vmatpush2.msra.mxu0 0.0
    %6933 = vmatprep.subr.mxu0 0.0
    %6934 = vmatpush2.msra.mxu0 0.0
    %6935 = vmatprep.subr.mxu0 0.0
    %6936 = vmatpush2.msra.mxu0 0.0
    %6937 = vmatprep.mubr.f32.mxu0 0.0
    %6938 = vmatmul.mubr.f32.gmra.mxu0 %v6871
    %v6939 = vpop.f32.mrf.mxu0
    %v6940 = vadd.f32 0.0, %v6939
    %v6941 = vpop.f32.mrf.mxu0
    %6942 = vdwg.mxu0
    %6943 = vrot.lane.b32.xlu0 %v4215, 40
    %v6944 = vpop.permute.xlu0 %6943
    %v6947 = vsel %vm590, %v6864, 0
    %6949 = vmatprep.subr.mxu0 0.0
    %6950 = vmatpush1.msra.mxu0 0.0
    %6951 = vmatprep.subr.mxu0 0.0
    %6952 = vmatpush1.msra.mxu0 0.0
    %6953 = vmatprep.subr.mxu0 0.0
    %6954 = vmatpush1.msra.mxu0 0.0
    %6955 = vmatprep.subr.mxu0 0.0
    %6956 = vmatpush1.msra.mxu0 0.0
    %6957 = vmatprep.subr.mxu0 0.0
    %6958 = vmatpush1.msra.mxu0 0.0
    %6959 = vmatprep.subr.mxu0 0.0
    %6960 = vmatpush1.msra.mxu0 0.0
    %6961 = vmatprep.subr.mxu0 0.0
    %6962 = vmatpush1.msra.mxu0 0.0
    %6963 = vmatprep.subr.mxu0 0.0
    %6964 = vmatpush1.msra.mxu0 0.0
    %6965 = vmatprep.subr.mxu0 0.0
    %6966 = vmatpush1.msra.mxu0 0.0
    %6967 = vmatprep.subr.mxu0 0.0
    %6968 = vmatpush1.msra.mxu0 0.0
    %6969 = vmatprep.subr.mxu0 0.0
    %6970 = vmatpush1.msra.mxu0 0.0
    %6971 = vmatprep.subr.mxu0 0.0
    %6972 = vmatpush1.msra.mxu0 0.0
    %6973 = vmatprep.subr.mxu0 0.0
    %6974 = vmatpush1.msra.mxu0 0.0
    %6975 = vmatprep.subr.mxu0 0.0
    %6976 = vmatpush1.msra.mxu0 0.0
    %6977 = vmatprep.subr.mxu0 0.0
    %6978 = vmatpush1.msra.mxu0 0.0
    %6979 = vmatprep.subr.mxu0 0.0
    %6980 = vmatpush1.msra.mxu0 %v6944
    %6981 = vmatprep.subr.mxu0 0.0
    %6982 = vmatpush2.msra.mxu0 0.0
    %6983 = vmatprep.subr.mxu0 0.0
    %6984 = vmatpush2.msra.mxu0 0.0
    %6985 = vmatprep.subr.mxu0 0.0
    %6986 = vmatpush2.msra.mxu0 0.0
    %6987 = vmatprep.subr.mxu0 0.0
    %6988 = vmatpush2.msra.mxu0 0.0
    %6989 = vmatprep.subr.mxu0 0.0
    %6990 = vmatpush2.msra.mxu0 0.0
    %6991 = vmatprep.subr.mxu0 0.0
    %6992 = vmatpush2.msra.mxu0 0.0
    %6993 = vmatprep.subr.mxu0 0.0
    %6994 = vmatpush2.msra.mxu0 0.0
    %6995 = vmatprep.subr.mxu0 0.0
    %6996 = vmatpush2.msra.mxu0 0.0
    %6997 = vmatprep.subr.mxu0 0.0
    %6998 = vmatpush2.msra.mxu0 0.0
    %6999 = vmatprep.subr.mxu0 0.0
    %7000 = vmatpush2.msra.mxu0 0.0
    %7001 = vmatprep.subr.mxu0 0.0
    %7002 = vmatpush2.msra.mxu0 0.0
    %7003 = vmatprep.subr.mxu0 0.0
    %7004 = vmatpush2.msra.mxu0 0.0
    %7005 = vmatprep.subr.mxu0 0.0
    %7006 = vmatpush2.msra.mxu0 0.0
    %7007 = vmatprep.subr.mxu0 0.0
    %7008 = vmatpush2.msra.mxu0 0.0
    %7009 = vmatprep.subr.mxu0 0.0
    %7010 = vmatpush2.msra.mxu0 0.0
    %7011 = vmatprep.subr.mxu0 0.0
    %7012 = vmatpush2.msra.mxu0 0.0
    %7013 = vmatprep.mubr.f32.mxu0 0.0
    %7014 = vmatmul.mubr.f32.gmra.mxu0 %v6947
    %v7015 = vpop.f32.mrf.mxu0
    %v7016 = vadd.f32 0.0, %v7015
    %v7017 = vpop.f32.mrf.mxu0
    %7018 = vdwg.mxu0
    %7019 = vrot.lane.b32.xlu0 %v4220, 40
    %v7020 = vpop.permute.xlu0 %7019
    %v7023 = vsel %vm590, %v6865, 0
    %7025 = vmatprep.subr.mxu0 0.0
    %7026 = vmatpush1.msra.mxu0 0.0
    %7027 = vmatprep.subr.mxu0 0.0
    %7028 = vmatpush1.msra.mxu0 0.0
    %7029 = vmatprep.subr.mxu0 0.0
    %7030 = vmatpush1.msra.mxu0 0.0
    %7031 = vmatprep.subr.mxu0 0.0
    %7032 = vmatpush1.msra.mxu0 0.0
    %7033 = vmatprep.subr.mxu0 0.0
    %7034 = vmatpush1.msra.mxu0 0.0
    %7035 = vmatprep.subr.mxu0 0.0
    %7036 = vmatpush1.msra.mxu0 0.0
    %7037 = vmatprep.subr.mxu0 0.0
    %7038 = vmatpush1.msra.mxu0 0.0
    %7039 = vmatprep.subr.mxu0 0.0
    %7040 = vmatpush1.msra.mxu0 0.0
    %7041 = vmatprep.subr.mxu0 0.0
    %7042 = vmatpush1.msra.mxu0 0.0
    %7043 = vmatprep.subr.mxu0 0.0
    %7044 = vmatpush1.msra.mxu0 0.0
    %7045 = vmatprep.subr.mxu0 0.0
    %7046 = vmatpush1.msra.mxu0 0.0
    %7047 = vmatprep.subr.mxu0 0.0
    %7048 = vmatpush1.msra.mxu0 0.0
    %7049 = vmatprep.subr.mxu0 0.0
    %7050 = vmatpush1.msra.mxu0 0.0
    %7051 = vmatprep.subr.mxu0 0.0
    %7052 = vmatpush1.msra.mxu0 0.0
    %7053 = vmatprep.subr.mxu0 0.0
    %7054 = vmatpush1.msra.mxu0 0.0
    %7055 = vmatprep.subr.mxu0 0.0
    %7056 = vmatpush1.msra.mxu0 %v7020
    %7057 = vmatprep.subr.mxu0 0.0
    %7058 = vmatpush2.msra.mxu0 0.0
    %7059 = vmatprep.subr.mxu0 0.0
    %7060 = vmatpush2.msra.mxu0 0.0
    %7061 = vmatprep.subr.mxu0 0.0
    %7062 = vmatpush2.msra.mxu0 0.0
    %7063 = vmatprep.subr.mxu0 0.0
    %7064 = vmatpush2.msra.mxu0 0.0
    %7065 = vmatprep.subr.mxu0 0.0
    %7066 = vmatpush2.msra.mxu0 0.0
    %7067 = vmatprep.subr.mxu0 0.0
    %7068 = vmatpush2.msra.mxu0 0.0
    %7069 = vmatprep.subr.mxu0 0.0
    %7070 = vmatpush2.msra.mxu0 0.0
    %7071 = vmatprep.subr.mxu0 0.0
    %7072 = vmatpush2.msra.mxu0 0.0
    %7073 = vmatprep.subr.mxu0 0.0
    %7074 = vmatpush2.msra.mxu0 0.0
    %7075 = vmatprep.subr.mxu0 0.0
    %7076 = vmatpush2.msra.mxu0 0.0
    %7077 = vmatprep.subr.mxu0 0.0
    %7078 = vmatpush2.msra.mxu0 0.0
    %7079 = vmatprep.subr.mxu0 0.0
    %7080 = vmatpush2.msra.mxu0 0.0
    %7081 = vmatprep.subr.mxu0 0.0
    %7082 = vmatpush2.msra.mxu0 0.0
    %7083 = vmatprep.subr.mxu0 0.0
    %7084 = vmatpush2.msra.mxu0 0.0
    %7085 = vmatprep.subr.mxu0 0.0
    %7086 = vmatpush2.msra.mxu0 0.0
    %7087 = vmatprep.subr.mxu0 0.0
    %7088 = vmatpush2.msra.mxu0 0.0
    %7089 = vmatprep.mubr.f32.mxu0 0.0
    %7090 = vmatmul.mubr.f32.gmra.mxu0 %v7023
    %v7091 = vpop.f32.mrf.mxu0
    %v7092 = vadd.f32 0.0, %v7091
    %v7093 = vpop.f32.mrf.mxu0
    %7094 = vdwg.mxu0
    %7095 = vrot.lane.b32.xlu0 %v4225, 40
    %v7096 = vpop.permute.xlu0 %7095
    %v7099 = vsel %vm590, %v6866, 0
    %7101 = vmatprep.subr.mxu0 0.0
    %7102 = vmatpush1.msra.mxu0 0.0
    %7103 = vmatprep.subr.mxu0 0.0
    %7104 = vmatpush1.msra.mxu0 0.0
    %7105 = vmatprep.subr.mxu0 0.0
    %7106 = vmatpush1.msra.mxu0 0.0
    %7107 = vmatprep.subr.mxu0 0.0
    %7108 = vmatpush1.msra.mxu0 0.0
    %7109 = vmatprep.subr.mxu0 0.0
    %7110 = vmatpush1.msra.mxu0 0.0
    %7111 = vmatprep.subr.mxu0 0.0
    %7112 = vmatpush1.msra.mxu0 0.0
    %7113 = vmatprep.subr.mxu0 0.0
    %7114 = vmatpush1.msra.mxu0 0.0
    %7115 = vmatprep.subr.mxu0 0.0
    %7116 = vmatpush1.msra.mxu0 0.0
    %7117 = vmatprep.subr.mxu0 0.0
    %7118 = vmatpush1.msra.mxu0 0.0
    %7119 = vmatprep.subr.mxu0 0.0
    %7120 = vmatpush1.msra.mxu0 0.0
    %7121 = vmatprep.subr.mxu0 0.0
    %7122 = vmatpush1.msra.mxu0 0.0
    %7123 = vmatprep.subr.mxu0 0.0
    %7124 = vmatpush1.msra.mxu0 0.0
    %7125 = vmatprep.subr.mxu0 0.0
    %7126 = vmatpush1.msra.mxu0 0.0
    %7127 = vmatprep.subr.mxu0 0.0
    %7128 = vmatpush1.msra.mxu0 0.0
    %7129 = vmatprep.subr.mxu0 0.0
    %7130 = vmatpush1.msra.mxu0 0.0
    %7131 = vmatprep.subr.mxu0 0.0
    %7132 = vmatpush1.msra.mxu0 %v7096
    %7133 = vmatprep.subr.mxu0 0.0
    %7134 = vmatpush2.msra.mxu0 0.0
    %7135 = vmatprep.subr.mxu0 0.0
    %7136 = vmatpush2.msra.mxu0 0.0
    %7137 = vmatprep.subr.mxu0 0.0
    %7138 = vmatpush2.msra.mxu0 0.0
    %7139 = vmatprep.subr.mxu0 0.0
    %7140 = vmatpush2.msra.mxu0 0.0
    %7141 = vmatprep.subr.mxu0 0.0
    %7142 = vmatpush2.msra.mxu0 0.0
    %7143 = vmatprep.subr.mxu0 0.0
    %7144 = vmatpush2.msra.mxu0 0.0
    %7145 = vmatprep.subr.mxu0 0.0
    %7146 = vmatpush2.msra.mxu0 0.0
    %7147 = vmatprep.subr.mxu0 0.0
    %7148 = vmatpush2.msra.mxu0 0.0
    %7149 = vmatprep.subr.mxu0 0.0
    %7150 = vmatpush2.msra.mxu0 0.0
    %7151 = vmatprep.subr.mxu0 0.0
    %7152 = vmatpush2.msra.mxu0 0.0
    %7153 = vmatprep.subr.mxu0 0.0
    %7154 = vmatpush2.msra.mxu0 0.0
    %7155 = vmatprep.subr.mxu0 0.0
    %7156 = vmatpush2.msra.mxu0 0.0
    %7157 = vmatprep.subr.mxu0 0.0
    %7158 = vmatpush2.msra.mxu0 0.0
    %7159 = vmatprep.subr.mxu0 0.0
    %7160 = vmatpush2.msra.mxu0 0.0
    %7161 = vmatprep.subr.mxu0 0.0
    %7162 = vmatpush2.msra.mxu0 0.0
    %7163 = vmatprep.subr.mxu0 0.0
    %7164 = vmatpush2.msra.mxu0 0.0
    %7165 = vmatprep.mubr.f32.mxu0 0.0
    %7166 = vmatmul.mubr.f32.gmra.mxu0 %v7099
    %v7167 = vpop.f32.mrf.mxu0
    %v7168 = vadd.f32 0.0, %v7167
    %v7169 = vpop.f32.mrf.mxu0
    %7170 = vdwg.mxu0
    %v7172 = vsel %vm590, %v6940, 0
    %v7175 = vsel %vm590, %v7016, 0
    %v7178 = vsel %vm590, %v7092, 0
    %v7181 = vsel %vm590, %v7168, 0
    %7183 = vmatprep.subr.mxu0 0.0
    %7184 = vmatpush1.msra.mxu0 0.0
    %7185 = vmatprep.subr.mxu0 0.0
    %7186 = vmatpush1.msra.mxu0 0.0
    %7187 = vmatprep.subr.mxu0 0.0
    %7188 = vmatpush1.msra.mxu0 0.0
    %7189 = vmatprep.subr.mxu0 0.0
    %7190 = vmatpush1.msra.mxu0 0.0
    %7191 = vmatprep.subr.mxu0 0.0
    %7192 = vmatpush1.msra.mxu0 0.0
    %7193 = vmatprep.subr.mxu0 0.0
    %7194 = vmatpush1.msra.mxu0 0.0
    %7195 = vmatprep.subr.mxu0 0.0
    %7196 = vmatpush1.msra.mxu0 0.0
    %7197 = vmatprep.subr.mxu0 0.0
    %7198 = vmatpush1.msra.mxu0 0.0
    %7199 = vmatprep.subr.mxu0 0.0
    %7200 = vmatpush1.msra.mxu0 0.0
    %7201 = vmatprep.subr.mxu0 0.0
    %7202 = vmatpush1.msra.mxu0 0.0
    %7203 = vmatprep.subr.mxu0 0.0
    %7204 = vmatpush1.msra.mxu0 0.0
    %7205 = vmatprep.subr.mxu0 0.0
    %7206 = vmatpush1.msra.mxu0 0.0
    %7207 = vmatprep.subr.mxu0 0.0
    %7208 = vmatpush1.msra.mxu0 0.0
    %7209 = vmatprep.subr.mxu0 0.0
    %7210 = vmatpush1.msra.mxu0 0.0
    %7211 = vmatprep.subr.mxu0 0.0
    %7212 = vmatpush1.msra.mxu0 0.0
    %7213 = vmatprep.subr.mxu0 0.0
    %7214 = vmatpush1.msra.mxu0 %v4235
    %7215 = vmatprep.subr.mxu0 0.0
    %7216 = vmatpush2.msra.mxu0 0.0
    %7217 = vmatprep.subr.mxu0 0.0
    %7218 = vmatpush2.msra.mxu0 0.0
    %7219 = vmatprep.subr.mxu0 0.0
    %7220 = vmatpush2.msra.mxu0 0.0
    %7221 = vmatprep.subr.mxu0 0.0
    %7222 = vmatpush2.msra.mxu0 0.0
    %7223 = vmatprep.subr.mxu0 0.0
    %7224 = vmatpush2.msra.mxu0 0.0
    %7225 = vmatprep.subr.mxu0 0.0
    %7226 = vmatpush2.msra.mxu0 0.0
    %7227 = vmatprep.subr.mxu0 0.0
    %7228 = vmatpush2.msra.mxu0 0.0
    %7229 = vmatprep.subr.mxu0 0.0
    %7230 = vmatpush2.msra.mxu0 0.0
    %7231 = vmatprep.subr.mxu0 0.0
    %7232 = vmatpush2.msra.mxu0 0.0
    %7233 = vmatprep.subr.mxu0 0.0
    %7234 = vmatpush2.msra.mxu0 0.0
    %7235 = vmatprep.subr.mxu0 0.0
    %7236 = vmatpush2.msra.mxu0 0.0
    %7237 = vmatprep.subr.mxu0 0.0
    %7238 = vmatpush2.msra.mxu0 0.0
    %7239 = vmatprep.subr.mxu0 0.0
    %7240 = vmatpush2.msra.mxu0 0.0
    %7241 = vmatprep.subr.mxu0 0.0
    %7242 = vmatpush2.msra.mxu0 0.0
    %7243 = vmatprep.subr.mxu0 0.0
    %7244 = vmatpush2.msra.mxu0 0.0
    %7245 = vmatprep.subr.mxu0 0.0
    %7246 = vmatpush2.msra.mxu0 0.0
    %7247 = vmatprep.mubr.f32.mxu0 0.0
    %7248 = vmatmul.mubr.f32.gmra.mxu0 %v7172
    %v7249 = vpop.f32.mrf.mxu0
    %v7250 = vadd.f32 0.0, %v7249
    %v7251 = vpop.f32.mrf.mxu0
    %7252 = vmatprep.mubr.f32.mxu0 0.0
    %7253 = vmatmul.mubr.f32.gmra.mxu0 %v7175
    %v7254 = vpop.f32.mrf.mxu0
    %v7255 = vadd.f32 0.0, %v7254
    %v7256 = vpop.f32.mrf.mxu0
    %7257 = vmatprep.mubr.f32.mxu0 0.0
    %7258 = vmatmul.mubr.f32.gmra.mxu0 %v7178
    %v7259 = vpop.f32.mrf.mxu0
    %v7260 = vadd.f32 0.0, %v7259
    %v7261 = vpop.f32.mrf.mxu0
    %7262 = vmatprep.mubr.f32.mxu0 0.0
    %7263 = vmatmul.mubr.f32.gmra.mxu0 %v7181
    %v7264 = vpop.f32.mrf.mxu0
    %v7265 = vadd.f32 0.0, %v7264
    %v7266 = vpop.f32.mrf.mxu0
    %7267 = vdwg.mxu0
    %v7268 = vadd.f32 %v6507, %v7250
    %v7269 = vadd.f32 %v6508, %v7255
    %v7270 = vadd.f32 %v6509, %v7260
    %v7271 = vadd.f32 %v6510, %v7265
    %v7272 = vld [vmem:[#allocation20] sm:$0x1]
    %v7274 = vlaneseq
    %v7275 = vshrl.u32 %v7274, 7
    %v7276 = vsub.s32 0, %v7275
    %v7277 = vrot.slane %v7272, %v7276
    %v7279 = vadd.f32 %v7268, %v7277
    %v7280 = vadd.f32 %v7269, %v7277
    %v7281 = vadd.f32 %v7270, %v7277
    %v7282 = vadd.f32 %v7271, %v7277
    %v7283 = vadd.f32 %v4116, %v7279
    %v7284 = vadd.f32 %v4117, %v7280
    %v7285 = vadd.f32 %v4118, %v7281
    %v7286 = vadd.f32 %v4119, %v7282
    %v7287 = vld [vmem:[#allocation21] sm:$0x1]
    %v7288 = vld [vmem:[#allocation23] sm:$0x1]
    %v7289 = vsel %vm369, %v7283, 0.0
    %7290 = vadd.xlane.f32.xlu0 %v7289
    %v7291 = vpop.xlane.xlu0 %7290
    %v7292 = vsel %vm369, %v7284, 0.0
    %7293 = vadd.xlane.f32.xlu0 %v7292
    %v7294 = vpop.xlane.xlu0 %7293
    %v7295 = vsel %vm369, %v7285, 0.0
    %7296 = vadd.xlane.f32.xlu0 %v7295
    %v7297 = vpop.xlane.xlu0 %7296
    %v7298 = vsel %vm369, %v7286, 0.0
    %7299 = vadd.xlane.f32.xlu0 %v7298
    %v7300 = vpop.xlane.xlu0 %7299
    %v7301 = vmul.f32 %v7291, %v382
    %v7302 = vmul.f32 %v7294, %v382
    %v7303 = vmul.f32 %v7297, %v382
    %v7304 = vmul.f32 %v7300, %v382
    %v7305 = vsub.f32 %v7283, %v7301
    %v7306 = vsub.f32 %v7284, %v7302
    %v7307 = vsub.f32 %v7285, %v7303
    %v7308 = vsub.f32 %v7286, %v7304
    %v7309 = vmul.f32 %v7305, %v7305
    %v7310 = vmul.f32 %v7306, %v7306
    %v7311 = vmul.f32 %v7307, %v7307
    %v7312 = vmul.f32 %v7308, %v7308
    %v7313 = vsel %vm369, %v7309, 0.0
    %7314 = vadd.xlane.f32.xlu0 %v7313
    %v7315 = vpop.xlane.xlu0 %7314
    %v7316 = vsel %vm369, %v7310, 0.0
    %7317 = vadd.xlane.f32.xlu0 %v7316
    %v7318 = vpop.xlane.xlu0 %7317
    %v7319 = vsel %vm369, %v7311, 0.0
    %7320 = vadd.xlane.f32.xlu0 %v7319
    %v7321 = vpop.xlane.xlu0 %7320
    %v7322 = vsel %vm369, %v7312, 0.0
    %7323 = vadd.xlane.f32.xlu0 %v7322
    %v7324 = vpop.xlane.xlu0 %7323
    %v7325 = vmul.f32 %v7315, %v382
    %v7326 = vmul.f32 %v7318, %v382
    %v7327 = vmul.f32 %v7321, %v382
    %v7328 = vmul.f32 %v7324, %v382
    %v7329 = vadd.f32 %v7325, 1e-12
    %v7330 = vadd.f32 %v7326, 1e-12
    %v7331 = vadd.f32 %v7327, 1e-12
    %v7332 = vadd.f32 %v7328, 1e-12
    %v7333 = vrsqrt.pop %v7329
    %v7334 = vrsqrt.pop %v7330
    %v7335 = vrsqrt.pop %v7331
    %v7336 = vrsqrt.pop %v7332
    %v7337 = vmul.f32 %v7305, %v7333
    %v7338 = vmul.f32 %v7306, %v7334
    %v7339 = vmul.f32 %v7307, %v7335
    %v7340 = vmul.f32 %v7308, %v7336
    %v7342 = vlaneseq
    %v7343 = vshrl.u32 %v7342, 7
    %v7344 = vsub.s32 0, %v7343
    %v7345 = vrot.slane %v7287, %v7344
    %v7347 = vmul.f32 %v7337, %v7345
    %v7348 = vmul.f32 %v7338, %v7345
    %v7349 = vmul.f32 %v7339, %v7345
    %v7350 = vmul.f32 %v7340, %v7345
    %v7352 = vlaneseq
    %v7353 = vshrl.u32 %v7352, 7
    %v7354 = vsub.s32 0, %v7353
    %v7355 = vrot.slane %v7288, %v7354
    %v7357 = vadd.f32 %v7347, %v7355
    %v7358 = vadd.f32 %v7348, %v7355
    %v7359 = vadd.f32 %v7349, %v7355
    %v7360 = vadd.f32 %v7350, %v7355
    %v7361 = vld [vmem:[#allocation24] sm:$0xff]
    %v7362 = vld [vmem:[#allocation24 + $0x8] sm:$0xff]
    %v7363 = vld [vmem:[#allocation24 + $0x10] sm:$0xff]
    %v7364 = vld [vmem:[#allocation24 + $0x18] sm:$0xff]
    %v7365 = vld [vmem:[#allocation26] sm:$0x1]
    %v7367 = vlaneseq
    %v7368 = vshrl.u32 %v7367, 7
    %v7369 = vsub.s32 0, %v7368
    %v7370 = vrot.slane %v7365, %v7369
    %v7373 = vsel %vm369, %v7357, 0
    %v7376 = vsel %vm369, %v7358, 0
    %v7379 = vsel %vm369, %v7359, 0
    %v7382 = vsel %vm369, %v7360, 0
    %7384 = vmatprep.subr.mxu0 0.0
    %7385 = vmatpush1.msra.mxu0 0.0
    %7386 = vmatprep.subr.mxu0 0.0
    %7387 = vmatpush1.msra.mxu0 0.0
    %7388 = vmatprep.subr.mxu0 0.0
    %7389 = vmatpush1.msra.mxu0 0.0
    %7390 = vmatprep.subr.mxu0 0.0
    %7391 = vmatpush1.msra.mxu0 0.0
    %7392 = vmatprep.subr.mxu0 0.0
    %7393 = vmatpush1.msra.mxu0 0.0
    %7394 = vmatprep.subr.mxu0 0.0
    %7395 = vmatpush1.msra.mxu0 0.0
    %7396 = vmatprep.subr.mxu0 0.0
    %7397 = vmatpush1.msra.mxu0 0.0
    %7398 = vmatprep.subr.mxu0 0.0
    %7399 = vmatpush1.msra.mxu0 0.0
    %7400 = vmatprep.subr.mxu0 0.0
    %7401 = vmatpush1.msra.mxu0 0.0
    %7402 = vmatprep.subr.mxu0 0.0
    %7403 = vmatpush1.msra.mxu0 0.0
    %7404 = vmatprep.subr.mxu0 0.0
    %7405 = vmatpush1.msra.mxu0 0.0
    %7406 = vmatprep.subr.mxu0 0.0
    %7407 = vmatpush1.msra.mxu0 0.0
    %7408 = vmatprep.subr.mxu0 0.0
    %7409 = vmatpush1.msra.mxu0 %v7364
    %7410 = vmatprep.subr.mxu0 0.0
    %7411 = vmatpush1.msra.mxu0 %v7363
    %7412 = vmatprep.subr.mxu0 0.0
    %7413 = vmatpush1.msra.mxu0 %v7362
    %7414 = vmatprep.subr.mxu0 0.0
    %7415 = vmatpush1.msra.mxu0 %v7361
    %7416 = vmatprep.subr.mxu0 0.0
    %7417 = vmatpush2.msra.mxu0 0.0
    %7418 = vmatprep.subr.mxu0 0.0
    %7419 = vmatpush2.msra.mxu0 0.0
    %7420 = vmatprep.subr.mxu0 0.0
    %7421 = vmatpush2.msra.mxu0 0.0
    %7422 = vmatprep.subr.mxu0 0.0
    %7423 = vmatpush2.msra.mxu0 0.0
    %7424 = vmatprep.subr.mxu0 0.0
    %7425 = vmatpush2.msra.mxu0 0.0
    %7426 = vmatprep.subr.mxu0 0.0
    %7427 = vmatpush2.msra.mxu0 0.0
    %7428 = vmatprep.subr.mxu0 0.0
    %7429 = vmatpush2.msra.mxu0 0.0
    %7430 = vmatprep.subr.mxu0 0.0
    %7431 = vmatpush2.msra.mxu0 0.0
    %7432 = vmatprep.subr.mxu0 0.0
    %7433 = vmatpush2.msra.mxu0 0.0
    %7434 = vmatprep.subr.mxu0 0.0
    %7435 = vmatpush2.msra.mxu0 0.0
    %7436 = vmatprep.subr.mxu0 0.0
    %7437 = vmatpush2.msra.mxu0 0.0
    %7438 = vmatprep.subr.mxu0 0.0
    %7439 = vmatpush2.msra.mxu0 0.0
    %7440 = vmatprep.subr.mxu0 0.0
    %7441 = vmatpush2.msra.mxu0 0.0
    %7442 = vmatprep.subr.mxu0 0.0
    %7443 = vmatpush2.msra.mxu0 0.0
    %7444 = vmatprep.subr.mxu0 0.0
    %7445 = vmatpush2.msra.mxu0 0.0
    %7446 = vmatprep.subr.mxu0 0.0
    %7447 = vmatpush2.msra.mxu0 0.0
    %7448 = vmatprep.mubr.f32.mxu0 0.0
    %7449 = vmatmul.mubr.f32.gmra.mxu0 %v7373
    %v7450 = vpop.f32.mrf.mxu0
    %v7451 = vadd.f32 %v7370, %v7450
    %v7452 = vpop.f32.mrf.mxu0
    %7453 = vmatprep.mubr.f32.mxu0 0.0
    %7454 = vmatmul.mubr.f32.gmra.mxu0 %v7376
    %v7455 = vpop.f32.mrf.mxu0
    %v7456 = vadd.f32 %v7370, %v7455
    %v7457 = vpop.f32.mrf.mxu0
    %7458 = vmatprep.mubr.f32.mxu0 0.0
    %7459 = vmatmul.mubr.f32.gmra.mxu0 %v7379
    %v7460 = vpop.f32.mrf.mxu0
    %v7461 = vadd.f32 %v7370, %v7460
    %v7462 = vpop.f32.mrf.mxu0
    %7463 = vmatprep.mubr.f32.mxu0 0.0
    %7464 = vmatmul.mubr.f32.gmra.mxu0 %v7382
    %v7465 = vpop.f32.mrf.mxu0
    %v7466 = vadd.f32 %v7370, %v7465
    %v7467 = vpop.f32.mrf.mxu0
    %7468 = vdwg.mxu0
    %v7469 = vmul.f32 %v7451, 0.5
    %v7470 = vmul.f32 %v7456, 0.5
    %v7471 = vmul.f32 %v7461, 0.5
    %v7472 = vmul.f32 %v7466, 0.5
    %v7473 = vmul.f32 %v7451, 0.70710677
    %v7474 = vmul.f32 %v7456, 0.70710677
    %v7475 = vmul.f32 %v7461, 0.70710677
    %v7476 = vmul.f32 %v7466, 0.70710677
    %vm7477 = vcmp.ge.f32.partialorder %v7473, 0.0
    %vm7478 = vcmp.ge.f32.partialorder %v7474, 0.0
    %vm7479 = vcmp.ge.f32.partialorder %v7475, 0.0
    %vm7480 = vcmp.ge.f32.partialorder %v7476, 0.0
    %v7481 = vsel %vm7477, 1.0, -1.0
    %v7482 = vsel %vm7478, 1.0, -1.0
    %v7483 = vsel %vm7479, 1.0, -1.0
    %v7484 = vsel %vm7480, 1.0, -1.0
    %v7485 = vand.u32 2147483647, %v7473
    %v7486 = vand.u32 2147483647, %v7474
    %v7487 = vand.u32 2147483647, %v7475
    %v7488 = vand.u32 2147483647, %v7476
    %v7489 = vmul.f32 %v7485, 0.3275911
    %v7490 = vmul.f32 %v7486, 0.3275911
    %v7491 = vmul.f32 %v7487, 0.3275911
    %v7492 = vmul.f32 %v7488, 0.3275911
    %v7493 = vadd.f32 %v7489, 1.0
    %v7494 = vadd.f32 %v7490, 1.0
    %v7495 = vadd.f32 %v7491, 1.0
    %v7496 = vadd.f32 %v7492, 1.0
    %v7497 = vrcp.pop %v7493
    %v7498 = vmul.f32 1.0, %v7497
    %v7499 = vrcp.pop %v7494
    %v7500 = vmul.f32 1.0, %v7499
    %v7501 = vrcp.pop %v7495
    %v7502 = vmul.f32 1.0, %v7501
    %v7503 = vrcp.pop %v7496
    %v7504 = vmul.f32 1.0, %v7503
    %v7505 = vmul.f32 %v7498, 1.0614054
    %v7506 = vmul.f32 %v7500, 1.0614054
    %v7507 = vmul.f32 %v7502, 1.0614054
    %v7508 = vmul.f32 %v7504, 1.0614054
    %v7509 = vadd.f32 %v7505, -1.4531521
    %v7510 = vadd.f32 %v7506, -1.4531521
    %v7511 = vadd.f32 %v7507, -1.4531521
    %v7512 = vadd.f32 %v7508, -1.4531521
    %v7513 = vmul.f32 %v7509, %v7498
    %v7514 = vmul.f32 %v7510, %v7500
    %v7515 = vmul.f32 %v7511, %v7502
    %v7516 = vmul.f32 %v7512, %v7504
    %v7517 = vadd.f32 %v7513, 1.4214138
    %v7518 = vadd.f32 %v7514, 1.4214138
    %v7519 = vadd.f32 %v7515, 1.4214138
    %v7520 = vadd.f32 %v7516, 1.4214138
    %v7521 = vmul.f32 %v7517, %v7498
    %v7522 = vmul.f32 %v7518, %v7500
    %v7523 = vmul.f32 %v7519, %v7502
    %v7524 = vmul.f32 %v7520, %v7504
    %v7525 = vadd.f32 %v7521, -0.28449672
    %v7526 = vadd.f32 %v7522, -0.28449672
    %v7527 = vadd.f32 %v7523, -0.28449672
    %v7528 = vadd.f32 %v7524, -0.28449672
    %v7529 = vmul.f32 %v7525, %v7498
    %v7530 = vmul.f32 %v7526, %v7500
    %v7531 = vmul.f32 %v7527, %v7502
    %v7532 = vmul.f32 %v7528, %v7504
    %v7533 = vadd.f32 %v7529, 0.2548296
    %v7534 = vadd.f32 %v7530, 0.2548296
    %v7535 = vadd.f32 %v7531, 0.2548296
    %v7536 = vadd.f32 %v7532, 0.2548296
    %v7537 = vmul.f32 %v7533, %v7498
    %v7538 = vmul.f32 %v7534, %v7500
    %v7539 = vmul.f32 %v7535, %v7502
    %v7540 = vmul.f32 %v7536, %v7504
    %v7541 = vsub.f32 0.0, %v7485
    %v7542 = vsub.f32 0.0, %v7486
    %v7543 = vsub.f32 0.0, %v7487
    %v7544 = vsub.f32 0.0, %v7488
    %v7545 = vmul.f32 %v7541, %v7485
    %v7546 = vmul.f32 %v7542, %v7486
    %v7547 = vmul.f32 %v7543, %v7487
    %v7548 = vmul.f32 %v7544, %v7488
    %v7549 = vmul.f32 %v7545, 1.442695
    %v7550 = vpow.pop %v7549
    %v7551 = vmul.f32 %v7546, 1.442695
    %v7552 = vpow.pop %v7551
    %v7553 = vmul.f32 %v7547, 1.442695
    %v7554 = vpow.pop %v7553
    %v7555 = vmul.f32 %v7548, 1.442695
    %v7556 = vpow.pop %v7555
    %v7557 = vmul.f32 %v7537, %v7550
    %v7558 = vmul.f32 %v7538, %v7552
    %v7559 = vmul.f32 %v7539, %v7554
    %v7560 = vmul.f32 %v7540, %v7556
    %v7561 = vsub.f32 1.0, %v7557
    %v7562 = vsub.f32 1.0, %v7558
    %v7563 = vsub.f32 1.0, %v7559
    %v7564 = vsub.f32 1.0, %v7560
    %v7565 = vmul.f32 %v7481, %v7561
    %v7566 = vmul.f32 %v7482, %v7562
    %v7567 = vmul.f32 %v7483, %v7563
    %v7568 = vmul.f32 %v7484, %v7564
    %v7569 = vadd.f32 %v7565, 1.0
    %v7570 = vadd.f32 %v7566, 1.0
    %v7571 = vadd.f32 %v7567, 1.0
    %v7572 = vadd.f32 %v7568, 1.0
    %v7573 = vmul.f32 %v7469, %v7569
    %v7574 = vmul.f32 %v7470, %v7570
    %v7575 = vmul.f32 %v7471, %v7571
    %v7576 = vmul.f32 %v7472, %v7572
    %v7577 = vld [vmem:[%s53] sm:$0xff]
    %v7578 = vld [vmem:[%s53 + $0x8] sm:$0xff]
    %v7579 = vld [vmem:[%s53 + $0x10] sm:$0xff]
    %v7580 = vld [vmem:[%s53 + $0x18] sm:$0xff]
    %v7581 = vld [vmem:[%s53 + $0x20] sm:$0xff]
    %v7582 = vld [vmem:[%s53 + $0x28] sm:$0xff]
    %v7583 = vld [vmem:[%s53 + $0x30] sm:$0xff]
    %v7584 = vld [vmem:[%s53 + $0x38] sm:$0xff]
    %v7585 = vld [vmem:[#allocation27] sm:$0x1]
    %v7587 = vlaneseq
    %v7588 = vshrl.u32 %v7587, 7
    %v7589 = vsub.s32 0, %v7588
    %v7590 = vrot.slane %v7585, %v7589
    %v7593 = vsel %vm3944, %v7573, 0
    %v7596 = vsel %vm3944, %v7574, 0
    %v7599 = vsel %vm3944, %v7575, 0
    %v7602 = vsel %vm3944, %v7576, 0
    %7604 = vmatprep.subr.mxu0 0.0
    %7605 = vmatpush1.msra.mxu0 0.0
    %7606 = vmatprep.subr.mxu0 0.0
    %7607 = vmatpush1.msra.mxu0 0.0
    %7608 = vmatprep.subr.mxu0 0.0
    %7609 = vmatpush1.msra.mxu0 0.0
    %7610 = vmatprep.subr.mxu0 0.0
    %7611 = vmatpush1.msra.mxu0 0.0
    %7612 = vmatprep.subr.mxu0 0.0
    %7613 = vmatpush1.msra.mxu0 0.0
    %7614 = vmatprep.subr.mxu0 0.0
    %7615 = vmatpush1.msra.mxu0 0.0
    %7616 = vmatprep.subr.mxu0 0.0
    %7617 = vmatpush1.msra.mxu0 0.0
    %7618 = vmatprep.subr.mxu0 0.0
    %7619 = vmatpush1.msra.mxu0 0.0
    %7620 = vmatprep.subr.mxu0 0.0
    %7621 = vmatpush1.msra.mxu0 %v7584
    %7622 = vmatprep.subr.mxu0 0.0
    %7623 = vmatpush1.msra.mxu0 %v7583
    %7624 = vmatprep.subr.mxu0 0.0
    %7625 = vmatpush1.msra.mxu0 %v7582
    %7626 = vmatprep.subr.mxu0 0.0
    %7627 = vmatpush1.msra.mxu0 %v7581
    %7628 = vmatprep.subr.mxu0 0.0
    %7629 = vmatpush1.msra.mxu0 %v7580
    %7630 = vmatprep.subr.mxu0 0.0
    %7631 = vmatpush1.msra.mxu0 %v7579
    %7632 = vmatprep.subr.mxu0 0.0
    %7633 = vmatpush1.msra.mxu0 %v7578
    %7634 = vmatprep.subr.mxu0 0.0
    %7635 = vmatpush1.msra.mxu0 %v7577
    %7636 = vmatprep.subr.mxu0 0.0
    %7637 = vmatpush2.msra.mxu0 0.0
    %7638 = vmatprep.subr.mxu0 0.0
    %7639 = vmatpush2.msra.mxu0 0.0
    %7640 = vmatprep.subr.mxu0 0.0
    %7641 = vmatpush2.msra.mxu0 0.0
    %7642 = vmatprep.subr.mxu0 0.0
    %7643 = vmatpush2.msra.mxu0 0.0
    %7644 = vmatprep.subr.mxu0 0.0
    %7645 = vmatpush2.msra.mxu0 0.0
    %7646 = vmatprep.subr.mxu0 0.0
    %7647 = vmatpush2.msra.mxu0 0.0
    %7648 = vmatprep.subr.mxu0 0.0
    %7649 = vmatpush2.msra.mxu0 0.0
    %7650 = vmatprep.subr.mxu0 0.0
    %7651 = vmatpush2.msra.mxu0 0.0
    %7652 = vmatprep.subr.mxu0 0.0
    %7653 = vmatpush2.msra.mxu0 0.0
    %7654 = vmatprep.subr.mxu0 0.0
    %7655 = vmatpush2.msra.mxu0 0.0
    %7656 = vmatprep.subr.mxu0 0.0
    %7657 = vmatpush2.msra.mxu0 0.0
    %7658 = vmatprep.subr.mxu0 0.0
    %7659 = vmatpush2.msra.mxu0 0.0
    %7660 = vmatprep.subr.mxu0 0.0
    %7661 = vmatpush2.msra.mxu0 0.0
    %7662 = vmatprep.subr.mxu0 0.0
    %7663 = vmatpush2.msra.mxu0 0.0
    %7664 = vmatprep.subr.mxu0 0.0
    %7665 = vmatpush2.msra.mxu0 0.0
    %7666 = vmatprep.subr.mxu0 0.0
    %7667 = vmatpush2.msra.mxu0 0.0
    %7668 = vmatprep.mubr.f32.mxu0 0.0
    %7669 = vmatmul.mubr.f32.gmra.mxu0 %v7593
    %v7670 = vpop.f32.mrf.mxu0
    %v7671 = vadd.f32 %v7590, %v7670
    %v7672 = vpop.f32.mrf.mxu0
    %7673 = vmatprep.mubr.f32.mxu0 0.0
    %7674 = vmatmul.mubr.f32.gmra.mxu0 %v7596
    %v7675 = vpop.f32.mrf.mxu0
    %v7676 = vadd.f32 %v7590, %v7675
    %v7677 = vpop.f32.mrf.mxu0
    %7678 = vmatprep.mubr.f32.mxu0 0.0
    %7679 = vmatmul.mubr.f32.gmra.mxu0 %v7599
    %v7680 = vpop.f32.mrf.mxu0
    %v7681 = vadd.f32 %v7590, %v7680
    %v7682 = vpop.f32.mrf.mxu0
    %7683 = vmatprep.mubr.f32.mxu0 0.0
    %7684 = vmatmul.mubr.f32.gmra.mxu0 %v7602
    %v7685 = vpop.f32.mrf.mxu0
    %v7686 = vadd.f32 %v7590, %v7685
    %v7687 = vpop.f32.mrf.mxu0
    %7688 = vdwg.mxu0
    %v7689 = vadd.f32 %v7357, %v7671
    %v7690 = vadd.f32 %v7358, %v7676
    %v7691 = vadd.f32 %v7359, %v7681
    %v7692 = vadd.f32 %v7360, %v7686
    %v7693 = vld [vmem:[#allocation29] sm:$0x1]
    %v7694 = vld [vmem:[#allocation30] sm:$0x1]
    %v7695 = vsel %vm369, %v7689, 0.0
    %7696 = vadd.xlane.f32.xlu0 %v7695
    %v7697 = vpop.xlane.xlu0 %7696
    %v7698 = vsel %vm369, %v7690, 0.0
    %7699 = vadd.xlane.f32.xlu0 %v7698
    %v7700 = vpop.xlane.xlu0 %7699
    %v7701 = vsel %vm369, %v7691, 0.0
    %7702 = vadd.xlane.f32.xlu0 %v7701
    %v7703 = vpop.xlane.xlu0 %7702
    %v7704 = vsel %vm369, %v7692, 0.0
    %7705 = vadd.xlane.f32.xlu0 %v7704
    %v7706 = vpop.xlane.xlu0 %7705
    %v7707 = vmul.f32 %v7697, %v382
    %v7708 = vmul.f32 %v7700, %v382
    %v7709 = vmul.f32 %v7703, %v382
    %v7710 = vmul.f32 %v7706, %v382
    %v7711 = vsub.f32 %v7689, %v7707
    %v7712 = vsub.f32 %v7690, %v7708
    %v7713 = vsub.f32 %v7691, %v7709
    %v7714 = vsub.f32 %v7692, %v7710
    %v7715 = vmul.f32 %v7711, %v7711
    %v7716 = vmul.f32 %v7712, %v7712
    %v7717 = vmul.f32 %v7713, %v7713
    %v7718 = vmul.f32 %v7714, %v7714
    %v7719 = vsel %vm369, %v7715, 0.0
    %7720 = vadd.xlane.f32.xlu0 %v7719
    %v7721 = vpop.xlane.xlu0 %7720
    %v7722 = vsel %vm369, %v7716, 0.0
    %7723 = vadd.xlane.f32.xlu0 %v7722
    %v7724 = vpop.xlane.xlu0 %7723
    %v7725 = vsel %vm369, %v7717, 0.0
    %7726 = vadd.xlane.f32.xlu0 %v7725
    %v7727 = vpop.xlane.xlu0 %7726
    %v7728 = vsel %vm369, %v7718, 0.0
    %7729 = vadd.xlane.f32.xlu0 %v7728
    %v7730 = vpop.xlane.xlu0 %7729
    %v7731 = vmul.f32 %v7721, %v382
    %v7732 = vmul.f32 %v7724, %v382
    %v7733 = vmul.f32 %v7727, %v382
    %v7734 = vmul.f32 %v7730, %v382
    %v7735 = vadd.f32 %v7731, 1e-12
    %v7736 = vadd.f32 %v7732, 1e-12
    %v7737 = vadd.f32 %v7733, 1e-12
    %v7738 = vadd.f32 %v7734, 1e-12
    %v7739 = vrsqrt.pop %v7735
    %v7740 = vrsqrt.pop %v7736
    %v7741 = vrsqrt.pop %v7737
    %v7742 = vrsqrt.pop %v7738
    %v7743 = vmul.f32 %v7711, %v7739
    %v7744 = vmul.f32 %v7712, %v7740
    %v7745 = vmul.f32 %v7713, %v7741
    %v7746 = vmul.f32 %v7714, %v7742
    %v7748 = vlaneseq
    %v7749 = vshrl.u32 %v7748, 7
    %v7750 = vsub.s32 0, %v7749
    %v7751 = vrot.slane %v7693, %v7750
    %v7753 = vmul.f32 %v7743, %v7751
    %v7754 = vmul.f32 %v7744, %v7751
    %v7755 = vmul.f32 %v7745, %v7751
    %v7756 = vmul.f32 %v7746, %v7751
    %v7758 = vlaneseq
    %v7759 = vshrl.u32 %v7758, 7
    %v7760 = vsub.s32 0, %v7759
    %v7761 = vrot.slane %v7694, %v7760
    %v7763 = vadd.f32 %v7753, %v7761
    %v7764 = vadd.f32 %v7754, %v7761
    %v7765 = vadd.f32 %v7755, %v7761
    %v7766 = vadd.f32 %v7756, %v7761
    %v7767 = vlaneseq
    %v7768 = vshrl.u32 %v7767, 7
    %v7769 = vlaneseq
    %v7770 = vand.u32 %v7769, 127
    %v7771 = vmul.u32 %v7768, 8
    %vm7772 = vcmp.eq.s32.totalorder %v7770, %v7771
    %v7773 = vsel %vm7772, 1, 0
    %v7774 = vcvt.s32.f32 %v7773
    %v7776 = vsel %vm369, %v7774, 0
    %7778 = vmatprep.subr.mxu0 0.0
    %7779 = vmatpush1.msra.mxu0 0.0
    %7780 = vmatprep.subr.mxu0 0.0
    %7781 = vmatpush1.msra.mxu0 0.0
    %7782 = vmatprep.subr.mxu0 0.0
    %7783 = vmatpush1.msra.mxu0 0.0
    %7784 = vmatprep.subr.mxu0 0.0
    %7785 = vmatpush1.msra.mxu0 0.0
    %7786 = vmatprep.subr.mxu0 0.0
    %7787 = vmatpush1.msra.mxu0 0.0
    %7788 = vmatprep.subr.mxu0 0.0
    %7789 = vmatpush1.msra.mxu0 0.0
    %7790 = vmatprep.subr.mxu0 0.0
    %7791 = vmatpush1.msra.mxu0 0.0
    %7792 = vmatprep.subr.mxu0 0.0
    %7793 = vmatpush1.msra.mxu0 0.0
    %7794 = vmatprep.subr.mxu0 0.0
    %7795 = vmatpush1.msra.mxu0 0.0
    %7796 = vmatprep.subr.mxu0 0.0
    %7797 = vmatpush1.msra.mxu0 0.0
    %7798 = vmatprep.subr.mxu0 0.0
    %7799 = vmatpush1.msra.mxu0 0.0
    %7800 = vmatprep.subr.mxu0 0.0
    %7801 = vmatpush1.msra.mxu0 0.0
    %7802 = vmatprep.subr.mxu0 0.0
    %7803 = vmatpush1.msra.mxu0 %v7766
    %7804 = vmatprep.subr.mxu0 0.0
    %7805 = vmatpush1.msra.mxu0 %v7765
    %7806 = vmatprep.subr.mxu0 0.0
    %7807 = vmatpush1.msra.mxu0 %v7764
    %7808 = vmatprep.subr.mxu0 0.0
    %7809 = vmatpush1.msra.mxu0 %v7763
    %7810 = vmatprep.subr.mxu0 0.0
    %7811 = vmatpush2.msra.mxu0 0.0
    %7812 = vmatprep.subr.mxu0 0.0
    %7813 = vmatpush2.msra.mxu0 0.0
    %7814 = vmatprep.subr.mxu0 0.0
    %7815 = vmatpush2.msra.mxu0 0.0
    %7816 = vmatprep.subr.mxu0 0.0
    %7817 = vmatpush2.msra.mxu0 0.0
    %7818 = vmatprep.subr.mxu0 0.0
    %7819 = vmatpush2.msra.mxu0 0.0
    %7820 = vmatprep.subr.mxu0 0.0
    %7821 = vmatpush2.msra.mxu0 0.0
    %7822 = vmatprep.subr.mxu0 0.0
    %7823 = vmatpush2.msra.mxu0 0.0
    %7824 = vmatprep.subr.mxu0 0.0
    %7825 = vmatpush2.msra.mxu0 0.0
    %7826 = vmatprep.subr.mxu0 0.0
    %7827 = vmatpush2.msra.mxu0 0.0
    %7828 = vmatprep.subr.mxu0 0.0
    %7829 = vmatpush2.msra.mxu0 0.0
    %7830 = vmatprep.subr.mxu0 0.0
    %7831 = vmatpush2.msra.mxu0 0.0
    %7832 = vmatprep.subr.mxu0 0.0
    %7833 = vmatpush2.msra.mxu0 0.0
    %7834 = vmatprep.subr.mxu0 0.0
    %7835 = vmatpush2.msra.mxu0 0.0
    %7836 = vmatprep.subr.mxu0 0.0
    %7837 = vmatpush2.msra.mxu0 0.0
    %7838 = vmatprep.subr.mxu0 0.0
    %7839 = vmatpush2.msra.mxu0 0.0
    %7840 = vmatprep.subr.mxu0 0.0
    %7841 = vmatpush2.msra.mxu0 0.0
    %7842 = vmatprep.mubr.f32.mxu0 0.0
    %7843 = vmatmul.mubr.f32.gmra.mxu0 %v7776
    %v7844 = vpop.f32.mrf.mxu0
    %v7845 = vadd.f32 0.0, %v7844
    %v7846 = vpop.f32.mrf.mxu0
    %7847 = vdwg.mxu0
    %v7848 = vld [vmem:[%s61] sm:$0xff]
    %v7849 = vld [vmem:[%s61 + $0x8] sm:$0xff]
    %v7850 = vld [vmem:[%s61 + $0x10] sm:$0xff]
    %v7851 = vld [vmem:[%s61 + $0x18] sm:$0xff]
    %v7852 = vld [vmem:[%s63] sm:$0x1]
    %v7854 = vlaneseq
    %v7855 = vshrl.u32 %v7854, 7
    %v7856 = vsub.s32 0, %v7855
    %v7857 = vrot.slane %v7852, %v7856
    %v7860 = vsel %vm369, %v7845, 0
    %7862 = vmatprep.subr.mxu0 0.0
    %7863 = vmatpush1.msra.mxu0 0.0
    %7864 = vmatprep.subr.mxu0 0.0
    %7865 = vmatpush1.msra.mxu0 0.0
    %7866 = vmatprep.subr.mxu0 0.0
    %7867 = vmatpush1.msra.mxu0 0.0
    %7868 = vmatprep.subr.mxu0 0.0
    %7869 = vmatpush1.msra.mxu0 0.0
    %7870 = vmatprep.subr.mxu0 0.0
    %7871 = vmatpush1.msra.mxu0 0.0
    %7872 = vmatprep.subr.mxu0 0.0
    %7873 = vmatpush1.msra.mxu0 0.0
    %7874 = vmatprep.subr.mxu0 0.0
    %7875 = vmatpush1.msra.mxu0 0.0
    %7876 = vmatprep.subr.mxu0 0.0
    %7877 = vmatpush1.msra.mxu0 0.0
    %7878 = vmatprep.subr.mxu0 0.0
    %7879 = vmatpush1.msra.mxu0 0.0
    %7880 = vmatprep.subr.mxu0 0.0
    %7881 = vmatpush1.msra.mxu0 0.0
    %7882 = vmatprep.subr.mxu0 0.0
    %7883 = vmatpush1.msra.mxu0 0.0
    %7884 = vmatprep.subr.mxu0 0.0
    %7885 = vmatpush1.msra.mxu0 0.0
    %7886 = vmatprep.subr.mxu0 0.0
    %7887 = vmatpush1.msra.mxu0 %v7851
    %7888 = vmatprep.subr.mxu0 0.0
    %7889 = vmatpush1.msra.mxu0 %v7850
    %7890 = vmatprep.subr.mxu0 0.0
    %7891 = vmatpush1.msra.mxu0 %v7849
    %7892 = vmatprep.subr.mxu0 0.0
    %7893 = vmatpush1.msra.mxu0 %v7848
    %7894 = vmatprep.subr.mxu0 0.0
    %7895 = vmatpush2.msra.mxu0 0.0
    %7896 = vmatprep.subr.mxu0 0.0
    %7897 = vmatpush2.msra.mxu0 0.0
    %7898 = vmatprep.subr.mxu0 0.0
    %7899 = vmatpush2.msra.mxu0 0.0
    %7900 = vmatprep.subr.mxu0 0.0
    %7901 = vmatpush2.msra.mxu0 0.0
    %7902 = vmatprep.subr.mxu0 0.0
    %7903 = vmatpush2.msra.mxu0 0.0
    %7904 = vmatprep.subr.mxu0 0.0
    %7905 = vmatpush2.msra.mxu0 0.0
    %7906 = vmatprep.subr.mxu0 0.0
    %7907 = vmatpush2.msra.mxu0 0.0
    %7908 = vmatprep.subr.mxu0 0.0
    %7909 = vmatpush2.msra.mxu0 0.0
    %7910 = vmatprep.subr.mxu0 0.0
    %7911 = vmatpush2.msra.mxu0 0.0
    %7912 = vmatprep.subr.mxu0 0.0
    %7913 = vmatpush2.msra.mxu0 0.0
    %7914 = vmatprep.subr.mxu0 0.0
    %7915 = vmatpush2.msra.mxu0 0.0
    %7916 = vmatprep.subr.mxu0 0.0
    %7917 = vmatpush2.msra.mxu0 0.0
    %7918 = vmatprep.subr.mxu0 0.0
    %7919 = vmatpush2.msra.mxu0 0.0
    %7920 = vmatprep.subr.mxu0 0.0
    %7921 = vmatpush2.msra.mxu0 0.0
    %7922 = vmatprep.subr.mxu0 0.0
    %7923 = vmatpush2.msra.mxu0 0.0
    %7924 = vmatprep.subr.mxu0 0.0
    %7925 = vmatpush2.msra.mxu0 0.0
    %7926 = vmatprep.mubr.f32.mxu0 0.0
    %7927 = vmatmul.mubr.f32.gmra.mxu0 %v7860
    %v7928 = vpop.f32.mrf.mxu0
    %v7929 = vadd.f32 %v7857, %v7928
    %v7930 = vpop.f32.mrf.mxu0
    %7931 = vdwg.mxu0
    %v7932 = vtanh.pop %v7929
    %v7933 = vld [vmem:[%s65] sm:$0xff]
    %v7934 = vld [vmem:[%s65 + $0x8] sm:$0xff]
    %v7935 = vld [vmem:[%s65 + $0x10] sm:$0xff]
    %v7936 = vld [vmem:[%s65 + $0x18] sm:$0xff]
    %v7937 = vld [vmem:[#allocation2] sm:$0x1]
    %v7939 = vlaneseq
    %v7940 = vshrl.u32 %v7939, 7
    %v7941 = vsub.s32 0, %v7940
    %v7942 = vrot.slane %v7937, %v7941
    %v7945 = vsel %vm369, %v7932, 0
    %7947 = vmatprep.subr.mxu0 0.0
    %7948 = vmatpush1.msra.mxu0 0.0
    %7949 = vmatprep.subr.mxu0 0.0
    %7950 = vmatpush1.msra.mxu0 0.0
    %7951 = vmatprep.subr.mxu0 0.0
    %7952 = vmatpush1.msra.mxu0 0.0
    %7953 = vmatprep.subr.mxu0 0.0
    %7954 = vmatpush1.msra.mxu0 0.0
    %7955 = vmatprep.subr.mxu0 0.0
    %7956 = vmatpush1.msra.mxu0 0.0
    %7957 = vmatprep.subr.mxu0 0.0
    %7958 = vmatpush1.msra.mxu0 0.0
    %7959 = vmatprep.subr.mxu0 0.0
    %7960 = vmatpush1.msra.mxu0 0.0
    %7961 = vmatprep.subr.mxu0 0.0
    %7962 = vmatpush1.msra.mxu0 0.0
    %7963 = vmatprep.subr.mxu0 0.0
    %7964 = vmatpush1.msra.mxu0 0.0
    %7965 = vmatprep.subr.mxu0 0.0
    %7966 = vmatpush1.msra.mxu0 0.0
    %7967 = vmatprep.subr.mxu0 0.0
    %7968 = vmatpush1.msra.mxu0 0.0
    %7969 = vmatprep.subr.mxu0 0.0
    %7970 = vmatpush1.msra.mxu0 0.0
    %7971 = vmatprep.subr.mxu0 0.0
    %7972 = vmatpush1.msra.mxu0 %v7936
    %7973 = vmatprep.subr.mxu0 0.0
    %7974 = vmatpush1.msra.mxu0 %v7935
    %7975 = vmatprep.subr.mxu0 0.0
    %7976 = vmatpush1.msra.mxu0 %v7934
    %7977 = vmatprep.subr.mxu0 0.0
    %7978 = vmatpush1.msra.mxu0 %v7933
    %7979 = vmatprep.subr.mxu0 0.0
    %7980 = vmatpush2.msra.mxu0 0.0
    %7981 = vmatprep.subr.mxu0 0.0
    %7982 = vmatpush2.msra.mxu0 0.0
    %7983 = vmatprep.subr.mxu0 0.0
    %7984 = vmatpush2.msra.mxu0 0.0
    %7985 = vmatprep.subr.mxu0 0.0
    %7986 = vmatpush2.msra.mxu0 0.0
    %7987 = vmatprep.subr.mxu0 0.0
    %7988 = vmatpush2.msra.mxu0 0.0
    %7989 = vmatprep.subr.mxu0 0.0
    %7990 = vmatpush2.msra.mxu0 0.0
    %7991 = vmatprep.subr.mxu0 0.0
    %7992 = vmatpush2.msra.mxu0 0.0
    %7993 = vmatprep.subr.mxu0 0.0
    %7994 = vmatpush2.msra.mxu0 0.0
    %7995 = vmatprep.subr.mxu0 0.0
    %7996 = vmatpush2.msra.mxu0 0.0
    %7997 = vmatprep.subr.mxu0 0.0
    %7998 = vmatpush2.msra.mxu0 0.0
    %7999 = vmatprep.subr.mxu0 0.0
    %8000 = vmatpush2.msra.mxu0 0.0
    %8001 = vmatprep.subr.mxu0 0.0
    %8002 = vmatpush2.msra.mxu0 0.0
    %8003 = vmatprep.subr.mxu0 0.0
    %8004 = vmatpush2.msra.mxu0 0.0
    %8005 = vmatprep.subr.mxu0 0.0
    %8006 = vmatpush2.msra.mxu0 0.0
    %8007 = vmatprep.subr.mxu0 0.0
    %8008 = vmatpush2.msra.mxu0 0.0
    %8009 = vmatprep.subr.mxu0 0.0
    %8010 = vmatpush2.msra.mxu0 0.0
    %8011 = vmatprep.mubr.f32.mxu0 0.0
    %8012 = vmatmul.mubr.f32.gmra.mxu0 %v7945
    %v8013 = vpop.f32.mrf.mxu0
    %v8014 = vadd.f32 %v7942, %v8013
    %v8015 = vpop.f32.mrf.mxu0
    %8016 = vdwg.mxu0
    %vm8017 = vcmask 3072
    %8018 = vst.msk [vmem:[%s69] sm:$0xf] %vm8017, %v8014
    %v8019 = vadd.s32 %v7768, 1
    %vm8020 = vcmp.eq.s32.totalorder %v7770, %v8019
    %v8021 = vsel %vm8020, 1, 0
    %v8022 = vcvt.s32.f32 %v8021
    %vm8023 = vcmask 31744
    %v8025 = vsel %vm8023, %v8022, 0
    %vm8027 = vcmask 1043456
    %v8029 = vsel %vm8027, %v8014, 0
    %8031 = vmatprep.subr.mxu0 0.0
    %8032 = vmatpush1.msra.mxu0 0.0
    %8033 = vmatprep.subr.mxu0 0.0
    %8034 = vmatpush1.msra.mxu0 0.0
    %8035 = vmatprep.subr.mxu0 0.0
    %8036 = vmatpush1.msra.mxu0 0.0
    %8037 = vmatprep.subr.mxu0 0.0
    %8038 = vmatpush1.msra.mxu0 0.0
    %8039 = vmatprep.subr.mxu0 0.0
    %8040 = vmatpush1.msra.mxu0 0.0
    %8041 = vmatprep.subr.mxu0 0.0
    %8042 = vmatpush1.msra.mxu0 0.0
    %8043 = vmatprep.subr.mxu0 0.0
    %8044 = vmatpush1.msra.mxu0 0.0
    %8045 = vmatprep.subr.mxu0 0.0
    %8046 = vmatpush1.msra.mxu0 0.0
    %8047 = vmatprep.subr.mxu0 0.0
    %8048 = vmatpush1.msra.mxu0 0.0
    %8049 = vmatprep.subr.mxu0 0.0
    %8050 = vmatpush1.msra.mxu0 0.0
    %8051 = vmatprep.subr.mxu0 0.0
    %8052 = vmatpush1.msra.mxu0 0.0
    %8053 = vmatprep.subr.mxu0 0.0
    %8054 = vmatpush1.msra.mxu0 0.0
    %8055 = vmatprep.subr.mxu0 0.0
    %8056 = vmatpush1.msra.mxu0 0.0
    %8057 = vmatprep.subr.mxu0 0.0
    %8058 = vmatpush1.msra.mxu0 0.0
    %8059 = vmatprep.subr.mxu0 0.0
    %8060 = vmatpush1.msra.mxu0 0.0
    %8061 = vmatprep.subr.mxu0 0.0
    %8062 = vmatpush1.msra.mxu0 %v8029
    %8063 = vmatprep.subr.mxu0 0.0
    %8064 = vmatpush2.msra.mxu0 0.0
    %8065 = vmatprep.subr.mxu0 0.0
    %8066 = vmatpush2.msra.mxu0 0.0
    %8067 = vmatprep.subr.mxu0 0.0
    %8068 = vmatpush2.msra.mxu0 0.0
    %8069 = vmatprep.subr.mxu0 0.0
    %8070 = vmatpush2.msra.mxu0 0.0
    %8071 = vmatprep.subr.mxu0 0.0
    %8072 = vmatpush2.msra.mxu0 0.0
    %8073 = vmatprep.subr.mxu0 0.0
    %8074 = vmatpush2.msra.mxu0 0.0
    %8075 = vmatprep.subr.mxu0 0.0
    %8076 = vmatpush2.msra.mxu0 0.0
    %8077 = vmatprep.subr.mxu0 0.0
    %8078 = vmatpush2.msra.mxu0 0.0
    %8079 = vmatprep.subr.mxu0 0.0
    %8080 = vmatpush2.msra.mxu0 0.0
    %8081 = vmatprep.subr.mxu0 0.0
    %8082 = vmatpush2.msra.mxu0 0.0
    %8083 = vmatprep.subr.mxu0 0.0
    %8084 = vmatpush2.msra.mxu0 0.0
    %8085 = vmatprep.subr.mxu0 0.0
    %8086 = vmatpush2.msra.mxu0 0.0
    %8087 = vmatprep.subr.mxu0 0.0
    %8088 = vmatpush2.msra.mxu0 0.0
    %8089 = vmatprep.subr.mxu0 0.0
    %8090 = vmatpush2.msra.mxu0 0.0
    %8091 = vmatprep.subr.mxu0 0.0
    %8092 = vmatpush2.msra.mxu0 0.0
    %8093 = vmatprep.subr.mxu0 0.0
    %8094 = vmatpush2.msra.mxu0 0.0
    %8095 = vmatprep.mubr.f32.mxu0 0.0
    %8096 = vmatmul.mubr.f32.gmra.mxu0 %v8025
    %v8097 = vpop.f32.mrf.mxu0
    %v8098 = vadd.f32 0.0, %v8097
    %v8099 = vpop.f32.mrf.mxu0
    %8100 = vdwg.mxu0
    %v8101 = vmax.f32 %v8014, %v8098
    %v8102 = vsub.f32 %v8014, %v8101
    %v8103 = vmul.f32 %v8102, 1.442695
    %v8104 = vpow.pop %v8103
    %v8105 = vsub.f32 %v8098, %v8101
    %v8106 = vmul.f32 %v8105, 1.442695
    %v8107 = vpow.pop %v8106
    %v8108 = vadd.f32 %v8104, %v8107
    %v8109 = vlog2.pop %v8108
    %v8110 = vmul.f32 %v8109, 0.6931472
    %v8111 = vadd.f32 %v8101, %v8110
    %v8112 = vsub.f32 %v8111, %v8014
    %v8113 = vld [vmem:[%s5] sm:$0xf]
    %v8114 = vmul.f32 %v8113, %v8112
    %v8115 = vsel %vm8017, %v8114, 0.0
    %8116 = vadd.xlane.f32.xlu0 %v8115
    %v8117 = vpop.xlane.xlu0 %8116
    %v8118 = vrot.slane %v8117, 4
    %v8119 = vadd.f32 %v8117, %v8118
    %v8120 = vrot.slane %v8119, 2
    %v8121 = vadd.f32 %v8119, %v8120
    %v8122 = vrot.slane %v8121, 1
    %v8123 = vadd.f32 %v8121, %v8122
    %s8124 = vtos %v8123
    %v8125 = vstv %s8124
    %v8126 = vmul.f32 %v8125, 0.5
    %vm8127 = vcmask 0
    %8128 = vst.msk [vmem:[#allocation32] sm:$0x1] %vm8127, %v8126
    %v8129 = vld [vmem:[%s7] sm:$0xf]
    %v8130 = vmul.f32 %v8129, %v8112
    %v8131 = vsel %vm8017, %v8130, 0.0
    %8132 = vadd.xlane.f32.xlu0 %v8131
    %v8133 = vpop.xlane.xlu0 %8132
    %v8134 = vrot.slane %v8133, 4
    %v8135 = vadd.f32 %v8133, %v8134
    %v8136 = vrot.slane %v8135, 2
    %v8137 = vadd.f32 %v8135, %v8136
    %v8138 = vrot.slane %v8137, 1
    %v8139 = vadd.f32 %v8137, %v8138
    %s8140 = vtos %v8139
    %v8141 = vstv %s8140
    %v8142 = vmul.f32 %v8141, 0.5
    %8143 = vst.msk [vmem:[#allocation33] sm:$0x1] %vm8127, %v8142
    // Predicated region
    $region210: #{tpu_custom_call.1} parent=1 // pred_check
      _
    $region211: #{tpu_custom_call.1} parent=1 // pred_check_branch
      %8145 = sbr.rel (0) target = $region213
    $region212: #{tpu_custom_call.1} parent=1 // pred_region
      _
    $region213: #{tpu_custom_call.1} parent=1 // pred_fallthru
      _
    // Predicated region
    $region214: #{tpu_custom_call.1} parent=1 // pred_check
      _
    $region215: #{tpu_custom_call.1} parent=1 // pred_check_branch
      %8147 = sbr.rel (0) target = $region217
    $region216: #{tpu_custom_call.1} parent=1 // pred_region
      %s8149 = ssub.s32 16, 16
      %8150 = vsyncadd [#allocation5], %s8149
      %s8152 = sshll.u32 [#allocation32], 4
      %s8153 = int_to_ptr.vmem [resolvable:$true] %s8152
      %8155 = dma.vmem_to_hbm [thread:$0]  %s8153, 16, %s71, [#allocation5]
    $region217: #{tpu_custom_call.1} parent=1 // pred_fallthru
      _
    // Predicated region
    $region218: #{tpu_custom_call.1} parent=1 // pred_check
      _
    $region219: #{tpu_custom_call.1} parent=1 // pred_check_branch
      %8157 = sbr.rel (0) target = $region221
    $region220: #{tpu_custom_call.1} parent=1 // pred_region
      %s8159 = ssub.s32 16, 16
      %8160 = vsyncadd [#allocation34], %s8159
      %s8162 = sshll.u32 [#allocation33], 4
      %s8163 = int_to_ptr.vmem [resolvable:$true] %s8162
      %8165 = dma.vmem_to_hbm [thread:$0]  %s8163, 16, %s73, [#allocation34]
    $region221: #{tpu_custom_call.1} parent=1 // pred_fallthru
      _
    // Predicated region
    $region222: #{tpu_custom_call.1} parent=1 // pred_check
      _
    $region223: #{tpu_custom_call.1} parent=1 // pred_check_branch
      %8167 = sbr.rel (0) target = $region225
    $region224: #{tpu_custom_call.1} parent=1 // pred_region
      _
    $region225: #{tpu_custom_call.1} parent=1 // pred_fallthru
      _
    // Predicated region
    $region226: #{tpu_custom_call.1} parent=1 // pred_check
      _
    $region227: #{tpu_custom_call.1} parent=1 // pred_check_branch
      %8169 = sbr.rel (0) target = $region229
    $region228: #{tpu_custom_call.1} parent=1 // pred_region
      %8170 = dma.done [#allocation5], 16
    $region229: #{tpu_custom_call.1} parent=1 // pred_fallthru
      _
    // Predicated region
    $region230: #{tpu_custom_call.1} parent=1 // pred_check
      _
    $region231: #{tpu_custom_call.1} parent=1 // pred_check_branch
      %8172 = sbr.rel (0) target = $region233
    $region232: #{tpu_custom_call.1} parent=1 // pred_region
      %8173 = dma.done [#allocation34], 16
    $region233: #{tpu_custom_call.1} parent=1 // pred_fallthru
      _
    %8174 = vsyncpa [#allocation4], 1
    %8175 = vsyncpa [#allocation7], 1
    %8176 = vsyncpa [#allocation10], 1
    %8177 = vsyncpa [#allocation13], 1
    %8178 = vsyncpa [#allocation16], 1
    %8179 = vsyncpa [#allocation19], 1
    %8180 = vsyncpa [#allocation22], 1
    %8181 = vsyncpa [#allocation25], 1
    %8182 = vsyncpa [#allocation28], 1
    %8183 = vsyncpa [#allocation31], 1
    %8184 = vsyncpa [#allocation5], 1
    %8185 = vsyncpa [#allocation34], 1

</llo_original>
